<compile_context>
chip_gen: v7x
topology: tpu7x:2x2x1
jax: 0.10.0
libtpu: 0.0.40
codegen_flags: <defaults>
</compile_context>

<pallas_src>
import jax
import jax.numpy as jnp
from jax import lax
from jax.experimental import pallas as pl
from jax.experimental.pallas import tpu as pltpu

# ----------------------------- model config (small, synthetic weights) -----------
CDIM = 32              # conv feature-encoder channels (true)
HID = 64               # transformer hidden size (true)
NHEAD = 4
DHEAD = HID // NHEAD
FFN = 128
NLAYERS = 2
POS_K = 9
TDNN_DIM = (64, 64, 96)
TDNN_K = (5, 3, 1)
TDNN_DIL = (1, 2, 1)
XVEC_DIM = 64

# lane-dense padded widths (pads are exact zeros everywhere)
HP = 128               # padded hidden
TP = 128               # padded TDNN channels
XP = 128               # padded embedding
QKVN = 3 * HID         # fused-QKV output kept at its TRUE width (192)

WAV_LEN = 400
CONV_K0, CONV_S0 = 10, 5
CONV_K1, CONV_S1 = 3, 2
ROWS = WAV_LEN // (2 * CONV_S0)                 # 40 rows of 10 samples each
ROWL = 16                                       # 10 samples + 6 zero lanes
T1 = (WAV_LEN - CONV_K0) // CONV_S0 + 1         # 79  conv0 outputs
T2 = (T1 - CONV_K1) // CONV_S1 + 1              # 39  conv1 outputs / seq length
T3 = T2 - (TDNN_K[0] - 1) * TDNN_DIL[0]         # 35
T4 = T3 - (TDNN_K[1] - 1) * TDNN_DIL[1]         # 31


# ----------------------------- in-kernel math helpers -----------------------------
def _gelu(x):
    # tanh-approximate GELU (f32, EUP tanh). TODO(synk): HF WavLM uses erf-GELU.
    return 0.5 * x * (1.0 + jnp.tanh(0.7978845608028654 * (x + 0.044715 * x * x * x)))


def _bf(x):
    return x.astype(jnp.bfloat16)


def _dot(a, b):
    return jnp.dot(_bf(a), _bf(b), preferred_element_type=jnp.float32)


def _ln_padded(x, g, b, true_dim):
    # LayerNorm over a lane-padded axis: pads of x are exact zeros, so sum-based
    # statistics divided by the TRUE width are exact; padded gains/betas are zero
    # so padded lanes come out as exact zeros again.
    s1 = jnp.sum(x, axis=-1, keepdims=True)
    s2 = jnp.sum(x * x, axis=-1, keepdims=True)
    mu = s1 / true_dim
    var = s2 / true_dim - mu * mu
    return (x - mu) * lax.rsqrt(var + 1e-5) * g + b


# ----------------------------- the single fused kernel ----------------------------
def _wavlm_kernel(wav_ref, lw_ref,
                  c0e_ref, c0ol_ref, c0oh_ref, gng_ref, gnb_ref, c1w_ref,
                  fplng_ref, fplnb_ref, fpw_ref, fpb_ref,
                  posw_ref, posb_ref, elng_ref, elnb_ref,
                  qkvw_ref, qkvb_ref, ow_ref, ob_ref,
                  ln1g_ref, ln1b_ref, ff1w_ref, ff1b_ref,
                  ff2w_ref, ff2b_ref, ln2g_ref, ln2b_ref,
                  projw_ref, projb_ref, t0w_ref, t0b_ref,
                  t1w_ref, t1b_ref, t2w_ref, t2b_ref,
                  few_ref, feb_ref, out_ref):
    # ---------- Wav2Vec2 feature extractor: per-utterance zero-mean / unit-var ----
    # wav is laid out as (40, 16): 10 real samples per row + 6 zero-pad lanes, so
    # full sums divided by the true length (400) are exact.
    xr = wav_ref[0]                                                    # (40, 16) f32
    s1 = jnp.sum(jnp.sum(xr, axis=1, keepdims=True), axis=0, keepdims=True)
    s2 = jnp.sum(jnp.sum(xr * xr, axis=1, keepdims=True), axis=0, keepdims=True)
    mu = s1 / float(WAV_LEN)
    var = s2 / float(WAV_LEN) - mu * mu
    xn = (xr - mu) * lax.rsqrt(var + 1e-7)        # pad lanes hit zero weight rows

    # ---------- conv0 (k10, s5, 1->CDIM, no bias) as even/odd-output matmuls ------
    # even outputs (windows at 10t) use one full row; odd outputs (windows at
    # 10t+5) straddle rows t and t+1 -> two shifted-slice matmuls, no gather.
    he = _dot(xn, c0e_ref[...])                                        # (40, CDIM)
    xn_next = jnp.concatenate(
        [xn[1:ROWS], jnp.zeros((1, ROWL), jnp.float32)], axis=0)       # rows 1..39 + 0
    ho = _dot(xn, c0ol_ref[...]) + _dot(xn_next, c0oh_ref[...])        # (40, CDIM)
    ridx = lax.broadcasted_iota(jnp.int32, (ROWS, CDIM), 0)
    ho = jnp.where(ridx < ROWS - 1, ho, 0.0)      # row 39 is not a real conv0 output

    # ---------- GroupNorm (groups == channels): per-channel over the 79 valid t --
    cnt = float(T1)
    s1c = jnp.sum(he, axis=0, keepdims=True) + jnp.sum(ho, axis=0, keepdims=True)
    s2c = (jnp.sum(he * he, axis=0, keepdims=True)
           + jnp.sum(ho * ho, axis=0, keepdims=True))
    mu_c = s1c / cnt
    var_c = s2c / cnt - mu_c * mu_c
    inv_c = lax.rsqrt(var_c + 1e-5)
    he = _gelu((he - mu_c) * inv_c * gng_ref[...] + gnb_ref[...])
    ho = _gelu((ho - mu_c) * inv_c * gng_ref[...] + gnb_ref[...])

    # ---------- conv1 (k3, s2) + GELU: taps land on even/odd/even+1 rows ----------
    h = _gelu(_dot(he[0:T2], c1w_ref[0]) + _dot(ho[0:T2], c1w_ref[1])
              + _dot(he[1:T2 + 1], c1w_ref[2]))                        # (39, CDIM)

    # ---------- feature projection: LayerNorm(CDIM) + Linear(CDIM -> HID|HP) ------
    mu_f = jnp.mean(h, axis=-1, keepdims=True)
    var_f = jnp.mean((h - mu_f) ** 2, axis=-1, keepdims=True)
    h = (h - mu_f) * lax.rsqrt(var_f + 1e-5) * fplng_ref[...] + fplnb_ref[...]
    h = _dot(h, fpw_ref[...]) + fpb_ref[...]                           # (39, HP)

    # ---------- positional conv embedding ("same" padding) + GELU, residual -------
    # TODO(synk): weight-norm, groups=16 and WavLM gated relative position bias omitted.
    zpad = jnp.zeros((POS_K // 2, HP), jnp.float32)
    hpad = jnp.concatenate([zpad, h, zpad], axis=0)                    # (47, HP)
    pos = _dot(hpad[0:T2], posw_ref[0])
    for j in range(1, POS_K):
        pos = pos + _dot(hpad[j:j + T2], posw_ref[j])
    h = h + _gelu(pos + posb_ref[...])
    h = _ln_padded(h, elng_ref[...], elnb_ref[...], float(HID))        # hidden_states[0]

    # ---------- transformer encoder (post-norm) + softmax-weighted layer sum ------
    lw = lw_ref[...]                                                   # (1, NLAYERS+1)
    hsum = lw[:, 0:1] * h
    lane = lax.broadcasted_iota(jnp.int32, (1, HID), 1)                # head masks

    for l in range(NLAYERS):                                           # static unroll
        # fused QKV: one (HP, 3*HID) MXU pass; 1/sqrt(DHEAD) folded into Q columns.
        qkv = _dot(h, qkvw_ref[l]) + qkvb_ref[l]                       # (39, 192)
        q = qkv[:, 0:HID]
        k = qkv[:, HID:2 * HID]
        v = qkv[:, 2 * HID:3 * HID]

        # Per-head attention WITHOUT lane-extract relayouts: head h is isolated by
        # zeroing q outside its 16 dims (VPU select); the K=64 contraction then
        # gives exactly head h's scores.  ctx columns are masked the same way and
        # summed, so one O-projection matmul merges all heads.
        ctx = jnp.zeros((T2, HID), jnp.float32)
        for hh in range(NHEAD):
            hm = (lane >= hh * DHEAD) & (lane < (hh + 1) * DHEAD)      # (1, HID) bool
            qh = jnp.where(hm, q, 0.0)
            s = lax.dot_general(_bf(qh), _bf(k), (((1,), (1,)), ((), ())),
                                preferred_element_type=jnp.float32)   # (39, 39)
            m = jnp.max(s, axis=-1, keepdims=True)
            e = jnp.exp(s - m)
            p = e * pl.reciprocal(jnp.sum(e, axis=-1, keepdims=True), approx=True)
            c = jnp.dot(_bf(p), _bf(v), preferred_element_type=jnp.float32)  # (39,64)
            ctx = ctx + jnp.where(hm, c, 0.0)
        attn = _dot(ctx, ow_ref[l]) + ob_ref[l]                        # (39, HP)

        # post-norm block
        h = _ln_padded(h + attn, ln1g_ref[l], ln1b_ref[l], float(HID))
        ff = _gelu(_dot(h, ff1w_ref[l]) + ff1b_ref[l])
        ff = _dot(ff, ff2w_ref[l]) + ff2b_ref[l]
        h = _ln_padded(h + ff, ln2g_ref[l], ln2b_ref[l], float(HID))

        hsum = hsum + lw[:, l + 1:l + 2] * h

    # ---------- x-vector head -----------------------------------------------------
    h = _dot(hsum, projw_ref[...]) + projb_ref[...]                    # projector (39,TP)

    def tdnn(x, w_ref, b_ref, ksz, dil, t_out):
        acc = _dot(x[0:t_out], w_ref[0])
        for j in range(1, ksz):
            acc = acc + _dot(x[j * dil:j * dil + t_out], w_ref[j])
        return jnp.maximum(acc + b_ref[...], 0.0)

    h = tdnn(h, t0w_ref, t0b_ref, TDNN_K[0], TDNN_DIL[0], T3)          # (35, TP)
    h = tdnn(h, t1w_ref, t1b_ref, TDNN_K[1], TDNN_DIL[1], T4)          # (31, TP)
    h = tdnn(h, t2w_ref, t2b_ref, TDNN_K[2], TDNN_DIL[2], T4)          # (31, TP)

    # statistics pooling (mean + unbiased std over time); padded lanes stay zero.
    mean = jnp.sum(h, axis=0, keepdims=True) / float(T4)
    var_t = jnp.sum((h - mean) ** 2, axis=0, keepdims=True) / float(T4 - 1)
    feat = jnp.concatenate([mean, jnp.sqrt(var_t)], axis=-1)           # (1, 2*TP)

    # embedding Linear + L2 normalize (rsqrt on the EUP).
    emb = _dot(feat, few_ref[...]) + feb_ref[...]                      # (1, XP)
    inv = lax.rsqrt(jnp.maximum(jnp.sum(emb * emb, axis=-1, keepdims=True), 1e-24))
    out_ref[0] = emb * inv


# ----------------------------- pallas_call plumbing -------------------------------
def _wspec(shape):
    # weight / constant: whole array, same block for every grid step (DMAed once)
    return pl.BlockSpec(tuple(shape), lambda i, _n=len(shape): (0,) * _n)


def _bspec(shape):
    # per-batch-element block along axis 0
    return pl.BlockSpec((1,) + tuple(shape[1:]),
                        lambda i, _n=len(shape) - 1: (i,) + (0,) * _n)


def wavlm_base_forward(wav, p):
    b = wav.shape[0]
    x = wav.reshape(b, -1)                                             # wav.squeeze()
    # lay the waveform out as (40, 10) stride blocks (+6 zero lanes): even/odd
    # conv0 outputs become contiguous-slice matmuls inside the kernel.
    xr = jnp.pad(x.reshape(b, ROWS, 2 * CONV_S0),
                 ((0, 0), (0, 0), (0, ROWL - 2 * CONV_S0)))
    lw = jax.nn.softmax(p["layer_weights"]).reshape(1, NLAYERS + 1)

    args = (xr, lw,
            p["c0_even"], p["c0_odd_lo"], p["c0_odd_hi"], p["gn_g"], p["gn_b"],
            p["conv1_w"], p["fp_ln_g"], p["fp_ln_b"], p["fp_w"], p["fp_b"],
            p["pos_w"], p["pos_b"], p["enc_ln_g"], p["enc_ln_b"],
            p["qkv_w"], p["qkv_b"], p["o_w"], p["o_b"],
            p["ln1_g"], p["ln1_b"], p["ff1_w"], p["ff1_b"],
            p["ff2_w"], p["ff2_b"], p["ln2_g"], p["ln2_b"],
            p["proj_w"], p["proj_b"], p["tdnn0_w"], p["tdnn0_b"],
            p["tdnn1_w"], p["tdnn1_b"], p["tdnn2_w"], p["tdnn2_b"],
            p["fe_w"], p["fe_b"])

    emb = pl.pallas_call(
        _wavlm_kernel,
        out_shape=jax.ShapeDtypeStruct((b, 1, XP), jnp.float32),
        grid=(b,),
        in_specs=[_bspec(xr.shape)] + [_wspec(a.shape) for a in args[1:]],
        out_specs=_bspec((b, 1, XP)),
        compiler_params=pltpu.CompilerParams(dimension_semantics=("parallel",)),
    )(*args)
    return emb[:, 0, :XVEC_DIM]                                        # (B, XVEC_DIM)


# ----------------------------- parameters (synthetic, zero-padded) ----------------
def _pad_zeros(x, shape):
    out = jnp.zeros(shape, x.dtype)
    return out.at[tuple(slice(0, s) for s in x.shape)].set(x)


def init_params(key):
    keys = iter(jax.random.split(key, 64))

    def rnd(shape, scale=0.05):
        return scale * jax.random.normal(next(keys), shape, dtype=jnp.float32)

    p = {}
    # conv0 taps -> even / odd-low / odd-high row blocks (conv_bias=False)
    c0 = rnd((CONV_K0, CDIM))
    c0e = jnp.zeros((ROWL, CDIM), jnp.float32).at[0:CONV_K0].set(c0)
    c0ol = jnp.zeros((ROWL, CDIM), jnp.float32).at[CONV_S0:CONV_K0].set(c0[0:CONV_S0])
    c0oh = jnp.zeros((ROWL, CDIM), jnp.float32).at[0:CONV_S0].set(c0[CONV_S0:CONV_K0])
    p["c0_even"] = c0e.astype(jnp.bfloat16)
    p["c0_odd_lo"] = c0ol.astype(jnp.bfloat16)
    p["c0_odd_hi"] = c0oh.astype(jnp.bfloat16)
    p["gn_g"] = jnp.ones((1, CDIM), jnp.float32)
    p["gn_b"] = jnp.zeros((1, CDIM), jnp.float32)
    p["conv1_w"] = rnd((CONV_K1, CDIM, CDIM)).astype(jnp.bfloat16)
    # feature projection
    p["fp_ln_g"] = jnp.ones((1, CDIM), jnp.float32)
    p["fp_ln_b"] = jnp.zeros((1, CDIM), jnp.float32)
    p["fp_w"] = _pad_zeros(rnd((CDIM, HID)), (CDIM, HP)).astype(jnp.bfloat16)
    p["fp_b"] = jnp.zeros((1, HP), jnp.float32)
    # positional conv embedding + encoder LayerNorm
    p["pos_w"] = _pad_zeros(rnd((POS_K, HID, HID)), (POS_K, HP, HP)).astype(jnp.bfloat16)
    p["pos_b"] = jnp.zeros((1, HP), jnp.float32)
    p["enc_ln_g"] = _pad_zeros(jnp.ones((1, HID), jnp.float32), (1, HP))
    p["enc_ln_b"] = jnp.zeros((1, HP), jnp.float32)
    # transformer: fused QKV kept at TRUE width 192; 1/sqrt(DHEAD) folded into Q cols
    scale = 1.0 / float(DHEAD) ** 0.5
    qkv_w = jnp.zeros((NLAYERS, HP, QKVN), jnp.float32)
    for l in range(NLAYERS):
        qkv_w = qkv_w.at[l, :HID, 0:HID].set(rnd((HID, HID)) * scale)
        qkv_w = qkv_w.at[l, :HID, HID:2 * HID].set(rnd((HID, HID)))
        qkv_w = qkv_w.at[l, :HID, 2 * HID:3 * HID].set(rnd((HID, HID)))
    p["qkv_w"] = qkv_w.astype(jnp.bfloat16)
    p["qkv_b"] = jnp.zeros((NLAYERS, 1, QKVN), jnp.float32)

    def stack(true_shape, pad_shape):
        return jnp.stack([_pad_zeros(rnd(true_shape), pad_shape)
                          for _ in range(NLAYERS)], axis=0).astype(jnp.bfloat16)

    p["o_w"] = stack((HID, HID), (HID, HP))
    p["o_b"] = jnp.zeros((NLAYERS, 1, HP), jnp.float32)
    ln_gain = jnp.stack([_pad_zeros(jnp.ones((1, HID), jnp.float32), (1, HP))] * NLAYERS, 0)
    p["ln1_g"] = ln_gain
    p["ln1_b"] = jnp.zeros((NLAYERS, 1, HP), jnp.float32)
    p["ff1_w"] = stack((HID, FFN), (HP, FFN))
    p["ff1_b"] = jnp.zeros((NLAYERS, 1, FFN), jnp.float32)
    p["ff2_w"] = stack((FFN, HID), (FFN, HP))
    p["ff2_b"] = jnp.zeros((NLAYERS, 1, HP), jnp.float32)
    p["ln2_g"] = ln_gain
    p["ln2_b"] = jnp.zeros((NLAYERS, 1, HP), jnp.float32)
    p["layer_weights"] = jnp.ones((NLAYERS + 1,), jnp.float32)         # weighted layer sum
    # x-vector head
    p["proj_w"] = _pad_zeros(rnd((HID, TDNN_DIM[0])), (HP, TP)).astype(jnp.bfloat16)
    p["proj_b"] = jnp.zeros((1, TP), jnp.float32)
    p["tdnn0_w"] = _pad_zeros(rnd((TDNN_K[0], TDNN_DIM[0], TDNN_DIM[0])),
                              (TDNN_K[0], TP, TP)).astype(jnp.bfloat16)
    p["tdnn0_b"] = jnp.zeros((1, TP), jnp.float32)
    p["tdnn1_w"] = _pad_zeros(rnd((TDNN_K[1], TDNN_DIM[0], TDNN_DIM[1])),
                              (TDNN_K[1], TP, TP)).astype(jnp.bfloat16)
    p["tdnn1_b"] = jnp.zeros((1, TP), jnp.float32)
    p["tdnn2_w"] = _pad_zeros(rnd((TDNN_K[2], TDNN_DIM[1], TDNN_DIM[2])),
                              (TDNN_K[2], TP, TP)).astype(jnp.bfloat16)
    p["tdnn2_b"] = jnp.zeros((1, TP), jnp.float32)
    fe = rnd((2 * TDNN_DIM[2], XVEC_DIM))
    few = jnp.zeros((2 * TP, XP), jnp.float32)
    few = few.at[0:TDNN_DIM[2], 0:XVEC_DIM].set(fe[0:TDNN_DIM[2]])
    few = few.at[TP:TP + TDNN_DIM[2], 0:XVEC_DIM].set(fe[TDNN_DIM[2]:])
    p["fe_w"] = few.astype(jnp.bfloat16)
    p["fe_b"] = jnp.zeros((1, XP), jnp.float32)
    return p


# ----------------------------- main -------------------------------------------------
if __name__ == "__main__":
    key = jax.random.PRNGKey(0)
    pkey, wkey = jax.random.split(key)
    params = init_params(pkey)
    # synthetic waveform: batch=2, 1 channel, 400 samples
    wav = jax.random.normal(wkey, (2, 1, WAV_LEN), dtype=jnp.float32)

    emb = jax.jit(wavlm_base_forward)(wav, params)
    emb = jax.block_until_ready(emb)

    assert emb.shape == (2, XVEC_DIM), emb.shape
    norms = jnp.linalg.norm(emb, axis=-1)
    assert bool(jnp.all(jnp.isfinite(emb)))
    assert bool(jnp.allclose(norms, 1.0, atol=1e-3)), norms
    print("KERNEL_OK")
</pallas_src>

<mosaic_0001>
module attributes {stable_mosaic.version = 11 : i64} {
  func.func @_wavlm_kernel(%arg0: i32, %arg1: memref<1x40x16xf32, #tpu.memory_space<vmem>>, %arg2: memref<1x3xf32, #tpu.memory_space<vmem>>, %arg3: memref<16x32xbf16, #tpu.memory_space<vmem>>, %arg4: memref<16x32xbf16, #tpu.memory_space<vmem>>, %arg5: memref<16x32xbf16, #tpu.memory_space<vmem>>, %arg6: memref<1x32xf32, #tpu.memory_space<vmem>>, %arg7: memref<1x32xf32, #tpu.memory_space<vmem>>, %arg8: memref<3x32x32xbf16, #tpu.memory_space<vmem>>, %arg9: memref<1x32xf32, #tpu.memory_space<vmem>>, %arg10: memref<1x32xf32, #tpu.memory_space<vmem>>, %arg11: memref<32x128xbf16, #tpu.memory_space<vmem>>, %arg12: memref<1x128xf32, #tpu.memory_space<vmem>>, %arg13: memref<9x128x128xbf16, #tpu.memory_space<vmem>>, %arg14: memref<1x128xf32, #tpu.memory_space<vmem>>, %arg15: memref<1x128xf32, #tpu.memory_space<vmem>>, %arg16: memref<1x128xf32, #tpu.memory_space<vmem>>, %arg17: memref<2x128x192xbf16, #tpu.memory_space<vmem>>, %arg18: memref<2x1x192xf32, #tpu.memory_space<vmem>>, %arg19: memref<2x64x128xbf16, #tpu.memory_space<vmem>>, %arg20: memref<2x1x128xf32, #tpu.memory_space<vmem>>, %arg21: memref<2x1x128xf32, #tpu.memory_space<vmem>>, %arg22: memref<2x1x128xf32, #tpu.memory_space<vmem>>, %arg23: memref<2x128x128xbf16, #tpu.memory_space<vmem>>, %arg24: memref<2x1x128xf32, #tpu.memory_space<vmem>>, %arg25: memref<2x128x128xbf16, #tpu.memory_space<vmem>>, %arg26: memref<2x1x128xf32, #tpu.memory_space<vmem>>, %arg27: memref<2x1x128xf32, #tpu.memory_space<vmem>>, %arg28: memref<2x1x128xf32, #tpu.memory_space<vmem>>, %arg29: memref<128x128xbf16, #tpu.memory_space<vmem>>, %arg30: memref<1x128xf32, #tpu.memory_space<vmem>>, %arg31: memref<5x128x128xbf16, #tpu.memory_space<vmem>>, %arg32: memref<1x128xf32, #tpu.memory_space<vmem>>, %arg33: memref<3x128x128xbf16, #tpu.memory_space<vmem>>, %arg34: memref<1x128xf32, #tpu.memory_space<vmem>>, %arg35: memref<1x128x128xbf16, #tpu.memory_space<vmem>>, %arg36: memref<1x128xf32, #tpu.memory_space<vmem>>, %arg37: memref<256x128xbf16, #tpu.memory_space<vmem>>, %arg38: memref<1x128xf32, #tpu.memory_space<vmem>>, %arg39: memref<1x1x128xf32, #tpu.memory_space<vmem>>) attributes {dimension_semantics = [#tpu.dimension_semantics<parallel>], iteration_bounds = array<i64: 2>, scalar_prefetch = 0 : i64, scratch_operands = 0 : i64, tpu.core_type = #tpu.core_type<tc>, window_params = [{transform_indices = @transform_0, window_bounds = array<i64: 1, 40, 16>}, {pipeline_mode = #tpu.pipeline_mode<synchronous>, transform_indices = @transform_1, window_bounds = array<i64: 1, 3>}, {pipeline_mode = #tpu.pipeline_mode<synchronous>, transform_indices = @transform_2, window_bounds = array<i64: 16, 32>}, {pipeline_mode = #tpu.pipeline_mode<synchronous>, transform_indices = @transform_3, window_bounds = array<i64: 16, 32>}, {pipeline_mode = #tpu.pipeline_mode<synchronous>, transform_indices = @transform_4, window_bounds = array<i64: 16, 32>}, {pipeline_mode = #tpu.pipeline_mode<synchronous>, transform_indices = @transform_5, window_bounds = array<i64: 1, 32>}, {pipeline_mode = #tpu.pipeline_mode<synchronous>, transform_indices = @transform_6, window_bounds = array<i64: 1, 32>}, {pipeline_mode = #tpu.pipeline_mode<synchronous>, transform_indices = @transform_7, window_bounds = array<i64: 3, 32, 32>}, {pipeline_mode = #tpu.pipeline_mode<synchronous>, transform_indices = @transform_8, window_bounds = array<i64: 1, 32>}, {pipeline_mode = #tpu.pipeline_mode<synchronous>, transform_indices = @transform_9, window_bounds = array<i64: 1, 32>}, {pipeline_mode = #tpu.pipeline_mode<synchronous>, transform_indices = @transform_10, window_bounds = array<i64: 32, 128>}, {pipeline_mode = #tpu.pipeline_mode<synchronous>, transform_indices = @transform_11, window_bounds = array<i64: 1, 128>}, {pipeline_mode = #tpu.pipeline_mode<synchronous>, transform_indices = @transform_12, window_bounds = array<i64: 9, 128, 128>}, {pipeline_mode = #tpu.pipeline_mode<synchronous>, transform_indices = @transform_13, window_bounds = array<i64: 1, 128>}, {pipeline_mode = #tpu.pipeline_mode<synchronous>, transform_indices = @transform_14, window_bounds = array<i64: 1, 128>}, {pipeline_mode = #tpu.pipeline_mode<synchronous>, transform_indices = @transform_15, window_bounds = array<i64: 1, 128>}, {pipeline_mode = #tpu.pipeline_mode<synchronous>, transform_indices = @transform_16, window_bounds = array<i64: 2, 128, 192>}, {pipeline_mode = #tpu.pipeline_mode<synchronous>, transform_indices = @transform_17, window_bounds = array<i64: 2, 1, 192>}, {pipeline_mode = #tpu.pipeline_mode<synchronous>, transform_indices = @transform_18, window_bounds = array<i64: 2, 64, 128>}, {pipeline_mode = #tpu.pipeline_mode<synchronous>, transform_indices = @transform_19, window_bounds = array<i64: 2, 1, 128>}, {pipeline_mode = #tpu.pipeline_mode<synchronous>, transform_indices = @transform_20, window_bounds = array<i64: 2, 1, 128>}, {pipeline_mode = #tpu.pipeline_mode<synchronous>, transform_indices = @transform_21, window_bounds = array<i64: 2, 1, 128>}, {pipeline_mode = #tpu.pipeline_mode<synchronous>, transform_indices = @transform_22, window_bounds = array<i64: 2, 128, 128>}, {pipeline_mode = #tpu.pipeline_mode<synchronous>, transform_indices = @transform_23, window_bounds = array<i64: 2, 1, 128>}, {pipeline_mode = #tpu.pipeline_mode<synchronous>, transform_indices = @transform_24, window_bounds = array<i64: 2, 128, 128>}, {pipeline_mode = #tpu.pipeline_mode<synchronous>, transform_indices = @transform_25, window_bounds = array<i64: 2, 1, 128>}, {pipeline_mode = #tpu.pipeline_mode<synchronous>, transform_indices = @transform_26, window_bounds = array<i64: 2, 1, 128>}, {pipeline_mode = #tpu.pipeline_mode<synchronous>, transform_indices = @transform_27, window_bounds = array<i64: 2, 1, 128>}, {pipeline_mode = #tpu.pipeline_mode<synchronous>, transform_indices = @transform_28, window_bounds = array<i64: 128, 128>}, {pipeline_mode = #tpu.pipeline_mode<synchronous>, transform_indices = @transform_29, window_bounds = array<i64: 1, 128>}, {pipeline_mode = #tpu.pipeline_mode<synchronous>, transform_indices = @transform_30, window_bounds = array<i64: 5, 128, 128>}, {pipeline_mode = #tpu.pipeline_mode<synchronous>, transform_indices = @transform_31, window_bounds = array<i64: 1, 128>}, {pipeline_mode = #tpu.pipeline_mode<synchronous>, transform_indices = @transform_32, window_bounds = array<i64: 3, 128, 128>}, {pipeline_mode = #tpu.pipeline_mode<synchronous>, transform_indices = @transform_33, window_bounds = array<i64: 1, 128>}, {pipeline_mode = #tpu.pipeline_mode<synchronous>, transform_indices = @transform_34, window_bounds = array<i64: 1, 128, 128>}, {pipeline_mode = #tpu.pipeline_mode<synchronous>, transform_indices = @transform_35, window_bounds = array<i64: 1, 128>}, {pipeline_mode = #tpu.pipeline_mode<synchronous>, transform_indices = @transform_36, window_bounds = array<i64: 256, 128>}, {pipeline_mode = #tpu.pipeline_mode<synchronous>, transform_indices = @transform_37, window_bounds = array<i64: 1, 128>}, {transform_indices = @transform_38, window_bounds = array<i64: 1, 1, 128>}]} {
    %c0 = arith.constant 0 : index
    %c0_0 = arith.constant 0 : index
    %c0_1 = arith.constant 0 : index
    %0 = vector.load %arg1[%c0, %c0_0, %c0_1] : memref<1x40x16xf32, #tpu.memory_space<vmem>>, vector<1x40x16xf32>
    %1 = vector.shape_cast %0 : vector<1x40x16xf32> to vector<40x16xf32>
    %cst = arith.constant dense<0.000000e+00> : vector<40xf32>
    %2 = vector.multi_reduction <add>, %1, %cst [1] : vector<40x16xf32> to vector<40xf32>
    %3 = vector.shape_cast %2 : vector<40xf32> to vector<40x1xf32>
    %cst_2 = arith.constant dense<0.000000e+00> : vector<1xf32>
    %4 = vector.multi_reduction <add>, %3, %cst_2 [0] : vector<40x1xf32> to vector<1xf32>
    %5 = vector.shape_cast %4 : vector<1xf32> to vector<1x1xf32>
    %6 = arith.mulf %1, %1 : vector<40x16xf32>
    %cst_3 = arith.constant dense<0.000000e+00> : vector<40xf32>
    %7 = vector.multi_reduction <add>, %6, %cst_3 [1] : vector<40x16xf32> to vector<40xf32>
    %8 = vector.shape_cast %7 : vector<40xf32> to vector<40x1xf32>
    %cst_4 = arith.constant dense<0.000000e+00> : vector<1xf32>
    %9 = vector.multi_reduction <add>, %8, %cst_4 [0] : vector<40x1xf32> to vector<1xf32>
    %10 = vector.shape_cast %9 : vector<1xf32> to vector<1x1xf32>
    %cst_5 = arith.constant 4.000000e+02 : f32
    %11 = vector.broadcast %cst_5 : f32 to vector<1x1xf32>
    %12 = arith.divf %5, %11 : vector<1x1xf32>
    %cst_6 = arith.constant 4.000000e+02 : f32
    %13 = vector.broadcast %cst_6 : f32 to vector<1x1xf32>
    %14 = arith.divf %10, %13 : vector<1x1xf32>
    %15 = arith.mulf %12, %12 : vector<1x1xf32>
    %16 = arith.subf %14, %15 : vector<1x1xf32>
    %17 = vector.broadcast %12 : vector<1x1xf32> to vector<40x16xf32>
    %18 = arith.subf %1, %17 : vector<40x16xf32>
    %cst_7 = arith.constant 1.000000e-07 : f32
    %19 = vector.broadcast %cst_7 : f32 to vector<1x1xf32>
    %20 = arith.addf %16, %19 : vector<1x1xf32>
    %21 = math.rsqrt %20 : vector<1x1xf32>
    %22 = vector.broadcast %21 : vector<1x1xf32> to vector<40x16xf32>
    %23 = arith.mulf %18, %22 : vector<40x16xf32>
    %c0_8 = arith.constant 0 : index
    %c0_9 = arith.constant 0 : index
    %24 = vector.load %arg3[%c0_8, %c0_9] : memref<16x32xbf16, #tpu.memory_space<vmem>>, vector<16x32xbf16>
    %25 = arith.truncf %23 : vector<40x16xf32> to vector<40x16xbf16>
    %cst_10 = arith.constant dense<0.000000e+00> : vector<40x32xf32>
    %26 = tpu.matmul %25, %24, %cst_10 {dimension_numbers = #tpu.dot_dimension_numbers<[1], [0], [0], [1], [0, 0, 1, 1], [], []>} : vector<40x16xbf16>, vector<16x32xbf16>, vector<40x32xf32> -> vector<40x32xf32>
    %27 = vector.extract_strided_slice %23 {offsets = [1, 0], sizes = [39, 16], strides = [1, 1]} : vector<40x16xf32> to vector<39x16xf32>
    %cst_11 = arith.constant 0.000000e+00 : f32
    %28 = vector.broadcast %cst_11 : f32 to vector<1x16xf32>
    %29 = tpu.concatenate %27, %28 in 0 : vector<39x16xf32>, vector<1x16xf32> -> vector<40x16xf32>
    %c0_12 = arith.constant 0 : index
    %c0_13 = arith.constant 0 : index
    %30 = vector.load %arg4[%c0_12, %c0_13] : memref<16x32xbf16, #tpu.memory_space<vmem>>, vector<16x32xbf16>
    %31 = arith.truncf %23 : vector<40x16xf32> to vector<40x16xbf16>
    %cst_14 = arith.constant dense<0.000000e+00> : vector<40x32xf32>
    %32 = tpu.matmul %31, %30, %cst_14 {dimension_numbers = #tpu.dot_dimension_numbers<[1], [0], [0], [1], [0, 0, 1, 1], [], []>} : vector<40x16xbf16>, vector<16x32xbf16>, vector<40x32xf32> -> vector<40x32xf32>
    %c0_15 = arith.constant 0 : index
    %c0_16 = arith.constant 0 : index
    %33 = vector.load %arg5[%c0_15, %c0_16] : memref<16x32xbf16, #tpu.memory_space<vmem>>, vector<16x32xbf16>
    %34 = arith.truncf %29 : vector<40x16xf32> to vector<40x16xbf16>
    %cst_17 = arith.constant dense<0.000000e+00> : vector<40x32xf32>
    %35 = tpu.matmul %34, %33, %cst_17 {dimension_numbers = #tpu.dot_dimension_numbers<[1], [0], [0], [1], [0, 0, 1, 1], [], []>} : vector<40x16xbf16>, vector<16x32xbf16>, vector<40x32xf32> -> vector<40x32xf32>
    %36 = arith.addf %32, %35 : vector<40x32xf32>
    %37 = tpu.iota {dimensions = array<i32: 0>} : vector<40x32xi32>
    %c39_i32 = arith.constant 39 : i32
    %38 = vector.broadcast %c39_i32 : i32 to vector<40x32xi32>
    %39 = arith.cmpi slt, %37, %38 : vector<40x32xi32>
    %cst_18 = arith.constant 0.000000e+00 : f32
    %40 = vector.broadcast %cst_18 : f32 to vector<40x32xf32>
    %41 = arith.select %39, %36, %40 : vector<40x32xi1>, vector<40x32xf32>
    %cst_19 = arith.constant dense<0.000000e+00> : vector<32xf32>
    %42 = vector.multi_reduction <add>, %26, %cst_19 [0] : vector<40x32xf32> to vector<32xf32>
    %43 = vector.shape_cast %42 : vector<32xf32> to vector<1x32xf32>
    %cst_20 = arith.constant dense<0.000000e+00> : vector<32xf32>
    %44 = vector.multi_reduction <add>, %41, %cst_20 [0] : vector<40x32xf32> to vector<32xf32>
    %45 = vector.shape_cast %44 : vector<32xf32> to vector<1x32xf32>
    %46 = arith.addf %43, %45 : vector<1x32xf32>
    %47 = arith.mulf %26, %26 : vector<40x32xf32>
    %cst_21 = arith.constant dense<0.000000e+00> : vector<32xf32>
    %48 = vector.multi_reduction <add>, %47, %cst_21 [0] : vector<40x32xf32> to vector<32xf32>
    %49 = vector.shape_cast %48 : vector<32xf32> to vector<1x32xf32>
    %50 = arith.mulf %41, %41 : vector<40x32xf32>
    %cst_22 = arith.constant dense<0.000000e+00> : vector<32xf32>
    %51 = vector.multi_reduction <add>, %50, %cst_22 [0] : vector<40x32xf32> to vector<32xf32>
    %52 = vector.shape_cast %51 : vector<32xf32> to vector<1x32xf32>
    %53 = arith.addf %49, %52 : vector<1x32xf32>
    %cst_23 = arith.constant 7.900000e+01 : f32
    %54 = vector.broadcast %cst_23 : f32 to vector<1x32xf32>
    %55 = arith.divf %46, %54 : vector<1x32xf32>
    %cst_24 = arith.constant 7.900000e+01 : f32
    %56 = vector.broadcast %cst_24 : f32 to vector<1x32xf32>
    %57 = arith.divf %53, %56 : vector<1x32xf32>
    %58 = arith.mulf %55, %55 : vector<1x32xf32>
    %59 = arith.subf %57, %58 : vector<1x32xf32>
    %cst_25 = arith.constant 9.99999974E-6 : f32
    %60 = vector.broadcast %cst_25 : f32 to vector<1x32xf32>
    %61 = arith.addf %59, %60 : vector<1x32xf32>
    %62 = math.rsqrt %61 : vector<1x32xf32>
    %63 = vector.broadcast %55 : vector<1x32xf32> to vector<40x32xf32>
    %64 = arith.subf %26, %63 : vector<40x32xf32>
    %65 = vector.broadcast %62 : vector<1x32xf32> to vector<40x32xf32>
    %66 = arith.mulf %64, %65 : vector<40x32xf32>
    %c0_26 = arith.constant 0 : index
    %c0_27 = arith.constant 0 : index
    %67 = vector.load %arg6[%c0_26, %c0_27] : memref<1x32xf32, #tpu.memory_space<vmem>>, vector<1x32xf32>
    %68 = vector.broadcast %67 : vector<1x32xf32> to vector<40x32xf32>
    %69 = arith.mulf %66, %68 : vector<40x32xf32>
    %c0_28 = arith.constant 0 : index
    %c0_29 = arith.constant 0 : index
    %70 = vector.load %arg7[%c0_28, %c0_29] : memref<1x32xf32, #tpu.memory_space<vmem>>, vector<1x32xf32>
    %71 = vector.broadcast %70 : vector<1x32xf32> to vector<40x32xf32>
    %72 = arith.addf %69, %71 : vector<40x32xf32>
    %cst_30 = arith.constant 5.000000e-01 : f32
    %73 = vector.broadcast %cst_30 : f32 to vector<40x32xf32>
    %74 = arith.mulf %73, %72 : vector<40x32xf32>
    %cst_31 = arith.constant 4.471500e-02 : f32
    %75 = vector.broadcast %cst_31 : f32 to vector<40x32xf32>
    %76 = arith.mulf %75, %72 : vector<40x32xf32>
    %77 = arith.mulf %76, %72 : vector<40x32xf32>
    %78 = arith.mulf %77, %72 : vector<40x32xf32>
    %79 = arith.addf %72, %78 : vector<40x32xf32>
    %cst_32 = arith.constant 0.797884583 : f32
    %80 = vector.broadcast %cst_32 : f32 to vector<40x32xf32>
    %81 = arith.mulf %80, %79 : vector<40x32xf32>
    %82 = math.tanh %81 : vector<40x32xf32>
    %cst_33 = arith.constant 1.000000e+00 : f32
    %83 = vector.broadcast %cst_33 : f32 to vector<40x32xf32>
    %84 = arith.addf %83, %82 : vector<40x32xf32>
    %85 = arith.mulf %74, %84 : vector<40x32xf32>
    %86 = vector.broadcast %55 : vector<1x32xf32> to vector<40x32xf32>
    %87 = arith.subf %41, %86 : vector<40x32xf32>
    %88 = vector.broadcast %62 : vector<1x32xf32> to vector<40x32xf32>
    %89 = arith.mulf %87, %88 : vector<40x32xf32>
    %c0_34 = arith.constant 0 : index
    %c0_35 = arith.constant 0 : index
    %90 = vector.load %arg6[%c0_34, %c0_35] : memref<1x32xf32, #tpu.memory_space<vmem>>, vector<1x32xf32>
    %91 = vector.broadcast %90 : vector<1x32xf32> to vector<40x32xf32>
    %92 = arith.mulf %89, %91 : vector<40x32xf32>
    %c0_36 = arith.constant 0 : index
    %c0_37 = arith.constant 0 : index
    %93 = vector.load %arg7[%c0_36, %c0_37] : memref<1x32xf32, #tpu.memory_space<vmem>>, vector<1x32xf32>
    %94 = vector.broadcast %93 : vector<1x32xf32> to vector<40x32xf32>
    %95 = arith.addf %92, %94 : vector<40x32xf32>
    %cst_38 = arith.constant 5.000000e-01 : f32
    %96 = vector.broadcast %cst_38 : f32 to vector<40x32xf32>
    %97 = arith.mulf %96, %95 : vector<40x32xf32>
    %cst_39 = arith.constant 4.471500e-02 : f32
    %98 = vector.broadcast %cst_39 : f32 to vector<40x32xf32>
    %99 = arith.mulf %98, %95 : vector<40x32xf32>
    %100 = arith.mulf %99, %95 : vector<40x32xf32>
    %101 = arith.mulf %100, %95 : vector<40x32xf32>
    %102 = arith.addf %95, %101 : vector<40x32xf32>
    %cst_40 = arith.constant 0.797884583 : f32
    %103 = vector.broadcast %cst_40 : f32 to vector<40x32xf32>
    %104 = arith.mulf %103, %102 : vector<40x32xf32>
    %105 = math.tanh %104 : vector<40x32xf32>
    %cst_41 = arith.constant 1.000000e+00 : f32
    %106 = vector.broadcast %cst_41 : f32 to vector<40x32xf32>
    %107 = arith.addf %106, %105 : vector<40x32xf32>
    %108 = arith.mulf %97, %107 : vector<40x32xf32>
    %109 = vector.extract_strided_slice %85 {offsets = [0, 0], sizes = [39, 32], strides = [1, 1]} : vector<40x32xf32> to vector<39x32xf32>
    %c0_42 = arith.constant 0 : index
    %c0_43 = arith.constant 0 : index
    %c0_44 = arith.constant 0 : index
    %110 = vector.load %arg8[%c0_42, %c0_43, %c0_44] : memref<3x32x32xbf16, #tpu.memory_space<vmem>>, vector<1x32x32xbf16>
    %111 = vector.shape_cast %110 : vector<1x32x32xbf16> to vector<32x32xbf16>
    %112 = arith.truncf %109 : vector<39x32xf32> to vector<39x32xbf16>
    %cst_45 = arith.constant dense<0.000000e+00> : vector<39x32xf32>
    %113 = tpu.matmul %112, %111, %cst_45 {dimension_numbers = #tpu.dot_dimension_numbers<[1], [0], [0], [1], [0, 0, 1, 1], [], []>} : vector<39x32xbf16>, vector<32x32xbf16>, vector<39x32xf32> -> vector<39x32xf32>
    %114 = vector.extract_strided_slice %108 {offsets = [0, 0], sizes = [39, 32], strides = [1, 1]} : vector<40x32xf32> to vector<39x32xf32>
    %c1 = arith.constant 1 : index
    %c0_46 = arith.constant 0 : index
    %c0_47 = arith.constant 0 : index
    %115 = vector.load %arg8[%c1, %c0_46, %c0_47] : memref<3x32x32xbf16, #tpu.memory_space<vmem>>, vector<1x32x32xbf16>
    %116 = vector.shape_cast %115 : vector<1x32x32xbf16> to vector<32x32xbf16>
    %117 = arith.truncf %114 : vector<39x32xf32> to vector<39x32xbf16>
    %cst_48 = arith.constant dense<0.000000e+00> : vector<39x32xf32>
    %118 = tpu.matmul %117, %116, %cst_48 {dimension_numbers = #tpu.dot_dimension_numbers<[1], [0], [0], [1], [0, 0, 1, 1], [], []>} : vector<39x32xbf16>, vector<32x32xbf16>, vector<39x32xf32> -> vector<39x32xf32>
    %119 = arith.addf %113, %118 : vector<39x32xf32>
    %120 = vector.extract_strided_slice %85 {offsets = [1, 0], sizes = [39, 32], strides = [1, 1]} : vector<40x32xf32> to vector<39x32xf32>
    %c2 = arith.constant 2 : index
    %c0_49 = arith.constant 0 : index
    %c0_50 = arith.constant 0 : index
    %121 = vector.load %arg8[%c2, %c0_49, %c0_50] : memref<3x32x32xbf16, #tpu.memory_space<vmem>>, vector<1x32x32xbf16>
    %122 = vector.shape_cast %121 : vector<1x32x32xbf16> to vector<32x32xbf16>
    %123 = arith.truncf %120 : vector<39x32xf32> to vector<39x32xbf16>
    %cst_51 = arith.constant dense<0.000000e+00> : vector<39x32xf32>
    %124 = tpu.matmul %123, %122, %cst_51 {dimension_numbers = #tpu.dot_dimension_numbers<[1], [0], [0], [1], [0, 0, 1, 1], [], []>} : vector<39x32xbf16>, vector<32x32xbf16>, vector<39x32xf32> -> vector<39x32xf32>
    %125 = arith.addf %119, %124 : vector<39x32xf32>
    %cst_52 = arith.constant 5.000000e-01 : f32
    %126 = vector.broadcast %cst_52 : f32 to vector<39x32xf32>
    %127 = arith.mulf %126, %125 : vector<39x32xf32>
    %cst_53 = arith.constant 4.471500e-02 : f32
    %128 = vector.broadcast %cst_53 : f32 to vector<39x32xf32>
    %129 = arith.mulf %128, %125 : vector<39x32xf32>
    %130 = arith.mulf %129, %125 : vector<39x32xf32>
    %131 = arith.mulf %130, %125 : vector<39x32xf32>
    %132 = arith.addf %125, %131 : vector<39x32xf32>
    %cst_54 = arith.constant 0.797884583 : f32
    %133 = vector.broadcast %cst_54 : f32 to vector<39x32xf32>
    %134 = arith.mulf %133, %132 : vector<39x32xf32>
    %135 = math.tanh %134 : vector<39x32xf32>
    %cst_55 = arith.constant 1.000000e+00 : f32
    %136 = vector.broadcast %cst_55 : f32 to vector<39x32xf32>
    %137 = arith.addf %136, %135 : vector<39x32xf32>
    %138 = arith.mulf %127, %137 : vector<39x32xf32>
    %cst_56 = arith.constant dense<0.000000e+00> : vector<39xf32>
    %139 = vector.multi_reduction <add>, %138, %cst_56 [1] : vector<39x32xf32> to vector<39xf32>
    %140 = vector.shape_cast %139 : vector<39xf32> to vector<39x1xf32>
    %cst_57 = arith.constant 3.200000e+01 : f32
    %141 = vector.broadcast %cst_57 : f32 to vector<39x1xf32>
    %142 = arith.divf %140, %141 : vector<39x1xf32>
    %143 = vector.broadcast %142 : vector<39x1xf32> to vector<39x32xf32>
    %144 = arith.subf %138, %143 : vector<39x32xf32>
    %145 = arith.mulf %144, %144 : vector<39x32xf32>
    %cst_58 = arith.constant dense<0.000000e+00> : vector<39xf32>
    %146 = vector.multi_reduction <add>, %145, %cst_58 [1] : vector<39x32xf32> to vector<39xf32>
    %147 = vector.shape_cast %146 : vector<39xf32> to vector<39x1xf32>
    %cst_59 = arith.constant 3.200000e+01 : f32
    %148 = vector.broadcast %cst_59 : f32 to vector<39x1xf32>
    %149 = arith.divf %147, %148 : vector<39x1xf32>
    %150 = vector.broadcast %142 : vector<39x1xf32> to vector<39x32xf32>
    %151 = arith.subf %138, %150 : vector<39x32xf32>
    %cst_60 = arith.constant 9.99999974E-6 : f32
    %152 = vector.broadcast %cst_60 : f32 to vector<39x1xf32>
    %153 = arith.addf %149, %152 : vector<39x1xf32>
    %154 = math.rsqrt %153 : vector<39x1xf32>
    %155 = vector.broadcast %154 : vector<39x1xf32> to vector<39x32xf32>
    %156 = arith.mulf %151, %155 : vector<39x32xf32>
    %c0_61 = arith.constant 0 : index
    %c0_62 = arith.constant 0 : index
    %157 = vector.load %arg9[%c0_61, %c0_62] : memref<1x32xf32, #tpu.memory_space<vmem>>, vector<1x32xf32>
    %158 = vector.broadcast %157 : vector<1x32xf32> to vector<39x32xf32>
    %159 = arith.mulf %156, %158 : vector<39x32xf32>
    %c0_63 = arith.constant 0 : index
    %c0_64 = arith.constant 0 : index
    %160 = vector.load %arg10[%c0_63, %c0_64] : memref<1x32xf32, #tpu.memory_space<vmem>>, vector<1x32xf32>
    %161 = vector.broadcast %160 : vector<1x32xf32> to vector<39x32xf32>
    %162 = arith.addf %159, %161 : vector<39x32xf32>
    %c0_65 = arith.constant 0 : index
    %c0_66 = arith.constant 0 : index
    %163 = vector.load %arg11[%c0_65, %c0_66] : memref<32x128xbf16, #tpu.memory_space<vmem>>, vector<32x128xbf16>
    %164 = arith.truncf %162 : vector<39x32xf32> to vector<39x32xbf16>
    %cst_67 = arith.constant dense<0.000000e+00> : vector<39x128xf32>
    %165 = tpu.matmul %164, %163, %cst_67 {dimension_numbers = #tpu.dot_dimension_numbers<[1], [0], [0], [1], [0, 0, 1, 1], [], []>} : vector<39x32xbf16>, vector<32x128xbf16>, vector<39x128xf32> -> vector<39x128xf32>
    %c0_68 = arith.constant 0 : index
    %c0_69 = arith.constant 0 : index
    %166 = vector.load %arg12[%c0_68, %c0_69] : memref<1x128xf32, #tpu.memory_space<vmem>>, vector<1x128xf32>
    %167 = vector.broadcast %166 : vector<1x128xf32> to vector<39x128xf32>
    %168 = arith.addf %165, %167 : vector<39x128xf32>
    %cst_70 = arith.constant 0.000000e+00 : f32
    %169 = vector.broadcast %cst_70 : f32 to vector<4x128xf32>
    %170 = tpu.concatenate %169, %168, %169 in 0 : vector<4x128xf32>, vector<39x128xf32>, vector<4x128xf32> -> vector<47x128xf32>
    %171 = vector.extract_strided_slice %170 {offsets = [0, 0], sizes = [39, 128], strides = [1, 1]} : vector<47x128xf32> to vector<39x128xf32>
    %c0_71 = arith.constant 0 : index
    %c0_72 = arith.constant 0 : index
    %c0_73 = arith.constant 0 : index
    %172 = vector.load %arg13[%c0_71, %c0_72, %c0_73] : memref<9x128x128xbf16, #tpu.memory_space<vmem>>, vector<1x128x128xbf16>
    %173 = vector.shape_cast %172 : vector<1x128x128xbf16> to vector<128x128xbf16>
    %174 = arith.truncf %171 : vector<39x128xf32> to vector<39x128xbf16>
    %cst_74 = arith.constant dense<0.000000e+00> : vector<39x128xf32>
    %175 = tpu.matmul %174, %173, %cst_74 {dimension_numbers = #tpu.dot_dimension_numbers<[1], [0], [0], [1], [0, 0, 1, 1], [], []>} : vector<39x128xbf16>, vector<128x128xbf16>, vector<39x128xf32> -> vector<39x128xf32>
    %176 = vector.extract_strided_slice %170 {offsets = [1, 0], sizes = [39, 128], strides = [1, 1]} : vector<47x128xf32> to vector<39x128xf32>
    %c1_75 = arith.constant 1 : index
    %c0_76 = arith.constant 0 : index
    %c0_77 = arith.constant 0 : index
    %177 = vector.load %arg13[%c1_75, %c0_76, %c0_77] : memref<9x128x128xbf16, #tpu.memory_space<vmem>>, vector<1x128x128xbf16>
    %178 = vector.shape_cast %177 : vector<1x128x128xbf16> to vector<128x128xbf16>
    %179 = arith.truncf %176 : vector<39x128xf32> to vector<39x128xbf16>
    %cst_78 = arith.constant dense<0.000000e+00> : vector<39x128xf32>
    %180 = tpu.matmul %179, %178, %cst_78 {dimension_numbers = #tpu.dot_dimension_numbers<[1], [0], [0], [1], [0, 0, 1, 1], [], []>} : vector<39x128xbf16>, vector<128x128xbf16>, vector<39x128xf32> -> vector<39x128xf32>
    %181 = arith.addf %175, %180 : vector<39x128xf32>
    %182 = vector.extract_strided_slice %170 {offsets = [2, 0], sizes = [39, 128], strides = [1, 1]} : vector<47x128xf32> to vector<39x128xf32>
    %c2_79 = arith.constant 2 : index
    %c0_80 = arith.constant 0 : index
    %c0_81 = arith.constant 0 : index
    %183 = vector.load %arg13[%c2_79, %c0_80, %c0_81] : memref<9x128x128xbf16, #tpu.memory_space<vmem>>, vector<1x128x128xbf16>
    %184 = vector.shape_cast %183 : vector<1x128x128xbf16> to vector<128x128xbf16>
    %185 = arith.truncf %182 : vector<39x128xf32> to vector<39x128xbf16>
    %cst_82 = arith.constant dense<0.000000e+00> : vector<39x128xf32>
    %186 = tpu.matmul %185, %184, %cst_82 {dimension_numbers = #tpu.dot_dimension_numbers<[1], [0], [0], [1], [0, 0, 1, 1], [], []>} : vector<39x128xbf16>, vector<128x128xbf16>, vector<39x128xf32> -> vector<39x128xf32>
    %187 = arith.addf %181, %186 : vector<39x128xf32>
    %188 = vector.extract_strided_slice %170 {offsets = [3, 0], sizes = [39, 128], strides = [1, 1]} : vector<47x128xf32> to vector<39x128xf32>
    %c3 = arith.constant 3 : index
    %c0_83 = arith.constant 0 : index
    %c0_84 = arith.constant 0 : index
    %189 = vector.load %arg13[%c3, %c0_83, %c0_84] : memref<9x128x128xbf16, #tpu.memory_space<vmem>>, vector<1x128x128xbf16>
    %190 = vector.shape_cast %189 : vector<1x128x128xbf16> to vector<128x128xbf16>
    %191 = arith.truncf %188 : vector<39x128xf32> to vector<39x128xbf16>
    %cst_85 = arith.constant dense<0.000000e+00> : vector<39x128xf32>
    %192 = tpu.matmul %191, %190, %cst_85 {dimension_numbers = #tpu.dot_dimension_numbers<[1], [0], [0], [1], [0, 0, 1, 1], [], []>} : vector<39x128xbf16>, vector<128x128xbf16>, vector<39x128xf32> -> vector<39x128xf32>
    %193 = arith.addf %187, %192 : vector<39x128xf32>
    %194 = vector.extract_strided_slice %170 {offsets = [4, 0], sizes = [39, 128], strides = [1, 1]} : vector<47x128xf32> to vector<39x128xf32>
    %c4 = arith.constant 4 : index
    %c0_86 = arith.constant 0 : index
    %c0_87 = arith.constant 0 : index
    %195 = vector.load %arg13[%c4, %c0_86, %c0_87] : memref<9x128x128xbf16, #tpu.memory_space<vmem>>, vector<1x128x128xbf16>
    %196 = vector.shape_cast %195 : vector<1x128x128xbf16> to vector<128x128xbf16>
    %197 = arith.truncf %194 : vector<39x128xf32> to vector<39x128xbf16>
    %cst_88 = arith.constant dense<0.000000e+00> : vector<39x128xf32>
    %198 = tpu.matmul %197, %196, %cst_88 {dimension_numbers = #tpu.dot_dimension_numbers<[1], [0], [0], [1], [0, 0, 1, 1], [], []>} : vector<39x128xbf16>, vector<128x128xbf16>, vector<39x128xf32> -> vector<39x128xf32>
    %199 = arith.addf %193, %198 : vector<39x128xf32>
    %200 = vector.extract_strided_slice %170 {offsets = [5, 0], sizes = [39, 128], strides = [1, 1]} : vector<47x128xf32> to vector<39x128xf32>
    %c5 = arith.constant 5 : index
    %c0_89 = arith.constant 0 : index
    %c0_90 = arith.constant 0 : index
    %201 = vector.load %arg13[%c5, %c0_89, %c0_90] : memref<9x128x128xbf16, #tpu.memory_space<vmem>>, vector<1x128x128xbf16>
    %202 = vector.shape_cast %201 : vector<1x128x128xbf16> to vector<128x128xbf16>
    %203 = arith.truncf %200 : vector<39x128xf32> to vector<39x128xbf16>
    %cst_91 = arith.constant dense<0.000000e+00> : vector<39x128xf32>
    %204 = tpu.matmul %203, %202, %cst_91 {dimension_numbers = #tpu.dot_dimension_numbers<[1], [0], [0], [1], [0, 0, 1, 1], [], []>} : vector<39x128xbf16>, vector<128x128xbf16>, vector<39x128xf32> -> vector<39x128xf32>
    %205 = arith.addf %199, %204 : vector<39x128xf32>
    %206 = vector.extract_strided_slice %170 {offsets = [6, 0], sizes = [39, 128], strides = [1, 1]} : vector<47x128xf32> to vector<39x128xf32>
    %c6 = arith.constant 6 : index
    %c0_92 = arith.constant 0 : index
    %c0_93 = arith.constant 0 : index
    %207 = vector.load %arg13[%c6, %c0_92, %c0_93] : memref<9x128x128xbf16, #tpu.memory_space<vmem>>, vector<1x128x128xbf16>
    %208 = vector.shape_cast %207 : vector<1x128x128xbf16> to vector<128x128xbf16>
    %209 = arith.truncf %206 : vector<39x128xf32> to vector<39x128xbf16>
    %cst_94 = arith.constant dense<0.000000e+00> : vector<39x128xf32>
    %210 = tpu.matmul %209, %208, %cst_94 {dimension_numbers = #tpu.dot_dimension_numbers<[1], [0], [0], [1], [0, 0, 1, 1], [], []>} : vector<39x128xbf16>, vector<128x128xbf16>, vector<39x128xf32> -> vector<39x128xf32>
    %211 = arith.addf %205, %210 : vector<39x128xf32>
    %212 = vector.extract_strided_slice %170 {offsets = [7, 0], sizes = [39, 128], strides = [1, 1]} : vector<47x128xf32> to vector<39x128xf32>
    %c7 = arith.constant 7 : index
    %c0_95 = arith.constant 0 : index
    %c0_96 = arith.constant 0 : index
    %213 = vector.load %arg13[%c7, %c0_95, %c0_96] : memref<9x128x128xbf16, #tpu.memory_space<vmem>>, vector<1x128x128xbf16>
    %214 = vector.shape_cast %213 : vector<1x128x128xbf16> to vector<128x128xbf16>
    %215 = arith.truncf %212 : vector<39x128xf32> to vector<39x128xbf16>
    %cst_97 = arith.constant dense<0.000000e+00> : vector<39x128xf32>
    %216 = tpu.matmul %215, %214, %cst_97 {dimension_numbers = #tpu.dot_dimension_numbers<[1], [0], [0], [1], [0, 0, 1, 1], [], []>} : vector<39x128xbf16>, vector<128x128xbf16>, vector<39x128xf32> -> vector<39x128xf32>
    %217 = arith.addf %211, %216 : vector<39x128xf32>
    %218 = vector.extract_strided_slice %170 {offsets = [8, 0], sizes = [39, 128], strides = [1, 1]} : vector<47x128xf32> to vector<39x128xf32>
    %c8 = arith.constant 8 : index
    %c0_98 = arith.constant 0 : index
    %c0_99 = arith.constant 0 : index
    %219 = vector.load %arg13[%c8, %c0_98, %c0_99] : memref<9x128x128xbf16, #tpu.memory_space<vmem>>, vector<1x128x128xbf16>
    %220 = vector.shape_cast %219 : vector<1x128x128xbf16> to vector<128x128xbf16>
    %221 = arith.truncf %218 : vector<39x128xf32> to vector<39x128xbf16>
    %cst_100 = arith.constant dense<0.000000e+00> : vector<39x128xf32>
    %222 = tpu.matmul %221, %220, %cst_100 {dimension_numbers = #tpu.dot_dimension_numbers<[1], [0], [0], [1], [0, 0, 1, 1], [], []>} : vector<39x128xbf16>, vector<128x128xbf16>, vector<39x128xf32> -> vector<39x128xf32>
    %223 = arith.addf %217, %222 : vector<39x128xf32>
    %c0_101 = arith.constant 0 : index
    %c0_102 = arith.constant 0 : index
    %224 = vector.load %arg14[%c0_101, %c0_102] : memref<1x128xf32, #tpu.memory_space<vmem>>, vector<1x128xf32>
    %225 = vector.broadcast %224 : vector<1x128xf32> to vector<39x128xf32>
    %226 = arith.addf %223, %225 : vector<39x128xf32>
    %cst_103 = arith.constant 5.000000e-01 : f32
    %227 = vector.broadcast %cst_103 : f32 to vector<39x128xf32>
    %228 = arith.mulf %227, %226 : vector<39x128xf32>
    %cst_104 = arith.constant 4.471500e-02 : f32
    %229 = vector.broadcast %cst_104 : f32 to vector<39x128xf32>
    %230 = arith.mulf %229, %226 : vector<39x128xf32>
    %231 = arith.mulf %230, %226 : vector<39x128xf32>
    %232 = arith.mulf %231, %226 : vector<39x128xf32>
    %233 = arith.addf %226, %232 : vector<39x128xf32>
    %cst_105 = arith.constant 0.797884583 : f32
    %234 = vector.broadcast %cst_105 : f32 to vector<39x128xf32>
    %235 = arith.mulf %234, %233 : vector<39x128xf32>
    %236 = math.tanh %235 : vector<39x128xf32>
    %cst_106 = arith.constant 1.000000e+00 : f32
    %237 = vector.broadcast %cst_106 : f32 to vector<39x128xf32>
    %238 = arith.addf %237, %236 : vector<39x128xf32>
    %239 = arith.mulf %228, %238 : vector<39x128xf32>
    %240 = arith.addf %168, %239 : vector<39x128xf32>
    %c0_107 = arith.constant 0 : index
    %c0_108 = arith.constant 0 : index
    %241 = vector.load %arg15[%c0_107, %c0_108] : memref<1x128xf32, #tpu.memory_space<vmem>>, vector<1x128xf32>
    %c0_109 = arith.constant 0 : index
    %c0_110 = arith.constant 0 : index
    %242 = vector.load %arg16[%c0_109, %c0_110] : memref<1x128xf32, #tpu.memory_space<vmem>>, vector<1x128xf32>
    %cst_111 = arith.constant dense<0.000000e+00> : vector<39xf32>
    %243 = vector.multi_reduction <add>, %240, %cst_111 [1] : vector<39x128xf32> to vector<39xf32>
    %244 = vector.shape_cast %243 : vector<39xf32> to vector<39x1xf32>
    %245 = arith.mulf %240, %240 : vector<39x128xf32>
    %cst_112 = arith.constant dense<0.000000e+00> : vector<39xf32>
    %246 = vector.multi_reduction <add>, %245, %cst_112 [1] : vector<39x128xf32> to vector<39xf32>
    %247 = vector.shape_cast %246 : vector<39xf32> to vector<39x1xf32>
    %cst_113 = arith.constant 6.400000e+01 : f32
    %248 = vector.broadcast %cst_113 : f32 to vector<39x1xf32>
    %249 = arith.divf %244, %248 : vector<39x1xf32>
    %cst_114 = arith.constant 6.400000e+01 : f32
    %250 = vector.broadcast %cst_114 : f32 to vector<39x1xf32>
    %251 = arith.divf %247, %250 : vector<39x1xf32>
    %252 = arith.mulf %249, %249 : vector<39x1xf32>
    %253 = arith.subf %251, %252 : vector<39x1xf32>
    %254 = vector.broadcast %249 : vector<39x1xf32> to vector<39x128xf32>
    %255 = arith.subf %240, %254 : vector<39x128xf32>
    %cst_115 = arith.constant 9.99999974E-6 : f32
    %256 = vector.broadcast %cst_115 : f32 to vector<39x1xf32>
    %257 = arith.addf %253, %256 : vector<39x1xf32>
    %258 = math.rsqrt %257 : vector<39x1xf32>
    %259 = vector.broadcast %258 : vector<39x1xf32> to vector<39x128xf32>
    %260 = arith.mulf %255, %259 : vector<39x128xf32>
    %261 = vector.broadcast %241 : vector<1x128xf32> to vector<39x128xf32>
    %262 = arith.mulf %260, %261 : vector<39x128xf32>
    %263 = vector.broadcast %242 : vector<1x128xf32> to vector<39x128xf32>
    %264 = arith.addf %262, %263 : vector<39x128xf32>
    %c0_116 = arith.constant 0 : index
    %c0_117 = arith.constant 0 : index
    %265 = vector.load %arg2[%c0_116, %c0_117] : memref<1x3xf32, #tpu.memory_space<vmem>>, vector<1x3xf32>
    %266 = vector.extract_strided_slice %265 {offsets = [0, 0], sizes = [1, 1], strides = [1, 1]} : vector<1x3xf32> to vector<1x1xf32>
    %267 = vector.broadcast %266 : vector<1x1xf32> to vector<39x128xf32>
    %268 = arith.mulf %267, %264 : vector<39x128xf32>
    %269 = tpu.iota {dimensions = array<i32: 1>} : vector<1x64xi32>
    %c0_118 = arith.constant 0 : index
    %c0_119 = arith.constant 0 : index
    %c0_120 = arith.constant 0 : index
    %270 = vector.load %arg17[%c0_118, %c0_119, %c0_120] : memref<2x128x192xbf16, #tpu.memory_space<vmem>>, vector<1x128x192xbf16>
    %271 = vector.shape_cast %270 : vector<1x128x192xbf16> to vector<128x192xbf16>
    %272 = arith.truncf %264 : vector<39x128xf32> to vector<39x128xbf16>
    %cst_121 = arith.constant dense<0.000000e+00> : vector<39x192xf32>
    %273 = tpu.matmul %272, %271, %cst_121 {dimension_numbers = #tpu.dot_dimension_numbers<[1], [0], [0], [1], [0, 0, 1, 1], [], []>} : vector<39x128xbf16>, vector<128x192xbf16>, vector<39x192xf32> -> vector<39x192xf32>
    %c0_122 = arith.constant 0 : index
    %c0_123 = arith.constant 0 : index
    %c0_124 = arith.constant 0 : index
    %274 = vector.load %arg18[%c0_122, %c0_123, %c0_124] : memref<2x1x192xf32, #tpu.memory_space<vmem>>, vector<1x1x192xf32>
    %275 = vector.shape_cast %274 : vector<1x1x192xf32> to vector<1x192xf32>
    %276 = vector.broadcast %275 : vector<1x192xf32> to vector<39x192xf32>
    %277 = arith.addf %273, %276 : vector<39x192xf32>
    %278 = vector.extract_strided_slice %277 {offsets = [0, 0], sizes = [39, 64], strides = [1, 1]} : vector<39x192xf32> to vector<39x64xf32>
    %279 = vector.extract_strided_slice %277 {offsets = [0, 64], sizes = [39, 64], strides = [1, 1]} : vector<39x192xf32> to vector<39x64xf32>
    %280 = vector.extract_strided_slice %277 {offsets = [0, 128], sizes = [39, 64], strides = [1, 1]} : vector<39x192xf32> to vector<39x64xf32>
    %cst_125 = arith.constant 0.000000e+00 : f32
    %281 = vector.broadcast %cst_125 : f32 to vector<39x64xf32>
    %c0_i32 = arith.constant 0 : i32
    %282 = vector.broadcast %c0_i32 : i32 to vector<1x64xi32>
    %283 = arith.cmpi sge, %269, %282 : vector<1x64xi32>
    %c16_i32 = arith.constant 16 : i32
    %284 = vector.broadcast %c16_i32 : i32 to vector<1x64xi32>
    %285 = arith.cmpi slt, %269, %284 : vector<1x64xi32>
    %286 = arith.andi %283, %285 : vector<1x64xi1>
    %cst_126 = arith.constant 0.000000e+00 : f32
    %287 = vector.shape_cast %286 : vector<1x64xi1> to vector<1x64xi1>
    %288 = vector.broadcast %287 : vector<1x64xi1> to vector<39x64xi1>
    %289 = vector.broadcast %cst_126 : f32 to vector<39x64xf32>
    %290 = arith.select %288, %278, %289 : vector<39x64xi1>, vector<39x64xf32>
    %291 = arith.truncf %290 : vector<39x64xf32> to vector<39x64xbf16>
    %292 = arith.truncf %279 : vector<39x64xf32> to vector<39x64xbf16>
    %cst_127 = arith.constant dense<0.000000e+00> : vector<39x39xf32>
    %293 = tpu.matmul %291, %292, %cst_127 {dimension_numbers = #tpu.dot_dimension_numbers<[1], [1], [0], [0], [0, 0, 1, 0], [], []>} : vector<39x64xbf16>, vector<39x64xbf16>, vector<39x39xf32> -> vector<39x39xf32>
    %cst_128 = arith.constant dense<0xFF800000> : vector<39xf32>
    %294 = vector.multi_reduction <maximumf>, %293, %cst_128 [1] : vector<39x39xf32> to vector<39xf32>
    %295 = vector.shape_cast %294 : vector<39xf32> to vector<39x1xf32>
    %296 = vector.broadcast %295 : vector<39x1xf32> to vector<39x39xf32>
    %297 = arith.subf %293, %296 : vector<39x39xf32>
    %298 = math.exp %297 : vector<39x39xf32>
    %cst_129 = arith.constant dense<0.000000e+00> : vector<39xf32>
    %299 = vector.multi_reduction <add>, %298, %cst_129 [1] : vector<39x39xf32> to vector<39xf32>
    %300 = vector.shape_cast %299 : vector<39xf32> to vector<39x1xf32>
    %301 = tpu.reciprocal %300 {approx = true} : vector<39x1xf32> -> vector<39x1xf32>
    %302 = vector.broadcast %301 : vector<39x1xf32> to vector<39x39xf32>
    %303 = arith.mulf %298, %302 : vector<39x39xf32>
    %304 = arith.truncf %303 : vector<39x39xf32> to vector<39x39xbf16>
    %305 = arith.truncf %280 : vector<39x64xf32> to vector<39x64xbf16>
    %cst_130 = arith.constant dense<0.000000e+00> : vector<39x64xf32>
    %306 = tpu.matmul %304, %305, %cst_130 {dimension_numbers = #tpu.dot_dimension_numbers<[1], [0], [0], [1], [0, 0, 1, 1], [], []>} : vector<39x39xbf16>, vector<39x64xbf16>, vector<39x64xf32> -> vector<39x64xf32>
    %cst_131 = arith.constant 0.000000e+00 : f32
    %307 = vector.shape_cast %286 : vector<1x64xi1> to vector<1x64xi1>
    %308 = vector.broadcast %307 : vector<1x64xi1> to vector<39x64xi1>
    %309 = vector.broadcast %cst_131 : f32 to vector<39x64xf32>
    %310 = arith.select %308, %306, %309 : vector<39x64xi1>, vector<39x64xf32>
    %311 = arith.addf %281, %310 : vector<39x64xf32>
    %c16_i32_132 = arith.constant 16 : i32
    %312 = vector.broadcast %c16_i32_132 : i32 to vector<1x64xi32>
    %313 = arith.cmpi sge, %269, %312 : vector<1x64xi32>
    %c32_i32 = arith.constant 32 : i32
    %314 = vector.broadcast %c32_i32 : i32 to vector<1x64xi32>
    %315 = arith.cmpi slt, %269, %314 : vector<1x64xi32>
    %316 = arith.andi %313, %315 : vector<1x64xi1>
    %cst_133 = arith.constant 0.000000e+00 : f32
    %317 = vector.shape_cast %316 : vector<1x64xi1> to vector<1x64xi1>
    %318 = vector.broadcast %317 : vector<1x64xi1> to vector<39x64xi1>
    %319 = vector.broadcast %cst_133 : f32 to vector<39x64xf32>
    %320 = arith.select %318, %278, %319 : vector<39x64xi1>, vector<39x64xf32>
    %321 = arith.truncf %320 : vector<39x64xf32> to vector<39x64xbf16>
    %322 = arith.truncf %279 : vector<39x64xf32> to vector<39x64xbf16>
    %cst_134 = arith.constant dense<0.000000e+00> : vector<39x39xf32>
    %323 = tpu.matmul %321, %322, %cst_134 {dimension_numbers = #tpu.dot_dimension_numbers<[1], [1], [0], [0], [0, 0, 1, 0], [], []>} : vector<39x64xbf16>, vector<39x64xbf16>, vector<39x39xf32> -> vector<39x39xf32>
    %cst_135 = arith.constant dense<0xFF800000> : vector<39xf32>
    %324 = vector.multi_reduction <maximumf>, %323, %cst_135 [1] : vector<39x39xf32> to vector<39xf32>
    %325 = vector.shape_cast %324 : vector<39xf32> to vector<39x1xf32>
    %326 = vector.broadcast %325 : vector<39x1xf32> to vector<39x39xf32>
    %327 = arith.subf %323, %326 : vector<39x39xf32>
    %328 = math.exp %327 : vector<39x39xf32>
    %cst_136 = arith.constant dense<0.000000e+00> : vector<39xf32>
    %329 = vector.multi_reduction <add>, %328, %cst_136 [1] : vector<39x39xf32> to vector<39xf32>
    %330 = vector.shape_cast %329 : vector<39xf32> to vector<39x1xf32>
    %331 = tpu.reciprocal %330 {approx = true} : vector<39x1xf32> -> vector<39x1xf32>
    %332 = vector.broadcast %331 : vector<39x1xf32> to vector<39x39xf32>
    %333 = arith.mulf %328, %332 : vector<39x39xf32>
    %334 = arith.truncf %333 : vector<39x39xf32> to vector<39x39xbf16>
    %335 = arith.truncf %280 : vector<39x64xf32> to vector<39x64xbf16>
    %cst_137 = arith.constant dense<0.000000e+00> : vector<39x64xf32>
    %336 = tpu.matmul %334, %335, %cst_137 {dimension_numbers = #tpu.dot_dimension_numbers<[1], [0], [0], [1], [0, 0, 1, 1], [], []>} : vector<39x39xbf16>, vector<39x64xbf16>, vector<39x64xf32> -> vector<39x64xf32>
    %cst_138 = arith.constant 0.000000e+00 : f32
    %337 = vector.shape_cast %316 : vector<1x64xi1> to vector<1x64xi1>
    %338 = vector.broadcast %337 : vector<1x64xi1> to vector<39x64xi1>
    %339 = vector.broadcast %cst_138 : f32 to vector<39x64xf32>
    %340 = arith.select %338, %336, %339 : vector<39x64xi1>, vector<39x64xf32>
    %341 = arith.addf %311, %340 : vector<39x64xf32>
    %c32_i32_139 = arith.constant 32 : i32
    %342 = vector.broadcast %c32_i32_139 : i32 to vector<1x64xi32>
    %343 = arith.cmpi sge, %269, %342 : vector<1x64xi32>
    %c48_i32 = arith.constant 48 : i32
    %344 = vector.broadcast %c48_i32 : i32 to vector<1x64xi32>
    %345 = arith.cmpi slt, %269, %344 : vector<1x64xi32>
    %346 = arith.andi %343, %345 : vector<1x64xi1>
    %cst_140 = arith.constant 0.000000e+00 : f32
    %347 = vector.shape_cast %346 : vector<1x64xi1> to vector<1x64xi1>
    %348 = vector.broadcast %347 : vector<1x64xi1> to vector<39x64xi1>
    %349 = vector.broadcast %cst_140 : f32 to vector<39x64xf32>
    %350 = arith.select %348, %278, %349 : vector<39x64xi1>, vector<39x64xf32>
    %351 = arith.truncf %350 : vector<39x64xf32> to vector<39x64xbf16>
    %352 = arith.truncf %279 : vector<39x64xf32> to vector<39x64xbf16>
    %cst_141 = arith.constant dense<0.000000e+00> : vector<39x39xf32>
    %353 = tpu.matmul %351, %352, %cst_141 {dimension_numbers = #tpu.dot_dimension_numbers<[1], [1], [0], [0], [0, 0, 1, 0], [], []>} : vector<39x64xbf16>, vector<39x64xbf16>, vector<39x39xf32> -> vector<39x39xf32>
    %cst_142 = arith.constant dense<0xFF800000> : vector<39xf32>
    %354 = vector.multi_reduction <maximumf>, %353, %cst_142 [1] : vector<39x39xf32> to vector<39xf32>
    %355 = vector.shape_cast %354 : vector<39xf32> to vector<39x1xf32>
    %356 = vector.broadcast %355 : vector<39x1xf32> to vector<39x39xf32>
    %357 = arith.subf %353, %356 : vector<39x39xf32>
    %358 = math.exp %357 : vector<39x39xf32>
    %cst_143 = arith.constant dense<0.000000e+00> : vector<39xf32>
    %359 = vector.multi_reduction <add>, %358, %cst_143 [1] : vector<39x39xf32> to vector<39xf32>
    %360 = vector.shape_cast %359 : vector<39xf32> to vector<39x1xf32>
    %361 = tpu.reciprocal %360 {approx = true} : vector<39x1xf32> -> vector<39x1xf32>
    %362 = vector.broadcast %361 : vector<39x1xf32> to vector<39x39xf32>
    %363 = arith.mulf %358, %362 : vector<39x39xf32>
    %364 = arith.truncf %363 : vector<39x39xf32> to vector<39x39xbf16>
    %365 = arith.truncf %280 : vector<39x64xf32> to vector<39x64xbf16>
    %cst_144 = arith.constant dense<0.000000e+00> : vector<39x64xf32>
    %366 = tpu.matmul %364, %365, %cst_144 {dimension_numbers = #tpu.dot_dimension_numbers<[1], [0], [0], [1], [0, 0, 1, 1], [], []>} : vector<39x39xbf16>, vector<39x64xbf16>, vector<39x64xf32> -> vector<39x64xf32>
    %cst_145 = arith.constant 0.000000e+00 : f32
    %367 = vector.shape_cast %346 : vector<1x64xi1> to vector<1x64xi1>
    %368 = vector.broadcast %367 : vector<1x64xi1> to vector<39x64xi1>
    %369 = vector.broadcast %cst_145 : f32 to vector<39x64xf32>
    %370 = arith.select %368, %366, %369 : vector<39x64xi1>, vector<39x64xf32>
    %371 = arith.addf %341, %370 : vector<39x64xf32>
    %c48_i32_146 = arith.constant 48 : i32
    %372 = vector.broadcast %c48_i32_146 : i32 to vector<1x64xi32>
    %373 = arith.cmpi sge, %269, %372 : vector<1x64xi32>
    %c64_i32 = arith.constant 64 : i32
    %374 = vector.broadcast %c64_i32 : i32 to vector<1x64xi32>
    %375 = arith.cmpi slt, %269, %374 : vector<1x64xi32>
    %376 = arith.andi %373, %375 : vector<1x64xi1>
    %cst_147 = arith.constant 0.000000e+00 : f32
    %377 = vector.shape_cast %376 : vector<1x64xi1> to vector<1x64xi1>
    %378 = vector.broadcast %377 : vector<1x64xi1> to vector<39x64xi1>
    %379 = vector.broadcast %cst_147 : f32 to vector<39x64xf32>
    %380 = arith.select %378, %278, %379 : vector<39x64xi1>, vector<39x64xf32>
    %381 = arith.truncf %380 : vector<39x64xf32> to vector<39x64xbf16>
    %382 = arith.truncf %279 : vector<39x64xf32> to vector<39x64xbf16>
    %cst_148 = arith.constant dense<0.000000e+00> : vector<39x39xf32>
    %383 = tpu.matmul %381, %382, %cst_148 {dimension_numbers = #tpu.dot_dimension_numbers<[1], [1], [0], [0], [0, 0, 1, 0], [], []>} : vector<39x64xbf16>, vector<39x64xbf16>, vector<39x39xf32> -> vector<39x39xf32>
    %cst_149 = arith.constant dense<0xFF800000> : vector<39xf32>
    %384 = vector.multi_reduction <maximumf>, %383, %cst_149 [1] : vector<39x39xf32> to vector<39xf32>
    %385 = vector.shape_cast %384 : vector<39xf32> to vector<39x1xf32>
    %386 = vector.broadcast %385 : vector<39x1xf32> to vector<39x39xf32>
    %387 = arith.subf %383, %386 : vector<39x39xf32>
    %388 = math.exp %387 : vector<39x39xf32>
    %cst_150 = arith.constant dense<0.000000e+00> : vector<39xf32>
    %389 = vector.multi_reduction <add>, %388, %cst_150 [1] : vector<39x39xf32> to vector<39xf32>
    %390 = vector.shape_cast %389 : vector<39xf32> to vector<39x1xf32>
    %391 = tpu.reciprocal %390 {approx = true} : vector<39x1xf32> -> vector<39x1xf32>
    %392 = vector.broadcast %391 : vector<39x1xf32> to vector<39x39xf32>
    %393 = arith.mulf %388, %392 : vector<39x39xf32>
    %394 = arith.truncf %393 : vector<39x39xf32> to vector<39x39xbf16>
    %395 = arith.truncf %280 : vector<39x64xf32> to vector<39x64xbf16>
    %cst_151 = arith.constant dense<0.000000e+00> : vector<39x64xf32>
    %396 = tpu.matmul %394, %395, %cst_151 {dimension_numbers = #tpu.dot_dimension_numbers<[1], [0], [0], [1], [0, 0, 1, 1], [], []>} : vector<39x39xbf16>, vector<39x64xbf16>, vector<39x64xf32> -> vector<39x64xf32>
    %cst_152 = arith.constant 0.000000e+00 : f32
    %397 = vector.shape_cast %376 : vector<1x64xi1> to vector<1x64xi1>
    %398 = vector.broadcast %397 : vector<1x64xi1> to vector<39x64xi1>
    %399 = vector.broadcast %cst_152 : f32 to vector<39x64xf32>
    %400 = arith.select %398, %396, %399 : vector<39x64xi1>, vector<39x64xf32>
    %401 = arith.addf %371, %400 : vector<39x64xf32>
    %c0_153 = arith.constant 0 : index
    %c0_154 = arith.constant 0 : index
    %c0_155 = arith.constant 0 : index
    %402 = vector.load %arg19[%c0_153, %c0_154, %c0_155] : memref<2x64x128xbf16, #tpu.memory_space<vmem>>, vector<1x64x128xbf16>
    %403 = vector.shape_cast %402 : vector<1x64x128xbf16> to vector<64x128xbf16>
    %404 = arith.truncf %401 : vector<39x64xf32> to vector<39x64xbf16>
    %cst_156 = arith.constant dense<0.000000e+00> : vector<39x128xf32>
    %405 = tpu.matmul %404, %403, %cst_156 {dimension_numbers = #tpu.dot_dimension_numbers<[1], [0], [0], [1], [0, 0, 1, 1], [], []>} : vector<39x64xbf16>, vector<64x128xbf16>, vector<39x128xf32> -> vector<39x128xf32>
    %c0_157 = arith.constant 0 : index
    %c0_158 = arith.constant 0 : index
    %c0_159 = arith.constant 0 : index
    %406 = vector.load %arg20[%c0_157, %c0_158, %c0_159] : memref<2x1x128xf32, #tpu.memory_space<vmem>>, vector<1x1x128xf32>
    %407 = vector.shape_cast %406 : vector<1x1x128xf32> to vector<1x128xf32>
    %408 = vector.broadcast %407 : vector<1x128xf32> to vector<39x128xf32>
    %409 = arith.addf %405, %408 : vector<39x128xf32>
    %410 = arith.addf %264, %409 : vector<39x128xf32>
    %c0_160 = arith.constant 0 : index
    %c0_161 = arith.constant 0 : index
    %c0_162 = arith.constant 0 : index
    %411 = vector.load %arg21[%c0_160, %c0_161, %c0_162] : memref<2x1x128xf32, #tpu.memory_space<vmem>>, vector<1x1x128xf32>
    %412 = vector.shape_cast %411 : vector<1x1x128xf32> to vector<1x128xf32>
    %c0_163 = arith.constant 0 : index
    %c0_164 = arith.constant 0 : index
    %c0_165 = arith.constant 0 : index
    %413 = vector.load %arg22[%c0_163, %c0_164, %c0_165] : memref<2x1x128xf32, #tpu.memory_space<vmem>>, vector<1x1x128xf32>
    %414 = vector.shape_cast %413 : vector<1x1x128xf32> to vector<1x128xf32>
    %cst_166 = arith.constant dense<0.000000e+00> : vector<39xf32>
    %415 = vector.multi_reduction <add>, %410, %cst_166 [1] : vector<39x128xf32> to vector<39xf32>
    %416 = vector.shape_cast %415 : vector<39xf32> to vector<39x1xf32>
    %417 = arith.mulf %410, %410 : vector<39x128xf32>
    %cst_167 = arith.constant dense<0.000000e+00> : vector<39xf32>
    %418 = vector.multi_reduction <add>, %417, %cst_167 [1] : vector<39x128xf32> to vector<39xf32>
    %419 = vector.shape_cast %418 : vector<39xf32> to vector<39x1xf32>
    %cst_168 = arith.constant 6.400000e+01 : f32
    %420 = vector.broadcast %cst_168 : f32 to vector<39x1xf32>
    %421 = arith.divf %416, %420 : vector<39x1xf32>
    %cst_169 = arith.constant 6.400000e+01 : f32
    %422 = vector.broadcast %cst_169 : f32 to vector<39x1xf32>
    %423 = arith.divf %419, %422 : vector<39x1xf32>
    %424 = arith.mulf %421, %421 : vector<39x1xf32>
    %425 = arith.subf %423, %424 : vector<39x1xf32>
    %426 = vector.broadcast %421 : vector<39x1xf32> to vector<39x128xf32>
    %427 = arith.subf %410, %426 : vector<39x128xf32>
    %cst_170 = arith.constant 9.99999974E-6 : f32
    %428 = vector.broadcast %cst_170 : f32 to vector<39x1xf32>
    %429 = arith.addf %425, %428 : vector<39x1xf32>
    %430 = math.rsqrt %429 : vector<39x1xf32>
    %431 = vector.broadcast %430 : vector<39x1xf32> to vector<39x128xf32>
    %432 = arith.mulf %427, %431 : vector<39x128xf32>
    %433 = vector.broadcast %412 : vector<1x128xf32> to vector<39x128xf32>
    %434 = arith.mulf %432, %433 : vector<39x128xf32>
    %435 = vector.broadcast %414 : vector<1x128xf32> to vector<39x128xf32>
    %436 = arith.addf %434, %435 : vector<39x128xf32>
    %c0_171 = arith.constant 0 : index
    %c0_172 = arith.constant 0 : index
    %c0_173 = arith.constant 0 : index
    %437 = vector.load %arg23[%c0_171, %c0_172, %c0_173] : memref<2x128x128xbf16, #tpu.memory_space<vmem>>, vector<1x128x128xbf16>
    %438 = vector.shape_cast %437 : vector<1x128x128xbf16> to vector<128x128xbf16>
    %439 = arith.truncf %436 : vector<39x128xf32> to vector<39x128xbf16>
    %cst_174 = arith.constant dense<0.000000e+00> : vector<39x128xf32>
    %440 = tpu.matmul %439, %438, %cst_174 {dimension_numbers = #tpu.dot_dimension_numbers<[1], [0], [0], [1], [0, 0, 1, 1], [], []>} : vector<39x128xbf16>, vector<128x128xbf16>, vector<39x128xf32> -> vector<39x128xf32>
    %c0_175 = arith.constant 0 : index
    %c0_176 = arith.constant 0 : index
    %c0_177 = arith.constant 0 : index
    %441 = vector.load %arg24[%c0_175, %c0_176, %c0_177] : memref<2x1x128xf32, #tpu.memory_space<vmem>>, vector<1x1x128xf32>
    %442 = vector.shape_cast %441 : vector<1x1x128xf32> to vector<1x128xf32>
    %443 = vector.broadcast %442 : vector<1x128xf32> to vector<39x128xf32>
    %444 = arith.addf %440, %443 : vector<39x128xf32>
    %cst_178 = arith.constant 5.000000e-01 : f32
    %445 = vector.broadcast %cst_178 : f32 to vector<39x128xf32>
    %446 = arith.mulf %445, %444 : vector<39x128xf32>
    %cst_179 = arith.constant 4.471500e-02 : f32
    %447 = vector.broadcast %cst_179 : f32 to vector<39x128xf32>
    %448 = arith.mulf %447, %444 : vector<39x128xf32>
    %449 = arith.mulf %448, %444 : vector<39x128xf32>
    %450 = arith.mulf %449, %444 : vector<39x128xf32>
    %451 = arith.addf %444, %450 : vector<39x128xf32>
    %cst_180 = arith.constant 0.797884583 : f32
    %452 = vector.broadcast %cst_180 : f32 to vector<39x128xf32>
    %453 = arith.mulf %452, %451 : vector<39x128xf32>
    %454 = math.tanh %453 : vector<39x128xf32>
    %cst_181 = arith.constant 1.000000e+00 : f32
    %455 = vector.broadcast %cst_181 : f32 to vector<39x128xf32>
    %456 = arith.addf %455, %454 : vector<39x128xf32>
    %457 = arith.mulf %446, %456 : vector<39x128xf32>
    %c0_182 = arith.constant 0 : index
    %c0_183 = arith.constant 0 : index
    %c0_184 = arith.constant 0 : index
    %458 = vector.load %arg25[%c0_182, %c0_183, %c0_184] : memref<2x128x128xbf16, #tpu.memory_space<vmem>>, vector<1x128x128xbf16>
    %459 = vector.shape_cast %458 : vector<1x128x128xbf16> to vector<128x128xbf16>
    %460 = arith.truncf %457 : vector<39x128xf32> to vector<39x128xbf16>
    %cst_185 = arith.constant dense<0.000000e+00> : vector<39x128xf32>
    %461 = tpu.matmul %460, %459, %cst_185 {dimension_numbers = #tpu.dot_dimension_numbers<[1], [0], [0], [1], [0, 0, 1, 1], [], []>} : vector<39x128xbf16>, vector<128x128xbf16>, vector<39x128xf32> -> vector<39x128xf32>
    %c0_186 = arith.constant 0 : index
    %c0_187 = arith.constant 0 : index
    %c0_188 = arith.constant 0 : index
    %462 = vector.load %arg26[%c0_186, %c0_187, %c0_188] : memref<2x1x128xf32, #tpu.memory_space<vmem>>, vector<1x1x128xf32>
    %463 = vector.shape_cast %462 : vector<1x1x128xf32> to vector<1x128xf32>
    %464 = vector.broadcast %463 : vector<1x128xf32> to vector<39x128xf32>
    %465 = arith.addf %461, %464 : vector<39x128xf32>
    %466 = arith.addf %436, %465 : vector<39x128xf32>
    %c0_189 = arith.constant 0 : index
    %c0_190 = arith.constant 0 : index
    %c0_191 = arith.constant 0 : index
    %467 = vector.load %arg27[%c0_189, %c0_190, %c0_191] : memref<2x1x128xf32, #tpu.memory_space<vmem>>, vector<1x1x128xf32>
    %468 = vector.shape_cast %467 : vector<1x1x128xf32> to vector<1x128xf32>
    %c0_192 = arith.constant 0 : index
    %c0_193 = arith.constant 0 : index
    %c0_194 = arith.constant 0 : index
    %469 = vector.load %arg28[%c0_192, %c0_193, %c0_194] : memref<2x1x128xf32, #tpu.memory_space<vmem>>, vector<1x1x128xf32>
    %470 = vector.shape_cast %469 : vector<1x1x128xf32> to vector<1x128xf32>
    %cst_195 = arith.constant dense<0.000000e+00> : vector<39xf32>
    %471 = vector.multi_reduction <add>, %466, %cst_195 [1] : vector<39x128xf32> to vector<39xf32>
    %472 = vector.shape_cast %471 : vector<39xf32> to vector<39x1xf32>
    %473 = arith.mulf %466, %466 : vector<39x128xf32>
    %cst_196 = arith.constant dense<0.000000e+00> : vector<39xf32>
    %474 = vector.multi_reduction <add>, %473, %cst_196 [1] : vector<39x128xf32> to vector<39xf32>
    %475 = vector.shape_cast %474 : vector<39xf32> to vector<39x1xf32>
    %cst_197 = arith.constant 6.400000e+01 : f32
    %476 = vector.broadcast %cst_197 : f32 to vector<39x1xf32>
    %477 = arith.divf %472, %476 : vector<39x1xf32>
    %cst_198 = arith.constant 6.400000e+01 : f32
    %478 = vector.broadcast %cst_198 : f32 to vector<39x1xf32>
    %479 = arith.divf %475, %478 : vector<39x1xf32>
    %480 = arith.mulf %477, %477 : vector<39x1xf32>
    %481 = arith.subf %479, %480 : vector<39x1xf32>
    %482 = vector.broadcast %477 : vector<39x1xf32> to vector<39x128xf32>
    %483 = arith.subf %466, %482 : vector<39x128xf32>
    %cst_199 = arith.constant 9.99999974E-6 : f32
    %484 = vector.broadcast %cst_199 : f32 to vector<39x1xf32>
    %485 = arith.addf %481, %484 : vector<39x1xf32>
    %486 = math.rsqrt %485 : vector<39x1xf32>
    %487 = vector.broadcast %486 : vector<39x1xf32> to vector<39x128xf32>
    %488 = arith.mulf %483, %487 : vector<39x128xf32>
    %489 = vector.broadcast %468 : vector<1x128xf32> to vector<39x128xf32>
    %490 = arith.mulf %488, %489 : vector<39x128xf32>
    %491 = vector.broadcast %470 : vector<1x128xf32> to vector<39x128xf32>
    %492 = arith.addf %490, %491 : vector<39x128xf32>
    %493 = vector.extract_strided_slice %265 {offsets = [0, 1], sizes = [1, 1], strides = [1, 1]} : vector<1x3xf32> to vector<1x1xf32>
    %494 = vector.broadcast %493 : vector<1x1xf32> to vector<39x128xf32>
    %495 = arith.mulf %494, %492 : vector<39x128xf32>
    %496 = arith.addf %268, %495 : vector<39x128xf32>
    %c1_200 = arith.constant 1 : index
    %c0_201 = arith.constant 0 : index
    %c0_202 = arith.constant 0 : index
    %497 = vector.load %arg17[%c1_200, %c0_201, %c0_202] : memref<2x128x192xbf16, #tpu.memory_space<vmem>>, vector<1x128x192xbf16>
    %498 = vector.shape_cast %497 : vector<1x128x192xbf16> to vector<128x192xbf16>
    %499 = arith.truncf %492 : vector<39x128xf32> to vector<39x128xbf16>
    %cst_203 = arith.constant dense<0.000000e+00> : vector<39x192xf32>
    %500 = tpu.matmul %499, %498, %cst_203 {dimension_numbers = #tpu.dot_dimension_numbers<[1], [0], [0], [1], [0, 0, 1, 1], [], []>} : vector<39x128xbf16>, vector<128x192xbf16>, vector<39x192xf32> -> vector<39x192xf32>
    %c1_204 = arith.constant 1 : index
    %c0_205 = arith.constant 0 : index
    %c0_206 = arith.constant 0 : index
    %501 = vector.load %arg18[%c1_204, %c0_205, %c0_206] : memref<2x1x192xf32, #tpu.memory_space<vmem>>, vector<1x1x192xf32>
    %502 = vector.shape_cast %501 : vector<1x1x192xf32> to vector<1x192xf32>
    %503 = vector.broadcast %502 : vector<1x192xf32> to vector<39x192xf32>
    %504 = arith.addf %500, %503 : vector<39x192xf32>
    %505 = vector.extract_strided_slice %504 {offsets = [0, 0], sizes = [39, 64], strides = [1, 1]} : vector<39x192xf32> to vector<39x64xf32>
    %506 = vector.extract_strided_slice %504 {offsets = [0, 64], sizes = [39, 64], strides = [1, 1]} : vector<39x192xf32> to vector<39x64xf32>
    %507 = vector.extract_strided_slice %504 {offsets = [0, 128], sizes = [39, 64], strides = [1, 1]} : vector<39x192xf32> to vector<39x64xf32>
    %cst_207 = arith.constant 0.000000e+00 : f32
    %508 = vector.broadcast %cst_207 : f32 to vector<39x64xf32>
    %c0_i32_208 = arith.constant 0 : i32
    %509 = vector.broadcast %c0_i32_208 : i32 to vector<1x64xi32>
    %510 = arith.cmpi sge, %269, %509 : vector<1x64xi32>
    %c16_i32_209 = arith.constant 16 : i32
    %511 = vector.broadcast %c16_i32_209 : i32 to vector<1x64xi32>
    %512 = arith.cmpi slt, %269, %511 : vector<1x64xi32>
    %513 = arith.andi %510, %512 : vector<1x64xi1>
    %cst_210 = arith.constant 0.000000e+00 : f32
    %514 = vector.shape_cast %513 : vector<1x64xi1> to vector<1x64xi1>
    %515 = vector.broadcast %514 : vector<1x64xi1> to vector<39x64xi1>
    %516 = vector.broadcast %cst_210 : f32 to vector<39x64xf32>
    %517 = arith.select %515, %505, %516 : vector<39x64xi1>, vector<39x64xf32>
    %518 = arith.truncf %517 : vector<39x64xf32> to vector<39x64xbf16>
    %519 = arith.truncf %506 : vector<39x64xf32> to vector<39x64xbf16>
    %cst_211 = arith.constant dense<0.000000e+00> : vector<39x39xf32>
    %520 = tpu.matmul %518, %519, %cst_211 {dimension_numbers = #tpu.dot_dimension_numbers<[1], [1], [0], [0], [0, 0, 1, 0], [], []>} : vector<39x64xbf16>, vector<39x64xbf16>, vector<39x39xf32> -> vector<39x39xf32>
    %cst_212 = arith.constant dense<0xFF800000> : vector<39xf32>
    %521 = vector.multi_reduction <maximumf>, %520, %cst_212 [1] : vector<39x39xf32> to vector<39xf32>
    %522 = vector.shape_cast %521 : vector<39xf32> to vector<39x1xf32>
    %523 = vector.broadcast %522 : vector<39x1xf32> to vector<39x39xf32>
    %524 = arith.subf %520, %523 : vector<39x39xf32>
    %525 = math.exp %524 : vector<39x39xf32>
    %cst_213 = arith.constant dense<0.000000e+00> : vector<39xf32>
    %526 = vector.multi_reduction <add>, %525, %cst_213 [1] : vector<39x39xf32> to vector<39xf32>
    %527 = vector.shape_cast %526 : vector<39xf32> to vector<39x1xf32>
    %528 = tpu.reciprocal %527 {approx = true} : vector<39x1xf32> -> vector<39x1xf32>
    %529 = vector.broadcast %528 : vector<39x1xf32> to vector<39x39xf32>
    %530 = arith.mulf %525, %529 : vector<39x39xf32>
    %531 = arith.truncf %530 : vector<39x39xf32> to vector<39x39xbf16>
    %532 = arith.truncf %507 : vector<39x64xf32> to vector<39x64xbf16>
    %cst_214 = arith.constant dense<0.000000e+00> : vector<39x64xf32>
    %533 = tpu.matmul %531, %532, %cst_214 {dimension_numbers = #tpu.dot_dimension_numbers<[1], [0], [0], [1], [0, 0, 1, 1], [], []>} : vector<39x39xbf16>, vector<39x64xbf16>, vector<39x64xf32> -> vector<39x64xf32>
    %cst_215 = arith.constant 0.000000e+00 : f32
    %534 = vector.shape_cast %513 : vector<1x64xi1> to vector<1x64xi1>
    %535 = vector.broadcast %534 : vector<1x64xi1> to vector<39x64xi1>
    %536 = vector.broadcast %cst_215 : f32 to vector<39x64xf32>
    %537 = arith.select %535, %533, %536 : vector<39x64xi1>, vector<39x64xf32>
    %538 = arith.addf %508, %537 : vector<39x64xf32>
    %c16_i32_216 = arith.constant 16 : i32
    %539 = vector.broadcast %c16_i32_216 : i32 to vector<1x64xi32>
    %540 = arith.cmpi sge, %269, %539 : vector<1x64xi32>
    %c32_i32_217 = arith.constant 32 : i32
    %541 = vector.broadcast %c32_i32_217 : i32 to vector<1x64xi32>
    %542 = arith.cmpi slt, %269, %541 : vector<1x64xi32>
    %543 = arith.andi %540, %542 : vector<1x64xi1>
    %cst_218 = arith.constant 0.000000e+00 : f32
    %544 = vector.shape_cast %543 : vector<1x64xi1> to vector<1x64xi1>
    %545 = vector.broadcast %544 : vector<1x64xi1> to vector<39x64xi1>
    %546 = vector.broadcast %cst_218 : f32 to vector<39x64xf32>
    %547 = arith.select %545, %505, %546 : vector<39x64xi1>, vector<39x64xf32>
    %548 = arith.truncf %547 : vector<39x64xf32> to vector<39x64xbf16>
    %549 = arith.truncf %506 : vector<39x64xf32> to vector<39x64xbf16>
    %cst_219 = arith.constant dense<0.000000e+00> : vector<39x39xf32>
    %550 = tpu.matmul %548, %549, %cst_219 {dimension_numbers = #tpu.dot_dimension_numbers<[1], [1], [0], [0], [0, 0, 1, 0], [], []>} : vector<39x64xbf16>, vector<39x64xbf16>, vector<39x39xf32> -> vector<39x39xf32>
    %cst_220 = arith.constant dense<0xFF800000> : vector<39xf32>
    %551 = vector.multi_reduction <maximumf>, %550, %cst_220 [1] : vector<39x39xf32> to vector<39xf32>
    %552 = vector.shape_cast %551 : vector<39xf32> to vector<39x1xf32>
    %553 = vector.broadcast %552 : vector<39x1xf32> to vector<39x39xf32>
    %554 = arith.subf %550, %553 : vector<39x39xf32>
    %555 = math.exp %554 : vector<39x39xf32>
    %cst_221 = arith.constant dense<0.000000e+00> : vector<39xf32>
    %556 = vector.multi_reduction <add>, %555, %cst_221 [1] : vector<39x39xf32> to vector<39xf32>
    %557 = vector.shape_cast %556 : vector<39xf32> to vector<39x1xf32>
    %558 = tpu.reciprocal %557 {approx = true} : vector<39x1xf32> -> vector<39x1xf32>
    %559 = vector.broadcast %558 : vector<39x1xf32> to vector<39x39xf32>
    %560 = arith.mulf %555, %559 : vector<39x39xf32>
    %561 = arith.truncf %560 : vector<39x39xf32> to vector<39x39xbf16>
    %562 = arith.truncf %507 : vector<39x64xf32> to vector<39x64xbf16>
    %cst_222 = arith.constant dense<0.000000e+00> : vector<39x64xf32>
    %563 = tpu.matmul %561, %562, %cst_222 {dimension_numbers = #tpu.dot_dimension_numbers<[1], [0], [0], [1], [0, 0, 1, 1], [], []>} : vector<39x39xbf16>, vector<39x64xbf16>, vector<39x64xf32> -> vector<39x64xf32>
    %cst_223 = arith.constant 0.000000e+00 : f32
    %564 = vector.shape_cast %543 : vector<1x64xi1> to vector<1x64xi1>
    %565 = vector.broadcast %564 : vector<1x64xi1> to vector<39x64xi1>
    %566 = vector.broadcast %cst_223 : f32 to vector<39x64xf32>
    %567 = arith.select %565, %563, %566 : vector<39x64xi1>, vector<39x64xf32>
    %568 = arith.addf %538, %567 : vector<39x64xf32>
    %c32_i32_224 = arith.constant 32 : i32
    %569 = vector.broadcast %c32_i32_224 : i32 to vector<1x64xi32>
    %570 = arith.cmpi sge, %269, %569 : vector<1x64xi32>
    %c48_i32_225 = arith.constant 48 : i32
    %571 = vector.broadcast %c48_i32_225 : i32 to vector<1x64xi32>
    %572 = arith.cmpi slt, %269, %571 : vector<1x64xi32>
    %573 = arith.andi %570, %572 : vector<1x64xi1>
    %cst_226 = arith.constant 0.000000e+00 : f32
    %574 = vector.shape_cast %573 : vector<1x64xi1> to vector<1x64xi1>
    %575 = vector.broadcast %574 : vector<1x64xi1> to vector<39x64xi1>
    %576 = vector.broadcast %cst_226 : f32 to vector<39x64xf32>
    %577 = arith.select %575, %505, %576 : vector<39x64xi1>, vector<39x64xf32>
    %578 = arith.truncf %577 : vector<39x64xf32> to vector<39x64xbf16>
    %579 = arith.truncf %506 : vector<39x64xf32> to vector<39x64xbf16>
    %cst_227 = arith.constant dense<0.000000e+00> : vector<39x39xf32>
    %580 = tpu.matmul %578, %579, %cst_227 {dimension_numbers = #tpu.dot_dimension_numbers<[1], [1], [0], [0], [0, 0, 1, 0], [], []>} : vector<39x64xbf16>, vector<39x64xbf16>, vector<39x39xf32> -> vector<39x39xf32>
    %cst_228 = arith.constant dense<0xFF800000> : vector<39xf32>
    %581 = vector.multi_reduction <maximumf>, %580, %cst_228 [1] : vector<39x39xf32> to vector<39xf32>
    %582 = vector.shape_cast %581 : vector<39xf32> to vector<39x1xf32>
    %583 = vector.broadcast %582 : vector<39x1xf32> to vector<39x39xf32>
    %584 = arith.subf %580, %583 : vector<39x39xf32>
    %585 = math.exp %584 : vector<39x39xf32>
    %cst_229 = arith.constant dense<0.000000e+00> : vector<39xf32>
    %586 = vector.multi_reduction <add>, %585, %cst_229 [1] : vector<39x39xf32> to vector<39xf32>
    %587 = vector.shape_cast %586 : vector<39xf32> to vector<39x1xf32>
    %588 = tpu.reciprocal %587 {approx = true} : vector<39x1xf32> -> vector<39x1xf32>
    %589 = vector.broadcast %588 : vector<39x1xf32> to vector<39x39xf32>
    %590 = arith.mulf %585, %589 : vector<39x39xf32>
    %591 = arith.truncf %590 : vector<39x39xf32> to vector<39x39xbf16>
    %592 = arith.truncf %507 : vector<39x64xf32> to vector<39x64xbf16>
    %cst_230 = arith.constant dense<0.000000e+00> : vector<39x64xf32>
    %593 = tpu.matmul %591, %592, %cst_230 {dimension_numbers = #tpu.dot_dimension_numbers<[1], [0], [0], [1], [0, 0, 1, 1], [], []>} : vector<39x39xbf16>, vector<39x64xbf16>, vector<39x64xf32> -> vector<39x64xf32>
    %cst_231 = arith.constant 0.000000e+00 : f32
    %594 = vector.shape_cast %573 : vector<1x64xi1> to vector<1x64xi1>
    %595 = vector.broadcast %594 : vector<1x64xi1> to vector<39x64xi1>
    %596 = vector.broadcast %cst_231 : f32 to vector<39x64xf32>
    %597 = arith.select %595, %593, %596 : vector<39x64xi1>, vector<39x64xf32>
    %598 = arith.addf %568, %597 : vector<39x64xf32>
    %c48_i32_232 = arith.constant 48 : i32
    %599 = vector.broadcast %c48_i32_232 : i32 to vector<1x64xi32>
    %600 = arith.cmpi sge, %269, %599 : vector<1x64xi32>
    %c64_i32_233 = arith.constant 64 : i32
    %601 = vector.broadcast %c64_i32_233 : i32 to vector<1x64xi32>
    %602 = arith.cmpi slt, %269, %601 : vector<1x64xi32>
    %603 = arith.andi %600, %602 : vector<1x64xi1>
    %cst_234 = arith.constant 0.000000e+00 : f32
    %604 = vector.shape_cast %603 : vector<1x64xi1> to vector<1x64xi1>
    %605 = vector.broadcast %604 : vector<1x64xi1> to vector<39x64xi1>
    %606 = vector.broadcast %cst_234 : f32 to vector<39x64xf32>
    %607 = arith.select %605, %505, %606 : vector<39x64xi1>, vector<39x64xf32>
    %608 = arith.truncf %607 : vector<39x64xf32> to vector<39x64xbf16>
    %609 = arith.truncf %506 : vector<39x64xf32> to vector<39x64xbf16>
    %cst_235 = arith.constant dense<0.000000e+00> : vector<39x39xf32>
    %610 = tpu.matmul %608, %609, %cst_235 {dimension_numbers = #tpu.dot_dimension_numbers<[1], [1], [0], [0], [0, 0, 1, 0], [], []>} : vector<39x64xbf16>, vector<39x64xbf16>, vector<39x39xf32> -> vector<39x39xf32>
    %cst_236 = arith.constant dense<0xFF800000> : vector<39xf32>
    %611 = vector.multi_reduction <maximumf>, %610, %cst_236 [1] : vector<39x39xf32> to vector<39xf32>
    %612 = vector.shape_cast %611 : vector<39xf32> to vector<39x1xf32>
    %613 = vector.broadcast %612 : vector<39x1xf32> to vector<39x39xf32>
    %614 = arith.subf %610, %613 : vector<39x39xf32>
    %615 = math.exp %614 : vector<39x39xf32>
    %cst_237 = arith.constant dense<0.000000e+00> : vector<39xf32>
    %616 = vector.multi_reduction <add>, %615, %cst_237 [1] : vector<39x39xf32> to vector<39xf32>
    %617 = vector.shape_cast %616 : vector<39xf32> to vector<39x1xf32>
    %618 = tpu.reciprocal %617 {approx = true} : vector<39x1xf32> -> vector<39x1xf32>
    %619 = vector.broadcast %618 : vector<39x1xf32> to vector<39x39xf32>
    %620 = arith.mulf %615, %619 : vector<39x39xf32>
    %621 = arith.truncf %620 : vector<39x39xf32> to vector<39x39xbf16>
    %622 = arith.truncf %507 : vector<39x64xf32> to vector<39x64xbf16>
    %cst_238 = arith.constant dense<0.000000e+00> : vector<39x64xf32>
    %623 = tpu.matmul %621, %622, %cst_238 {dimension_numbers = #tpu.dot_dimension_numbers<[1], [0], [0], [1], [0, 0, 1, 1], [], []>} : vector<39x39xbf16>, vector<39x64xbf16>, vector<39x64xf32> -> vector<39x64xf32>
    %cst_239 = arith.constant 0.000000e+00 : f32
    %624 = vector.shape_cast %603 : vector<1x64xi1> to vector<1x64xi1>
    %625 = vector.broadcast %624 : vector<1x64xi1> to vector<39x64xi1>
    %626 = vector.broadcast %cst_239 : f32 to vector<39x64xf32>
    %627 = arith.select %625, %623, %626 : vector<39x64xi1>, vector<39x64xf32>
    %628 = arith.addf %598, %627 : vector<39x64xf32>
    %c1_240 = arith.constant 1 : index
    %c0_241 = arith.constant 0 : index
    %c0_242 = arith.constant 0 : index
    %629 = vector.load %arg19[%c1_240, %c0_241, %c0_242] : memref<2x64x128xbf16, #tpu.memory_space<vmem>>, vector<1x64x128xbf16>
    %630 = vector.shape_cast %629 : vector<1x64x128xbf16> to vector<64x128xbf16>
    %631 = arith.truncf %628 : vector<39x64xf32> to vector<39x64xbf16>
    %cst_243 = arith.constant dense<0.000000e+00> : vector<39x128xf32>
    %632 = tpu.matmul %631, %630, %cst_243 {dimension_numbers = #tpu.dot_dimension_numbers<[1], [0], [0], [1], [0, 0, 1, 1], [], []>} : vector<39x64xbf16>, vector<64x128xbf16>, vector<39x128xf32> -> vector<39x128xf32>
    %c1_244 = arith.constant 1 : index
    %c0_245 = arith.constant 0 : index
    %c0_246 = arith.constant 0 : index
    %633 = vector.load %arg20[%c1_244, %c0_245, %c0_246] : memref<2x1x128xf32, #tpu.memory_space<vmem>>, vector<1x1x128xf32>
    %634 = vector.shape_cast %633 : vector<1x1x128xf32> to vector<1x128xf32>
    %635 = vector.broadcast %634 : vector<1x128xf32> to vector<39x128xf32>
    %636 = arith.addf %632, %635 : vector<39x128xf32>
    %637 = arith.addf %492, %636 : vector<39x128xf32>
    %c1_247 = arith.constant 1 : index
    %c0_248 = arith.constant 0 : index
    %c0_249 = arith.constant 0 : index
    %638 = vector.load %arg21[%c1_247, %c0_248, %c0_249] : memref<2x1x128xf32, #tpu.memory_space<vmem>>, vector<1x1x128xf32>
    %639 = vector.shape_cast %638 : vector<1x1x128xf32> to vector<1x128xf32>
    %c1_250 = arith.constant 1 : index
    %c0_251 = arith.constant 0 : index
    %c0_252 = arith.constant 0 : index
    %640 = vector.load %arg22[%c1_250, %c0_251, %c0_252] : memref<2x1x128xf32, #tpu.memory_space<vmem>>, vector<1x1x128xf32>
    %641 = vector.shape_cast %640 : vector<1x1x128xf32> to vector<1x128xf32>
    %cst_253 = arith.constant dense<0.000000e+00> : vector<39xf32>
    %642 = vector.multi_reduction <add>, %637, %cst_253 [1] : vector<39x128xf32> to vector<39xf32>
    %643 = vector.shape_cast %642 : vector<39xf32> to vector<39x1xf32>
    %644 = arith.mulf %637, %637 : vector<39x128xf32>
    %cst_254 = arith.constant dense<0.000000e+00> : vector<39xf32>
    %645 = vector.multi_reduction <add>, %644, %cst_254 [1] : vector<39x128xf32> to vector<39xf32>
    %646 = vector.shape_cast %645 : vector<39xf32> to vector<39x1xf32>
    %cst_255 = arith.constant 6.400000e+01 : f32
    %647 = vector.broadcast %cst_255 : f32 to vector<39x1xf32>
    %648 = arith.divf %643, %647 : vector<39x1xf32>
    %cst_256 = arith.constant 6.400000e+01 : f32
    %649 = vector.broadcast %cst_256 : f32 to vector<39x1xf32>
    %650 = arith.divf %646, %649 : vector<39x1xf32>
    %651 = arith.mulf %648, %648 : vector<39x1xf32>
    %652 = arith.subf %650, %651 : vector<39x1xf32>
    %653 = vector.broadcast %648 : vector<39x1xf32> to vector<39x128xf32>
    %654 = arith.subf %637, %653 : vector<39x128xf32>
    %cst_257 = arith.constant 9.99999974E-6 : f32
    %655 = vector.broadcast %cst_257 : f32 to vector<39x1xf32>
    %656 = arith.addf %652, %655 : vector<39x1xf32>
    %657 = math.rsqrt %656 : vector<39x1xf32>
    %658 = vector.broadcast %657 : vector<39x1xf32> to vector<39x128xf32>
    %659 = arith.mulf %654, %658 : vector<39x128xf32>
    %660 = vector.broadcast %639 : vector<1x128xf32> to vector<39x128xf32>
    %661 = arith.mulf %659, %660 : vector<39x128xf32>
    %662 = vector.broadcast %641 : vector<1x128xf32> to vector<39x128xf32>
    %663 = arith.addf %661, %662 : vector<39x128xf32>
    %c1_258 = arith.constant 1 : index
    %c0_259 = arith.constant 0 : index
    %c0_260 = arith.constant 0 : index
    %664 = vector.load %arg23[%c1_258, %c0_259, %c0_260] : memref<2x128x128xbf16, #tpu.memory_space<vmem>>, vector<1x128x128xbf16>
    %665 = vector.shape_cast %664 : vector<1x128x128xbf16> to vector<128x128xbf16>
    %666 = arith.truncf %663 : vector<39x128xf32> to vector<39x128xbf16>
    %cst_261 = arith.constant dense<0.000000e+00> : vector<39x128xf32>
    %667 = tpu.matmul %666, %665, %cst_261 {dimension_numbers = #tpu.dot_dimension_numbers<[1], [0], [0], [1], [0, 0, 1, 1], [], []>} : vector<39x128xbf16>, vector<128x128xbf16>, vector<39x128xf32> -> vector<39x128xf32>
    %c1_262 = arith.constant 1 : index
    %c0_263 = arith.constant 0 : index
    %c0_264 = arith.constant 0 : index
    %668 = vector.load %arg24[%c1_262, %c0_263, %c0_264] : memref<2x1x128xf32, #tpu.memory_space<vmem>>, vector<1x1x128xf32>
    %669 = vector.shape_cast %668 : vector<1x1x128xf32> to vector<1x128xf32>
    %670 = vector.broadcast %669 : vector<1x128xf32> to vector<39x128xf32>
    %671 = arith.addf %667, %670 : vector<39x128xf32>
    %cst_265 = arith.constant 5.000000e-01 : f32
    %672 = vector.broadcast %cst_265 : f32 to vector<39x128xf32>
    %673 = arith.mulf %672, %671 : vector<39x128xf32>
    %cst_266 = arith.constant 4.471500e-02 : f32
    %674 = vector.broadcast %cst_266 : f32 to vector<39x128xf32>
    %675 = arith.mulf %674, %671 : vector<39x128xf32>
    %676 = arith.mulf %675, %671 : vector<39x128xf32>
    %677 = arith.mulf %676, %671 : vector<39x128xf32>
    %678 = arith.addf %671, %677 : vector<39x128xf32>
    %cst_267 = arith.constant 0.797884583 : f32
    %679 = vector.broadcast %cst_267 : f32 to vector<39x128xf32>
    %680 = arith.mulf %679, %678 : vector<39x128xf32>
    %681 = math.tanh %680 : vector<39x128xf32>
    %cst_268 = arith.constant 1.000000e+00 : f32
    %682 = vector.broadcast %cst_268 : f32 to vector<39x128xf32>
    %683 = arith.addf %682, %681 : vector<39x128xf32>
    %684 = arith.mulf %673, %683 : vector<39x128xf32>
    %c1_269 = arith.constant 1 : index
    %c0_270 = arith.constant 0 : index
    %c0_271 = arith.constant 0 : index
    %685 = vector.load %arg25[%c1_269, %c0_270, %c0_271] : memref<2x128x128xbf16, #tpu.memory_space<vmem>>, vector<1x128x128xbf16>
    %686 = vector.shape_cast %685 : vector<1x128x128xbf16> to vector<128x128xbf16>
    %687 = arith.truncf %684 : vector<39x128xf32> to vector<39x128xbf16>
    %cst_272 = arith.constant dense<0.000000e+00> : vector<39x128xf32>
    %688 = tpu.matmul %687, %686, %cst_272 {dimension_numbers = #tpu.dot_dimension_numbers<[1], [0], [0], [1], [0, 0, 1, 1], [], []>} : vector<39x128xbf16>, vector<128x128xbf16>, vector<39x128xf32> -> vector<39x128xf32>
    %c1_273 = arith.constant 1 : index
    %c0_274 = arith.constant 0 : index
    %c0_275 = arith.constant 0 : index
    %689 = vector.load %arg26[%c1_273, %c0_274, %c0_275] : memref<2x1x128xf32, #tpu.memory_space<vmem>>, vector<1x1x128xf32>
    %690 = vector.shape_cast %689 : vector<1x1x128xf32> to vector<1x128xf32>
    %691 = vector.broadcast %690 : vector<1x128xf32> to vector<39x128xf32>
    %692 = arith.addf %688, %691 : vector<39x128xf32>
    %693 = arith.addf %663, %692 : vector<39x128xf32>
    %c1_276 = arith.constant 1 : index
    %c0_277 = arith.constant 0 : index
    %c0_278 = arith.constant 0 : index
    %694 = vector.load %arg27[%c1_276, %c0_277, %c0_278] : memref<2x1x128xf32, #tpu.memory_space<vmem>>, vector<1x1x128xf32>
    %695 = vector.shape_cast %694 : vector<1x1x128xf32> to vector<1x128xf32>
    %c1_279 = arith.constant 1 : index
    %c0_280 = arith.constant 0 : index
    %c0_281 = arith.constant 0 : index
    %696 = vector.load %arg28[%c1_279, %c0_280, %c0_281] : memref<2x1x128xf32, #tpu.memory_space<vmem>>, vector<1x1x128xf32>
    %697 = vector.shape_cast %696 : vector<1x1x128xf32> to vector<1x128xf32>
    %cst_282 = arith.constant dense<0.000000e+00> : vector<39xf32>
    %698 = vector.multi_reduction <add>, %693, %cst_282 [1] : vector<39x128xf32> to vector<39xf32>
    %699 = vector.shape_cast %698 : vector<39xf32> to vector<39x1xf32>
    %700 = arith.mulf %693, %693 : vector<39x128xf32>
    %cst_283 = arith.constant dense<0.000000e+00> : vector<39xf32>
    %701 = vector.multi_reduction <add>, %700, %cst_283 [1] : vector<39x128xf32> to vector<39xf32>
    %702 = vector.shape_cast %701 : vector<39xf32> to vector<39x1xf32>
    %cst_284 = arith.constant 6.400000e+01 : f32
    %703 = vector.broadcast %cst_284 : f32 to vector<39x1xf32>
    %704 = arith.divf %699, %703 : vector<39x1xf32>
    %cst_285 = arith.constant 6.400000e+01 : f32
    %705 = vector.broadcast %cst_285 : f32 to vector<39x1xf32>
    %706 = arith.divf %702, %705 : vector<39x1xf32>
    %707 = arith.mulf %704, %704 : vector<39x1xf32>
    %708 = arith.subf %706, %707 : vector<39x1xf32>
    %709 = vector.broadcast %704 : vector<39x1xf32> to vector<39x128xf32>
    %710 = arith.subf %693, %709 : vector<39x128xf32>
    %cst_286 = arith.constant 9.99999974E-6 : f32
    %711 = vector.broadcast %cst_286 : f32 to vector<39x1xf32>
    %712 = arith.addf %708, %711 : vector<39x1xf32>
    %713 = math.rsqrt %712 : vector<39x1xf32>
    %714 = vector.broadcast %713 : vector<39x1xf32> to vector<39x128xf32>
    %715 = arith.mulf %710, %714 : vector<39x128xf32>
    %716 = vector.broadcast %695 : vector<1x128xf32> to vector<39x128xf32>
    %717 = arith.mulf %715, %716 : vector<39x128xf32>
    %718 = vector.broadcast %697 : vector<1x128xf32> to vector<39x128xf32>
    %719 = arith.addf %717, %718 : vector<39x128xf32>
    %720 = vector.extract_strided_slice %265 {offsets = [0, 2], sizes = [1, 1], strides = [1, 1]} : vector<1x3xf32> to vector<1x1xf32>
    %721 = vector.broadcast %720 : vector<1x1xf32> to vector<39x128xf32>
    %722 = arith.mulf %721, %719 : vector<39x128xf32>
    %723 = arith.addf %496, %722 : vector<39x128xf32>
    %c0_287 = arith.constant 0 : index
    %c0_288 = arith.constant 0 : index
    %724 = vector.load %arg29[%c0_287, %c0_288] : memref<128x128xbf16, #tpu.memory_space<vmem>>, vector<128x128xbf16>
    %725 = arith.truncf %723 : vector<39x128xf32> to vector<39x128xbf16>
    %cst_289 = arith.constant dense<0.000000e+00> : vector<39x128xf32>
    %726 = tpu.matmul %725, %724, %cst_289 {dimension_numbers = #tpu.dot_dimension_numbers<[1], [0], [0], [1], [0, 0, 1, 1], [], []>} : vector<39x128xbf16>, vector<128x128xbf16>, vector<39x128xf32> -> vector<39x128xf32>
    %c0_290 = arith.constant 0 : index
    %c0_291 = arith.constant 0 : index
    %727 = vector.load %arg30[%c0_290, %c0_291] : memref<1x128xf32, #tpu.memory_space<vmem>>, vector<1x128xf32>
    %728 = vector.broadcast %727 : vector<1x128xf32> to vector<39x128xf32>
    %729 = arith.addf %726, %728 : vector<39x128xf32>
    %730 = vector.extract_strided_slice %729 {offsets = [0, 0], sizes = [35, 128], strides = [1, 1]} : vector<39x128xf32> to vector<35x128xf32>
    %c0_292 = arith.constant 0 : index
    %c0_293 = arith.constant 0 : index
    %c0_294 = arith.constant 0 : index
    %731 = vector.load %arg31[%c0_292, %c0_293, %c0_294] : memref<5x128x128xbf16, #tpu.memory_space<vmem>>, vector<1x128x128xbf16>
    %732 = vector.shape_cast %731 : vector<1x128x128xbf16> to vector<128x128xbf16>
    %733 = arith.truncf %730 : vector<35x128xf32> to vector<35x128xbf16>
    %cst_295 = arith.constant dense<0.000000e+00> : vector<35x128xf32>
    %734 = tpu.matmul %733, %732, %cst_295 {dimension_numbers = #tpu.dot_dimension_numbers<[1], [0], [0], [1], [0, 0, 1, 1], [], []>} : vector<35x128xbf16>, vector<128x128xbf16>, vector<35x128xf32> -> vector<35x128xf32>
    %735 = vector.extract_strided_slice %729 {offsets = [1, 0], sizes = [35, 128], strides = [1, 1]} : vector<39x128xf32> to vector<35x128xf32>
    %c1_296 = arith.constant 1 : index
    %c0_297 = arith.constant 0 : index
    %c0_298 = arith.constant 0 : index
    %736 = vector.load %arg31[%c1_296, %c0_297, %c0_298] : memref<5x128x128xbf16, #tpu.memory_space<vmem>>, vector<1x128x128xbf16>
    %737 = vector.shape_cast %736 : vector<1x128x128xbf16> to vector<128x128xbf16>
    %738 = arith.truncf %735 : vector<35x128xf32> to vector<35x128xbf16>
    %cst_299 = arith.constant dense<0.000000e+00> : vector<35x128xf32>
    %739 = tpu.matmul %738, %737, %cst_299 {dimension_numbers = #tpu.dot_dimension_numbers<[1], [0], [0], [1], [0, 0, 1, 1], [], []>} : vector<35x128xbf16>, vector<128x128xbf16>, vector<35x128xf32> -> vector<35x128xf32>
    %740 = arith.addf %734, %739 : vector<35x128xf32>
    %741 = vector.extract_strided_slice %729 {offsets = [2, 0], sizes = [35, 128], strides = [1, 1]} : vector<39x128xf32> to vector<35x128xf32>
    %c2_300 = arith.constant 2 : index
    %c0_301 = arith.constant 0 : index
    %c0_302 = arith.constant 0 : index
    %742 = vector.load %arg31[%c2_300, %c0_301, %c0_302] : memref<5x128x128xbf16, #tpu.memory_space<vmem>>, vector<1x128x128xbf16>
    %743 = vector.shape_cast %742 : vector<1x128x128xbf16> to vector<128x128xbf16>
    %744 = arith.truncf %741 : vector<35x128xf32> to vector<35x128xbf16>
    %cst_303 = arith.constant dense<0.000000e+00> : vector<35x128xf32>
    %745 = tpu.matmul %744, %743, %cst_303 {dimension_numbers = #tpu.dot_dimension_numbers<[1], [0], [0], [1], [0, 0, 1, 1], [], []>} : vector<35x128xbf16>, vector<128x128xbf16>, vector<35x128xf32> -> vector<35x128xf32>
    %746 = arith.addf %740, %745 : vector<35x128xf32>
    %747 = vector.extract_strided_slice %729 {offsets = [3, 0], sizes = [35, 128], strides = [1, 1]} : vector<39x128xf32> to vector<35x128xf32>
    %c3_304 = arith.constant 3 : index
    %c0_305 = arith.constant 0 : index
    %c0_306 = arith.constant 0 : index
    %748 = vector.load %arg31[%c3_304, %c0_305, %c0_306] : memref<5x128x128xbf16, #tpu.memory_space<vmem>>, vector<1x128x128xbf16>
    %749 = vector.shape_cast %748 : vector<1x128x128xbf16> to vector<128x128xbf16>
    %750 = arith.truncf %747 : vector<35x128xf32> to vector<35x128xbf16>
    %cst_307 = arith.constant dense<0.000000e+00> : vector<35x128xf32>
    %751 = tpu.matmul %750, %749, %cst_307 {dimension_numbers = #tpu.dot_dimension_numbers<[1], [0], [0], [1], [0, 0, 1, 1], [], []>} : vector<35x128xbf16>, vector<128x128xbf16>, vector<35x128xf32> -> vector<35x128xf32>
    %752 = arith.addf %746, %751 : vector<35x128xf32>
    %753 = vector.extract_strided_slice %729 {offsets = [4, 0], sizes = [35, 128], strides = [1, 1]} : vector<39x128xf32> to vector<35x128xf32>
    %c4_308 = arith.constant 4 : index
    %c0_309 = arith.constant 0 : index
    %c0_310 = arith.constant 0 : index
    %754 = vector.load %arg31[%c4_308, %c0_309, %c0_310] : memref<5x128x128xbf16, #tpu.memory_space<vmem>>, vector<1x128x128xbf16>
    %755 = vector.shape_cast %754 : vector<1x128x128xbf16> to vector<128x128xbf16>
    %756 = arith.truncf %753 : vector<35x128xf32> to vector<35x128xbf16>
    %cst_311 = arith.constant dense<0.000000e+00> : vector<35x128xf32>
    %757 = tpu.matmul %756, %755, %cst_311 {dimension_numbers = #tpu.dot_dimension_numbers<[1], [0], [0], [1], [0, 0, 1, 1], [], []>} : vector<35x128xbf16>, vector<128x128xbf16>, vector<35x128xf32> -> vector<35x128xf32>
    %758 = arith.addf %752, %757 : vector<35x128xf32>
    %c0_312 = arith.constant 0 : index
    %c0_313 = arith.constant 0 : index
    %759 = vector.load %arg32[%c0_312, %c0_313] : memref<1x128xf32, #tpu.memory_space<vmem>>, vector<1x128xf32>
    %760 = vector.broadcast %759 : vector<1x128xf32> to vector<35x128xf32>
    %761 = arith.addf %758, %760 : vector<35x128xf32>
    %cst_314 = arith.constant 0.000000e+00 : f32
    %762 = vector.broadcast %cst_314 : f32 to vector<35x128xf32>
    %763 = arith.maximumf %761, %762 : vector<35x128xf32>
    %764 = vector.extract_strided_slice %763 {offsets = [0, 0], sizes = [31, 128], strides = [1, 1]} : vector<35x128xf32> to vector<31x128xf32>
    %c0_315 = arith.constant 0 : index
    %c0_316 = arith.constant 0 : index
    %c0_317 = arith.constant 0 : index
    %765 = vector.load %arg33[%c0_315, %c0_316, %c0_317] : memref<3x128x128xbf16, #tpu.memory_space<vmem>>, vector<1x128x128xbf16>
    %766 = vector.shape_cast %765 : vector<1x128x128xbf16> to vector<128x128xbf16>
    %767 = arith.truncf %764 : vector<31x128xf32> to vector<31x128xbf16>
    %cst_318 = arith.constant dense<0.000000e+00> : vector<31x128xf32>
    %768 = tpu.matmul %767, %766, %cst_318 {dimension_numbers = #tpu.dot_dimension_numbers<[1], [0], [0], [1], [0, 0, 1, 1], [], []>} : vector<31x128xbf16>, vector<128x128xbf16>, vector<31x128xf32> -> vector<31x128xf32>
    %769 = vector.extract_strided_slice %763 {offsets = [2, 0], sizes = [31, 128], strides = [1, 1]} : vector<35x128xf32> to vector<31x128xf32>
    %c1_319 = arith.constant 1 : index
    %c0_320 = arith.constant 0 : index
    %c0_321 = arith.constant 0 : index
    %770 = vector.load %arg33[%c1_319, %c0_320, %c0_321] : memref<3x128x128xbf16, #tpu.memory_space<vmem>>, vector<1x128x128xbf16>
    %771 = vector.shape_cast %770 : vector<1x128x128xbf16> to vector<128x128xbf16>
    %772 = arith.truncf %769 : vector<31x128xf32> to vector<31x128xbf16>
    %cst_322 = arith.constant dense<0.000000e+00> : vector<31x128xf32>
    %773 = tpu.matmul %772, %771, %cst_322 {dimension_numbers = #tpu.dot_dimension_numbers<[1], [0], [0], [1], [0, 0, 1, 1], [], []>} : vector<31x128xbf16>, vector<128x128xbf16>, vector<31x128xf32> -> vector<31x128xf32>
    %774 = arith.addf %768, %773 : vector<31x128xf32>
    %775 = vector.extract_strided_slice %763 {offsets = [4, 0], sizes = [31, 128], strides = [1, 1]} : vector<35x128xf32> to vector<31x128xf32>
    %c2_323 = arith.constant 2 : index
    %c0_324 = arith.constant 0 : index
    %c0_325 = arith.constant 0 : index
    %776 = vector.load %arg33[%c2_323, %c0_324, %c0_325] : memref<3x128x128xbf16, #tpu.memory_space<vmem>>, vector<1x128x128xbf16>
    %777 = vector.shape_cast %776 : vector<1x128x128xbf16> to vector<128x128xbf16>
    %778 = arith.truncf %775 : vector<31x128xf32> to vector<31x128xbf16>
    %cst_326 = arith.constant dense<0.000000e+00> : vector<31x128xf32>
    %779 = tpu.matmul %778, %777, %cst_326 {dimension_numbers = #tpu.dot_dimension_numbers<[1], [0], [0], [1], [0, 0, 1, 1], [], []>} : vector<31x128xbf16>, vector<128x128xbf16>, vector<31x128xf32> -> vector<31x128xf32>
    %780 = arith.addf %774, %779 : vector<31x128xf32>
    %c0_327 = arith.constant 0 : index
    %c0_328 = arith.constant 0 : index
    %781 = vector.load %arg34[%c0_327, %c0_328] : memref<1x128xf32, #tpu.memory_space<vmem>>, vector<1x128xf32>
    %782 = vector.broadcast %781 : vector<1x128xf32> to vector<31x128xf32>
    %783 = arith.addf %780, %782 : vector<31x128xf32>
    %cst_329 = arith.constant 0.000000e+00 : f32
    %784 = vector.broadcast %cst_329 : f32 to vector<31x128xf32>
    %785 = arith.maximumf %783, %784 : vector<31x128xf32>
    %c0_330 = arith.constant 0 : index
    %c0_331 = arith.constant 0 : index
    %c0_332 = arith.constant 0 : index
    %786 = vector.load %arg35[%c0_330, %c0_331, %c0_332] : memref<1x128x128xbf16, #tpu.memory_space<vmem>>, vector<1x128x128xbf16>
    %787 = vector.shape_cast %786 : vector<1x128x128xbf16> to vector<128x128xbf16>
    %788 = arith.truncf %785 : vector<31x128xf32> to vector<31x128xbf16>
    %cst_333 = arith.constant dense<0.000000e+00> : vector<31x128xf32>
    %789 = tpu.matmul %788, %787, %cst_333 {dimension_numbers = #tpu.dot_dimension_numbers<[1], [0], [0], [1], [0, 0, 1, 1], [], []>} : vector<31x128xbf16>, vector<128x128xbf16>, vector<31x128xf32> -> vector<31x128xf32>
    %c0_334 = arith.constant 0 : index
    %c0_335 = arith.constant 0 : index
    %790 = vector.load %arg36[%c0_334, %c0_335] : memref<1x128xf32, #tpu.memory_space<vmem>>, vector<1x128xf32>
    %791 = vector.broadcast %790 : vector<1x128xf32> to vector<31x128xf32>
    %792 = arith.addf %789, %791 : vector<31x128xf32>
    %cst_336 = arith.constant 0.000000e+00 : f32
    %793 = vector.broadcast %cst_336 : f32 to vector<31x128xf32>
    %794 = arith.maximumf %792, %793 : vector<31x128xf32>
    %cst_337 = arith.constant dense<0.000000e+00> : vector<128xf32>
    %795 = vector.multi_reduction <add>, %794, %cst_337 [0] : vector<31x128xf32> to vector<128xf32>
    %796 = vector.shape_cast %795 : vector<128xf32> to vector<1x128xf32>
    %cst_338 = arith.constant 3.100000e+01 : f32
    %797 = vector.broadcast %cst_338 : f32 to vector<1x128xf32>
    %798 = arith.divf %796, %797 : vector<1x128xf32>
    %799 = vector.broadcast %798 : vector<1x128xf32> to vector<31x128xf32>
    %800 = arith.subf %794, %799 : vector<31x128xf32>
    %801 = arith.mulf %800, %800 : vector<31x128xf32>
    %cst_339 = arith.constant dense<0.000000e+00> : vector<128xf32>
    %802 = vector.multi_reduction <add>, %801, %cst_339 [0] : vector<31x128xf32> to vector<128xf32>
    %803 = vector.shape_cast %802 : vector<128xf32> to vector<1x128xf32>
    %cst_340 = arith.constant 3.000000e+01 : f32
    %804 = vector.broadcast %cst_340 : f32 to vector<1x128xf32>
    %805 = arith.divf %803, %804 : vector<1x128xf32>
    %806 = math.sqrt %805 : vector<1x128xf32>
    %807 = tpu.concatenate %798, %806 in 1 : vector<1x128xf32>, vector<1x128xf32> -> vector<1x256xf32>
    %c0_341 = arith.constant 0 : index
    %c0_342 = arith.constant 0 : index
    %808 = vector.load %arg37[%c0_341, %c0_342] : memref<256x128xbf16, #tpu.memory_space<vmem>>, vector<256x128xbf16>
    %809 = arith.truncf %807 : vector<1x256xf32> to vector<1x256xbf16>
    %cst_343 = arith.constant dense<0.000000e+00> : vector<1x128xf32>
    %810 = tpu.matmul %809, %808, %cst_343 {dimension_numbers = #tpu.dot_dimension_numbers<[1], [0], [0], [1], [0, 0, 1, 1], [], []>} : vector<1x256xbf16>, vector<256x128xbf16>, vector<1x128xf32> -> vector<1x128xf32>
    %c0_344 = arith.constant 0 : index
    %c0_345 = arith.constant 0 : index
    %811 = vector.load %arg38[%c0_344, %c0_345] : memref<1x128xf32, #tpu.memory_space<vmem>>, vector<1x128xf32>
    %812 = arith.addf %810, %811 : vector<1x128xf32>
    %813 = arith.mulf %812, %812 : vector<1x128xf32>
    %cst_346 = arith.constant dense<0.000000e+00> : vector<1xf32>
    %814 = vector.multi_reduction <add>, %813, %cst_346 [1] : vector<1x128xf32> to vector<1xf32>
    %815 = vector.shape_cast %814 : vector<1xf32> to vector<1x1xf32>
    %cst_347 = arith.constant 1.000000e-24 : f32
    %816 = vector.broadcast %cst_347 : f32 to vector<1x1xf32>
    %817 = arith.maximumf %815, %816 : vector<1x1xf32>
    %818 = math.rsqrt %817 : vector<1x1xf32>
    %819 = vector.broadcast %818 : vector<1x1xf32> to vector<1x128xf32>
    %820 = arith.mulf %812, %819 : vector<1x128xf32>
    %c0_348 = arith.constant 0 : index
    %c0_349 = arith.constant 0 : index
    %c0_350 = arith.constant 0 : index
    %821 = vector.load %arg39[%c0_348, %c0_349, %c0_350] : memref<1x1x128xf32, #tpu.memory_space<vmem>>, vector<1x1x128xf32>
    %822 = vector.shape_cast %821 : vector<1x1x128xf32> to vector<1x128xf32>
    %823 = vector.shape_cast %820 : vector<1x128xf32> to vector<1x1x128xf32>
    tpu.vector_store %arg39[%c0_348, %c0_349, %c0_350], %823 {strides = array<i32>} : memref<1x1x128xf32, #tpu.memory_space<vmem>>, vector<1x1x128xf32>,
    return
  }
  func.func @transform_0(%arg0: i32) -> (i32, i32, i32) {
    %c0_i32 = arith.constant 0 : i32
    %c0_i32_0 = arith.constant 0 : i32
    %c0_i32_1 = arith.constant 0 : i32
    return %arg0, %c0_i32, %c0_i32_0 : i32, i32, i32
  }
  func.func @transform_1(%arg0: i32) -> (i32, i32) {
    %c0_i32 = arith.constant 0 : i32
    %c0_i32_0 = arith.constant 0 : i32
    %c0_i32_1 = arith.constant 0 : i32
    return %c0_i32, %c0_i32_0 : i32, i32
  }
  func.func @transform_2(%arg0: i32) -> (i32, i32) {
    %c0_i32 = arith.constant 0 : i32
    %c0_i32_0 = arith.constant 0 : i32
    %c0_i32_1 = arith.constant 0 : i32
    return %c0_i32, %c0_i32_0 : i32, i32
  }
  func.func @transform_3(%arg0: i32) -> (i32, i32) {
    %c0_i32 = arith.constant 0 : i32
    %c0_i32_0 = arith.constant 0 : i32
    %c0_i32_1 = arith.constant 0 : i32
    return %c0_i32, %c0_i32_0 : i32, i32
  }
  func.func @transform_4(%arg0: i32) -> (i32, i32) {
    %c0_i32 = arith.constant 0 : i32
    %c0_i32_0 = arith.constant 0 : i32
    %c0_i32_1 = arith.constant 0 : i32
    return %c0_i32, %c0_i32_0 : i32, i32
  }
  func.func @transform_5(%arg0: i32) -> (i32, i32) {
    %c0_i32 = arith.constant 0 : i32
    %c0_i32_0 = arith.constant 0 : i32
    %c0_i32_1 = arith.constant 0 : i32
    return %c0_i32, %c0_i32_0 : i32, i32
  }
  func.func @transform_6(%arg0: i32) -> (i32, i32) {
    %c0_i32 = arith.constant 0 : i32
    %c0_i32_0 = arith.constant 0 : i32
    %c0_i32_1 = arith.constant 0 : i32
    return %c0_i32, %c0_i32_0 : i32, i32
  }
  func.func @transform_7(%arg0: i32) -> (i32, i32, i32) {
    %c0_i32 = arith.constant 0 : i32
    %c0_i32_0 = arith.constant 0 : i32
    %c0_i32_1 = arith.constant 0 : i32
    %c0_i32_2 = arith.constant 0 : i32
    return %c0_i32, %c0_i32_0, %c0_i32_1 : i32, i32, i32
  }
  func.func @transform_8(%arg0: i32) -> (i32, i32) {
    %c0_i32 = arith.constant 0 : i32
    %c0_i32_0 = arith.constant 0 : i32
    %c0_i32_1 = arith.constant 0 : i32
    return %c0_i32, %c0_i32_0 : i32, i32
  }
  func.func @transform_9(%arg0: i32) -> (i32, i32) {
    %c0_i32 = arith.constant 0 : i32
    %c0_i32_0 = arith.constant 0 : i32
    %c0_i32_1 = arith.constant 0 : i32
    return %c0_i32, %c0_i32_0 : i32, i32
  }
  func.func @transform_10(%arg0: i32) -> (i32, i32) {
    %c0_i32 = arith.constant 0 : i32
    %c0_i32_0 = arith.constant 0 : i32
    %c0_i32_1 = arith.constant 0 : i32
    return %c0_i32, %c0_i32_0 : i32, i32
  }
  func.func @transform_11(%arg0: i32) -> (i32, i32) {
    %c0_i32 = arith.constant 0 : i32
    %c0_i32_0 = arith.constant 0 : i32
    %c0_i32_1 = arith.constant 0 : i32
    return %c0_i32, %c0_i32_0 : i32, i32
  }
  func.func @transform_12(%arg0: i32) -> (i32, i32, i32) {
    %c0_i32 = arith.constant 0 : i32
    %c0_i32_0 = arith.constant 0 : i32
    %c0_i32_1 = arith.constant 0 : i32
    %c0_i32_2 = arith.constant 0 : i32
    return %c0_i32, %c0_i32_0, %c0_i32_1 : i32, i32, i32
  }
  func.func @transform_13(%arg0: i32) -> (i32, i32) {
    %c0_i32 = arith.constant 0 : i32
    %c0_i32_0 = arith.constant 0 : i32
    %c0_i32_1 = arith.constant 0 : i32
    return %c0_i32, %c0_i32_0 : i32, i32
  }
  func.func @transform_14(%arg0: i32) -> (i32, i32) {
    %c0_i32 = arith.constant 0 : i32
    %c0_i32_0 = arith.constant 0 : i32
    %c0_i32_1 = arith.constant 0 : i32
    return %c0_i32, %c0_i32_0 : i32, i32
  }
  func.func @transform_15(%arg0: i32) -> (i32, i32) {
    %c0_i32 = arith.constant 0 : i32
    %c0_i32_0 = arith.constant 0 : i32
    %c0_i32_1 = arith.constant 0 : i32
    return %c0_i32, %c0_i32_0 : i32, i32
  }
  func.func @transform_16(%arg0: i32) -> (i32, i32, i32) {
    %c0_i32 = arith.constant 0 : i32
    %c0_i32_0 = arith.constant 0 : i32
    %c0_i32_1 = arith.constant 0 : i32
    %c0_i32_2 = arith.constant 0 : i32
    return %c0_i32, %c0_i32_0, %c0_i32_1 : i32, i32, i32
  }
  func.func @transform_17(%arg0: i32) -> (i32, i32, i32) {
    %c0_i32 = arith.constant 0 : i32
    %c0_i32_0 = arith.constant 0 : i32
    %c0_i32_1 = arith.constant 0 : i32
    %c0_i32_2 = arith.constant 0 : i32
    return %c0_i32, %c0_i32_0, %c0_i32_1 : i32, i32, i32
  }
  func.func @transform_18(%arg0: i32) -> (i32, i32, i32) {
    %c0_i32 = arith.constant 0 : i32
    %c0_i32_0 = arith.constant 0 : i32
    %c0_i32_1 = arith.constant 0 : i32
    %c0_i32_2 = arith.constant 0 : i32
    return %c0_i32, %c0_i32_0, %c0_i32_1 : i32, i32, i32
  }
  func.func @transform_19(%arg0: i32) -> (i32, i32, i32) {
    %c0_i32 = arith.constant 0 : i32
    %c0_i32_0 = arith.constant 0 : i32
    %c0_i32_1 = arith.constant 0 : i32
    %c0_i32_2 = arith.constant 0 : i32
    return %c0_i32, %c0_i32_0, %c0_i32_1 : i32, i32, i32
  }
  func.func @transform_20(%arg0: i32) -> (i32, i32, i32) {
    %c0_i32 = arith.constant 0 : i32
    %c0_i32_0 = arith.constant 0 : i32
    %c0_i32_1 = arith.constant 0 : i32
    %c0_i32_2 = arith.constant 0 : i32
    return %c0_i32, %c0_i32_0, %c0_i32_1 : i32, i32, i32
  }
  func.func @transform_21(%arg0: i32) -> (i32, i32, i32) {
    %c0_i32 = arith.constant 0 : i32
    %c0_i32_0 = arith.constant 0 : i32
    %c0_i32_1 = arith.constant 0 : i32
    %c0_i32_2 = arith.constant 0 : i32
    return %c0_i32, %c0_i32_0, %c0_i32_1 : i32, i32, i32
  }
  func.func @transform_22(%arg0: i32) -> (i32, i32, i32) {
    %c0_i32 = arith.constant 0 : i32
    %c0_i32_0 = arith.constant 0 : i32
    %c0_i32_1 = arith.constant 0 : i32
    %c0_i32_2 = arith.constant 0 : i32
    return %c0_i32, %c0_i32_0, %c0_i32_1 : i32, i32, i32
  }
  func.func @transform_23(%arg0: i32) -> (i32, i32, i32) {
    %c0_i32 = arith.constant 0 : i32
    %c0_i32_0 = arith.constant 0 : i32
    %c0_i32_1 = arith.constant 0 : i32
    %c0_i32_2 = arith.constant 0 : i32
    return %c0_i32, %c0_i32_0, %c0_i32_1 : i32, i32, i32
  }
  func.func @transform_24(%arg0: i32) -> (i32, i32, i32) {
    %c0_i32 = arith.constant 0 : i32
    %c0_i32_0 = arith.constant 0 : i32
    %c0_i32_1 = arith.constant 0 : i32
    %c0_i32_2 = arith.constant 0 : i32
    return %c0_i32, %c0_i32_0, %c0_i32_1 : i32, i32, i32
  }
  func.func @transform_25(%arg0: i32) -> (i32, i32, i32) {
    %c0_i32 = arith.constant 0 : i32
    %c0_i32_0 = arith.constant 0 : i32
    %c0_i32_1 = arith.constant 0 : i32
    %c0_i32_2 = arith.constant 0 : i32
    return %c0_i32, %c0_i32_0, %c0_i32_1 : i32, i32, i32
  }
  func.func @transform_26(%arg0: i32) -> (i32, i32, i32) {
    %c0_i32 = arith.constant 0 : i32
    %c0_i32_0 = arith.constant 0 : i32
    %c0_i32_1 = arith.constant 0 : i32
    %c0_i32_2 = arith.constant 0 : i32
    return %c0_i32, %c0_i32_0, %c0_i32_1 : i32, i32, i32
  }
  func.func @transform_27(%arg0: i32) -> (i32, i32, i32) {
    %c0_i32 = arith.constant 0 : i32
    %c0_i32_0 = arith.constant 0 : i32
    %c0_i32_1 = arith.constant 0 : i32
    %c0_i32_2 = arith.constant 0 : i32
    return %c0_i32, %c0_i32_0, %c0_i32_1 : i32, i32, i32
  }
  func.func @transform_28(%arg0: i32) -> (i32, i32) {
    %c0_i32 = arith.constant 0 : i32
    %c0_i32_0 = arith.constant 0 : i32
    %c0_i32_1 = arith.constant 0 : i32
    return %c0_i32, %c0_i32_0 : i32, i32
  }
  func.func @transform_29(%arg0: i32) -> (i32, i32) {
    %c0_i32 = arith.constant 0 : i32
    %c0_i32_0 = arith.constant 0 : i32
    %c0_i32_1 = arith.constant 0 : i32
    return %c0_i32, %c0_i32_0 : i32, i32
  }
  func.func @transform_30(%arg0: i32) -> (i32, i32, i32) {
    %c0_i32 = arith.constant 0 : i32
    %c0_i32_0 = arith.constant 0 : i32
    %c0_i32_1 = arith.constant 0 : i32
    %c0_i32_2 = arith.constant 0 : i32
    return %c0_i32, %c0_i32_0, %c0_i32_1 : i32, i32, i32
  }
  func.func @transform_31(%arg0: i32) -> (i32, i32) {
    %c0_i32 = arith.constant 0 : i32
    %c0_i32_0 = arith.constant 0 : i32
    %c0_i32_1 = arith.constant 0 : i32
    return %c0_i32, %c0_i32_0 : i32, i32
  }
  func.func @transform_32(%arg0: i32) -> (i32, i32, i32) {
    %c0_i32 = arith.constant 0 : i32
    %c0_i32_0 = arith.constant 0 : i32
    %c0_i32_1 = arith.constant 0 : i32
    %c0_i32_2 = arith.constant 0 : i32
    return %c0_i32, %c0_i32_0, %c0_i32_1 : i32, i32, i32
  }
  func.func @transform_33(%arg0: i32) -> (i32, i32) {
    %c0_i32 = arith.constant 0 : i32
    %c0_i32_0 = arith.constant 0 : i32
    %c0_i32_1 = arith.constant 0 : i32
    return %c0_i32, %c0_i32_0 : i32, i32
  }
  func.func @transform_34(%arg0: i32) -> (i32, i32, i32) {
    %c0_i32 = arith.constant 0 : i32
    %c0_i32_0 = arith.constant 0 : i32
    %c0_i32_1 = arith.constant 0 : i32
    %c0_i32_2 = arith.constant 0 : i32
    return %c0_i32, %c0_i32_0, %c0_i32_1 : i32, i32, i32
  }
  func.func @transform_35(%arg0: i32) -> (i32, i32) {
    %c0_i32 = arith.constant 0 : i32
    %c0_i32_0 = arith.constant 0 : i32
    %c0_i32_1 = arith.constant 0 : i32
    return %c0_i32, %c0_i32_0 : i32, i32
  }
  func.func @transform_36(%arg0: i32) -> (i32, i32) {
    %c0_i32 = arith.constant 0 : i32
    %c0_i32_0 = arith.constant 0 : i32
    %c0_i32_1 = arith.constant 0 : i32
    return %c0_i32, %c0_i32_0 : i32, i32
  }
  func.func @transform_37(%arg0: i32) -> (i32, i32) {
    %c0_i32 = arith.constant 0 : i32
    %c0_i32_0 = arith.constant 0 : i32
    %c0_i32_1 = arith.constant 0 : i32
    return %c0_i32, %c0_i32_0 : i32, i32
  }
  func.func @transform_38(%arg0: i32) -> (i32, i32, i32) {
    %c0_i32 = arith.constant 0 : i32
    %c0_i32_0 = arith.constant 0 : i32
    %c0_i32_1 = arith.constant 0 : i32
    return %arg0, %c0_i32, %c0_i32_0 : i32, i32, i32
  }
}

</mosaic_0001>

<llo_original>
// kernel: wavlm_base_forward.1
$region0: #{wavlm_base_forward.1}
  #allocation0 [shape = 'u32[]', space=smem, size = 0x4, offset = 0x4, fixed_abs, tag = 'smem constant byte address 0x4 - core index']
  #allocation1 [shape = 'u32[144,128]{1,0:T(1,128)}', space=vmem, size = 0x12000, scoped, tag = 'internal scratch']
  %s0 = inlined_call_operand.smem [shape: u32[39], index: -1, kind: input, shape index: {}]
  %s1 = sld [smem:[%s0]]
  %s2 = scalar_lea.smem %s0, 1
  %s3 = sld [smem:[%s2]]
  %s4 = scalar_lea.smem %s0, 2
  %s5 = sld [smem:[%s4]]
  %s6 = scalar_lea.smem %s0, 3
  %s7 = sld [smem:[%s6]]
  %s8 = scalar_lea.smem %s0, 4
  %s9 = sld [smem:[%s8]]
  %s10 = scalar_lea.smem %s0, 5
  %s11 = sld [smem:[%s10]]
  %s12 = scalar_lea.smem %s0, 6
  %s13 = sld [smem:[%s12]]
  %s14 = scalar_lea.smem %s0, 7
  %s15 = sld [smem:[%s14]]
  %s16 = scalar_lea.smem %s0, 8
  %s17 = sld [smem:[%s16]]
  %s18 = scalar_lea.smem %s0, 9
  %s19 = sld [smem:[%s18]]
  %s20 = scalar_lea.smem %s0, 10
  %s21 = sld [smem:[%s20]]
  %s22 = scalar_lea.smem %s0, 11
  %s23 = sld [smem:[%s22]]
  %s24 = scalar_lea.smem %s0, 12
  %s25 = sld [smem:[%s24]]
  %s26 = scalar_lea.smem %s0, 13
  %s27 = sld [smem:[%s26]]
  %s28 = scalar_lea.smem %s0, 14
  %s29 = sld [smem:[%s28]]
  %s30 = scalar_lea.smem %s0, 15
  %s31 = sld [smem:[%s30]]
  %s32 = scalar_lea.smem %s0, 16
  %s33 = sld [smem:[%s32]]
  %s34 = scalar_lea.smem %s0, 17
  %s35 = sld [smem:[%s34]]
  %s36 = scalar_lea.smem %s0, 18
  %s37 = sld [smem:[%s36]]
  %s38 = scalar_lea.smem %s0, 19
  %s39 = sld [smem:[%s38]]
  %s40 = scalar_lea.smem %s0, 20
  %s41 = sld [smem:[%s40]]
  %s42 = scalar_lea.smem %s0, 21
  %s43 = sld [smem:[%s42]]
  %s44 = scalar_lea.smem %s0, 22
  %s45 = sld [smem:[%s44]]
  %s46 = scalar_lea.smem %s0, 23
  %s47 = sld [smem:[%s46]]
  %s48 = scalar_lea.smem %s0, 24
  %s49 = sld [smem:[%s48]]
  %s50 = scalar_lea.smem %s0, 25
  %s51 = sld [smem:[%s50]]
  %s52 = scalar_lea.smem %s0, 26
  %s53 = sld [smem:[%s52]]
  %s54 = scalar_lea.smem %s0, 27
  %s55 = sld [smem:[%s54]]
  %s56 = scalar_lea.smem %s0, 28
  %s57 = sld [smem:[%s56]]
  %s58 = scalar_lea.smem %s0, 29
  %s59 = sld [smem:[%s58]]
  %s60 = scalar_lea.smem %s0, 30
  %s61 = sld [smem:[%s60]]
  %s62 = scalar_lea.smem %s0, 31
  %s63 = sld [smem:[%s62]]
  %s64 = scalar_lea.smem %s0, 32
  %s65 = sld [smem:[%s64]]
  %s66 = scalar_lea.smem %s0, 33
  %s67 = sld [smem:[%s66]]
  %s68 = scalar_lea.smem %s0, 34
  %s69 = sld [smem:[%s68]]
  %s70 = scalar_lea.smem %s0, 35
  %s71 = sld [smem:[%s70]]
  %s72 = scalar_lea.smem %s0, 36
  %s73 = sld [smem:[%s72]]
  %s74 = scalar_lea.smem %s0, 37
  %s75 = sld [smem:[%s74]]
  %s76 = scalar_lea.smem %s0, 38
  %s77 = sld [smem:[%s76]]
  %s78 = sld [smem:[#allocation0]]
  $region297: #{wavlm_base_forward.1} parent=0
    _
  %s80 = ssub.s32 1, %s78
  %s81 = scalar_select 0, %s80, %s78
  $region1: #{wavlm_base_forward.1} parent=0
    #allocation2 [shape = 'u8[4096]{0}', space=vmem, size = 0x1000, scoped, tag = 'input window, operand 2, single buffered']
    #allocation3 [shape = 's32[2]{0}', space=sflag, size = 0x8, scoped, tag = 'scoped memory for wavlm_base_forward.1']
    #allocation4 [shape = 's32[2]{0}', space=sflag, size = 0x8, scoped, tag = 'scoped memory for wavlm_base_forward.1']
    #allocation5 [shape = 'u8[4096]{0}', space=vmem, size = 0x1000, scoped, tag = 'input window, operand 3, single buffered']
    #allocation6 [shape = 's32[1]{0}', space=sflag, size = 0x4, scoped, tag = 'scoped memory for wavlm_base_forward.1']
    #allocation7 [shape = 'u8[4096]{0}', space=vmem, size = 0x1000, scoped, tag = 'input window, operand 4, single buffered']
    #allocation8 [shape = 'u8[512]{0}', space=vmem, size = 0x400, scoped, tag = 'input window, operand 6, single buffered']
    #allocation9 [shape = 's32[1]{0}', space=sflag, size = 0x4, scoped, tag = 'scoped memory for wavlm_base_forward.1']
    #allocation10 [shape = 'u8[24576]{0}', space=vmem, size = 0x6000, scoped, tag = 'input window, operand 7, single buffered']
    #allocation11 [shape = 'u8[512]{0}', space=vmem, size = 0x400, scoped, tag = 'input window, operand 8, single buffered']
    #allocation12 [shape = 's32[1]{0}', space=sflag, size = 0x4, scoped, tag = 'scoped memory for wavlm_base_forward.1']
    #allocation13 [shape = 'u8[512]{0}', space=vmem, size = 0x400, scoped, tag = 'input window, operand 9, single buffered']
    #allocation14 [shape = 'u8[8192]{0}', space=vmem, size = 0x2000, scoped, tag = 'input window, operand 10, single buffered']
    #allocation15 [shape = 's32[1]{0}', space=sflag, size = 0x4, scoped, tag = 'scoped memory for wavlm_base_forward.1']
    #allocation16 [shape = 'u8[512]{0}', space=vmem, size = 0x400, scoped, tag = 'input window, operand 11, single buffered']
    #allocation17 [shape = 'u8[512]{0}', space=vmem, size = 0x400, scoped, tag = 'input window, operand 13, single buffered']
    #allocation18 [shape = 's32[1]{0}', space=sflag, size = 0x4, scoped, tag = 'scoped memory for wavlm_base_forward.1']
    #allocation19 [shape = 'u8[512]{0}', space=vmem, size = 0x400, scoped, tag = 'input window, operand 14, single buffered']
    #allocation20 [shape = 'u8[512]{0}', space=vmem, size = 0x400, scoped, tag = 'input window, operand 15, single buffered']
    #allocation21 [shape = 's32[1]{0}', space=sflag, size = 0x4, scoped, tag = 'scoped memory for wavlm_base_forward.1']
    #allocation22 [shape = 'u8[32768]{0}', space=vmem, size = 0x8000, scoped, tag = 'input window, operand 18, single buffered']
    #allocation23 [shape = 'u8[1024]{0}', space=vmem, size = 0x400, scoped, tag = 'input window, operand 20, single buffered']
    #allocation24 [shape = 's32[1]{0}', space=sflag, size = 0x4, scoped, tag = 'scoped memory for wavlm_base_forward.1']
    #allocation25 [shape = 'u8[1024]{0}', space=vmem, size = 0x400, scoped, tag = 'input window, operand 21, single buffered']
    #allocation26 [shape = 'u8[65536]{0}', space=vmem, size = 0x10000, scoped, tag = 'input window, operand 22, single buffered']
    #allocation27 [shape = 's32[1]{0}', space=sflag, size = 0x4, scoped, tag = 'scoped memory for wavlm_base_forward.1']
    #allocation28 [shape = 'u8[1024]{0}', space=vmem, size = 0x400, scoped, tag = 'input window, operand 23, single buffered']
    #allocation29 [shape = 'u8[65536]{0}', space=vmem, size = 0x10000, scoped, tag = 'input window, operand 24, single buffered']
    #allocation30 [shape = 's32[1]{0}', space=sflag, size = 0x4, scoped, tag = 'scoped memory for wavlm_base_forward.1']
    #allocation31 [shape = 'u8[1024]{0}', space=vmem, size = 0x400, scoped, tag = 'input window, operand 25, single buffered']
    #allocation32 [shape = 'u8[1024]{0}', space=vmem, size = 0x400, scoped, tag = 'input window, operand 26, single buffered']
    #allocation33 [shape = 's32[1]{0}', space=sflag, size = 0x4, scoped, tag = 'scoped memory for wavlm_base_forward.1']
    #allocation34 [shape = 'u8[1024]{0}', space=vmem, size = 0x400, scoped, tag = 'input window, operand 27, single buffered']
    #allocation35 [shape = 'u8[32768]{0}', space=vmem, size = 0x8000, scoped, tag = 'input window, operand 28, single buffered']
    #allocation36 [shape = 's32[1]{0}', space=sflag, size = 0x4, scoped, tag = 'scoped memory for wavlm_base_forward.1']
    #allocation37 [shape = 'u8[512]{0}', space=vmem, size = 0x400, scoped, tag = 'input window, operand 29, single buffered']
    #allocation38 [shape = 'u8[163840]{0}', space=vmem, size = 0x28000, scoped, tag = 'input window, operand 30, single buffered']
    #allocation39 [shape = 's32[1]{0}', space=sflag, size = 0x4, scoped, tag = 'scoped memory for wavlm_base_forward.1']
    #allocation40 [shape = 'u8[512]{0}', space=vmem, size = 0x400, scoped, tag = 'input window, operand 31, single buffered']
    #allocation41 [shape = 'u8[98304]{0}', space=vmem, size = 0x18000, scoped, tag = 'input window, operand 32, single buffered']
    #allocation42 [shape = 's32[1]{0}', space=sflag, size = 0x4, scoped, tag = 'scoped memory for wavlm_base_forward.1']
    #allocation43 [shape = 'u8[65536]{0}', space=vmem, size = 0x10000, scoped, tag = 'input window, operand 36, single buffered']
    #allocation44 [shape = 'u8[512]{0}', space=vmem, size = 0x400, scoped, tag = 'input window, operand 37, single buffered']
    #allocation45 [shape = 's32[1]{0}', space=sflag, size = 0x4, scoped, tag = 'scoped memory for wavlm_base_forward.1']
    #allocation46 [shape = 'u8[1024]{0}', space=vmem, size = 0x400, scoped, tag = 'output window, operand 0']
    %82 = vsyncpa [#allocation3], 0
    %83 = vsyncpa [#allocation6], 0
    %84 = vsyncpa [#allocation9], 0
    %85 = vsyncpa [#allocation12], 0
    %86 = vsyncpa [#allocation15], 0
    %87 = vsyncpa [#allocation18], 0
    %88 = vsyncpa [#allocation21], 0
    %89 = vsyncpa [#allocation24], 0
    %90 = vsyncpa [#allocation27], 0
    %91 = vsyncpa [#allocation30], 0
    %92 = vsyncpa [#allocation33], 0
    %93 = vsyncpa [#allocation36], 0
    %94 = vsyncpa [#allocation39], 0
    %95 = vsyncpa [#allocation42], 0
    %96 = vsyncpa [#allocation45], 0
    %97 = vsyncpa [#allocation4], 0
    %s98 = scalar_lea.sflag [#allocation4], 1
    %99 = vsyncpa %s98, 0
    loop: start=0, step=1, limit=4
    $region2: #{wavlm_base_forward.1} parent=1 // loop_pre_header
      _
    $region3: #{wavlm_base_forward.1} parent=1 // loop_header
      %s101 = sphi 0, %s105
      %p102 = scmp.ge.s32.totalorder %s101, 4
      %s111 = sphi 0, %s113
      %s114 = sphi 0, %s111
      %s115 = sphi 0, %s114
      %s131 = sphi 0, %s115
      %s135 = sphi 0, %s135
      %s137 = sphi 0, %s135
      %s138 = sphi 0, %s137
      %s152 = sphi 0, %s138
      %s156 = sphi 0, %s156
      %s158 = sphi 0, %s156
      %s159 = sphi 0, %s158
      %s173 = sphi 0, %s159
      %s177 = sphi 0, %s177
      %s179 = sphi 0, %s177
      %s180 = sphi 0, %s179
      %s194 = sphi 0, %s180
      %s198 = sphi 0, %s198
      %s200 = sphi 0, %s198
      %s201 = sphi 0, %s200
      %s215 = sphi 0, %s201
      %s219 = sphi 0, %s219
      %s221 = sphi 0, %s219
      %s222 = sphi 0, %s221
      %s236 = sphi 0, %s222
      %s240 = sphi 0, %s240
      %s242 = sphi 0, %s240
      %s243 = sphi 0, %s242
      %s257 = sphi 0, %s243
      %s261 = sphi 0, %s261
      %s263 = sphi 0, %s261
      %s264 = sphi 0, %s263
      %s278 = sphi 0, %s264
      %s282 = sphi 0, %s282
      %s284 = sphi 0, %s282
      %s285 = sphi 0, %s284
      %s299 = sphi 0, %s285
      %s303 = sphi 0, %s303
      %s305 = sphi 0, %s303
      %s306 = sphi 0, %s305
      %s320 = sphi 0, %s306
      %s324 = sphi 0, %s324
      %s326 = sphi 0, %s324
      %s327 = sphi 0, %s326
      %s341 = sphi 0, %s327
      %s345 = sphi 0, %s345
      %s347 = sphi 0, %s345
      %s348 = sphi 0, %s347
      %s362 = sphi 0, %s348
      %s366 = sphi 0, %s366
      %s368 = sphi 0, %s366
      %s369 = sphi 0, %s368
      %s383 = sphi 0, %s369
      %s387 = sphi 0, %s387
      %s389 = sphi 0, %s387
      %s390 = sphi 0, %s389
      %s404 = sphi 0, %s390
      %s408 = sphi 0, %s408
      %s410 = sphi 0, %s408
      %s411 = sphi 0, %s410
      %s425 = sphi 0, %s411
      %s429 = sphi 0, %s429
      %s431 = sphi 0, %s429
      %s432 = sphi 0, %s431
      %s446 = sphi 0, %s432
      %s450 = sphi 0, %s450
      %s452 = sphi 0, %s450
      %s453 = sphi 0, %s452
      %s467 = sphi 0, %s453
      %s471 = sphi 0, %s471
      %s473 = sphi 0, %s471
      %s474 = sphi 0, %s473
      %s488 = sphi 0, %s474
      %s492 = sphi 0, %s492
      %s494 = sphi 0, %s492
      %s495 = sphi 0, %s494
      %s509 = sphi 0, %s495
      %s513 = sphi 0, %s513
      %s515 = sphi 0, %s513
      %s516 = sphi 0, %s515
      %s530 = sphi 0, %s516
      %s534 = sphi 0, %s534
      %s536 = sphi 0, %s534
      %s537 = sphi 0, %s536
      %s551 = sphi 0, %s537
      %s555 = sphi 0, %s555
      %s557 = sphi 0, %s555
      %s558 = sphi 0, %s557
      %s572 = sphi 0, %s558
      %s576 = sphi 0, %s576
      %s578 = sphi 0, %s576
      %s579 = sphi 0, %s578
      %s593 = sphi 0, %s579
      %s597 = sphi 0, %s597
      %s599 = sphi 0, %s597
      %s600 = sphi 0, %s599
      %s614 = sphi 0, %s600
      %s618 = sphi 0, %s618
      %s620 = sphi 0, %s618
      %s621 = sphi 0, %s620
      %s635 = sphi 0, %s621
      %s639 = sphi 0, %s639
      %s641 = sphi 0, %s639
      %s642 = sphi 0, %s641
      %s656 = sphi 0, %s642
      %s660 = sphi 0, %s660
      %s662 = sphi 0, %s660
      %s663 = sphi 0, %s662
      %s677 = sphi 0, %s663
      %s681 = sphi 0, %s681
      %s683 = sphi 0, %s681
      %s684 = sphi 0, %s683
      %s698 = sphi 0, %s684
      %s702 = sphi 0, %s702
      %s704 = sphi 0, %s702
      %s705 = sphi 0, %s704
      %s719 = sphi 0, %s705
      %s723 = sphi 0, %s723
      %s725 = sphi 0, %s723
      %s726 = sphi 0, %s725
      %s740 = sphi 0, %s726
      %s744 = sphi 0, %s744
      %s746 = sphi 0, %s744
      %s747 = sphi 0, %s746
      %s761 = sphi 0, %s747
      %s765 = sphi 0, %s765
      %s767 = sphi 0, %s765
      %s768 = sphi 0, %s767
      %s782 = sphi 0, %s768
      %s786 = sphi 0, %s786
      %s788 = sphi 0, %s786
      %s789 = sphi 0, %s788
      %s803 = sphi 0, %s789
      %s807 = sphi 0, %s807
      %s809 = sphi 0, %s807
      %s810 = sphi 0, %s809
      %s824 = sphi 0, %s810
      %s828 = sphi 0, %s828
      %s830 = sphi 0, %s828
      %s831 = sphi 0, %s830
      %s845 = sphi 0, %s831
      %s849 = sphi 0, %s849
      %s851 = sphi 0, %s849
      %s852 = sphi 0, %s851
      %s866 = sphi 0, %s852
      %s870 = sphi 0, %s870
      %s872 = sphi 0, %s870
      %s873 = sphi 0, %s872
      %s887 = sphi 0, %s873
      %s891 = sphi 0, %s891
      %s893 = sphi 0, %s891
      %s894 = sphi 0, %s893
      %s908 = sphi 0, %s894
      %s914 = sphi 0, %s916
      %s917 = sphi 0, %s914
      %s918 = sphi 0, %s917
      %s934 = sphi 0, %s918
    $region4: #{wavlm_base_forward.1} parent=1 // loop_header_branch
      %104 = sbr.rel (%p102) target = $region8
    $region5: #{wavlm_base_forward.1} parent=1 // loop_body
      %s106 = ssub.s32 %s101, 1
      %s107 = ssub.s32 %s101, 2
      %s108 = sadd.s32 %s101, 1
      %s109 = ssub.s32 %s101, %s108
      %p110 = scmp.eq.s32.totalorder %s109, 0
      %s112 = sadd.s32 %s111, 1
      %s113 = scalar_select %p110, %s111, %s112
      %p116 = pneg %p110
      %p117 = scmp.eq.s32.totalorder %s101, 1
      %p118 = por %p116, %p117
      %p119 = scmp.ne.s32.totalorder %s111, %s114
      %p120 = scmp.eq.s32.totalorder %s101, 0
      %p121 = por %p119, %p120
      %p122 = scmp.ne.s32.totalorder %s111, %s114
      %p123 = scmp.eq.s32.totalorder %s106, 1
      %p124 = por %p122, %p123
      %p125 = scmp.ne.s32.totalorder %s114, %s115
      %p126 = scmp.eq.s32.totalorder %s106, 0
      %p127 = por %p125, %p126
      %p128 = scmp.ne.s32.totalorder %s114, %s115
      %p129 = scmp.eq.s32.totalorder %s107, 1
      %p130 = por %p128, %p129
      %p132 = scmp.ne.s32.totalorder %s115, %s131
      %p133 = scmp.eq.s32.totalorder %s107, 0
      %p134 = por %p132, %p133
      %s136 = sadd.s32 %s135, 1
      %p139 = scmp.eq.s32.totalorder %s101, 1
      %p140 = scmp.ne.s32.totalorder %s135, %s137
      %p141 = scmp.eq.s32.totalorder %s101, 0
      %p142 = por %p140, %p141
      %p143 = scmp.ne.s32.totalorder %s135, %s137
      %p144 = scmp.eq.s32.totalorder %s106, 1
      %p145 = por %p143, %p144
      %p146 = scmp.ne.s32.totalorder %s137, %s138
      %p147 = scmp.eq.s32.totalorder %s106, 0
      %p148 = por %p146, %p147
      %p149 = scmp.ne.s32.totalorder %s137, %s138
      %p150 = scmp.eq.s32.totalorder %s107, 1
      %p151 = por %p149, %p150
      %p153 = scmp.ne.s32.totalorder %s138, %s152
      %p154 = scmp.eq.s32.totalorder %s107, 0
      %p155 = por %p153, %p154
      %s157 = sadd.s32 %s156, 1
      %p160 = scmp.eq.s32.totalorder %s101, 1
      %p161 = scmp.ne.s32.totalorder %s156, %s158
      %p162 = scmp.eq.s32.totalorder %s101, 0
      %p163 = por %p161, %p162
      %p164 = scmp.ne.s32.totalorder %s156, %s158
      %p165 = scmp.eq.s32.totalorder %s106, 1
      %p166 = por %p164, %p165
      %p167 = scmp.ne.s32.totalorder %s158, %s159
      %p168 = scmp.eq.s32.totalorder %s106, 0
      %p169 = por %p167, %p168
      %p170 = scmp.ne.s32.totalorder %s158, %s159
      %p171 = scmp.eq.s32.totalorder %s107, 1
      %p172 = por %p170, %p171
      %p174 = scmp.ne.s32.totalorder %s159, %s173
      %p175 = scmp.eq.s32.totalorder %s107, 0
      %p176 = por %p174, %p175
      %s178 = sadd.s32 %s177, 1
      %p181 = scmp.eq.s32.totalorder %s101, 1
      %p182 = scmp.ne.s32.totalorder %s177, %s179
      %p183 = scmp.eq.s32.totalorder %s101, 0
      %p184 = por %p182, %p183
      %p185 = scmp.ne.s32.totalorder %s177, %s179
      %p186 = scmp.eq.s32.totalorder %s106, 1
      %p187 = por %p185, %p186
      %p188 = scmp.ne.s32.totalorder %s179, %s180
      %p189 = scmp.eq.s32.totalorder %s106, 0
      %p190 = por %p188, %p189
      %p191 = scmp.ne.s32.totalorder %s179, %s180
      %p192 = scmp.eq.s32.totalorder %s107, 1
      %p193 = por %p191, %p192
      %p195 = scmp.ne.s32.totalorder %s180, %s194
      %p196 = scmp.eq.s32.totalorder %s107, 0
      %p197 = por %p195, %p196
      %s199 = sadd.s32 %s198, 1
      %p202 = scmp.eq.s32.totalorder %s101, 1
      %p203 = scmp.ne.s32.totalorder %s198, %s200
      %p204 = scmp.eq.s32.totalorder %s101, 0
      %p205 = por %p203, %p204
      %p206 = scmp.ne.s32.totalorder %s198, %s200
      %p207 = scmp.eq.s32.totalorder %s106, 1
      %p208 = por %p206, %p207
      %p209 = scmp.ne.s32.totalorder %s200, %s201
      %p210 = scmp.eq.s32.totalorder %s106, 0
      %p211 = por %p209, %p210
      %p212 = scmp.ne.s32.totalorder %s200, %s201
      %p213 = scmp.eq.s32.totalorder %s107, 1
      %p214 = por %p212, %p213
      %p216 = scmp.ne.s32.totalorder %s201, %s215
      %p217 = scmp.eq.s32.totalorder %s107, 0
      %p218 = por %p216, %p217
      %s220 = sadd.s32 %s219, 1
      %p223 = scmp.eq.s32.totalorder %s101, 1
      %p224 = scmp.ne.s32.totalorder %s219, %s221
      %p225 = scmp.eq.s32.totalorder %s101, 0
      %p226 = por %p224, %p225
      %p227 = scmp.ne.s32.totalorder %s219, %s221
      %p228 = scmp.eq.s32.totalorder %s106, 1
      %p229 = por %p227, %p228
      %p230 = scmp.ne.s32.totalorder %s221, %s222
      %p231 = scmp.eq.s32.totalorder %s106, 0
      %p232 = por %p230, %p231
      %p233 = scmp.ne.s32.totalorder %s221, %s222
      %p234 = scmp.eq.s32.totalorder %s107, 1
      %p235 = por %p233, %p234
      %p237 = scmp.ne.s32.totalorder %s222, %s236
      %p238 = scmp.eq.s32.totalorder %s107, 0
      %p239 = por %p237, %p238
      %s241 = sadd.s32 %s240, 1
      %p244 = scmp.eq.s32.totalorder %s101, 1
      %p245 = scmp.ne.s32.totalorder %s240, %s242
      %p246 = scmp.eq.s32.totalorder %s101, 0
      %p247 = por %p245, %p246
      %p248 = scmp.ne.s32.totalorder %s240, %s242
      %p249 = scmp.eq.s32.totalorder %s106, 1
      %p250 = por %p248, %p249
      %p251 = scmp.ne.s32.totalorder %s242, %s243
      %p252 = scmp.eq.s32.totalorder %s106, 0
      %p253 = por %p251, %p252
      %p254 = scmp.ne.s32.totalorder %s242, %s243
      %p255 = scmp.eq.s32.totalorder %s107, 1
      %p256 = por %p254, %p255
      %p258 = scmp.ne.s32.totalorder %s243, %s257
      %p259 = scmp.eq.s32.totalorder %s107, 0
      %p260 = por %p258, %p259
      %s262 = sadd.s32 %s261, 1
      %p265 = scmp.eq.s32.totalorder %s101, 1
      %p266 = scmp.ne.s32.totalorder %s261, %s263
      %p267 = scmp.eq.s32.totalorder %s101, 0
      %p268 = por %p266, %p267
      %p269 = scmp.ne.s32.totalorder %s261, %s263
      %p270 = scmp.eq.s32.totalorder %s106, 1
      %p271 = por %p269, %p270
      %p272 = scmp.ne.s32.totalorder %s263, %s264
      %p273 = scmp.eq.s32.totalorder %s106, 0
      %p274 = por %p272, %p273
      %p275 = scmp.ne.s32.totalorder %s263, %s264
      %p276 = scmp.eq.s32.totalorder %s107, 1
      %p277 = por %p275, %p276
      %p279 = scmp.ne.s32.totalorder %s264, %s278
      %p280 = scmp.eq.s32.totalorder %s107, 0
      %p281 = por %p279, %p280
      %s283 = sadd.s32 %s282, 1
      %p286 = scmp.eq.s32.totalorder %s101, 1
      %p287 = scmp.ne.s32.totalorder %s282, %s284
      %p288 = scmp.eq.s32.totalorder %s101, 0
      %p289 = por %p287, %p288
      %p290 = scmp.ne.s32.totalorder %s282, %s284
      %p291 = scmp.eq.s32.totalorder %s106, 1
      %p292 = por %p290, %p291
      %p293 = scmp.ne.s32.totalorder %s284, %s285
      %p294 = scmp.eq.s32.totalorder %s106, 0
      %p295 = por %p293, %p294
      %p296 = scmp.ne.s32.totalorder %s284, %s285
      %p297 = scmp.eq.s32.totalorder %s107, 1
      %p298 = por %p296, %p297
      %p300 = scmp.ne.s32.totalorder %s285, %s299
      %p301 = scmp.eq.s32.totalorder %s107, 0
      %p302 = por %p300, %p301
      %s304 = sadd.s32 %s303, 1
      %p307 = scmp.eq.s32.totalorder %s101, 1
      %p308 = scmp.ne.s32.totalorder %s303, %s305
      %p309 = scmp.eq.s32.totalorder %s101, 0
      %p310 = por %p308, %p309
      %p311 = scmp.ne.s32.totalorder %s303, %s305
      %p312 = scmp.eq.s32.totalorder %s106, 1
      %p313 = por %p311, %p312
      %p314 = scmp.ne.s32.totalorder %s305, %s306
      %p315 = scmp.eq.s32.totalorder %s106, 0
      %p316 = por %p314, %p315
      %p317 = scmp.ne.s32.totalorder %s305, %s306
      %p318 = scmp.eq.s32.totalorder %s107, 1
      %p319 = por %p317, %p318
      %p321 = scmp.ne.s32.totalorder %s306, %s320
      %p322 = scmp.eq.s32.totalorder %s107, 0
      %p323 = por %p321, %p322
      %s325 = sadd.s32 %s324, 1
      %p328 = scmp.eq.s32.totalorder %s101, 1
      %p329 = scmp.ne.s32.totalorder %s324, %s326
      %p330 = scmp.eq.s32.totalorder %s101, 0
      %p331 = por %p329, %p330
      %p332 = scmp.ne.s32.totalorder %s324, %s326
      %p333 = scmp.eq.s32.totalorder %s106, 1
      %p334 = por %p332, %p333
      %p335 = scmp.ne.s32.totalorder %s326, %s327
      %p336 = scmp.eq.s32.totalorder %s106, 0
      %p337 = por %p335, %p336
      %p338 = scmp.ne.s32.totalorder %s326, %s327
      %p339 = scmp.eq.s32.totalorder %s107, 1
      %p340 = por %p338, %p339
      %p342 = scmp.ne.s32.totalorder %s327, %s341
      %p343 = scmp.eq.s32.totalorder %s107, 0
      %p344 = por %p342, %p343
      %s346 = sadd.s32 %s345, 1
      %p349 = scmp.eq.s32.totalorder %s101, 1
      %p350 = scmp.ne.s32.totalorder %s345, %s347
      %p351 = scmp.eq.s32.totalorder %s101, 0
      %p352 = por %p350, %p351
      %p353 = scmp.ne.s32.totalorder %s345, %s347
      %p354 = scmp.eq.s32.totalorder %s106, 1
      %p355 = por %p353, %p354
      %p356 = scmp.ne.s32.totalorder %s347, %s348
      %p357 = scmp.eq.s32.totalorder %s106, 0
      %p358 = por %p356, %p357
      %p359 = scmp.ne.s32.totalorder %s347, %s348
      %p360 = scmp.eq.s32.totalorder %s107, 1
      %p361 = por %p359, %p360
      %p363 = scmp.ne.s32.totalorder %s348, %s362
      %p364 = scmp.eq.s32.totalorder %s107, 0
      %p365 = por %p363, %p364
      %s367 = sadd.s32 %s366, 1
      %p370 = scmp.eq.s32.totalorder %s101, 1
      %p371 = scmp.ne.s32.totalorder %s366, %s368
      %p372 = scmp.eq.s32.totalorder %s101, 0
      %p373 = por %p371, %p372
      %p374 = scmp.ne.s32.totalorder %s366, %s368
      %p375 = scmp.eq.s32.totalorder %s106, 1
      %p376 = por %p374, %p375
      %p377 = scmp.ne.s32.totalorder %s368, %s369
      %p378 = scmp.eq.s32.totalorder %s106, 0
      %p379 = por %p377, %p378
      %p380 = scmp.ne.s32.totalorder %s368, %s369
      %p381 = scmp.eq.s32.totalorder %s107, 1
      %p382 = por %p380, %p381
      %p384 = scmp.ne.s32.totalorder %s369, %s383
      %p385 = scmp.eq.s32.totalorder %s107, 0
      %p386 = por %p384, %p385
      %s388 = sadd.s32 %s387, 1
      %p391 = scmp.eq.s32.totalorder %s101, 1
      %p392 = scmp.ne.s32.totalorder %s387, %s389
      %p393 = scmp.eq.s32.totalorder %s101, 0
      %p394 = por %p392, %p393
      %p395 = scmp.ne.s32.totalorder %s387, %s389
      %p396 = scmp.eq.s32.totalorder %s106, 1
      %p397 = por %p395, %p396
      %p398 = scmp.ne.s32.totalorder %s389, %s390
      %p399 = scmp.eq.s32.totalorder %s106, 0
      %p400 = por %p398, %p399
      %p401 = scmp.ne.s32.totalorder %s389, %s390
      %p402 = scmp.eq.s32.totalorder %s107, 1
      %p403 = por %p401, %p402
      %p405 = scmp.ne.s32.totalorder %s390, %s404
      %p406 = scmp.eq.s32.totalorder %s107, 0
      %p407 = por %p405, %p406
      %s409 = sadd.s32 %s408, 1
      %p412 = scmp.eq.s32.totalorder %s101, 1
      %p413 = scmp.ne.s32.totalorder %s408, %s410
      %p414 = scmp.eq.s32.totalorder %s101, 0
      %p415 = por %p413, %p414
      %p416 = scmp.ne.s32.totalorder %s408, %s410
      %p417 = scmp.eq.s32.totalorder %s106, 1
      %p418 = por %p416, %p417
      %p419 = scmp.ne.s32.totalorder %s410, %s411
      %p420 = scmp.eq.s32.totalorder %s106, 0
      %p421 = por %p419, %p420
      %p422 = scmp.ne.s32.totalorder %s410, %s411
      %p423 = scmp.eq.s32.totalorder %s107, 1
      %p424 = por %p422, %p423
      %p426 = scmp.ne.s32.totalorder %s411, %s425
      %p427 = scmp.eq.s32.totalorder %s107, 0
      %p428 = por %p426, %p427
      %s430 = sadd.s32 %s429, 1
      %p433 = scmp.eq.s32.totalorder %s101, 1
      %p434 = scmp.ne.s32.totalorder %s429, %s431
      %p435 = scmp.eq.s32.totalorder %s101, 0
      %p436 = por %p434, %p435
      %p437 = scmp.ne.s32.totalorder %s429, %s431
      %p438 = scmp.eq.s32.totalorder %s106, 1
      %p439 = por %p437, %p438
      %p440 = scmp.ne.s32.totalorder %s431, %s432
      %p441 = scmp.eq.s32.totalorder %s106, 0
      %p442 = por %p440, %p441
      %p443 = scmp.ne.s32.totalorder %s431, %s432
      %p444 = scmp.eq.s32.totalorder %s107, 1
      %p445 = por %p443, %p444
      %p447 = scmp.ne.s32.totalorder %s432, %s446
      %p448 = scmp.eq.s32.totalorder %s107, 0
      %p449 = por %p447, %p448
      %s451 = sadd.s32 %s450, 1
      %p454 = scmp.eq.s32.totalorder %s101, 1
      %p455 = scmp.ne.s32.totalorder %s450, %s452
      %p456 = scmp.eq.s32.totalorder %s101, 0
      %p457 = por %p455, %p456
      %p458 = scmp.ne.s32.totalorder %s450, %s452
      %p459 = scmp.eq.s32.totalorder %s106, 1
      %p460 = por %p458, %p459
      %p461 = scmp.ne.s32.totalorder %s452, %s453
      %p462 = scmp.eq.s32.totalorder %s106, 0
      %p463 = por %p461, %p462
      %p464 = scmp.ne.s32.totalorder %s452, %s453
      %p465 = scmp.eq.s32.totalorder %s107, 1
      %p466 = por %p464, %p465
      %p468 = scmp.ne.s32.totalorder %s453, %s467
      %p469 = scmp.eq.s32.totalorder %s107, 0
      %p470 = por %p468, %p469
      %s472 = sadd.s32 %s471, 1
      %p475 = scmp.eq.s32.totalorder %s101, 1
      %p476 = scmp.ne.s32.totalorder %s471, %s473
      %p477 = scmp.eq.s32.totalorder %s101, 0
      %p478 = por %p476, %p477
      %p479 = scmp.ne.s32.totalorder %s471, %s473
      %p480 = scmp.eq.s32.totalorder %s106, 1
      %p481 = por %p479, %p480
      %p482 = scmp.ne.s32.totalorder %s473, %s474
      %p483 = scmp.eq.s32.totalorder %s106, 0
      %p484 = por %p482, %p483
      %p485 = scmp.ne.s32.totalorder %s473, %s474
      %p486 = scmp.eq.s32.totalorder %s107, 1
      %p487 = por %p485, %p486
      %p489 = scmp.ne.s32.totalorder %s474, %s488
      %p490 = scmp.eq.s32.totalorder %s107, 0
      %p491 = por %p489, %p490
      %s493 = sadd.s32 %s492, 1
      %p496 = scmp.eq.s32.totalorder %s101, 1
      %p497 = scmp.ne.s32.totalorder %s492, %s494
      %p498 = scmp.eq.s32.totalorder %s101, 0
      %p499 = por %p497, %p498
      %p500 = scmp.ne.s32.totalorder %s492, %s494
      %p501 = scmp.eq.s32.totalorder %s106, 1
      %p502 = por %p500, %p501
      %p503 = scmp.ne.s32.totalorder %s494, %s495
      %p504 = scmp.eq.s32.totalorder %s106, 0
      %p505 = por %p503, %p504
      %p506 = scmp.ne.s32.totalorder %s494, %s495
      %p507 = scmp.eq.s32.totalorder %s107, 1
      %p508 = por %p506, %p507
      %p510 = scmp.ne.s32.totalorder %s495, %s509
      %p511 = scmp.eq.s32.totalorder %s107, 0
      %p512 = por %p510, %p511
      %s514 = sadd.s32 %s513, 1
      %p517 = scmp.eq.s32.totalorder %s101, 1
      %p518 = scmp.ne.s32.totalorder %s513, %s515
      %p519 = scmp.eq.s32.totalorder %s101, 0
      %p520 = por %p518, %p519
      %p521 = scmp.ne.s32.totalorder %s513, %s515
      %p522 = scmp.eq.s32.totalorder %s106, 1
      %p523 = por %p521, %p522
      %p524 = scmp.ne.s32.totalorder %s515, %s516
      %p525 = scmp.eq.s32.totalorder %s106, 0
      %p526 = por %p524, %p525
      %p527 = scmp.ne.s32.totalorder %s515, %s516
      %p528 = scmp.eq.s32.totalorder %s107, 1
      %p529 = por %p527, %p528
      %p531 = scmp.ne.s32.totalorder %s516, %s530
      %p532 = scmp.eq.s32.totalorder %s107, 0
      %p533 = por %p531, %p532
      %s535 = sadd.s32 %s534, 1
      %p538 = scmp.eq.s32.totalorder %s101, 1
      %p539 = scmp.ne.s32.totalorder %s534, %s536
      %p540 = scmp.eq.s32.totalorder %s101, 0
      %p541 = por %p539, %p540
      %p542 = scmp.ne.s32.totalorder %s534, %s536
      %p543 = scmp.eq.s32.totalorder %s106, 1
      %p544 = por %p542, %p543
      %p545 = scmp.ne.s32.totalorder %s536, %s537
      %p546 = scmp.eq.s32.totalorder %s106, 0
      %p547 = por %p545, %p546
      %p548 = scmp.ne.s32.totalorder %s536, %s537
      %p549 = scmp.eq.s32.totalorder %s107, 1
      %p550 = por %p548, %p549
      %p552 = scmp.ne.s32.totalorder %s537, %s551
      %p553 = scmp.eq.s32.totalorder %s107, 0
      %p554 = por %p552, %p553
      %s556 = sadd.s32 %s555, 1
      %p559 = scmp.eq.s32.totalorder %s101, 1
      %p560 = scmp.ne.s32.totalorder %s555, %s557
      %p561 = scmp.eq.s32.totalorder %s101, 0
      %p562 = por %p560, %p561
      %p563 = scmp.ne.s32.totalorder %s555, %s557
      %p564 = scmp.eq.s32.totalorder %s106, 1
      %p565 = por %p563, %p564
      %p566 = scmp.ne.s32.totalorder %s557, %s558
      %p567 = scmp.eq.s32.totalorder %s106, 0
      %p568 = por %p566, %p567
      %p569 = scmp.ne.s32.totalorder %s557, %s558
      %p570 = scmp.eq.s32.totalorder %s107, 1
      %p571 = por %p569, %p570
      %p573 = scmp.ne.s32.totalorder %s558, %s572
      %p574 = scmp.eq.s32.totalorder %s107, 0
      %p575 = por %p573, %p574
      %s577 = sadd.s32 %s576, 1
      %p580 = scmp.eq.s32.totalorder %s101, 1
      %p581 = scmp.ne.s32.totalorder %s576, %s578
      %p582 = scmp.eq.s32.totalorder %s101, 0
      %p583 = por %p581, %p582
      %p584 = scmp.ne.s32.totalorder %s576, %s578
      %p585 = scmp.eq.s32.totalorder %s106, 1
      %p586 = por %p584, %p585
      %p587 = scmp.ne.s32.totalorder %s578, %s579
      %p588 = scmp.eq.s32.totalorder %s106, 0
      %p589 = por %p587, %p588
      %p590 = scmp.ne.s32.totalorder %s578, %s579
      %p591 = scmp.eq.s32.totalorder %s107, 1
      %p592 = por %p590, %p591
      %p594 = scmp.ne.s32.totalorder %s579, %s593
      %p595 = scmp.eq.s32.totalorder %s107, 0
      %p596 = por %p594, %p595
      %s598 = sadd.s32 %s597, 1
      %p601 = scmp.eq.s32.totalorder %s101, 1
      %p602 = scmp.ne.s32.totalorder %s597, %s599
      %p603 = scmp.eq.s32.totalorder %s101, 0
      %p604 = por %p602, %p603
      %p605 = scmp.ne.s32.totalorder %s597, %s599
      %p606 = scmp.eq.s32.totalorder %s106, 1
      %p607 = por %p605, %p606
      %p608 = scmp.ne.s32.totalorder %s599, %s600
      %p609 = scmp.eq.s32.totalorder %s106, 0
      %p610 = por %p608, %p609
      %p611 = scmp.ne.s32.totalorder %s599, %s600
      %p612 = scmp.eq.s32.totalorder %s107, 1
      %p613 = por %p611, %p612
      %p615 = scmp.ne.s32.totalorder %s600, %s614
      %p616 = scmp.eq.s32.totalorder %s107, 0
      %p617 = por %p615, %p616
      %s619 = sadd.s32 %s618, 1
      %p622 = scmp.eq.s32.totalorder %s101, 1
      %p623 = scmp.ne.s32.totalorder %s618, %s620
      %p624 = scmp.eq.s32.totalorder %s101, 0
      %p625 = por %p623, %p624
      %p626 = scmp.ne.s32.totalorder %s618, %s620
      %p627 = scmp.eq.s32.totalorder %s106, 1
      %p628 = por %p626, %p627
      %p629 = scmp.ne.s32.totalorder %s620, %s621
      %p630 = scmp.eq.s32.totalorder %s106, 0
      %p631 = por %p629, %p630
      %p632 = scmp.ne.s32.totalorder %s620, %s621
      %p633 = scmp.eq.s32.totalorder %s107, 1
      %p634 = por %p632, %p633
      %p636 = scmp.ne.s32.totalorder %s621, %s635
      %p637 = scmp.eq.s32.totalorder %s107, 0
      %p638 = por %p636, %p637
      %s640 = sadd.s32 %s639, 1
      %p643 = scmp.eq.s32.totalorder %s101, 1
      %p644 = scmp.ne.s32.totalorder %s639, %s641
      %p645 = scmp.eq.s32.totalorder %s101, 0
      %p646 = por %p644, %p645
      %p647 = scmp.ne.s32.totalorder %s639, %s641
      %p648 = scmp.eq.s32.totalorder %s106, 1
      %p649 = por %p647, %p648
      %p650 = scmp.ne.s32.totalorder %s641, %s642
      %p651 = scmp.eq.s32.totalorder %s106, 0
      %p652 = por %p650, %p651
      %p653 = scmp.ne.s32.totalorder %s641, %s642
      %p654 = scmp.eq.s32.totalorder %s107, 1
      %p655 = por %p653, %p654
      %p657 = scmp.ne.s32.totalorder %s642, %s656
      %p658 = scmp.eq.s32.totalorder %s107, 0
      %p659 = por %p657, %p658
      %s661 = sadd.s32 %s660, 1
      %p664 = scmp.eq.s32.totalorder %s101, 1
      %p665 = scmp.ne.s32.totalorder %s660, %s662
      %p666 = scmp.eq.s32.totalorder %s101, 0
      %p667 = por %p665, %p666
      %p668 = scmp.ne.s32.totalorder %s660, %s662
      %p669 = scmp.eq.s32.totalorder %s106, 1
      %p670 = por %p668, %p669
      %p671 = scmp.ne.s32.totalorder %s662, %s663
      %p672 = scmp.eq.s32.totalorder %s106, 0
      %p673 = por %p671, %p672
      %p674 = scmp.ne.s32.totalorder %s662, %s663
      %p675 = scmp.eq.s32.totalorder %s107, 1
      %p676 = por %p674, %p675
      %p678 = scmp.ne.s32.totalorder %s663, %s677
      %p679 = scmp.eq.s32.totalorder %s107, 0
      %p680 = por %p678, %p679
      %s682 = sadd.s32 %s681, 1
      %p685 = scmp.eq.s32.totalorder %s101, 1
      %p686 = scmp.ne.s32.totalorder %s681, %s683
      %p687 = scmp.eq.s32.totalorder %s101, 0
      %p688 = por %p686, %p687
      %p689 = scmp.ne.s32.totalorder %s681, %s683
      %p690 = scmp.eq.s32.totalorder %s106, 1
      %p691 = por %p689, %p690
      %p692 = scmp.ne.s32.totalorder %s683, %s684
      %p693 = scmp.eq.s32.totalorder %s106, 0
      %p694 = por %p692, %p693
      %p695 = scmp.ne.s32.totalorder %s683, %s684
      %p696 = scmp.eq.s32.totalorder %s107, 1
      %p697 = por %p695, %p696
      %p699 = scmp.ne.s32.totalorder %s684, %s698
      %p700 = scmp.eq.s32.totalorder %s107, 0
      %p701 = por %p699, %p700
      %s703 = sadd.s32 %s702, 1
      %p706 = scmp.eq.s32.totalorder %s101, 1
      %p707 = scmp.ne.s32.totalorder %s702, %s704
      %p708 = scmp.eq.s32.totalorder %s101, 0
      %p709 = por %p707, %p708
      %p710 = scmp.ne.s32.totalorder %s702, %s704
      %p711 = scmp.eq.s32.totalorder %s106, 1
      %p712 = por %p710, %p711
      %p713 = scmp.ne.s32.totalorder %s704, %s705
      %p714 = scmp.eq.s32.totalorder %s106, 0
      %p715 = por %p713, %p714
      %p716 = scmp.ne.s32.totalorder %s704, %s705
      %p717 = scmp.eq.s32.totalorder %s107, 1
      %p718 = por %p716, %p717
      %p720 = scmp.ne.s32.totalorder %s705, %s719
      %p721 = scmp.eq.s32.totalorder %s107, 0
      %p722 = por %p720, %p721
      %s724 = sadd.s32 %s723, 1
      %p727 = scmp.eq.s32.totalorder %s101, 1
      %p728 = scmp.ne.s32.totalorder %s723, %s725
      %p729 = scmp.eq.s32.totalorder %s101, 0
      %p730 = por %p728, %p729
      %p731 = scmp.ne.s32.totalorder %s723, %s725
      %p732 = scmp.eq.s32.totalorder %s106, 1
      %p733 = por %p731, %p732
      %p734 = scmp.ne.s32.totalorder %s725, %s726
      %p735 = scmp.eq.s32.totalorder %s106, 0
      %p736 = por %p734, %p735
      %p737 = scmp.ne.s32.totalorder %s725, %s726
      %p738 = scmp.eq.s32.totalorder %s107, 1
      %p739 = por %p737, %p738
      %p741 = scmp.ne.s32.totalorder %s726, %s740
      %p742 = scmp.eq.s32.totalorder %s107, 0
      %p743 = por %p741, %p742
      %s745 = sadd.s32 %s744, 1
      %p748 = scmp.eq.s32.totalorder %s101, 1
      %p749 = scmp.ne.s32.totalorder %s744, %s746
      %p750 = scmp.eq.s32.totalorder %s101, 0
      %p751 = por %p749, %p750
      %p752 = scmp.ne.s32.totalorder %s744, %s746
      %p753 = scmp.eq.s32.totalorder %s106, 1
      %p754 = por %p752, %p753
      %p755 = scmp.ne.s32.totalorder %s746, %s747
      %p756 = scmp.eq.s32.totalorder %s106, 0
      %p757 = por %p755, %p756
      %p758 = scmp.ne.s32.totalorder %s746, %s747
      %p759 = scmp.eq.s32.totalorder %s107, 1
      %p760 = por %p758, %p759
      %p762 = scmp.ne.s32.totalorder %s747, %s761
      %p763 = scmp.eq.s32.totalorder %s107, 0
      %p764 = por %p762, %p763
      %s766 = sadd.s32 %s765, 1
      %p769 = scmp.eq.s32.totalorder %s101, 1
      %p770 = scmp.ne.s32.totalorder %s765, %s767
      %p771 = scmp.eq.s32.totalorder %s101, 0
      %p772 = por %p770, %p771
      %p773 = scmp.ne.s32.totalorder %s765, %s767
      %p774 = scmp.eq.s32.totalorder %s106, 1
      %p775 = por %p773, %p774
      %p776 = scmp.ne.s32.totalorder %s767, %s768
      %p777 = scmp.eq.s32.totalorder %s106, 0
      %p778 = por %p776, %p777
      %p779 = scmp.ne.s32.totalorder %s767, %s768
      %p780 = scmp.eq.s32.totalorder %s107, 1
      %p781 = por %p779, %p780
      %p783 = scmp.ne.s32.totalorder %s768, %s782
      %p784 = scmp.eq.s32.totalorder %s107, 0
      %p785 = por %p783, %p784
      %s787 = sadd.s32 %s786, 1
      %p790 = scmp.eq.s32.totalorder %s101, 1
      %p791 = scmp.ne.s32.totalorder %s786, %s788
      %p792 = scmp.eq.s32.totalorder %s101, 0
      %p793 = por %p791, %p792
      %p794 = scmp.ne.s32.totalorder %s786, %s788
      %p795 = scmp.eq.s32.totalorder %s106, 1
      %p796 = por %p794, %p795
      %p797 = scmp.ne.s32.totalorder %s788, %s789
      %p798 = scmp.eq.s32.totalorder %s106, 0
      %p799 = por %p797, %p798
      %p800 = scmp.ne.s32.totalorder %s788, %s789
      %p801 = scmp.eq.s32.totalorder %s107, 1
      %p802 = por %p800, %p801
      %p804 = scmp.ne.s32.totalorder %s789, %s803
      %p805 = scmp.eq.s32.totalorder %s107, 0
      %p806 = por %p804, %p805
      %s808 = sadd.s32 %s807, 1
      %p811 = scmp.eq.s32.totalorder %s101, 1
      %p812 = scmp.ne.s32.totalorder %s807, %s809
      %p813 = scmp.eq.s32.totalorder %s101, 0
      %p814 = por %p812, %p813
      %p815 = scmp.ne.s32.totalorder %s807, %s809
      %p816 = scmp.eq.s32.totalorder %s106, 1
      %p817 = por %p815, %p816
      %p818 = scmp.ne.s32.totalorder %s809, %s810
      %p819 = scmp.eq.s32.totalorder %s106, 0
      %p820 = por %p818, %p819
      %p821 = scmp.ne.s32.totalorder %s809, %s810
      %p822 = scmp.eq.s32.totalorder %s107, 1
      %p823 = por %p821, %p822
      %p825 = scmp.ne.s32.totalorder %s810, %s824
      %p826 = scmp.eq.s32.totalorder %s107, 0
      %p827 = por %p825, %p826
      %s829 = sadd.s32 %s828, 1
      %p832 = scmp.eq.s32.totalorder %s101, 1
      %p833 = scmp.ne.s32.totalorder %s828, %s830
      %p834 = scmp.eq.s32.totalorder %s101, 0
      %p835 = por %p833, %p834
      %p836 = scmp.ne.s32.totalorder %s828, %s830
      %p837 = scmp.eq.s32.totalorder %s106, 1
      %p838 = por %p836, %p837
      %p839 = scmp.ne.s32.totalorder %s830, %s831
      %p840 = scmp.eq.s32.totalorder %s106, 0
      %p841 = por %p839, %p840
      %p842 = scmp.ne.s32.totalorder %s830, %s831
      %p843 = scmp.eq.s32.totalorder %s107, 1
      %p844 = por %p842, %p843
      %p846 = scmp.ne.s32.totalorder %s831, %s845
      %p847 = scmp.eq.s32.totalorder %s107, 0
      %p848 = por %p846, %p847
      %s850 = sadd.s32 %s849, 1
      %p853 = scmp.eq.s32.totalorder %s101, 1
      %p854 = scmp.ne.s32.totalorder %s849, %s851
      %p855 = scmp.eq.s32.totalorder %s101, 0
      %p856 = por %p854, %p855
      %p857 = scmp.ne.s32.totalorder %s849, %s851
      %p858 = scmp.eq.s32.totalorder %s106, 1
      %p859 = por %p857, %p858
      %p860 = scmp.ne.s32.totalorder %s851, %s852
      %p861 = scmp.eq.s32.totalorder %s106, 0
      %p862 = por %p860, %p861
      %p863 = scmp.ne.s32.totalorder %s851, %s852
      %p864 = scmp.eq.s32.totalorder %s107, 1
      %p865 = por %p863, %p864
      %p867 = scmp.ne.s32.totalorder %s852, %s866
      %p868 = scmp.eq.s32.totalorder %s107, 0
      %p869 = por %p867, %p868
      %s871 = sadd.s32 %s870, 1
      %p874 = scmp.eq.s32.totalorder %s101, 1
      %p875 = scmp.ne.s32.totalorder %s870, %s872
      %p876 = scmp.eq.s32.totalorder %s101, 0
      %p877 = por %p875, %p876
      %p878 = scmp.ne.s32.totalorder %s870, %s872
      %p879 = scmp.eq.s32.totalorder %s106, 1
      %p880 = por %p878, %p879
      %p881 = scmp.ne.s32.totalorder %s872, %s873
      %p882 = scmp.eq.s32.totalorder %s106, 0
      %p883 = por %p881, %p882
      %p884 = scmp.ne.s32.totalorder %s872, %s873
      %p885 = scmp.eq.s32.totalorder %s107, 1
      %p886 = por %p884, %p885
      %p888 = scmp.ne.s32.totalorder %s873, %s887
      %p889 = scmp.eq.s32.totalorder %s107, 0
      %p890 = por %p888, %p889
      %s892 = sadd.s32 %s891, 1
      %p895 = scmp.eq.s32.totalorder %s101, 1
      %p896 = scmp.ne.s32.totalorder %s891, %s893
      %p897 = scmp.eq.s32.totalorder %s101, 0
      %p898 = por %p896, %p897
      %p899 = scmp.ne.s32.totalorder %s891, %s893
      %p900 = scmp.eq.s32.totalorder %s106, 1
      %p901 = por %p899, %p900
      %p902 = scmp.ne.s32.totalorder %s893, %s894
      %p903 = scmp.eq.s32.totalorder %s106, 0
      %p904 = por %p902, %p903
      %p905 = scmp.ne.s32.totalorder %s893, %s894
      %p906 = scmp.eq.s32.totalorder %s107, 1
      %p907 = por %p905, %p906
      %p909 = scmp.ne.s32.totalorder %s894, %s908
      %p910 = scmp.eq.s32.totalorder %s107, 0
      %p911 = por %p909, %p910
      %s912 = ssub.s32 %s101, %s108
      %p913 = scmp.eq.s32.totalorder %s912, 0
      %s915 = sadd.s32 %s914, 1
      %s916 = scalar_select %p913, %s914, %s915
      %p919 = pneg %p913
      %p920 = scmp.eq.s32.totalorder %s101, 1
      %p921 = por %p919, %p920
      %p922 = scmp.ne.s32.totalorder %s914, %s917
      %p923 = scmp.eq.s32.totalorder %s101, 0
      %p924 = por %p922, %p923
      %p925 = scmp.ne.s32.totalorder %s914, %s917
      %p926 = scmp.eq.s32.totalorder %s106, 1
      %p927 = por %p925, %p926
      %p928 = scmp.ne.s32.totalorder %s917, %s918
      %p929 = scmp.eq.s32.totalorder %s106, 0
      %p930 = por %p928, %p929
      %p931 = scmp.ne.s32.totalorder %s917, %s918
      %p932 = scmp.eq.s32.totalorder %s107, 1
      %p933 = por %p931, %p932
      %p935 = scmp.ne.s32.totalorder %s918, %s934
      %p936 = scmp.eq.s32.totalorder %s107, 0
      %p937 = por %p935, %p936
      %p938 = scmp.le.s32.totalorder 1, %s101
      %p939 = scmp.lt.s32.totalorder %s101, 3
      %p940 = pnand %p938, %p939
      %p941 = pneg %p940
      // Predicated region
      $region9: #{wavlm_base_forward.1} parent=5 // pred_check
        _
      $region10: #{wavlm_base_forward.1} parent=5 // pred_check_branch
        %943 = sbr.rel (%p940) target = $region12
      $region11: #{wavlm_base_forward.1} parent=5 // pred_region
        %s944 = ssub.s32 %s101, 1
        // Predicated region
        $region13: #{wavlm_base_forward.1} parent=11 // pred_check
          %p945 = pneg %p148
        $region14: #{wavlm_base_forward.1} parent=11 // pred_check_branch
          %947 = sbr.rel (%p945) target = $region16
        $region15: #{wavlm_base_forward.1} parent=11 // pred_region
          _
        $region16: #{wavlm_base_forward.1} parent=11 // pred_fallthru
          _
        // Predicated region
        $region17: #{wavlm_base_forward.1} parent=11 // pred_check
          %p948 = pneg %p169
        $region18: #{wavlm_base_forward.1} parent=11 // pred_check_branch
          %950 = sbr.rel (%p948) target = $region20
        $region19: #{wavlm_base_forward.1} parent=11 // pred_region
          %s952 = ssub.s32 128, 128
          %953 = vsyncadd [#allocation3], %s952
          %s954 = sshll.u32 [#allocation2], 4
          %s955 = int_to_ptr.vmem [resolvable:$true] %s954
          %960 = dma.hbm_to_vmem [thread:$0]  %s5, 128, %s955, [#allocation3], 64, 64, 4
        $region20: #{wavlm_base_forward.1} parent=11 // pred_fallthru
          _
        // Predicated region
        $region21: #{wavlm_base_forward.1} parent=11 // pred_check
          %p961 = pneg %p190
        $region22: #{wavlm_base_forward.1} parent=11 // pred_check_branch
          %963 = sbr.rel (%p961) target = $region24
        $region23: #{wavlm_base_forward.1} parent=11 // pred_region
          %s965 = ssub.s32 128, 128
          %966 = vsyncadd [#allocation6], %s965
          %s967 = sshll.u32 [#allocation5], 4
          %s968 = int_to_ptr.vmem [resolvable:$true] %s967
          %973 = dma.hbm_to_vmem [thread:$0]  %s7, 128, %s968, [#allocation6], 64, 64, 4
        $region24: #{wavlm_base_forward.1} parent=11 // pred_fallthru
          _
        // Predicated region
        $region25: #{wavlm_base_forward.1} parent=11 // pred_check
          %p974 = pneg %p211
        $region26: #{wavlm_base_forward.1} parent=11 // pred_check_branch
          %976 = sbr.rel (%p974) target = $region28
        $region27: #{wavlm_base_forward.1} parent=11 // pred_region
          %s978 = ssub.s32 128, 128
          %979 = vsyncadd [#allocation6], %s978
          %s980 = sshll.u32 [#allocation7], 4
          %s981 = int_to_ptr.vmem [resolvable:$true] %s980
          %986 = dma.hbm_to_vmem [thread:$0]  %s9, 128, %s981, [#allocation6], 64, 64, 4
        $region28: #{wavlm_base_forward.1} parent=11 // pred_fallthru
          _
        // Predicated region
        $region29: #{wavlm_base_forward.1} parent=11 // pred_check
          %p987 = pneg %p232
        $region30: #{wavlm_base_forward.1} parent=11 // pred_check_branch
          %989 = sbr.rel (%p987) target = $region32
        $region31: #{wavlm_base_forward.1} parent=11 // pred_region
          _
        $region32: #{wavlm_base_forward.1} parent=11 // pred_fallthru
          _
        // Predicated region
        $region33: #{wavlm_base_forward.1} parent=11 // pred_check
          %p990 = pneg %p253
        $region34: #{wavlm_base_forward.1} parent=11 // pred_check_branch
          %992 = sbr.rel (%p990) target = $region36
        $region35: #{wavlm_base_forward.1} parent=11 // pred_region
          %s994 = ssub.s32 16, 16
          %995 = vsyncadd [#allocation9], %s994
          %s997 = sshll.u32 [#allocation8], 4
          %s998 = int_to_ptr.vmem [resolvable:$true] %s997
          %1000 = dma.hbm_to_vmem [thread:$0]  %s13, 16, %s998, [#allocation9]
        $region36: #{wavlm_base_forward.1} parent=11 // pred_fallthru
          _
        // Predicated region
        $region37: #{wavlm_base_forward.1} parent=11 // pred_check
          %p1001 = pneg %p274
        $region38: #{wavlm_base_forward.1} parent=11 // pred_check_branch
          %1003 = sbr.rel (%p1001) target = $region40
        $region39: #{wavlm_base_forward.1} parent=11 // pred_region
          %s1005 = ssub.s32 768, 768
          %1006 = vsyncadd [#allocation9], %s1005
          %s1007 = sshll.u32 [#allocation10], 4
          %s1008 = int_to_ptr.vmem [resolvable:$true] %s1007
          %1013 = dma.hbm_to_vmem [thread:$0]  %s15, 768, %s1008, [#allocation9], 64, 64, 4
        $region40: #{wavlm_base_forward.1} parent=11 // pred_fallthru
          _
        // Predicated region
        $region41: #{wavlm_base_forward.1} parent=11 // pred_check
          %p1014 = pneg %p295
        $region42: #{wavlm_base_forward.1} parent=11 // pred_check_branch
          %1016 = sbr.rel (%p1014) target = $region44
        $region43: #{wavlm_base_forward.1} parent=11 // pred_region
          %s1018 = ssub.s32 16, 16
          %1019 = vsyncadd [#allocation12], %s1018
          %s1021 = sshll.u32 [#allocation11], 4
          %s1022 = int_to_ptr.vmem [resolvable:$true] %s1021
          %1024 = dma.hbm_to_vmem [thread:$0]  %s17, 16, %s1022, [#allocation12]
        $region44: #{wavlm_base_forward.1} parent=11 // pred_fallthru
          _
        // Predicated region
        $region45: #{wavlm_base_forward.1} parent=11 // pred_check
          %p1025 = pneg %p316
        $region46: #{wavlm_base_forward.1} parent=11 // pred_check_branch
          %1027 = sbr.rel (%p1025) target = $region48
        $region47: #{wavlm_base_forward.1} parent=11 // pred_region
          %s1029 = ssub.s32 16, 16
          %1030 = vsyncadd [#allocation12], %s1029
          %s1032 = sshll.u32 [#allocation13], 4
          %s1033 = int_to_ptr.vmem [resolvable:$true] %s1032
          %1035 = dma.hbm_to_vmem [thread:$0]  %s19, 16, %s1033, [#allocation12]
        $region48: #{wavlm_base_forward.1} parent=11 // pred_fallthru
          _
        // Predicated region
        $region49: #{wavlm_base_forward.1} parent=11 // pred_check
          %p1036 = pneg %p337
        $region50: #{wavlm_base_forward.1} parent=11 // pred_check_branch
          %1038 = sbr.rel (%p1036) target = $region52
        $region51: #{wavlm_base_forward.1} parent=11 // pred_region
          %s1040 = ssub.s32 256, 256
          %1041 = vsyncadd [#allocation15], %s1040
          %s1042 = sshll.u32 [#allocation14], 4
          %s1043 = int_to_ptr.vmem [resolvable:$true] %s1042
          %1048 = dma.hbm_to_vmem [thread:$0]  %s21, 256, %s1043, [#allocation15], 64, 64, 4
        $region52: #{wavlm_base_forward.1} parent=11 // pred_fallthru
          _
        // Predicated region
        $region53: #{wavlm_base_forward.1} parent=11 // pred_check
          %p1049 = pneg %p358
        $region54: #{wavlm_base_forward.1} parent=11 // pred_check_branch
          %1051 = sbr.rel (%p1049) target = $region56
        $region55: #{wavlm_base_forward.1} parent=11 // pred_region
          %s1053 = ssub.s32 16, 16
          %1054 = vsyncadd [#allocation15], %s1053
          %s1056 = sshll.u32 [#allocation16], 4
          %s1057 = int_to_ptr.vmem [resolvable:$true] %s1056
          %1059 = dma.hbm_to_vmem [thread:$0]  %s23, 16, %s1057, [#allocation15]
        $region56: #{wavlm_base_forward.1} parent=11 // pred_fallthru
          _
        // Predicated region
        $region57: #{wavlm_base_forward.1} parent=11 // pred_check
          %p1060 = pneg %p379
        $region58: #{wavlm_base_forward.1} parent=11 // pred_check_branch
          %1062 = sbr.rel (%p1060) target = $region60
        $region59: #{wavlm_base_forward.1} parent=11 // pred_region
          _
        $region60: #{wavlm_base_forward.1} parent=11 // pred_fallthru
          _
        // Predicated region
        $region61: #{wavlm_base_forward.1} parent=11 // pred_check
          %p1063 = pneg %p400
        $region62: #{wavlm_base_forward.1} parent=11 // pred_check_branch
          %1065 = sbr.rel (%p1063) target = $region64
        $region63: #{wavlm_base_forward.1} parent=11 // pred_region
          %s1067 = ssub.s32 16, 16
          %1068 = vsyncadd [#allocation18], %s1067
          %s1070 = sshll.u32 [#allocation17], 4
          %s1071 = int_to_ptr.vmem [resolvable:$true] %s1070
          %1073 = dma.hbm_to_vmem [thread:$0]  %s27, 16, %s1071, [#allocation18]
        $region64: #{wavlm_base_forward.1} parent=11 // pred_fallthru
          _
        // Predicated region
        $region65: #{wavlm_base_forward.1} parent=11 // pred_check
          %p1074 = pneg %p421
        $region66: #{wavlm_base_forward.1} parent=11 // pred_check_branch
          %1076 = sbr.rel (%p1074) target = $region68
        $region67: #{wavlm_base_forward.1} parent=11 // pred_region
          %s1078 = ssub.s32 16, 16
          %1079 = vsyncadd [#allocation18], %s1078
          %s1081 = sshll.u32 [#allocation19], 4
          %s1082 = int_to_ptr.vmem [resolvable:$true] %s1081
          %1084 = dma.hbm_to_vmem [thread:$0]  %s29, 16, %s1082, [#allocation18]
        $region68: #{wavlm_base_forward.1} parent=11 // pred_fallthru
          _
        // Predicated region
        $region69: #{wavlm_base_forward.1} parent=11 // pred_check
          %p1085 = pneg %p442
        $region70: #{wavlm_base_forward.1} parent=11 // pred_check_branch
          %1087 = sbr.rel (%p1085) target = $region72
        $region71: #{wavlm_base_forward.1} parent=11 // pred_region
          %s1089 = ssub.s32 16, 16
          %1090 = vsyncadd [#allocation21], %s1089
          %s1092 = sshll.u32 [#allocation20], 4
          %s1093 = int_to_ptr.vmem [resolvable:$true] %s1092
          %1095 = dma.hbm_to_vmem [thread:$0]  %s31, 16, %s1093, [#allocation21]
        $region72: #{wavlm_base_forward.1} parent=11 // pred_fallthru
          _
        // Predicated region
        $region73: #{wavlm_base_forward.1} parent=11 // pred_check
          %p1096 = pneg %p463
        $region74: #{wavlm_base_forward.1} parent=11 // pred_check_branch
          %1098 = sbr.rel (%p1096) target = $region76
        $region75: #{wavlm_base_forward.1} parent=11 // pred_region
          _
        $region76: #{wavlm_base_forward.1} parent=11 // pred_fallthru
          _
        // Predicated region
        $region77: #{wavlm_base_forward.1} parent=11 // pred_check
          %p1099 = pneg %p484
        $region78: #{wavlm_base_forward.1} parent=11 // pred_check_branch
          %1101 = sbr.rel (%p1099) target = $region80
        $region79: #{wavlm_base_forward.1} parent=11 // pred_region
          _
        $region80: #{wavlm_base_forward.1} parent=11 // pred_fallthru
          _
        // Predicated region
        $region81: #{wavlm_base_forward.1} parent=11 // pred_check
          %p1102 = pneg %p505
        $region82: #{wavlm_base_forward.1} parent=11 // pred_check_branch
          %1104 = sbr.rel (%p1102) target = $region84
        $region83: #{wavlm_base_forward.1} parent=11 // pred_region
          %s1106 = ssub.s32 1024, 1024
          %1107 = vsyncadd [#allocation21], %s1106
          %s1108 = sshll.u32 [#allocation22], 4
          %s1109 = int_to_ptr.vmem [resolvable:$true] %s1108
          %1114 = dma.hbm_to_vmem [thread:$0]  %s37, 1024, %s1109, [#allocation21], 64, 64, 4
        $region84: #{wavlm_base_forward.1} parent=11 // pred_fallthru
          _
        // Predicated region
        $region85: #{wavlm_base_forward.1} parent=11 // pred_check
          %p1115 = pneg %p526
        $region86: #{wavlm_base_forward.1} parent=11 // pred_check_branch
          %1117 = sbr.rel (%p1115) target = $region88
        $region87: #{wavlm_base_forward.1} parent=11 // pred_region
          _
        $region88: #{wavlm_base_forward.1} parent=11 // pred_fallthru
          _
        // Predicated region
        $region89: #{wavlm_base_forward.1} parent=11 // pred_check
          %p1118 = pneg %p547
        $region90: #{wavlm_base_forward.1} parent=11 // pred_check_branch
          %1120 = sbr.rel (%p1118) target = $region92
        $region91: #{wavlm_base_forward.1} parent=11 // pred_region
          %s1122 = ssub.s32 32, 32
          %1123 = vsyncadd [#allocation24], %s1122
          %s1124 = sshll.u32 [#allocation23], 4
          %s1125 = int_to_ptr.vmem [resolvable:$true] %s1124
          %1130 = dma.hbm_to_vmem [thread:$0]  %s41, 32, %s1125, [#allocation24], 16, 16, 1
        $region92: #{wavlm_base_forward.1} parent=11 // pred_fallthru
          _
        // Predicated region
        $region93: #{wavlm_base_forward.1} parent=11 // pred_check
          %p1131 = pneg %p568
        $region94: #{wavlm_base_forward.1} parent=11 // pred_check_branch
          %1133 = sbr.rel (%p1131) target = $region96
        $region95: #{wavlm_base_forward.1} parent=11 // pred_region
          %s1135 = ssub.s32 32, 32
          %1136 = vsyncadd [#allocation24], %s1135
          %s1137 = sshll.u32 [#allocation25], 4
          %s1138 = int_to_ptr.vmem [resolvable:$true] %s1137
          %1143 = dma.hbm_to_vmem [thread:$0]  %s43, 32, %s1138, [#allocation24], 16, 16, 1
        $region96: #{wavlm_base_forward.1} parent=11 // pred_fallthru
          _
        // Predicated region
        $region97: #{wavlm_base_forward.1} parent=11 // pred_check
          %p1144 = pneg %p589
        $region98: #{wavlm_base_forward.1} parent=11 // pred_check_branch
          %1146 = sbr.rel (%p1144) target = $region100
        $region99: #{wavlm_base_forward.1} parent=11 // pred_region
          %s1148 = ssub.s32 2048, 2048
          %1149 = vsyncadd [#allocation27], %s1148
          %s1150 = sshll.u32 [#allocation26], 4
          %s1151 = int_to_ptr.vmem [resolvable:$true] %s1150
          %1156 = dma.hbm_to_vmem [thread:$0]  %s45, 2048, %s1151, [#allocation27], 64, 64, 4
        $region100: #{wavlm_base_forward.1} parent=11 // pred_fallthru
          _
        // Predicated region
        $region101: #{wavlm_base_forward.1} parent=11 // pred_check
          %p1157 = pneg %p610
        $region102: #{wavlm_base_forward.1} parent=11 // pred_check_branch
          %1159 = sbr.rel (%p1157) target = $region104
        $region103: #{wavlm_base_forward.1} parent=11 // pred_region
          %s1161 = ssub.s32 32, 32
          %1162 = vsyncadd [#allocation27], %s1161
          %s1163 = sshll.u32 [#allocation28], 4
          %s1164 = int_to_ptr.vmem [resolvable:$true] %s1163
          %1169 = dma.hbm_to_vmem [thread:$0]  %s47, 32, %s1164, [#allocation27], 16, 16, 1
        $region104: #{wavlm_base_forward.1} parent=11 // pred_fallthru
          _
        // Predicated region
        $region105: #{wavlm_base_forward.1} parent=11 // pred_check
          %p1170 = pneg %p631
        $region106: #{wavlm_base_forward.1} parent=11 // pred_check_branch
          %1172 = sbr.rel (%p1170) target = $region108
        $region107: #{wavlm_base_forward.1} parent=11 // pred_region
          %s1174 = ssub.s32 2048, 2048
          %1175 = vsyncadd [#allocation30], %s1174
          %s1176 = sshll.u32 [#allocation29], 4
          %s1177 = int_to_ptr.vmem [resolvable:$true] %s1176
          %1182 = dma.hbm_to_vmem [thread:$0]  %s49, 2048, %s1177, [#allocation30], 64, 64, 4
        $region108: #{wavlm_base_forward.1} parent=11 // pred_fallthru
          _
        // Predicated region
        $region109: #{wavlm_base_forward.1} parent=11 // pred_check
          %p1183 = pneg %p652
        $region110: #{wavlm_base_forward.1} parent=11 // pred_check_branch
          %1185 = sbr.rel (%p1183) target = $region112
        $region111: #{wavlm_base_forward.1} parent=11 // pred_region
          %s1187 = ssub.s32 32, 32
          %1188 = vsyncadd [#allocation30], %s1187
          %s1189 = sshll.u32 [#allocation31], 4
          %s1190 = int_to_ptr.vmem [resolvable:$true] %s1189
          %1195 = dma.hbm_to_vmem [thread:$0]  %s51, 32, %s1190, [#allocation30], 16, 16, 1
        $region112: #{wavlm_base_forward.1} parent=11 // pred_fallthru
          _
        // Predicated region
        $region113: #{wavlm_base_forward.1} parent=11 // pred_check
          %p1196 = pneg %p673
        $region114: #{wavlm_base_forward.1} parent=11 // pred_check_branch
          %1198 = sbr.rel (%p1196) target = $region116
        $region115: #{wavlm_base_forward.1} parent=11 // pred_region
          %s1200 = ssub.s32 32, 32
          %1201 = vsyncadd [#allocation33], %s1200
          %s1202 = sshll.u32 [#allocation32], 4
          %s1203 = int_to_ptr.vmem [resolvable:$true] %s1202
          %1208 = dma.hbm_to_vmem [thread:$0]  %s53, 32, %s1203, [#allocation33], 16, 16, 1
        $region116: #{wavlm_base_forward.1} parent=11 // pred_fallthru
          _
        // Predicated region
        $region117: #{wavlm_base_forward.1} parent=11 // pred_check
          %p1209 = pneg %p694
        $region118: #{wavlm_base_forward.1} parent=11 // pred_check_branch
          %1211 = sbr.rel (%p1209) target = $region120
        $region119: #{wavlm_base_forward.1} parent=11 // pred_region
          %s1213 = ssub.s32 32, 32
          %1214 = vsyncadd [#allocation33], %s1213
          %s1215 = sshll.u32 [#allocation34], 4
          %s1216 = int_to_ptr.vmem [resolvable:$true] %s1215
          %1221 = dma.hbm_to_vmem [thread:$0]  %s55, 32, %s1216, [#allocation33], 16, 16, 1
        $region120: #{wavlm_base_forward.1} parent=11 // pred_fallthru
          _
        // Predicated region
        $region121: #{wavlm_base_forward.1} parent=11 // pred_check
          %p1222 = pneg %p715
        $region122: #{wavlm_base_forward.1} parent=11 // pred_check_branch
          %1224 = sbr.rel (%p1222) target = $region124
        $region123: #{wavlm_base_forward.1} parent=11 // pred_region
          %s1226 = ssub.s32 1024, 1024
          %1227 = vsyncadd [#allocation36], %s1226
          %s1228 = sshll.u32 [#allocation35], 4
          %s1229 = int_to_ptr.vmem [resolvable:$true] %s1228
          %1234 = dma.hbm_to_vmem [thread:$0]  %s57, 1024, %s1229, [#allocation36], 64, 64, 4
        $region124: #{wavlm_base_forward.1} parent=11 // pred_fallthru
          _
        // Predicated region
        $region125: #{wavlm_base_forward.1} parent=11 // pred_check
          %p1235 = pneg %p736
        $region126: #{wavlm_base_forward.1} parent=11 // pred_check_branch
          %1237 = sbr.rel (%p1235) target = $region128
        $region127: #{wavlm_base_forward.1} parent=11 // pred_region
          %s1239 = ssub.s32 16, 16
          %1240 = vsyncadd [#allocation36], %s1239
          %s1242 = sshll.u32 [#allocation37], 4
          %s1243 = int_to_ptr.vmem [resolvable:$true] %s1242
          %1245 = dma.hbm_to_vmem [thread:$0]  %s59, 16, %s1243, [#allocation36]
        $region128: #{wavlm_base_forward.1} parent=11 // pred_fallthru
          _
        // Predicated region
        $region129: #{wavlm_base_forward.1} parent=11 // pred_check
          %p1246 = pneg %p757
        $region130: #{wavlm_base_forward.1} parent=11 // pred_check_branch
          %1248 = sbr.rel (%p1246) target = $region132
        $region131: #{wavlm_base_forward.1} parent=11 // pred_region
          %s1250 = ssub.s32 5120, 5120
          %1251 = vsyncadd [#allocation39], %s1250
          %s1252 = sshll.u32 [#allocation38], 4
          %s1253 = int_to_ptr.vmem [resolvable:$true] %s1252
          %1258 = dma.hbm_to_vmem [thread:$0]  %s61, 5120, %s1253, [#allocation39], 64, 64, 4
        $region132: #{wavlm_base_forward.1} parent=11 // pred_fallthru
          _
        // Predicated region
        $region133: #{wavlm_base_forward.1} parent=11 // pred_check
          %p1259 = pneg %p778
        $region134: #{wavlm_base_forward.1} parent=11 // pred_check_branch
          %1261 = sbr.rel (%p1259) target = $region136
        $region135: #{wavlm_base_forward.1} parent=11 // pred_region
          %s1263 = ssub.s32 16, 16
          %1264 = vsyncadd [#allocation39], %s1263
          %s1266 = sshll.u32 [#allocation40], 4
          %s1267 = int_to_ptr.vmem [resolvable:$true] %s1266
          %1269 = dma.hbm_to_vmem [thread:$0]  %s63, 16, %s1267, [#allocation39]
        $region136: #{wavlm_base_forward.1} parent=11 // pred_fallthru
          _
        // Predicated region
        $region137: #{wavlm_base_forward.1} parent=11 // pred_check
          %p1270 = pneg %p799
        $region138: #{wavlm_base_forward.1} parent=11 // pred_check_branch
          %1272 = sbr.rel (%p1270) target = $region140
        $region139: #{wavlm_base_forward.1} parent=11 // pred_region
          %s1274 = ssub.s32 3072, 3072
          %1275 = vsyncadd [#allocation42], %s1274
          %s1276 = sshll.u32 [#allocation41], 4
          %s1277 = int_to_ptr.vmem [resolvable:$true] %s1276
          %1282 = dma.hbm_to_vmem [thread:$0]  %s65, 3072, %s1277, [#allocation42], 64, 64, 4
        $region140: #{wavlm_base_forward.1} parent=11 // pred_fallthru
          _
        // Predicated region
        $region141: #{wavlm_base_forward.1} parent=11 // pred_check
          %p1283 = pneg %p820
        $region142: #{wavlm_base_forward.1} parent=11 // pred_check_branch
          %1285 = sbr.rel (%p1283) target = $region144
        $region143: #{wavlm_base_forward.1} parent=11 // pred_region
          _
        $region144: #{wavlm_base_forward.1} parent=11 // pred_fallthru
          _
        // Predicated region
        $region145: #{wavlm_base_forward.1} parent=11 // pred_check
          %p1286 = pneg %p841
        $region146: #{wavlm_base_forward.1} parent=11 // pred_check_branch
          %1288 = sbr.rel (%p1286) target = $region148
        $region147: #{wavlm_base_forward.1} parent=11 // pred_region
          _
        $region148: #{wavlm_base_forward.1} parent=11 // pred_fallthru
          _
        // Predicated region
        $region149: #{wavlm_base_forward.1} parent=11 // pred_check
          %p1289 = pneg %p862
        $region150: #{wavlm_base_forward.1} parent=11 // pred_check_branch
          %1291 = sbr.rel (%p1289) target = $region152
        $region151: #{wavlm_base_forward.1} parent=11 // pred_region
          _
        $region152: #{wavlm_base_forward.1} parent=11 // pred_fallthru
          _
        // Predicated region
        $region153: #{wavlm_base_forward.1} parent=11 // pred_check
          %p1292 = pneg %p883
        $region154: #{wavlm_base_forward.1} parent=11 // pred_check_branch
          %1294 = sbr.rel (%p1292) target = $region156
        $region155: #{wavlm_base_forward.1} parent=11 // pred_region
          %s1296 = ssub.s32 2048, 2048
          %1297 = vsyncadd [#allocation42], %s1296
          %s1298 = sshll.u32 [#allocation43], 4
          %s1299 = int_to_ptr.vmem [resolvable:$true] %s1298
          %1304 = dma.hbm_to_vmem [thread:$0]  %s73, 2048, %s1299, [#allocation42], 64, 64, 4
        $region156: #{wavlm_base_forward.1} parent=11 // pred_fallthru
          _
        // Predicated region
        $region157: #{wavlm_base_forward.1} parent=11 // pred_check
          %p1305 = pneg %p904
        $region158: #{wavlm_base_forward.1} parent=11 // pred_check_branch
          %1307 = sbr.rel (%p1305) target = $region160
        $region159: #{wavlm_base_forward.1} parent=11 // pred_region
          %s1309 = ssub.s32 16, 16
          %1310 = vsyncadd [#allocation45], %s1309
          %s1312 = sshll.u32 [#allocation44], 4
          %s1313 = int_to_ptr.vmem [resolvable:$true] %s1312
          %1315 = dma.hbm_to_vmem [thread:$0]  %s75, 16, %s1313, [#allocation45]
        $region160: #{wavlm_base_forward.1} parent=11 // pred_fallthru
          _
      $region12: #{wavlm_base_forward.1} parent=5 // pred_fallthru
        _
      %p1316 = scmp.lt.s32.totalorder %s101, 2
      // Predicated region
      $region161: #{wavlm_base_forward.1} parent=5 // pred_check
        %p1317 = pneg %p1316
      $region162: #{wavlm_base_forward.1} parent=5 // pred_check_branch
        %1319 = sbr.rel (%p1317) target = $region164
      $region163: #{wavlm_base_forward.1} parent=5 // pred_region
        // Predicated region
        $region165: #{wavlm_base_forward.1} parent=163 // pred_check
          %p1320 = pneg %p121
        $region166: #{wavlm_base_forward.1} parent=163 // pred_check_branch
          %1322 = sbr.rel (%p1320) target = $region168
        $region167: #{wavlm_base_forward.1} parent=163 // pred_region
          %p1323 = scmp.lt.s32.totalorder %s101, 1
          %s1324 = scalar_select %p1323, %s101, 1
          %s1325 = smul.addr %s1324, 5
          %s1326 = smul.addr %s1325, 8
          %s1327 = scalar_lea.vmem %s1, %s1326
        $region168: #{wavlm_base_forward.1} parent=163 // pred_fallthru
          _
      $region164: #{wavlm_base_forward.1} parent=5 // pred_fallthru
        _
      %p1328 = scmp.le.s32.totalorder 1, %s101
      %p1329 = scmp.lt.s32.totalorder %s101, 3
      %p1330 = pnand %p1328, %p1329
      %p1331 = pneg %p1330
      // Predicated region
      $region169: #{wavlm_base_forward.1} parent=5 // pred_check
        _
      $region170: #{wavlm_base_forward.1} parent=5 // pred_check_branch
        %1333 = sbr.rel (%p1330) target = $region172
      $region171: #{wavlm_base_forward.1} parent=5 // pred_region
        %s1334 = ssub.s32 %s101, 1
        // Predicated region
        $region173: #{wavlm_base_forward.1} parent=171 // pred_check
          %p1335 = pneg %p169
        $region174: #{wavlm_base_forward.1} parent=171 // pred_check_branch
          %1337 = sbr.rel (%p1335) target = $region176
        $region175: #{wavlm_base_forward.1} parent=171 // pred_region
          %1338 = dma.done [#allocation3], 128
        $region176: #{wavlm_base_forward.1} parent=171 // pred_fallthru
          _
        // Predicated region
        $region177: #{wavlm_base_forward.1} parent=171 // pred_check
          %p1339 = pneg %p190
        $region178: #{wavlm_base_forward.1} parent=171 // pred_check_branch
          %1341 = sbr.rel (%p1339) target = $region180
        $region179: #{wavlm_base_forward.1} parent=171 // pred_region
          %1342 = dma.done [#allocation6], 128
        $region180: #{wavlm_base_forward.1} parent=171 // pred_fallthru
          _
        // Predicated region
        $region181: #{wavlm_base_forward.1} parent=171 // pred_check
          %p1343 = pneg %p211
        $region182: #{wavlm_base_forward.1} parent=171 // pred_check_branch
          %1345 = sbr.rel (%p1343) target = $region184
        $region183: #{wavlm_base_forward.1} parent=171 // pred_region
          %1346 = dma.done [#allocation6], 128
        $region184: #{wavlm_base_forward.1} parent=171 // pred_fallthru
          _
        // Predicated region
        $region185: #{wavlm_base_forward.1} parent=171 // pred_check
          %p1347 = pneg %p253
        $region186: #{wavlm_base_forward.1} parent=171 // pred_check_branch
          %1349 = sbr.rel (%p1347) target = $region188
        $region187: #{wavlm_base_forward.1} parent=171 // pred_region
          %1350 = dma.done [#allocation9], 16
        $region188: #{wavlm_base_forward.1} parent=171 // pred_fallthru
          _
        // Predicated region
        $region189: #{wavlm_base_forward.1} parent=171 // pred_check
          %p1351 = pneg %p274
        $region190: #{wavlm_base_forward.1} parent=171 // pred_check_branch
          %1353 = sbr.rel (%p1351) target = $region192
        $region191: #{wavlm_base_forward.1} parent=171 // pred_region
          %1354 = dma.done [#allocation9], 768
        $region192: #{wavlm_base_forward.1} parent=171 // pred_fallthru
          _
        // Predicated region
        $region193: #{wavlm_base_forward.1} parent=171 // pred_check
          %p1355 = pneg %p295
        $region194: #{wavlm_base_forward.1} parent=171 // pred_check_branch
          %1357 = sbr.rel (%p1355) target = $region196
        $region195: #{wavlm_base_forward.1} parent=171 // pred_region
          %1358 = dma.done [#allocation12], 16
        $region196: #{wavlm_base_forward.1} parent=171 // pred_fallthru
          _
        // Predicated region
        $region197: #{wavlm_base_forward.1} parent=171 // pred_check
          %p1359 = pneg %p316
        $region198: #{wavlm_base_forward.1} parent=171 // pred_check_branch
          %1361 = sbr.rel (%p1359) target = $region200
        $region199: #{wavlm_base_forward.1} parent=171 // pred_region
          %1362 = dma.done [#allocation12], 16
        $region200: #{wavlm_base_forward.1} parent=171 // pred_fallthru
          _
        // Predicated region
        $region201: #{wavlm_base_forward.1} parent=171 // pred_check
          %p1363 = pneg %p337
        $region202: #{wavlm_base_forward.1} parent=171 // pred_check_branch
          %1365 = sbr.rel (%p1363) target = $region204
        $region203: #{wavlm_base_forward.1} parent=171 // pred_region
          %1366 = dma.done [#allocation15], 256
        $region204: #{wavlm_base_forward.1} parent=171 // pred_fallthru
          _
        // Predicated region
        $region205: #{wavlm_base_forward.1} parent=171 // pred_check
          %p1367 = pneg %p358
        $region206: #{wavlm_base_forward.1} parent=171 // pred_check_branch
          %1369 = sbr.rel (%p1367) target = $region208
        $region207: #{wavlm_base_forward.1} parent=171 // pred_region
          %1370 = dma.done [#allocation15], 16
        $region208: #{wavlm_base_forward.1} parent=171 // pred_fallthru
          _
        // Predicated region
        $region209: #{wavlm_base_forward.1} parent=171 // pred_check
          %p1371 = pneg %p400
        $region210: #{wavlm_base_forward.1} parent=171 // pred_check_branch
          %1373 = sbr.rel (%p1371) target = $region212
        $region211: #{wavlm_base_forward.1} parent=171 // pred_region
          %1374 = dma.done [#allocation18], 16
        $region212: #{wavlm_base_forward.1} parent=171 // pred_fallthru
          _
        // Predicated region
        $region213: #{wavlm_base_forward.1} parent=171 // pred_check
          %p1375 = pneg %p421
        $region214: #{wavlm_base_forward.1} parent=171 // pred_check_branch
          %1377 = sbr.rel (%p1375) target = $region216
        $region215: #{wavlm_base_forward.1} parent=171 // pred_region
          %1378 = dma.done [#allocation18], 16
        $region216: #{wavlm_base_forward.1} parent=171 // pred_fallthru
          _
        // Predicated region
        $region217: #{wavlm_base_forward.1} parent=171 // pred_check
          %p1379 = pneg %p442
        $region218: #{wavlm_base_forward.1} parent=171 // pred_check_branch
          %1381 = sbr.rel (%p1379) target = $region220
        $region219: #{wavlm_base_forward.1} parent=171 // pred_region
          %1382 = dma.done [#allocation21], 16
        $region220: #{wavlm_base_forward.1} parent=171 // pred_fallthru
          _
        // Predicated region
        $region221: #{wavlm_base_forward.1} parent=171 // pred_check
          %p1383 = pneg %p505
        $region222: #{wavlm_base_forward.1} parent=171 // pred_check_branch
          %1385 = sbr.rel (%p1383) target = $region224
        $region223: #{wavlm_base_forward.1} parent=171 // pred_region
          %1386 = dma.done [#allocation21], 1024
        $region224: #{wavlm_base_forward.1} parent=171 // pred_fallthru
          _
        // Predicated region
        $region225: #{wavlm_base_forward.1} parent=171 // pred_check
          %p1387 = pneg %p547
        $region226: #{wavlm_base_forward.1} parent=171 // pred_check_branch
          %1389 = sbr.rel (%p1387) target = $region228
        $region227: #{wavlm_base_forward.1} parent=171 // pred_region
          %1390 = dma.done [#allocation24], 32
        $region228: #{wavlm_base_forward.1} parent=171 // pred_fallthru
          _
        // Predicated region
        $region229: #{wavlm_base_forward.1} parent=171 // pred_check
          %p1391 = pneg %p568
        $region230: #{wavlm_base_forward.1} parent=171 // pred_check_branch
          %1393 = sbr.rel (%p1391) target = $region232
        $region231: #{wavlm_base_forward.1} parent=171 // pred_region
          %1394 = dma.done [#allocation24], 32
        $region232: #{wavlm_base_forward.1} parent=171 // pred_fallthru
          _
        // Predicated region
        $region233: #{wavlm_base_forward.1} parent=171 // pred_check
          %p1395 = pneg %p589
        $region234: #{wavlm_base_forward.1} parent=171 // pred_check_branch
          %1397 = sbr.rel (%p1395) target = $region236
        $region235: #{wavlm_base_forward.1} parent=171 // pred_region
          %1398 = dma.done [#allocation27], 2048
        $region236: #{wavlm_base_forward.1} parent=171 // pred_fallthru
          _
        // Predicated region
        $region237: #{wavlm_base_forward.1} parent=171 // pred_check
          %p1399 = pneg %p610
        $region238: #{wavlm_base_forward.1} parent=171 // pred_check_branch
          %1401 = sbr.rel (%p1399) target = $region240
        $region239: #{wavlm_base_forward.1} parent=171 // pred_region
          %1402 = dma.done [#allocation27], 32
        $region240: #{wavlm_base_forward.1} parent=171 // pred_fallthru
          _
        // Predicated region
        $region241: #{wavlm_base_forward.1} parent=171 // pred_check
          %p1403 = pneg %p631
        $region242: #{wavlm_base_forward.1} parent=171 // pred_check_branch
          %1405 = sbr.rel (%p1403) target = $region244
        $region243: #{wavlm_base_forward.1} parent=171 // pred_region
          %1406 = dma.done [#allocation30], 2048
        $region244: #{wavlm_base_forward.1} parent=171 // pred_fallthru
          _
        // Predicated region
        $region245: #{wavlm_base_forward.1} parent=171 // pred_check
          %p1407 = pneg %p652
        $region246: #{wavlm_base_forward.1} parent=171 // pred_check_branch
          %1409 = sbr.rel (%p1407) target = $region248
        $region247: #{wavlm_base_forward.1} parent=171 // pred_region
          %1410 = dma.done [#allocation30], 32
        $region248: #{wavlm_base_forward.1} parent=171 // pred_fallthru
          _
        // Predicated region
        $region249: #{wavlm_base_forward.1} parent=171 // pred_check
          %p1411 = pneg %p673
        $region250: #{wavlm_base_forward.1} parent=171 // pred_check_branch
          %1413 = sbr.rel (%p1411) target = $region252
        $region251: #{wavlm_base_forward.1} parent=171 // pred_region
          %1414 = dma.done [#allocation33], 32
        $region252: #{wavlm_base_forward.1} parent=171 // pred_fallthru
          _
        // Predicated region
        $region253: #{wavlm_base_forward.1} parent=171 // pred_check
          %p1415 = pneg %p694
        $region254: #{wavlm_base_forward.1} parent=171 // pred_check_branch
          %1417 = sbr.rel (%p1415) target = $region256
        $region255: #{wavlm_base_forward.1} parent=171 // pred_region
          %1418 = dma.done [#allocation33], 32
        $region256: #{wavlm_base_forward.1} parent=171 // pred_fallthru
          _
        // Predicated region
        $region257: #{wavlm_base_forward.1} parent=171 // pred_check
          %p1419 = pneg %p715
        $region258: #{wavlm_base_forward.1} parent=171 // pred_check_branch
          %1421 = sbr.rel (%p1419) target = $region260
        $region259: #{wavlm_base_forward.1} parent=171 // pred_region
          %1422 = dma.done [#allocation36], 1024
        $region260: #{wavlm_base_forward.1} parent=171 // pred_fallthru
          _
        // Predicated region
        $region261: #{wavlm_base_forward.1} parent=171 // pred_check
          %p1423 = pneg %p736
        $region262: #{wavlm_base_forward.1} parent=171 // pred_check_branch
          %1425 = sbr.rel (%p1423) target = $region264
        $region263: #{wavlm_base_forward.1} parent=171 // pred_region
          %1426 = dma.done [#allocation36], 16
        $region264: #{wavlm_base_forward.1} parent=171 // pred_fallthru
          _
        // Predicated region
        $region265: #{wavlm_base_forward.1} parent=171 // pred_check
          %p1427 = pneg %p757
        $region266: #{wavlm_base_forward.1} parent=171 // pred_check_branch
          %1429 = sbr.rel (%p1427) target = $region268
        $region267: #{wavlm_base_forward.1} parent=171 // pred_region
          %1430 = dma.done [#allocation39], 5120
        $region268: #{wavlm_base_forward.1} parent=171 // pred_fallthru
          _
        // Predicated region
        $region269: #{wavlm_base_forward.1} parent=171 // pred_check
          %p1431 = pneg %p778
        $region270: #{wavlm_base_forward.1} parent=171 // pred_check_branch
          %1433 = sbr.rel (%p1431) target = $region272
        $region271: #{wavlm_base_forward.1} parent=171 // pred_region
          %1434 = dma.done [#allocation39], 16
        $region272: #{wavlm_base_forward.1} parent=171 // pred_fallthru
          _
        // Predicated region
        $region273: #{wavlm_base_forward.1} parent=171 // pred_check
          %p1435 = pneg %p799
        $region274: #{wavlm_base_forward.1} parent=171 // pred_check_branch
          %1437 = sbr.rel (%p1435) target = $region276
        $region275: #{wavlm_base_forward.1} parent=171 // pred_region
          %1438 = dma.done [#allocation42], 3072
        $region276: #{wavlm_base_forward.1} parent=171 // pred_fallthru
          _
        // Predicated region
        $region277: #{wavlm_base_forward.1} parent=171 // pred_check
          %p1439 = pneg %p883
        $region278: #{wavlm_base_forward.1} parent=171 // pred_check_branch
          %1441 = sbr.rel (%p1439) target = $region280
        $region279: #{wavlm_base_forward.1} parent=171 // pred_region
          %1442 = dma.done [#allocation42], 2048
        $region280: #{wavlm_base_forward.1} parent=171 // pred_fallthru
          _
        // Predicated region
        $region281: #{wavlm_base_forward.1} parent=171 // pred_check
          %p1443 = pneg %p904
        $region282: #{wavlm_base_forward.1} parent=171 // pred_check_branch
          %1445 = sbr.rel (%p1443) target = $region284
        $region283: #{wavlm_base_forward.1} parent=171 // pred_region
          %1446 = dma.done [#allocation45], 16
        $region284: #{wavlm_base_forward.1} parent=171 // pred_fallthru
          _
        %p1447 = scmp.lt.s32.totalorder %s106, 1
        %s1448 = scalar_select %p1447, %s106, 1
        %s1449 = smul.addr %s1448, 5
        %s1450 = smul.addr %s1449, 8
        %s1451 = scalar_lea.vmem %s1, %s1450
        %p1452 = pneg %p127
        %p1453 = pneg %p124
        %p1454 = pneg %p148
        %p1455 = pneg %p145
        %p1456 = pneg %p169
        %p1457 = pneg %p166
        %p1458 = pneg %p190
        %p1459 = pneg %p187
        %p1460 = pneg %p211
        %p1461 = pneg %p208
        %p1462 = pneg %p232
        %p1463 = pneg %p229
        %p1464 = pneg %p253
        %p1465 = pneg %p250
        %p1466 = pneg %p274
        %p1467 = pneg %p271
        %p1468 = pneg %p295
        %p1469 = pneg %p292
        %p1470 = pneg %p316
        %p1471 = pneg %p313
        %p1472 = pneg %p337
        %p1473 = pneg %p334
        %p1474 = pneg %p358
        %p1475 = pneg %p355
        %p1476 = pneg %p379
        %p1477 = pneg %p376
        %p1478 = pneg %p400
        %p1479 = pneg %p397
        %p1480 = pneg %p421
        %p1481 = pneg %p418
        %p1482 = pneg %p442
        %p1483 = pneg %p439
        %p1484 = pneg %p463
        %p1485 = pneg %p460
        %p1486 = pneg %p484
        %p1487 = pneg %p481
        %p1488 = pneg %p505
        %p1489 = pneg %p502
        %p1490 = pneg %p526
        %p1491 = pneg %p523
        %p1492 = pneg %p547
        %p1493 = pneg %p544
        %p1494 = pneg %p568
        %p1495 = pneg %p565
        %p1496 = pneg %p589
        %p1497 = pneg %p586
        %p1498 = pneg %p610
        %p1499 = pneg %p607
        %p1500 = pneg %p631
        %p1501 = pneg %p628
        %p1502 = pneg %p652
        %p1503 = pneg %p649
        %p1504 = pneg %p673
        %p1505 = pneg %p670
        %p1506 = pneg %p694
        %p1507 = pneg %p691
        %p1508 = pneg %p715
        %p1509 = pneg %p712
        %p1510 = pneg %p736
        %p1511 = pneg %p733
        %p1512 = pneg %p757
        %p1513 = pneg %p754
        %p1514 = pneg %p778
        %p1515 = pneg %p775
        %p1516 = pneg %p799
        %p1517 = pneg %p796
        %p1518 = pneg %p820
        %p1519 = pneg %p817
        %p1520 = pneg %p841
        %p1521 = pneg %p838
        %p1522 = pneg %p862
        %p1523 = pneg %p859
        %p1524 = pneg %p883
        %p1525 = pneg %p880
        %p1526 = pneg %p904
        %p1527 = pneg %p901
        %p1528 = pneg %p930
        %p1529 = pneg %p927
        %s1530 = sand.u32 %s917, 1
        %s1531 = scalar_lea.sflag [#allocation4], %s1530
        %s1532 = sand.u32 %s917, 1
        %s1533 = scalar_lea.vmem [#allocation46], %s1532
        %p1534 = scmp.lt.s32.totalorder %s106, 1
        %s1535 = scalar_select %p1534, %s106, 1
        %s1536 = smul.addr %s1535, 5
        %s1537 = smul.addr %s1536, 8
        %s1538 = scalar_lea.vmem %s1, %s1537
        %v1540 = vld [vmem:[%s1538] sm:$0xff]
        %v1541 = vld [vmem:[%s1538 + $0x8] sm:$0xff]
        %v1542 = vld [vmem:[%s1538 + $0x10] sm:$0xff]
        %v1543 = vld [vmem:[%s1538 + $0x18] sm:$0xff]
        %v1544 = vld [vmem:[%s1538 + $0x20] sm:$0xff]
        %vm1545 = vcmask 130048
        %v1546 = vsel %vm1545, %v1540, 0.0
        %1547 = vadd.xlane.f32.xlu0 %v1546
        %v1548 = vpop.xlane.xlu0 %1547
        %v1549 = vsel %vm1545, %v1541, 0.0
        %1550 = vadd.xlane.f32.xlu0 %v1549
        %v1551 = vpop.xlane.xlu0 %1550
        %v1552 = vsel %vm1545, %v1542, 0.0
        %1553 = vadd.xlane.f32.xlu0 %v1552
        %v1554 = vpop.xlane.xlu0 %1553
        %v1555 = vsel %vm1545, %v1543, 0.0
        %1556 = vadd.xlane.f32.xlu0 %v1555
        %v1557 = vpop.xlane.xlu0 %1556
        %v1558 = vsel %vm1545, %v1544, 0.0
        %1559 = vadd.xlane.f32.xlu0 %v1558
        %v1560 = vpop.xlane.xlu0 %1559
        %v1561 = vadd.f32 %v1548, %v1551
        %v1562 = vadd.f32 %v1561, %v1554
        %v1563 = vadd.f32 %v1562, %v1557
        %v1564 = vadd.f32 %v1563, %v1560
        %v1565 = vrot.slane %v1564, 4
        %v1566 = vadd.f32 %v1564, %v1565
        %v1567 = vrot.slane %v1566, 2
        %v1568 = vadd.f32 %v1566, %v1567
        %v1569 = vrot.slane %v1568, 1
        %v1570 = vadd.f32 %v1568, %v1569
        %v1571 = vmul.f32 %v1540, %v1540
        %v1572 = vmul.f32 %v1541, %v1541
        %v1573 = vmul.f32 %v1542, %v1542
        %v1574 = vmul.f32 %v1543, %v1543
        %v1575 = vmul.f32 %v1544, %v1544
        %v1576 = vsel %vm1545, %v1571, 0.0
        %1577 = vadd.xlane.f32.xlu0 %v1576
        %v1578 = vpop.xlane.xlu0 %1577
        %v1579 = vsel %vm1545, %v1572, 0.0
        %1580 = vadd.xlane.f32.xlu0 %v1579
        %v1581 = vpop.xlane.xlu0 %1580
        %v1582 = vsel %vm1545, %v1573, 0.0
        %1583 = vadd.xlane.f32.xlu0 %v1582
        %v1584 = vpop.xlane.xlu0 %1583
        %v1585 = vsel %vm1545, %v1574, 0.0
        %1586 = vadd.xlane.f32.xlu0 %v1585
        %v1587 = vpop.xlane.xlu0 %1586
        %v1588 = vsel %vm1545, %v1575, 0.0
        %1589 = vadd.xlane.f32.xlu0 %v1588
        %v1590 = vpop.xlane.xlu0 %1589
        %v1591 = vadd.f32 %v1578, %v1581
        %v1592 = vadd.f32 %v1591, %v1584
        %v1593 = vadd.f32 %v1592, %v1587
        %v1594 = vadd.f32 %v1593, %v1590
        %v1595 = vrot.slane %v1594, 4
        %v1596 = vadd.f32 %v1594, %v1595
        %v1597 = vrot.slane %v1596, 2
        %v1598 = vadd.f32 %v1596, %v1597
        %v1599 = vrot.slane %v1598, 1
        %v1600 = vadd.f32 %v1598, %v1599
        %v1601 = vrcp.pop 400.0
        %v1602 = vmul.f32 %v1570, %v1601
        %v1603 = vmul.f32 %v1600, %v1601
        %v1604 = vmul.f32 %v1602, %v1602
        %v1605 = vsub.f32 %v1603, %v1604
        %v1606 = vsub.f32 %v1540, %v1602
        %v1607 = vsub.f32 %v1541, %v1602
        %v1608 = vsub.f32 %v1542, %v1602
        %v1609 = vsub.f32 %v1543, %v1602
        %v1610 = vsub.f32 %v1544, %v1602
        %v1611 = vadd.f32 %v1605, 1e-07
        %v1612 = vrsqrt.pop %v1611
        %v1613 = vmul.f32 %v1606, %v1612
        %v1614 = vmul.f32 %v1607, %v1612
        %v1615 = vmul.f32 %v1608, %v1612
        %v1616 = vmul.f32 %v1609, %v1612
        %v1617 = vmul.f32 %v1610, %v1612
        %v1618 = vld [vmem:[#allocation2] sm:$0xf]
        %v1619 = vld [vmem:[#allocation2 + $0x4] sm:$0xf]
        %v1620 = vpack.c.bf16 %v1614, %v1613
        %v1621 = vpack.c.bf16 %v1616, %v1615
        %v1622 = vpack.c.bf16 %v1617, %v1617
        %v1625 = vunpack.c.l.b16 %v1618
        %v1626 = vunpack.c.l.b16 %v1619
        %v1627 = vpack.c.b16 %v1626, %v1625
        %v1630 = vsel %vm1545, %v1620, 0
        %v1633 = vsel %vm1545, %v1621, 0
        %v1636 = vsel %vm1545, %v1622, 0
        %1638 = vmatprep.subr.bf16.mxu0 0
        %1639 = vmatpush1.bf16.msra.mxu0 %v1627
        %1640 = vmatprep.subr.bf16.mxu0 0
        %1641 = vmatpush1.bf16.msra.mxu0 0
        %1642 = vmatprep.subr.bf16.mxu0 0
        %1643 = vmatpush1.bf16.msra.mxu0 0
        %1644 = vmatprep.subr.bf16.mxu0 0
        %1645 = vmatpush1.bf16.msra.mxu0 0
        %1646 = vmatprep.subr.bf16.mxu0 0
        %1647 = vmatpush1.bf16.msra.mxu0 0
        %1648 = vmatprep.subr.bf16.mxu0 0
        %1649 = vmatpush1.bf16.msra.mxu0 0
        %1650 = vmatprep.subr.bf16.mxu0 0
        %1651 = vmatpush1.bf16.msra.mxu0 0
        %1652 = vmatprep.subr.bf16.mxu0 0
        %1653 = vmatpush1.bf16.msra.mxu0 0
        %1654 = vmatprep.subr.bf16.mxu0 0
        %1655 = vmatpush1.bf16.msra.mxu0 0
        %1656 = vmatprep.subr.bf16.mxu0 0
        %1657 = vmatpush1.bf16.msra.mxu0 0
        %1658 = vmatprep.subr.bf16.mxu0 0
        %1659 = vmatpush1.bf16.msra.mxu0 0
        %1660 = vmatprep.subr.bf16.mxu0 0
        %1661 = vmatpush1.bf16.msra.mxu0 0
        %1662 = vmatprep.subr.bf16.mxu0 0
        %1663 = vmatpush1.bf16.msra.mxu0 0
        %1664 = vmatprep.subr.bf16.mxu0 0
        %1665 = vmatpush1.bf16.msra.mxu0 0
        %1666 = vmatprep.subr.bf16.mxu0 0
        %1667 = vmatpush1.bf16.msra.mxu0 0
        %1668 = vmatprep.subr.bf16.mxu0 0
        %1669 = vmatpush1.bf16.msra.mxu0 0
        %1670 = vmatprep.mubr.bf16.mxu0 0
        %1671 = vmatmul.mubr.bf16.gmra.mrb[0].mxu0 %v1630
        %v1672 = vpop.f32.mrb[0].mxu0
        %v1673 = vadd.f32 0.0, %v1672
        %v1674 = vpop.f32.mrb[0].mxu0
        %v1675 = vpop.f32.mrb[0].mxu0
        %v1676 = vadd.f32 0.0, %v1675
        %v1677 = vpop.f32.mrb[0].mxu0
        %1678 = vmatprep.mubr.bf16.mxu0 0
        %1679 = vmatmul.mubr.bf16.gmra.mrb[0].mxu0 %v1633
        %v1680 = vpop.f32.mrb[0].mxu0
        %v1681 = vadd.f32 0.0, %v1680
        %v1682 = vpop.f32.mrb[0].mxu0
        %v1683 = vpop.f32.mrb[0].mxu0
        %v1684 = vadd.f32 0.0, %v1683
        %v1685 = vpop.f32.mrb[0].mxu0
        %1686 = vmatprep.mubr.bf16.mxu0 0
        %1687 = vmatmul.mubr.bf16.gmra.mrb[0].mxu0 %v1636
        %v1688 = vpop.f32.mrb[0].mxu0
        %v1689 = vadd.f32 0.0, %v1688
        %v1690 = vpop.f32.mrb[0].mxu0
        %v1691 = vpop.f32.mrb[0].mxu0
        %v1692 = vpop.f32.mrb[0].mxu0
        %1693 = vdwg.mxu0
        %vm1699 = vcmask 1046528
        %v1700 = vrot.slane %v1613, 1
        %v1701 = vrot.slane %v1614, 1
        %v1702 = vsel %vm1699, %v1700, %v1701
        %v1703 = vrot.slane %v1615, 1
        %v1704 = vsel %vm1699, %v1701, %v1703
        %v1705 = vrot.slane %v1616, 1
        %v1706 = vsel %vm1699, %v1703, %v1705
        %v1707 = vrot.slane %v1617, 1
        %v1708 = vsel %vm1699, %v1705, %v1707
        %v1714 = vsel %vm1699, %v1707, 0.0
        %v1715 = vld [vmem:[#allocation5] sm:$0xf]
        %v1716 = vld [vmem:[#allocation5 + $0x4] sm:$0xf]
        %v1717 = vld [vmem:[#allocation7] sm:$0xf]
        %v1718 = vld [vmem:[#allocation7 + $0x4] sm:$0xf]
        %v1719 = vpack.c.bf16 %v1704, %v1702
        %v1720 = vpack.c.bf16 %v1708, %v1706
        %v1721 = vpack.c.bf16 %v1714, %v1714
        %v1724 = vunpack.c.l.b16 %v1717
        %v1725 = vunpack.c.l.b16 %v1718
        %v1726 = vpack.c.b16 %v1725, %v1724
        %v1729 = vsel %vm1545, %v1719, 0
        %v1732 = vsel %vm1545, %v1720, 0
        %v1735 = vsel %vm1545, %v1721, 0
        %1737 = vmatprep.subr.bf16.mxu0 0
        %1738 = vmatpush1.bf16.msra.mxu0 %v1726
        %1739 = vmatprep.subr.bf16.mxu0 0
        %1740 = vmatpush1.bf16.msra.mxu0 0
        %1741 = vmatprep.subr.bf16.mxu0 0
        %1742 = vmatpush1.bf16.msra.mxu0 0
        %1743 = vmatprep.subr.bf16.mxu0 0
        %1744 = vmatpush1.bf16.msra.mxu0 0
        %1745 = vmatprep.subr.bf16.mxu0 0
        %1746 = vmatpush1.bf16.msra.mxu0 0
        %1747 = vmatprep.subr.bf16.mxu0 0
        %1748 = vmatpush1.bf16.msra.mxu0 0
        %1749 = vmatprep.subr.bf16.mxu0 0
        %1750 = vmatpush1.bf16.msra.mxu0 0
        %1751 = vmatprep.subr.bf16.mxu0 0
        %1752 = vmatpush1.bf16.msra.mxu0 0
        %1753 = vmatprep.subr.bf16.mxu0 0
        %1754 = vmatpush1.bf16.msra.mxu0 0
        %1755 = vmatprep.subr.bf16.mxu0 0
        %1756 = vmatpush1.bf16.msra.mxu0 0
        %1757 = vmatprep.subr.bf16.mxu0 0
        %1758 = vmatpush1.bf16.msra.mxu0 0
        %1759 = vmatprep.subr.bf16.mxu0 0
        %1760 = vmatpush1.bf16.msra.mxu0 0
        %1761 = vmatprep.subr.bf16.mxu0 0
        %1762 = vmatpush1.bf16.msra.mxu0 0
        %1763 = vmatprep.subr.bf16.mxu0 0
        %1764 = vmatpush1.bf16.msra.mxu0 0
        %1765 = vmatprep.subr.bf16.mxu0 0
        %1766 = vmatpush1.bf16.msra.mxu0 0
        %1767 = vmatprep.subr.bf16.mxu0 0
        %1768 = vmatpush1.bf16.msra.mxu0 0
        %1769 = vmatprep.mubr.bf16.mxu0 0
        %1770 = vmatmul.mubr.bf16.gmra.mrb[0].mxu0 %v1729
        %v1771 = vpop.f32.mrb[0].mxu0
        %v1772 = vadd.f32 0.0, %v1771
        %v1773 = vpop.f32.mrb[0].mxu0
        %v1774 = vpop.f32.mrb[0].mxu0
        %v1775 = vadd.f32 0.0, %v1774
        %v1776 = vpop.f32.mrb[0].mxu0
        %1777 = vmatprep.mubr.bf16.mxu0 0
        %1778 = vmatmul.mubr.bf16.gmra.mrb[0].mxu0 %v1732
        %v1779 = vpop.f32.mrb[0].mxu0
        %v1780 = vadd.f32 0.0, %v1779
        %v1781 = vpop.f32.mrb[0].mxu0
        %v1782 = vpop.f32.mrb[0].mxu0
        %v1783 = vadd.f32 0.0, %v1782
        %v1784 = vpop.f32.mrb[0].mxu0
        %1785 = vmatprep.mubr.bf16.mxu0 0
        %1786 = vmatmul.mubr.bf16.gmra.mrb[0].mxu0 %v1735
        %v1787 = vpop.f32.mrb[0].mxu0
        %v1788 = vadd.f32 0.0, %v1787
        %v1789 = vpop.f32.mrb[0].mxu0
        %v1790 = vpop.f32.mrb[0].mxu0
        %v1791 = vpop.f32.mrb[0].mxu0
        %1792 = vdwg.mxu0
        %v1795 = vunpack.c.l.b16 %v1715
        %v1796 = vunpack.c.l.b16 %v1716
        %v1797 = vpack.c.b16 %v1796, %v1795
        %1799 = vmatprep.subr.bf16.mxu0 0
        %1800 = vmatpush1.bf16.msra.mxu0 %v1797
        %1801 = vmatprep.subr.bf16.mxu0 0
        %1802 = vmatpush1.bf16.msra.mxu0 0
        %1803 = vmatprep.subr.bf16.mxu0 0
        %1804 = vmatpush1.bf16.msra.mxu0 0
        %1805 = vmatprep.subr.bf16.mxu0 0
        %1806 = vmatpush1.bf16.msra.mxu0 0
        %1807 = vmatprep.subr.bf16.mxu0 0
        %1808 = vmatpush1.bf16.msra.mxu0 0
        %1809 = vmatprep.subr.bf16.mxu0 0
        %1810 = vmatpush1.bf16.msra.mxu0 0
        %1811 = vmatprep.subr.bf16.mxu0 0
        %1812 = vmatpush1.bf16.msra.mxu0 0
        %1813 = vmatprep.subr.bf16.mxu0 0
        %1814 = vmatpush1.bf16.msra.mxu0 0
        %1815 = vmatprep.subr.bf16.mxu0 0
        %1816 = vmatpush1.bf16.msra.mxu0 0
        %1817 = vmatprep.subr.bf16.mxu0 0
        %1818 = vmatpush1.bf16.msra.mxu0 0
        %1819 = vmatprep.subr.bf16.mxu0 0
        %1820 = vmatpush1.bf16.msra.mxu0 0
        %1821 = vmatprep.subr.bf16.mxu0 0
        %1822 = vmatpush1.bf16.msra.mxu0 0
        %1823 = vmatprep.subr.bf16.mxu0 0
        %1824 = vmatpush1.bf16.msra.mxu0 0
        %1825 = vmatprep.subr.bf16.mxu0 0
        %1826 = vmatpush1.bf16.msra.mxu0 0
        %1827 = vmatprep.subr.bf16.mxu0 0
        %1828 = vmatpush1.bf16.msra.mxu0 0
        %1829 = vmatprep.subr.bf16.mxu0 0
        %1830 = vmatpush1.bf16.msra.mxu0 0
        %1831 = vmatprep.mubr.bf16.mxu0 0
        %1832 = vmatmul.mubr.bf16.gmra.mrb[0].mxu0 %v1630
        %v1833 = vpop.f32.mrb[0].mxu0
        %v1834 = vadd.f32 %v1772, %v1833
        %v1835 = vpop.f32.mrb[0].mxu0
        %v1836 = vpop.f32.mrb[0].mxu0
        %v1837 = vadd.f32 %v1775, %v1836
        %v1838 = vpop.f32.mrb[0].mxu0
        %1839 = vmatprep.mubr.bf16.mxu0 0
        %1840 = vmatmul.mubr.bf16.gmra.mrb[0].mxu0 %v1633
        %v1841 = vpop.f32.mrb[0].mxu0
        %v1842 = vadd.f32 %v1780, %v1841
        %v1843 = vpop.f32.mrb[0].mxu0
        %v1844 = vpop.f32.mrb[0].mxu0
        %v1845 = vadd.f32 %v1783, %v1844
        %v1846 = vpop.f32.mrb[0].mxu0
        %1847 = vmatprep.mubr.bf16.mxu0 0
        %1848 = vmatmul.mubr.bf16.gmra.mrb[0].mxu0 %v1636
        %v1849 = vpop.f32.mrb[0].mxu0
        %v1850 = vadd.f32 %v1788, %v1849
        %v1851 = vpop.f32.mrb[0].mxu0
        %v1852 = vpop.f32.mrb[0].mxu0
        %v1853 = vpop.f32.mrb[0].mxu0
        %1854 = vdwg.mxu0
        %v1855 = vlaneseq
        %v1856 = vshrl.u32 %v1855, 7
        %v1857 = vadd.s32 %v1856, 8
        %v1858 = vadd.s32 %v1856, 16
        %v1859 = vadd.s32 %v1856, 24
        %v1860 = vadd.s32 %v1856, 32
        %vm1861 = vcmp.lt.s32.totalorder %v1856, 39
        %vm1862 = vcmp.lt.s32.totalorder %v1857, 39
        %vm1863 = vcmp.lt.s32.totalorder %v1858, 39
        %vm1864 = vcmp.lt.s32.totalorder %v1859, 39
        %vm1865 = vcmp.lt.s32.totalorder %v1860, 39
        %v1866 = vsel %vm1861, %v1834, 0.0
        %v1867 = vsel %vm1862, %v1837, 0.0
        %v1868 = vsel %vm1863, %v1842, 0.0
        %v1869 = vsel %vm1864, %v1845, 0.0
        %v1870 = vsel %vm1865, %v1850, 0.0
        %vm1871 = vcmask 261120
        %v1872 = vsel %vm1871, %v1673, 0.0
        %v1873 = vsel %vm1871, %v1676, 0.0
        %v1874 = vadd.f32 %v1872, %v1873
        %v1875 = vsel %vm1871, %v1681, 0.0
        %v1876 = vadd.f32 %v1874, %v1875
        %v1877 = vsel %vm1871, %v1684, 0.0
        %v1878 = vadd.f32 %v1876, %v1877
        %v1879 = vsel %vm1871, %v1689, 0.0
        %v1880 = vadd.f32 %v1878, %v1879
        %v1881 = vrot.slane %v1880, 4
        %v1882 = vadd.f32 %v1880, %v1881
        %v1883 = vrot.slane %v1882, 2
        %v1884 = vadd.f32 %v1882, %v1883
        %v1885 = vrot.slane %v1884, 1
        %v1886 = vadd.f32 %v1884, %v1885
        %v1887 = vsel %vm1871, %v1866, 0.0
        %v1888 = vsel %vm1871, %v1867, 0.0
        %v1889 = vadd.f32 %v1887, %v1888
        %v1890 = vsel %vm1871, %v1868, 0.0
        %v1891 = vadd.f32 %v1889, %v1890
        %v1892 = vsel %vm1871, %v1869, 0.0
        %v1893 = vadd.f32 %v1891, %v1892
        %v1894 = vsel %vm1871, %v1870, 0.0
        %v1895 = vadd.f32 %v1893, %v1894
        %v1896 = vrot.slane %v1895, 4
        %v1897 = vadd.f32 %v1895, %v1896
        %v1898 = vrot.slane %v1897, 2
        %v1899 = vadd.f32 %v1897, %v1898
        %v1900 = vrot.slane %v1899, 1
        %v1901 = vadd.f32 %v1899, %v1900
        %v1902 = vadd.f32 %v1886, %v1901
        %v1903 = vmul.f32 %v1673, %v1673
        %v1904 = vmul.f32 %v1676, %v1676
        %v1905 = vmul.f32 %v1681, %v1681
        %v1906 = vmul.f32 %v1684, %v1684
        %v1907 = vmul.f32 %v1689, %v1689
        %v1908 = vsel %vm1871, %v1903, 0.0
        %v1909 = vsel %vm1871, %v1904, 0.0
        %v1910 = vadd.f32 %v1908, %v1909
        %v1911 = vsel %vm1871, %v1905, 0.0
        %v1912 = vadd.f32 %v1910, %v1911
        %v1913 = vsel %vm1871, %v1906, 0.0
        %v1914 = vadd.f32 %v1912, %v1913
        %v1915 = vsel %vm1871, %v1907, 0.0
        %v1916 = vadd.f32 %v1914, %v1915
        %v1917 = vrot.slane %v1916, 4
        %v1918 = vadd.f32 %v1916, %v1917
        %v1919 = vrot.slane %v1918, 2
        %v1920 = vadd.f32 %v1918, %v1919
        %v1921 = vrot.slane %v1920, 1
        %v1922 = vadd.f32 %v1920, %v1921
        %v1923 = vmul.f32 %v1866, %v1866
        %v1924 = vmul.f32 %v1867, %v1867
        %v1925 = vmul.f32 %v1868, %v1868
        %v1926 = vmul.f32 %v1869, %v1869
        %v1927 = vmul.f32 %v1870, %v1870
        %v1928 = vsel %vm1871, %v1923, 0.0
        %v1929 = vsel %vm1871, %v1924, 0.0
        %v1930 = vadd.f32 %v1928, %v1929
        %v1931 = vsel %vm1871, %v1925, 0.0
        %v1932 = vadd.f32 %v1930, %v1931
        %v1933 = vsel %vm1871, %v1926, 0.0
        %v1934 = vadd.f32 %v1932, %v1933
        %v1935 = vsel %vm1871, %v1927, 0.0
        %v1936 = vadd.f32 %v1934, %v1935
        %v1937 = vrot.slane %v1936, 4
        %v1938 = vadd.f32 %v1936, %v1937
        %v1939 = vrot.slane %v1938, 2
        %v1940 = vadd.f32 %v1938, %v1939
        %v1941 = vrot.slane %v1940, 1
        %v1942 = vadd.f32 %v1940, %v1941
        %v1943 = vadd.f32 %v1922, %v1942
        %v1944 = vrcp.pop 79.0
        %v1945 = vmul.f32 %v1902, %v1944
        %v1946 = vmul.f32 %v1943, %v1944
        %v1947 = vmul.f32 %v1945, %v1945
        %v1948 = vsub.f32 %v1946, %v1947
        %v1949 = vadd.f32 %v1948, 1e-05
        %v1950 = vrsqrt.pop %v1949
        %v1951 = vsub.f32 %v1673, %v1945
        %v1952 = vsub.f32 %v1676, %v1945
        %v1953 = vsub.f32 %v1681, %v1945
        %v1954 = vsub.f32 %v1684, %v1945
        %v1955 = vsub.f32 %v1689, %v1945
        %v1956 = vmul.f32 %v1951, %v1950
        %v1957 = vmul.f32 %v1952, %v1950
        %v1958 = vmul.f32 %v1953, %v1950
        %v1959 = vmul.f32 %v1954, %v1950
        %v1960 = vmul.f32 %v1955, %v1950
        %v1961 = vld [vmem:[%s11] sm:$0x1]
        %v1963 = vlaneseq
        %v1964 = vshrl.u32 %v1963, 7
        %v1965 = vsub.s32 0, %v1964
        %v1966 = vrot.slane %v1961, %v1965
        %v1968 = vmul.f32 %v1956, %v1966
        %v1969 = vmul.f32 %v1957, %v1966
        %v1970 = vmul.f32 %v1958, %v1966
        %v1971 = vmul.f32 %v1959, %v1966
        %v1972 = vmul.f32 %v1960, %v1966
        %v1973 = vld [vmem:[#allocation8] sm:$0x1]
        %v1975 = vlaneseq
        %v1976 = vshrl.u32 %v1975, 7
        %v1977 = vsub.s32 0, %v1976
        %v1978 = vrot.slane %v1973, %v1977
        %v1980 = vadd.f32 %v1968, %v1978
        %v1981 = vadd.f32 %v1969, %v1978
        %v1982 = vadd.f32 %v1970, %v1978
        %v1983 = vadd.f32 %v1971, %v1978
        %v1984 = vadd.f32 %v1972, %v1978
        %v1985 = vmul.f32 %v1980, 0.5
        %v1986 = vmul.f32 %v1981, 0.5
        %v1987 = vmul.f32 %v1982, 0.5
        %v1988 = vmul.f32 %v1983, 0.5
        %v1989 = vmul.f32 %v1984, 0.5
        %v1990 = vmul.f32 %v1980, 0.044715
        %v1991 = vmul.f32 %v1981, 0.044715
        %v1992 = vmul.f32 %v1982, 0.044715
        %v1993 = vmul.f32 %v1983, 0.044715
        %v1994 = vmul.f32 %v1984, 0.044715
        %v1995 = vmul.f32 %v1990, %v1980
        %v1996 = vmul.f32 %v1991, %v1981
        %v1997 = vmul.f32 %v1992, %v1982
        %v1998 = vmul.f32 %v1993, %v1983
        %v1999 = vmul.f32 %v1994, %v1984
        %v2000 = vmul.f32 %v1995, %v1980
        %v2001 = vmul.f32 %v1996, %v1981
        %v2002 = vmul.f32 %v1997, %v1982
        %v2003 = vmul.f32 %v1998, %v1983
        %v2004 = vmul.f32 %v1999, %v1984
        %v2005 = vadd.f32 %v1980, %v2000
        %v2006 = vadd.f32 %v1981, %v2001
        %v2007 = vadd.f32 %v1982, %v2002
        %v2008 = vadd.f32 %v1983, %v2003
        %v2009 = vadd.f32 %v1984, %v2004
        %v2010 = vmul.f32 %v2005, 0.7978846
        %v2011 = vmul.f32 %v2006, 0.7978846
        %v2012 = vmul.f32 %v2007, 0.7978846
        %v2013 = vmul.f32 %v2008, 0.7978846
        %v2014 = vmul.f32 %v2009, 0.7978846
        %v2015 = vtanh.pop %v2010
        %v2016 = vtanh.pop %v2011
        %v2017 = vtanh.pop %v2012
        %v2018 = vtanh.pop %v2013
        %v2019 = vtanh.pop %v2014
        %v2020 = vadd.f32 %v2015, 1.0
        %v2021 = vadd.f32 %v2016, 1.0
        %v2022 = vadd.f32 %v2017, 1.0
        %v2023 = vadd.f32 %v2018, 1.0
        %v2024 = vadd.f32 %v2019, 1.0
        %v2025 = vmul.f32 %v1985, %v2020
        %v2026 = vmul.f32 %v1986, %v2021
        %v2027 = vmul.f32 %v1987, %v2022
        %v2028 = vmul.f32 %v1988, %v2023
        %v2029 = vmul.f32 %v1989, %v2024
        %v2030 = vsub.f32 %v1866, %v1945
        %v2031 = vsub.f32 %v1867, %v1945
        %v2032 = vsub.f32 %v1868, %v1945
        %v2033 = vsub.f32 %v1869, %v1945
        %v2034 = vsub.f32 %v1870, %v1945
        %v2035 = vmul.f32 %v2030, %v1950
        %v2036 = vmul.f32 %v2031, %v1950
        %v2037 = vmul.f32 %v2032, %v1950
        %v2038 = vmul.f32 %v2033, %v1950
        %v2039 = vmul.f32 %v2034, %v1950
        %v2040 = vmul.f32 %v2035, %v1966
        %v2041 = vmul.f32 %v2036, %v1966
        %v2042 = vmul.f32 %v2037, %v1966
        %v2043 = vmul.f32 %v2038, %v1966
        %v2044 = vmul.f32 %v2039, %v1966
        %v2045 = vadd.f32 %v2040, %v1978
        %v2046 = vadd.f32 %v2041, %v1978
        %v2047 = vadd.f32 %v2042, %v1978
        %v2048 = vadd.f32 %v2043, %v1978
        %v2049 = vadd.f32 %v2044, %v1978
        %v2050 = vmul.f32 %v2045, 0.5
        %v2051 = vmul.f32 %v2046, 0.5
        %v2052 = vmul.f32 %v2047, 0.5
        %v2053 = vmul.f32 %v2048, 0.5
        %v2054 = vmul.f32 %v2049, 0.5
        %v2055 = vmul.f32 %v2045, 0.044715
        %v2056 = vmul.f32 %v2046, 0.044715
        %v2057 = vmul.f32 %v2047, 0.044715
        %v2058 = vmul.f32 %v2048, 0.044715
        %v2059 = vmul.f32 %v2049, 0.044715
        %v2060 = vmul.f32 %v2055, %v2045
        %v2061 = vmul.f32 %v2056, %v2046
        %v2062 = vmul.f32 %v2057, %v2047
        %v2063 = vmul.f32 %v2058, %v2048
        %v2064 = vmul.f32 %v2059, %v2049
        %v2065 = vmul.f32 %v2060, %v2045
        %v2066 = vmul.f32 %v2061, %v2046
        %v2067 = vmul.f32 %v2062, %v2047
        %v2068 = vmul.f32 %v2063, %v2048
        %v2069 = vmul.f32 %v2064, %v2049
        %v2070 = vadd.f32 %v2045, %v2065
        %v2071 = vadd.f32 %v2046, %v2066
        %v2072 = vadd.f32 %v2047, %v2067
        %v2073 = vadd.f32 %v2048, %v2068
        %v2074 = vadd.f32 %v2049, %v2069
        %v2075 = vmul.f32 %v2070, 0.7978846
        %v2076 = vmul.f32 %v2071, 0.7978846
        %v2077 = vmul.f32 %v2072, 0.7978846
        %v2078 = vmul.f32 %v2073, 0.7978846
        %v2079 = vmul.f32 %v2074, 0.7978846
        %v2080 = vtanh.pop %v2075
        %v2081 = vtanh.pop %v2076
        %v2082 = vtanh.pop %v2077
        %v2083 = vtanh.pop %v2078
        %v2084 = vtanh.pop %v2079
        %v2085 = vadd.f32 %v2080, 1.0
        %v2086 = vadd.f32 %v2081, 1.0
        %v2087 = vadd.f32 %v2082, 1.0
        %v2088 = vadd.f32 %v2083, 1.0
        %v2089 = vadd.f32 %v2084, 1.0
        %v2090 = vmul.f32 %v2050, %v2085
        %v2091 = vmul.f32 %v2051, %v2086
        %v2092 = vmul.f32 %v2052, %v2087
        %v2093 = vmul.f32 %v2053, %v2088
        %v2094 = vmul.f32 %v2054, %v2089
        %v2095 = vld [vmem:[#allocation10] sm:$0xf]
        %v2096 = vld [vmem:[#allocation10 + $0x4] sm:$0xf]
        %v2097 = vld [vmem:[#allocation10 + $0x8] sm:$0xf]
        %v2098 = vld [vmem:[#allocation10 + $0xc] sm:$0xf]
        %v2099 = vpack.c.bf16 %v2026, %v2025
        %v2100 = vpack.c.bf16 %v2028, %v2027
        %v2101 = vpack.c.bf16 %v2029, %v2029
        %s2102 = scalar_lea.vmem [#allocation10], 16
        %v2103 = vld [vmem:[%s2102] sm:$0xf]
        %v2104 = vld [vmem:[%s2102 + $0x4] sm:$0xf]
        %v2105 = vld [vmem:[%s2102 + $0x8] sm:$0xf]
        %v2106 = vld [vmem:[%s2102 + $0xc] sm:$0xf]
        %v2107 = vpack.c.bf16 %v2091, %v2090
        %v2108 = vpack.c.bf16 %v2093, %v2092
        %v2109 = vpack.c.bf16 %v2094, %v2094
        %v2114 = vunpack.c.l.b16 %v2103
        %v2115 = vunpack.c.l.b16 %v2104
        %v2116 = vunpack.c.l.b16 %v2105
        %v2117 = vunpack.c.l.b16 %v2106
        %v2118 = vpack.c.b16 %v2115, %v2114
        %v2119 = vpack.c.b16 %v2117, %v2116
        %v2123 = vsel %vm1871, %v2107, 0
        %v2126 = vsel %vm1871, %v2108, 0
        %v2129 = vsel %vm1871, %v2109, 0
        %2131 = vmatprep.subr.bf16.mxu0 0
        %2132 = vmatpush1.bf16.msra.mxu0 %v2118
        %2133 = vmatprep.subr.bf16.mxu0 0
        %2134 = vmatpush1.bf16.msra.mxu0 %v2119
        %2135 = vmatprep.subr.bf16.mxu0 0
        %2136 = vmatpush1.bf16.msra.mxu0 0
        %2137 = vmatprep.subr.bf16.mxu0 0
        %2138 = vmatpush1.bf16.msra.mxu0 0
        %2139 = vmatprep.subr.bf16.mxu0 0
        %2140 = vmatpush1.bf16.msra.mxu0 0
        %2141 = vmatprep.subr.bf16.mxu0 0
        %2142 = vmatpush1.bf16.msra.mxu0 0
        %2143 = vmatprep.subr.bf16.mxu0 0
        %2144 = vmatpush1.bf16.msra.mxu0 0
        %2145 = vmatprep.subr.bf16.mxu0 0
        %2146 = vmatpush1.bf16.msra.mxu0 0
        %2147 = vmatprep.subr.bf16.mxu0 0
        %2148 = vmatpush1.bf16.msra.mxu0 0
        %2149 = vmatprep.subr.bf16.mxu0 0
        %2150 = vmatpush1.bf16.msra.mxu0 0
        %2151 = vmatprep.subr.bf16.mxu0 0
        %2152 = vmatpush1.bf16.msra.mxu0 0
        %2153 = vmatprep.subr.bf16.mxu0 0
        %2154 = vmatpush1.bf16.msra.mxu0 0
        %2155 = vmatprep.subr.bf16.mxu0 0
        %2156 = vmatpush1.bf16.msra.mxu0 0
        %2157 = vmatprep.subr.bf16.mxu0 0
        %2158 = vmatpush1.bf16.msra.mxu0 0
        %2159 = vmatprep.subr.bf16.mxu0 0
        %2160 = vmatpush1.bf16.msra.mxu0 0
        %2161 = vmatprep.subr.bf16.mxu0 0
        %2162 = vmatpush1.bf16.msra.mxu0 0
        %2163 = vmatprep.mubr.bf16.mxu0 0
        %2164 = vmatmul.mubr.bf16.gmra.mrb[0].mxu0 %v2123
        %v2165 = vpop.f32.mrb[0].mxu0
        %v2166 = vadd.f32 0.0, %v2165
        %v2167 = vpop.f32.mrb[0].mxu0
        %v2168 = vpop.f32.mrb[0].mxu0
        %v2169 = vadd.f32 0.0, %v2168
        %v2170 = vpop.f32.mrb[0].mxu0
        %2171 = vmatprep.mubr.bf16.mxu0 0
        %2172 = vmatmul.mubr.bf16.gmra.mrb[0].mxu0 %v2126
        %v2173 = vpop.f32.mrb[0].mxu0
        %v2174 = vadd.f32 0.0, %v2173
        %v2175 = vpop.f32.mrb[0].mxu0
        %v2176 = vpop.f32.mrb[0].mxu0
        %v2177 = vadd.f32 0.0, %v2176
        %v2178 = vpop.f32.mrb[0].mxu0
        %2179 = vmatprep.mubr.bf16.mxu0 0
        %2180 = vmatmul.mubr.bf16.gmra.mrb[0].mxu0 %v2129
        %v2181 = vpop.f32.mrb[0].mxu0
        %v2182 = vadd.f32 0.0, %v2181
        %v2183 = vpop.f32.mrb[0].mxu0
        %v2184 = vpop.f32.mrb[0].mxu0
        %v2185 = vpop.f32.mrb[0].mxu0
        %2186 = vdwg.mxu0
        %v2191 = vunpack.c.l.b16 %v2095
        %v2192 = vunpack.c.l.b16 %v2096
        %v2193 = vunpack.c.l.b16 %v2097
        %v2194 = vunpack.c.l.b16 %v2098
        %v2195 = vpack.c.b16 %v2192, %v2191
        %v2196 = vpack.c.b16 %v2194, %v2193
        %v2200 = vsel %vm1871, %v2099, 0
        %v2203 = vsel %vm1871, %v2100, 0
        %v2206 = vsel %vm1871, %v2101, 0
        %2208 = vmatprep.subr.bf16.mxu0 0
        %2209 = vmatpush1.bf16.msra.mxu0 %v2195
        %2210 = vmatprep.subr.bf16.mxu0 0
        %2211 = vmatpush1.bf16.msra.mxu0 %v2196
        %2212 = vmatprep.subr.bf16.mxu0 0
        %2213 = vmatpush1.bf16.msra.mxu0 0
        %2214 = vmatprep.subr.bf16.mxu0 0
        %2215 = vmatpush1.bf16.msra.mxu0 0
        %2216 = vmatprep.subr.bf16.mxu0 0
        %2217 = vmatpush1.bf16.msra.mxu0 0
        %2218 = vmatprep.subr.bf16.mxu0 0
        %2219 = vmatpush1.bf16.msra.mxu0 0
        %2220 = vmatprep.subr.bf16.mxu0 0
        %2221 = vmatpush1.bf16.msra.mxu0 0
        %2222 = vmatprep.subr.bf16.mxu0 0
        %2223 = vmatpush1.bf16.msra.mxu0 0
        %2224 = vmatprep.subr.bf16.mxu0 0
        %2225 = vmatpush1.bf16.msra.mxu0 0
        %2226 = vmatprep.subr.bf16.mxu0 0
        %2227 = vmatpush1.bf16.msra.mxu0 0
        %2228 = vmatprep.subr.bf16.mxu0 0
        %2229 = vmatpush1.bf16.msra.mxu0 0
        %2230 = vmatprep.subr.bf16.mxu0 0
        %2231 = vmatpush1.bf16.msra.mxu0 0
        %2232 = vmatprep.subr.bf16.mxu0 0
        %2233 = vmatpush1.bf16.msra.mxu0 0
        %2234 = vmatprep.subr.bf16.mxu0 0
        %2235 = vmatpush1.bf16.msra.mxu0 0
        %2236 = vmatprep.subr.bf16.mxu0 0
        %2237 = vmatpush1.bf16.msra.mxu0 0
        %2238 = vmatprep.subr.bf16.mxu0 0
        %2239 = vmatpush1.bf16.msra.mxu0 0
        %2240 = vmatprep.mubr.bf16.mxu0 0
        %2241 = vmatmul.mubr.bf16.gmra.mrb[0].mxu0 %v2200
        %v2242 = vpop.f32.mrb[0].mxu0
        %v2243 = vadd.f32 %v2166, %v2242
        %v2244 = vpop.f32.mrb[0].mxu0
        %v2245 = vpop.f32.mrb[0].mxu0
        %v2246 = vadd.f32 %v2169, %v2245
        %v2247 = vpop.f32.mrb[0].mxu0
        %2248 = vmatprep.mubr.bf16.mxu0 0
        %2249 = vmatmul.mubr.bf16.gmra.mrb[0].mxu0 %v2203
        %v2250 = vpop.f32.mrb[0].mxu0
        %v2251 = vadd.f32 %v2174, %v2250
        %v2252 = vpop.f32.mrb[0].mxu0
        %v2253 = vpop.f32.mrb[0].mxu0
        %v2254 = vadd.f32 %v2177, %v2253
        %v2255 = vpop.f32.mrb[0].mxu0
        %2256 = vmatprep.mubr.bf16.mxu0 0
        %2257 = vmatmul.mubr.bf16.gmra.mrb[0].mxu0 %v2206
        %v2258 = vpop.f32.mrb[0].mxu0
        %v2259 = vadd.f32 %v2182, %v2258
        %v2260 = vpop.f32.mrb[0].mxu0
        %v2261 = vpop.f32.mrb[0].mxu0
        %v2262 = vpop.f32.mrb[0].mxu0
        %2263 = vdwg.mxu0
        %s2264 = scalar_lea.vmem [#allocation10], 32
        %v2265 = vld [vmem:[%s2264] sm:$0xf]
        %v2266 = vld [vmem:[%s2264 + $0x4] sm:$0xf]
        %v2267 = vld [vmem:[%s2264 + $0x8] sm:$0xf]
        %v2268 = vld [vmem:[%s2264 + $0xc] sm:$0xf]
        %vm2269 = vsmask.f32 7424
        %v2270 = vshrl.u32 %v2099, 16
        %v2272 = vshll.u32 %v2099, 16
        %v2274 = vrot.slane %v2272, 1
        %v2275 = vor.u32 %v2270, %v2274
        %v2276 = vshll.u32 %v2100, 16
        %v2278 = vrot.slane %v2276, 1
        %v2279 = vsel %vm2269, %v2275, %v2278
        %v2280 = vshrl.u32 %v2100, 16
        %v2282 = vor.u32 %v2280, %v2278
        %v2283 = vshll.u32 %v2101, 16
        %v2285 = vrot.slane %v2283, 1
        %v2286 = vsel %vm2269, %v2282, %v2285
        %v2287 = vshrl.u32 %v2101, 16
        %v2289 = vor.u32 %v2287, %v2285
        %v2294 = vunpack.c.l.b16 %v2265
        %v2295 = vunpack.c.l.b16 %v2266
        %v2296 = vunpack.c.l.b16 %v2267
        %v2297 = vunpack.c.l.b16 %v2268
        %v2298 = vpack.c.b16 %v2295, %v2294
        %v2299 = vpack.c.b16 %v2297, %v2296
        %v2303 = vsel %vm1871, %v2279, 0
        %v2306 = vsel %vm1871, %v2286, 0
        %v2309 = vsel %vm1871, %v2289, 0
        %2311 = vmatprep.subr.bf16.mxu0 0
        %2312 = vmatpush1.bf16.msra.mxu0 %v2298
        %2313 = vmatprep.subr.bf16.mxu0 0
        %2314 = vmatpush1.bf16.msra.mxu0 %v2299
        %2315 = vmatprep.subr.bf16.mxu0 0
        %2316 = vmatpush1.bf16.msra.mxu0 0
        %2317 = vmatprep.subr.bf16.mxu0 0
        %2318 = vmatpush1.bf16.msra.mxu0 0
        %2319 = vmatprep.subr.bf16.mxu0 0
        %2320 = vmatpush1.bf16.msra.mxu0 0
        %2321 = vmatprep.subr.bf16.mxu0 0
        %2322 = vmatpush1.bf16.msra.mxu0 0
        %2323 = vmatprep.subr.bf16.mxu0 0
        %2324 = vmatpush1.bf16.msra.mxu0 0
        %2325 = vmatprep.subr.bf16.mxu0 0
        %2326 = vmatpush1.bf16.msra.mxu0 0
        %2327 = vmatprep.subr.bf16.mxu0 0
        %2328 = vmatpush1.bf16.msra.mxu0 0
        %2329 = vmatprep.subr.bf16.mxu0 0
        %2330 = vmatpush1.bf16.msra.mxu0 0
        %2331 = vmatprep.subr.bf16.mxu0 0
        %2332 = vmatpush1.bf16.msra.mxu0 0
        %2333 = vmatprep.subr.bf16.mxu0 0
        %2334 = vmatpush1.bf16.msra.mxu0 0
        %2335 = vmatprep.subr.bf16.mxu0 0
        %2336 = vmatpush1.bf16.msra.mxu0 0
        %2337 = vmatprep.subr.bf16.mxu0 0
        %2338 = vmatpush1.bf16.msra.mxu0 0
        %2339 = vmatprep.subr.bf16.mxu0 0
        %2340 = vmatpush1.bf16.msra.mxu0 0
        %2341 = vmatprep.subr.bf16.mxu0 0
        %2342 = vmatpush1.bf16.msra.mxu0 0
        %2343 = vmatprep.mubr.bf16.mxu0 0
        %2344 = vmatmul.mubr.bf16.gmra.mrb[0].mxu0 %v2303
        %v2345 = vpop.f32.mrb[0].mxu0
        %v2346 = vadd.f32 0.0, %v2345
        %v2347 = vpop.f32.mrb[0].mxu0
        %v2348 = vpop.f32.mrb[0].mxu0
        %v2349 = vadd.f32 0.0, %v2348
        %v2350 = vpop.f32.mrb[0].mxu0
        %2351 = vmatprep.mubr.bf16.mxu0 0
        %2352 = vmatmul.mubr.bf16.gmra.mrb[0].mxu0 %v2306
        %v2353 = vpop.f32.mrb[0].mxu0
        %v2354 = vadd.f32 0.0, %v2353
        %v2355 = vpop.f32.mrb[0].mxu0
        %v2356 = vpop.f32.mrb[0].mxu0
        %v2357 = vadd.f32 0.0, %v2356
        %v2358 = vpop.f32.mrb[0].mxu0
        %2359 = vmatprep.mubr.bf16.mxu0 0
        %2360 = vmatmul.mubr.bf16.gmra.mrb[0].mxu0 %v2309
        %v2361 = vpop.f32.mrb[0].mxu0
        %v2362 = vadd.f32 0.0, %v2361
        %v2363 = vpop.f32.mrb[0].mxu0
        %v2364 = vpop.f32.mrb[0].mxu0
        %v2365 = vpop.f32.mrb[0].mxu0
        %2366 = vdwg.mxu0
        %v2367 = vadd.f32 %v2243, %v2346
        %v2368 = vadd.f32 %v2246, %v2349
        %v2369 = vadd.f32 %v2251, %v2354
        %v2370 = vadd.f32 %v2254, %v2357
        %v2371 = vadd.f32 %v2259, %v2362
        %v2372 = vmul.f32 %v2367, 0.5
        %v2373 = vmul.f32 %v2368, 0.5
        %v2374 = vmul.f32 %v2369, 0.5
        %v2375 = vmul.f32 %v2370, 0.5
        %v2376 = vmul.f32 %v2371, 0.5
        %v2377 = vmul.f32 %v2367, 0.044715
        %v2378 = vmul.f32 %v2368, 0.044715
        %v2379 = vmul.f32 %v2369, 0.044715
        %v2380 = vmul.f32 %v2370, 0.044715
        %v2381 = vmul.f32 %v2371, 0.044715
        %v2382 = vmul.f32 %v2377, %v2367
        %v2383 = vmul.f32 %v2378, %v2368
        %v2384 = vmul.f32 %v2379, %v2369
        %v2385 = vmul.f32 %v2380, %v2370
        %v2386 = vmul.f32 %v2381, %v2371
        %v2387 = vmul.f32 %v2382, %v2367
        %v2388 = vmul.f32 %v2383, %v2368
        %v2389 = vmul.f32 %v2384, %v2369
        %v2390 = vmul.f32 %v2385, %v2370
        %v2391 = vmul.f32 %v2386, %v2371
        %v2392 = vadd.f32 %v2367, %v2387
        %v2393 = vadd.f32 %v2368, %v2388
        %v2394 = vadd.f32 %v2369, %v2389
        %v2395 = vadd.f32 %v2370, %v2390
        %v2396 = vadd.f32 %v2371, %v2391
        %v2397 = vmul.f32 %v2392, 0.7978846
        %v2398 = vmul.f32 %v2393, 0.7978846
        %v2399 = vmul.f32 %v2394, 0.7978846
        %v2400 = vmul.f32 %v2395, 0.7978846
        %v2401 = vmul.f32 %v2396, 0.7978846
        %v2402 = vtanh.pop %v2397
        %v2403 = vtanh.pop %v2398
        %v2404 = vtanh.pop %v2399
        %v2405 = vtanh.pop %v2400
        %v2406 = vtanh.pop %v2401
        %v2407 = vadd.f32 %v2402, 1.0
        %v2408 = vadd.f32 %v2403, 1.0
        %v2409 = vadd.f32 %v2404, 1.0
        %v2410 = vadd.f32 %v2405, 1.0
        %v2411 = vadd.f32 %v2406, 1.0
        %v2412 = vmul.f32 %v2372, %v2407
        %v2413 = vmul.f32 %v2373, %v2408
        %v2414 = vmul.f32 %v2374, %v2409
        %v2415 = vmul.f32 %v2375, %v2410
        %v2416 = vmul.f32 %v2376, %v2411
        %v2417 = vsel %vm1871, %v2412, 0.0
        %2418 = vadd.xlane.f32.xlu0 %v2417
        %v2419 = vpop.xlane.xlu0 %2418
        %v2420 = vsel %vm1871, %v2413, 0.0
        %2421 = vadd.xlane.f32.xlu0 %v2420
        %v2422 = vpop.xlane.xlu0 %2421
        %v2423 = vsel %vm1871, %v2414, 0.0
        %2424 = vadd.xlane.f32.xlu0 %v2423
        %v2425 = vpop.xlane.xlu0 %2424
        %v2426 = vsel %vm1871, %v2415, 0.0
        %2427 = vadd.xlane.f32.xlu0 %v2426
        %v2428 = vpop.xlane.xlu0 %2427
        %vm2429 = vcmask 260096
        %v2430 = vsel %vm2429, %v2416, 0.0
        %2431 = vadd.xlane.f32.xlu0 %v2430
        %v2432 = vpop.xlane.xlu0 %2431
        %v2433 = vrcp.pop 32.0
        %v2434 = vmul.f32 %v2419, %v2433
        %v2435 = vmul.f32 %v2422, %v2433
        %v2436 = vmul.f32 %v2425, %v2433
        %v2437 = vmul.f32 %v2428, %v2433
        %v2438 = vmul.f32 %v2432, %v2433
        %v2439 = vsub.f32 %v2412, %v2434
        %v2440 = vsub.f32 %v2413, %v2435
        %v2441 = vsub.f32 %v2414, %v2436
        %v2442 = vsub.f32 %v2415, %v2437
        %v2443 = vsub.f32 %v2416, %v2438
        %v2444 = vmul.f32 %v2439, %v2439
        %v2445 = vmul.f32 %v2440, %v2440
        %v2446 = vmul.f32 %v2441, %v2441
        %v2447 = vmul.f32 %v2442, %v2442
        %v2448 = vmul.f32 %v2443, %v2443
        %v2449 = vsel %vm1871, %v2444, 0.0
        %2450 = vadd.xlane.f32.xlu0 %v2449
        %v2451 = vpop.xlane.xlu0 %2450
        %v2452 = vsel %vm1871, %v2445, 0.0
        %2453 = vadd.xlane.f32.xlu0 %v2452
        %v2454 = vpop.xlane.xlu0 %2453
        %v2455 = vsel %vm1871, %v2446, 0.0
        %2456 = vadd.xlane.f32.xlu0 %v2455
        %v2457 = vpop.xlane.xlu0 %2456
        %v2458 = vsel %vm1871, %v2447, 0.0
        %2459 = vadd.xlane.f32.xlu0 %v2458
        %v2460 = vpop.xlane.xlu0 %2459
        %v2461 = vsel %vm2429, %v2448, 0.0
        %2462 = vadd.xlane.f32.xlu0 %v2461
        %v2463 = vpop.xlane.xlu0 %2462
        %v2464 = vmul.f32 %v2451, %v2433
        %v2465 = vmul.f32 %v2454, %v2433
        %v2466 = vmul.f32 %v2457, %v2433
        %v2467 = vmul.f32 %v2460, %v2433
        %v2468 = vmul.f32 %v2463, %v2433
        %v2469 = vadd.f32 %v2464, 1e-05
        %v2470 = vadd.f32 %v2465, 1e-05
        %v2471 = vadd.f32 %v2466, 1e-05
        %v2472 = vadd.f32 %v2467, 1e-05
        %v2473 = vadd.f32 %v2468, 1e-05
        %v2474 = vrsqrt.pop %v2469
        %v2475 = vrsqrt.pop %v2470
        %v2476 = vrsqrt.pop %v2471
        %v2477 = vrsqrt.pop %v2472
        %v2478 = vrsqrt.pop %v2473
        %v2479 = vmul.f32 %v2439, %v2474
        %v2480 = vmul.f32 %v2440, %v2475
        %v2481 = vmul.f32 %v2441, %v2476
        %v2482 = vmul.f32 %v2442, %v2477
        %v2483 = vmul.f32 %v2443, %v2478
        %v2484 = vld [vmem:[#allocation11] sm:$0x1]
        %v2486 = vlaneseq
        %v2487 = vshrl.u32 %v2486, 7
        %v2488 = vsub.s32 0, %v2487
        %v2489 = vrot.slane %v2484, %v2488
        %v2491 = vmul.f32 %v2479, %v2489
        %v2492 = vmul.f32 %v2480, %v2489
        %v2493 = vmul.f32 %v2481, %v2489
        %v2494 = vmul.f32 %v2482, %v2489
        %v2495 = vmul.f32 %v2483, %v2489
        %v2496 = vld [vmem:[#allocation13] sm:$0x1]
        %v2498 = vlaneseq
        %v2499 = vshrl.u32 %v2498, 7
        %v2500 = vsub.s32 0, %v2499
        %v2501 = vrot.slane %v2496, %v2500
        %v2503 = vadd.f32 %v2491, %v2501
        %v2504 = vadd.f32 %v2492, %v2501
        %v2505 = vadd.f32 %v2493, %v2501
        %v2506 = vadd.f32 %v2494, %v2501
        %v2507 = vadd.f32 %v2495, %v2501
        %v2508 = vld [vmem:[#allocation14] sm:$0xf]
        %v2509 = vld [vmem:[#allocation14 + $0x4] sm:$0xf]
        %v2510 = vld [vmem:[#allocation14 + $0x8] sm:$0xf]
        %v2511 = vld [vmem:[#allocation14 + $0xc] sm:$0xf]
        %v2512 = vpack.c.bf16 %v2504, %v2503
        %v2513 = vpack.c.bf16 %v2506, %v2505
        %v2514 = vpack.c.bf16 %v2507, %v2507
        %v2515 = vld [vmem:[#allocation16] sm:$0x1]
        %v2517 = vlaneseq
        %v2518 = vshrl.u32 %v2517, 7
        %v2519 = vsub.s32 0, %v2518
        %v2520 = vrot.slane %v2515, %v2519
        %v2526 = vunpack.c.l.b16 %v2508
        %v2527 = vunpack.c.l.b16 %v2509
        %v2528 = vunpack.c.l.b16 %v2510
        %v2529 = vunpack.c.l.b16 %v2511
        %v2530 = vpack.c.b16 %v2527, %v2526
        %v2531 = vpack.c.b16 %v2529, %v2528
        %v2535 = vsel %vm1871, %v2512, 0
        %v2538 = vsel %vm1871, %v2513, 0
        %v2541 = vsel %vm1871, %v2514, 0
        %2543 = vmatprep.subr.bf16.mxu0 0
        %2544 = vmatpush1.bf16.msra.mxu0 %v2530
        %2545 = vmatprep.subr.bf16.mxu0 0
        %2546 = vmatpush1.bf16.msra.mxu0 %v2531
        %2547 = vmatprep.subr.bf16.mxu0 0
        %2548 = vmatpush1.bf16.msra.mxu0 0
        %2549 = vmatprep.subr.bf16.mxu0 0
        %2550 = vmatpush1.bf16.msra.mxu0 0
        %2551 = vmatprep.subr.bf16.mxu0 0
        %2552 = vmatpush1.bf16.msra.mxu0 0
        %2553 = vmatprep.subr.bf16.mxu0 0
        %2554 = vmatpush1.bf16.msra.mxu0 0
        %2555 = vmatprep.subr.bf16.mxu0 0
        %2556 = vmatpush1.bf16.msra.mxu0 0
        %2557 = vmatprep.subr.bf16.mxu0 0
        %2558 = vmatpush1.bf16.msra.mxu0 0
        %2559 = vmatprep.subr.bf16.mxu0 0
        %2560 = vmatpush1.bf16.msra.mxu0 0
        %2561 = vmatprep.subr.bf16.mxu0 0
        %2562 = vmatpush1.bf16.msra.mxu0 0
        %2563 = vmatprep.subr.bf16.mxu0 0
        %2564 = vmatpush1.bf16.msra.mxu0 0
        %2565 = vmatprep.subr.bf16.mxu0 0
        %2566 = vmatpush1.bf16.msra.mxu0 0
        %2567 = vmatprep.subr.bf16.mxu0 0
        %2568 = vmatpush1.bf16.msra.mxu0 0
        %2569 = vmatprep.subr.bf16.mxu0 0
        %2570 = vmatpush1.bf16.msra.mxu0 0
        %2571 = vmatprep.subr.bf16.mxu0 0
        %2572 = vmatpush1.bf16.msra.mxu0 0
        %2573 = vmatprep.subr.bf16.mxu0 0
        %2574 = vmatpush1.bf16.msra.mxu0 0
        %2575 = vmatprep.mubr.bf16.mxu0 0
        %2576 = vmatmul.mubr.bf16.gmra.mrb[0].mxu0 %v2535
        %v2577 = vpop.f32.mrb[0].mxu0
        %v2578 = vadd.f32 %v2520, %v2577
        %v2579 = vpop.f32.mrb[0].mxu0
        %v2580 = vpop.f32.mrb[0].mxu0
        %v2581 = vadd.f32 %v2520, %v2580
        %v2582 = vpop.f32.mrb[0].mxu0
        %2583 = vmatprep.mubr.bf16.mxu0 0
        %2584 = vmatmul.mubr.bf16.gmra.mrb[0].mxu0 %v2538
        %v2585 = vpop.f32.mrb[0].mxu0
        %v2586 = vadd.f32 %v2520, %v2585
        %v2587 = vpop.f32.mrb[0].mxu0
        %v2588 = vpop.f32.mrb[0].mxu0
        %v2589 = vadd.f32 %v2520, %v2588
        %v2590 = vpop.f32.mrb[0].mxu0
        %2591 = vmatprep.mubr.bf16.mxu0 0
        %2592 = vmatmul.mubr.bf16.gmra.mrb[0].mxu0 %v2541
        %v2593 = vpop.f32.mrb[0].mxu0
        %v2594 = vadd.f32 %v2520, %v2593
        %v2595 = vpop.f32.mrb[0].mxu0
        %v2596 = vpop.f32.mrb[0].mxu0
        %v2597 = vpop.f32.mrb[0].mxu0
        %2598 = vdwg.mxu0
        %vm2604 = vcmask 1043456
        %v2605 = vrot.slane %v2578, 4
        %v2606 = vrot.slane %v2581, 4
        %v2607 = vsel %vm2604, %v2605, %v2606
        %v2608 = vrot.slane %v2586, 4
        %v2609 = vsel %vm2604, %v2606, %v2608
        %v2610 = vrot.slane %v2589, 4
        %v2611 = vsel %vm2604, %v2608, %v2610
        %v2612 = vrot.slane %v2594, 4
        %v2613 = vsel %vm2604, %v2610, %v2612
        %v2620 = vsel %vm2604, 0.0, %v2605
        %vm2621 = vcmask 1042432
        %v2622 = vsel %vm2621, %v2612, 0.0
        %v2623 = vld [vmem:[%s25] sm:$0xf]
        %v2624 = vld [vmem:[%s25 + $0x4] sm:$0xf]
        %v2625 = vld [vmem:[%s25 + $0x8] sm:$0xf]
        %v2626 = vld [vmem:[%s25 + $0xc] sm:$0xf]
        %v2627 = vld [vmem:[%s25 + $0x10] sm:$0xf]
        %v2628 = vld [vmem:[%s25 + $0x14] sm:$0xf]
        %v2629 = vld [vmem:[%s25 + $0x18] sm:$0xf]
        %v2630 = vld [vmem:[%s25 + $0x1c] sm:$0xf]
        %v2631 = vld [vmem:[%s25 + $0x20] sm:$0xf]
        %v2632 = vld [vmem:[%s25 + $0x24] sm:$0xf]
        %v2633 = vld [vmem:[%s25 + $0x28] sm:$0xf]
        %v2634 = vld [vmem:[%s25 + $0x2c] sm:$0xf]
        %v2635 = vld [vmem:[%s25 + $0x30] sm:$0xf]
        %v2636 = vld [vmem:[%s25 + $0x34] sm:$0xf]
        %v2637 = vld [vmem:[%s25 + $0x38] sm:$0xf]
        %v2638 = vld [vmem:[%s25 + $0x3c] sm:$0xf]
        %v2639 = vpack.c.bf16 %v2607, %v2620
        %v2640 = vpack.c.bf16 %v2611, %v2609
        %v2641 = vpack.c.bf16 %v2613, %v2613
        %s2642 = scalar_lea.vmem %s25, 64
        %v2643 = vld [vmem:[%s2642] sm:$0xf]
        %v2644 = vld [vmem:[%s2642 + $0x4] sm:$0xf]
        %v2645 = vld [vmem:[%s2642 + $0x8] sm:$0xf]
        %v2646 = vld [vmem:[%s2642 + $0xc] sm:$0xf]
        %v2647 = vld [vmem:[%s2642 + $0x10] sm:$0xf]
        %v2648 = vld [vmem:[%s2642 + $0x14] sm:$0xf]
        %v2649 = vld [vmem:[%s2642 + $0x18] sm:$0xf]
        %v2650 = vld [vmem:[%s2642 + $0x1c] sm:$0xf]
        %v2651 = vld [vmem:[%s2642 + $0x20] sm:$0xf]
        %v2652 = vld [vmem:[%s2642 + $0x24] sm:$0xf]
        %v2653 = vld [vmem:[%s2642 + $0x28] sm:$0xf]
        %v2654 = vld [vmem:[%s2642 + $0x2c] sm:$0xf]
        %v2655 = vld [vmem:[%s2642 + $0x30] sm:$0xf]
        %v2656 = vld [vmem:[%s2642 + $0x34] sm:$0xf]
        %v2657 = vld [vmem:[%s2642 + $0x38] sm:$0xf]
        %v2658 = vld [vmem:[%s2642 + $0x3c] sm:$0xf]
        %v2660 = vshrl.u32 %v2639, 16
        %v2662 = vshll.u32 %v2639, 16
        %v2664 = vrot.slane %v2662, 1
        %v2665 = vor.u32 %v2660, %v2664
        %v2667 = vshll.u32 %v2640, 16
        %v2669 = vrot.slane %v2667, 1
        %v2670 = vsel %vm2269, %v2665, %v2669
        %v2671 = vshrl.u32 %v2640, 16
        %v2673 = vor.u32 %v2671, %v2669
        %v2675 = vshll.u32 %v2641, 16
        %v2677 = vrot.slane %v2675, 1
        %v2678 = vsel %vm2269, %v2673, %v2677
        %v2679 = vshrl.u32 %v2641, 16
        %v2681 = vor.u32 %v2679, %v2677
        %v2701 = vunpack.c.l.b16 %v2643
        %v2702 = vunpack.c.l.b16 %v2644
        %v2703 = vunpack.c.l.b16 %v2645
        %v2704 = vunpack.c.l.b16 %v2646
        %v2705 = vunpack.c.l.b16 %v2647
        %v2706 = vunpack.c.l.b16 %v2648
        %v2707 = vunpack.c.l.b16 %v2649
        %v2708 = vunpack.c.l.b16 %v2650
        %v2709 = vunpack.c.l.b16 %v2651
        %v2710 = vunpack.c.l.b16 %v2652
        %v2711 = vunpack.c.l.b16 %v2653
        %v2712 = vunpack.c.l.b16 %v2654
        %v2713 = vunpack.c.l.b16 %v2655
        %v2714 = vunpack.c.l.b16 %v2656
        %v2715 = vunpack.c.l.b16 %v2657
        %v2716 = vunpack.c.l.b16 %v2658
        %v2717 = vpack.c.b16 %v2702, %v2701
        %v2718 = vpack.c.b16 %v2704, %v2703
        %v2719 = vpack.c.b16 %v2706, %v2705
        %v2720 = vpack.c.b16 %v2708, %v2707
        %v2721 = vpack.c.b16 %v2710, %v2709
        %v2722 = vpack.c.b16 %v2712, %v2711
        %v2723 = vpack.c.b16 %v2714, %v2713
        %v2724 = vpack.c.b16 %v2716, %v2715
        %2733 = vmatprep.subr.bf16.mxu0 0
        %2734 = vmatpush1.bf16.msra.mxu0 %v2717
        %2735 = vmatprep.subr.bf16.mxu0 0
        %2736 = vmatpush1.bf16.msra.mxu0 %v2718
        %2737 = vmatprep.subr.bf16.mxu0 0
        %2738 = vmatpush1.bf16.msra.mxu0 %v2719
        %2739 = vmatprep.subr.bf16.mxu0 0
        %2740 = vmatpush1.bf16.msra.mxu0 %v2720
        %2741 = vmatprep.subr.bf16.mxu0 0
        %2742 = vmatpush1.bf16.msra.mxu0 %v2721
        %2743 = vmatprep.subr.bf16.mxu0 0
        %2744 = vmatpush1.bf16.msra.mxu0 %v2722
        %2745 = vmatprep.subr.bf16.mxu0 0
        %2746 = vmatpush1.bf16.msra.mxu0 %v2723
        %2747 = vmatprep.subr.bf16.mxu0 0
        %2748 = vmatpush1.bf16.msra.mxu0 %v2724
        %2749 = vmatprep.subr.bf16.mxu0 0
        %2750 = vmatpush1.bf16.msra.mxu0 0
        %2751 = vmatprep.subr.bf16.mxu0 0
        %2752 = vmatpush1.bf16.msra.mxu0 0
        %2753 = vmatprep.subr.bf16.mxu0 0
        %2754 = vmatpush1.bf16.msra.mxu0 0
        %2755 = vmatprep.subr.bf16.mxu0 0
        %2756 = vmatpush1.bf16.msra.mxu0 0
        %2757 = vmatprep.subr.bf16.mxu0 0
        %2758 = vmatpush1.bf16.msra.mxu0 0
        %2759 = vmatprep.subr.bf16.mxu0 0
        %2760 = vmatpush1.bf16.msra.mxu0 0
        %2761 = vmatprep.subr.bf16.mxu0 0
        %2762 = vmatpush1.bf16.msra.mxu0 0
        %2763 = vmatprep.subr.bf16.mxu0 0
        %2764 = vmatpush1.bf16.msra.mxu0 0
        %2765 = vmatprep.mubr.bf16.mxu0 0
        %2766 = vmatmul.mubr.bf16.gmra.mrb[0].mxu0 %v2670
        %v2767 = vpop.f32.mrb[0].mxu0
        %v2768 = vadd.f32 0.0, %v2767
        %v2769 = vpop.f32.mrb[0].mxu0
        %v2770 = vpop.f32.mrb[0].mxu0
        %v2771 = vadd.f32 0.0, %v2770
        %v2772 = vpop.f32.mrb[0].mxu0
        %2773 = vmatprep.mubr.bf16.mxu0 0
        %2774 = vmatmul.mubr.bf16.gmra.mrb[0].mxu0 %v2678
        %v2775 = vpop.f32.mrb[0].mxu0
        %v2776 = vadd.f32 0.0, %v2775
        %v2777 = vpop.f32.mrb[0].mxu0
        %v2778 = vpop.f32.mrb[0].mxu0
        %v2779 = vadd.f32 0.0, %v2778
        %v2780 = vpop.f32.mrb[0].mxu0
        %2781 = vmatprep.mubr.bf16.mxu0 0
        %2782 = vmatmul.mubr.bf16.gmra.mrb[0].mxu0 %v2681
        %v2783 = vpop.f32.mrb[0].mxu0
        %v2784 = vadd.f32 0.0, %v2783
        %v2785 = vpop.f32.mrb[0].mxu0
        %v2786 = vpop.f32.mrb[0].mxu0
        %v2787 = vpop.f32.mrb[0].mxu0
        %2788 = vdwg.mxu0
        %v2805 = vunpack.c.l.b16 %v2623
        %v2806 = vunpack.c.l.b16 %v2624
        %v2807 = vunpack.c.l.b16 %v2625
        %v2808 = vunpack.c.l.b16 %v2626
        %v2809 = vunpack.c.l.b16 %v2627
        %v2810 = vunpack.c.l.b16 %v2628
        %v2811 = vunpack.c.l.b16 %v2629
        %v2812 = vunpack.c.l.b16 %v2630
        %v2813 = vunpack.c.l.b16 %v2631
        %v2814 = vunpack.c.l.b16 %v2632
        %v2815 = vunpack.c.l.b16 %v2633
        %v2816 = vunpack.c.l.b16 %v2634
        %v2817 = vunpack.c.l.b16 %v2635
        %v2818 = vunpack.c.l.b16 %v2636
        %v2819 = vunpack.c.l.b16 %v2637
        %v2820 = vunpack.c.l.b16 %v2638
        %v2821 = vpack.c.b16 %v2806, %v2805
        %v2822 = vpack.c.b16 %v2808, %v2807
        %v2823 = vpack.c.b16 %v2810, %v2809
        %v2824 = vpack.c.b16 %v2812, %v2811
        %v2825 = vpack.c.b16 %v2814, %v2813
        %v2826 = vpack.c.b16 %v2816, %v2815
        %v2827 = vpack.c.b16 %v2818, %v2817
        %v2828 = vpack.c.b16 %v2820, %v2819
        %2837 = vmatprep.subr.bf16.mxu0 0
        %2838 = vmatpush1.bf16.msra.mxu0 %v2821
        %2839 = vmatprep.subr.bf16.mxu0 0
        %2840 = vmatpush1.bf16.msra.mxu0 %v2822
        %2841 = vmatprep.subr.bf16.mxu0 0
        %2842 = vmatpush1.bf16.msra.mxu0 %v2823
        %2843 = vmatprep.subr.bf16.mxu0 0
        %2844 = vmatpush1.bf16.msra.mxu0 %v2824
        %2845 = vmatprep.subr.bf16.mxu0 0
        %2846 = vmatpush1.bf16.msra.mxu0 %v2825
        %2847 = vmatprep.subr.bf16.mxu0 0
        %2848 = vmatpush1.bf16.msra.mxu0 %v2826
        %2849 = vmatprep.subr.bf16.mxu0 0
        %2850 = vmatpush1.bf16.msra.mxu0 %v2827
        %2851 = vmatprep.subr.bf16.mxu0 0
        %2852 = vmatpush1.bf16.msra.mxu0 %v2828
        %2853 = vmatprep.subr.bf16.mxu0 0
        %2854 = vmatpush1.bf16.msra.mxu0 0
        %2855 = vmatprep.subr.bf16.mxu0 0
        %2856 = vmatpush1.bf16.msra.mxu0 0
        %2857 = vmatprep.subr.bf16.mxu0 0
        %2858 = vmatpush1.bf16.msra.mxu0 0
        %2859 = vmatprep.subr.bf16.mxu0 0
        %2860 = vmatpush1.bf16.msra.mxu0 0
        %2861 = vmatprep.subr.bf16.mxu0 0
        %2862 = vmatpush1.bf16.msra.mxu0 0
        %2863 = vmatprep.subr.bf16.mxu0 0
        %2864 = vmatpush1.bf16.msra.mxu0 0
        %2865 = vmatprep.subr.bf16.mxu0 0
        %2866 = vmatpush1.bf16.msra.mxu0 0
        %2867 = vmatprep.subr.bf16.mxu0 0
        %2868 = vmatpush1.bf16.msra.mxu0 0
        %2869 = vmatprep.mubr.bf16.mxu0 0
        %2870 = vmatmul.mubr.bf16.gmra.mrb[0].mxu0 %v2639
        %v2871 = vpop.f32.mrb[0].mxu0
        %v2872 = vadd.f32 %v2768, %v2871
        %v2873 = vpop.f32.mrb[0].mxu0
        %v2874 = vpop.f32.mrb[0].mxu0
        %v2875 = vadd.f32 %v2771, %v2874
        %v2876 = vpop.f32.mrb[0].mxu0
        %2877 = vmatprep.mubr.bf16.mxu0 0
        %2878 = vmatmul.mubr.bf16.gmra.mrb[0].mxu0 %v2640
        %v2879 = vpop.f32.mrb[0].mxu0
        %v2880 = vadd.f32 %v2776, %v2879
        %v2881 = vpop.f32.mrb[0].mxu0
        %v2882 = vpop.f32.mrb[0].mxu0
        %v2883 = vadd.f32 %v2779, %v2882
        %v2884 = vpop.f32.mrb[0].mxu0
        %2885 = vmatprep.mubr.bf16.mxu0 0
        %2886 = vmatmul.mubr.bf16.gmra.mrb[0].mxu0 %v2641
        %v2887 = vpop.f32.mrb[0].mxu0
        %v2888 = vadd.f32 %v2784, %v2887
        %v2889 = vpop.f32.mrb[0].mxu0
        %v2890 = vpop.f32.mrb[0].mxu0
        %v2891 = vpop.f32.mrb[0].mxu0
        %2892 = vdwg.mxu0
        %s2893 = scalar_lea.vmem %s25, 128
        %v2894 = vld [vmem:[%s2893] sm:$0xf]
        %v2895 = vld [vmem:[%s2893 + $0x4] sm:$0xf]
        %v2896 = vld [vmem:[%s2893 + $0x8] sm:$0xf]
        %v2897 = vld [vmem:[%s2893 + $0xc] sm:$0xf]
        %v2898 = vld [vmem:[%s2893 + $0x10] sm:$0xf]
        %v2899 = vld [vmem:[%s2893 + $0x14] sm:$0xf]
        %v2900 = vld [vmem:[%s2893 + $0x18] sm:$0xf]
        %v2901 = vld [vmem:[%s2893 + $0x1c] sm:$0xf]
        %v2902 = vld [vmem:[%s2893 + $0x20] sm:$0xf]
        %v2903 = vld [vmem:[%s2893 + $0x24] sm:$0xf]
        %v2904 = vld [vmem:[%s2893 + $0x28] sm:$0xf]
        %v2905 = vld [vmem:[%s2893 + $0x2c] sm:$0xf]
        %v2906 = vld [vmem:[%s2893 + $0x30] sm:$0xf]
        %v2907 = vld [vmem:[%s2893 + $0x34] sm:$0xf]
        %v2908 = vld [vmem:[%s2893 + $0x38] sm:$0xf]
        %v2909 = vld [vmem:[%s2893 + $0x3c] sm:$0xf]
        %v2910 = vpack.c.bf16 %v2622, %v2613
        %vm2914 = vcmask 1046528
        %v2915 = vrot.slane %v2639, 1
        %v2916 = vrot.slane %v2640, 1
        %v2917 = vsel %vm2914, %v2915, %v2916
        %v2918 = vrot.slane %v2910, 1
        %v2919 = vsel %vm2914, %v2916, %v2918
        %v2939 = vunpack.c.l.b16 %v2894
        %v2940 = vunpack.c.l.b16 %v2895
        %v2941 = vunpack.c.l.b16 %v2896
        %v2942 = vunpack.c.l.b16 %v2897
        %v2943 = vunpack.c.l.b16 %v2898
        %v2944 = vunpack.c.l.b16 %v2899
        %v2945 = vunpack.c.l.b16 %v2900
        %v2946 = vunpack.c.l.b16 %v2901
        %v2947 = vunpack.c.l.b16 %v2902
        %v2948 = vunpack.c.l.b16 %v2903
        %v2949 = vunpack.c.l.b16 %v2904
        %v2950 = vunpack.c.l.b16 %v2905
        %v2951 = vunpack.c.l.b16 %v2906
        %v2952 = vunpack.c.l.b16 %v2907
        %v2953 = vunpack.c.l.b16 %v2908
        %v2954 = vunpack.c.l.b16 %v2909
        %v2955 = vpack.c.b16 %v2940, %v2939
        %v2956 = vpack.c.b16 %v2942, %v2941
        %v2957 = vpack.c.b16 %v2944, %v2943
        %v2958 = vpack.c.b16 %v2946, %v2945
        %v2959 = vpack.c.b16 %v2948, %v2947
        %v2960 = vpack.c.b16 %v2950, %v2949
        %v2961 = vpack.c.b16 %v2952, %v2951
        %v2962 = vpack.c.b16 %v2954, %v2953
        %2971 = vmatprep.subr.bf16.mxu0 0
        %2972 = vmatpush1.bf16.msra.mxu0 %v2955
        %2973 = vmatprep.subr.bf16.mxu0 0
        %2974 = vmatpush1.bf16.msra.mxu0 %v2956
        %2975 = vmatprep.subr.bf16.mxu0 0
        %2976 = vmatpush1.bf16.msra.mxu0 %v2957
        %2977 = vmatprep.subr.bf16.mxu0 0
        %2978 = vmatpush1.bf16.msra.mxu0 %v2958
        %2979 = vmatprep.subr.bf16.mxu0 0
        %2980 = vmatpush1.bf16.msra.mxu0 %v2959
        %2981 = vmatprep.subr.bf16.mxu0 0
        %2982 = vmatpush1.bf16.msra.mxu0 %v2960
        %2983 = vmatprep.subr.bf16.mxu0 0
        %2984 = vmatpush1.bf16.msra.mxu0 %v2961
        %2985 = vmatprep.subr.bf16.mxu0 0
        %2986 = vmatpush1.bf16.msra.mxu0 %v2962
        %2987 = vmatprep.subr.bf16.mxu0 0
        %2988 = vmatpush1.bf16.msra.mxu0 0
        %2989 = vmatprep.subr.bf16.mxu0 0
        %2990 = vmatpush1.bf16.msra.mxu0 0
        %2991 = vmatprep.subr.bf16.mxu0 0
        %2992 = vmatpush1.bf16.msra.mxu0 0
        %2993 = vmatprep.subr.bf16.mxu0 0
        %2994 = vmatpush1.bf16.msra.mxu0 0
        %2995 = vmatprep.subr.bf16.mxu0 0
        %2996 = vmatpush1.bf16.msra.mxu0 0
        %2997 = vmatprep.subr.bf16.mxu0 0
        %2998 = vmatpush1.bf16.msra.mxu0 0
        %2999 = vmatprep.subr.bf16.mxu0 0
        %3000 = vmatpush1.bf16.msra.mxu0 0
        %3001 = vmatprep.subr.bf16.mxu0 0
        %3002 = vmatpush1.bf16.msra.mxu0 0
        %3003 = vmatprep.mubr.bf16.mxu0 0
        %3004 = vmatmul.mubr.bf16.gmra.mrb[0].mxu0 %v2917
        %v3005 = vpop.f32.mrb[0].mxu0
        %v3006 = vadd.f32 0.0, %v3005
        %v3007 = vpop.f32.mrb[0].mxu0
        %v3008 = vpop.f32.mrb[0].mxu0
        %v3009 = vadd.f32 0.0, %v3008
        %v3010 = vpop.f32.mrb[0].mxu0
        %3011 = vmatprep.mubr.bf16.mxu0 0
        %3012 = vmatmul.mubr.bf16.gmra.mrb[0].mxu0 %v2919
        %v3013 = vpop.f32.mrb[0].mxu0
        %v3014 = vadd.f32 0.0, %v3013
        %v3015 = vpop.f32.mrb[0].mxu0
        %v3016 = vpop.f32.mrb[0].mxu0
        %v3017 = vadd.f32 0.0, %v3016
        %v3018 = vpop.f32.mrb[0].mxu0
        %3019 = vmatprep.mubr.bf16.mxu0 0
        %3020 = vmatmul.mubr.bf16.gmra.mrb[0].mxu0 %v2918
        %v3021 = vpop.f32.mrb[0].mxu0
        %v3022 = vadd.f32 0.0, %v3021
        %v3023 = vpop.f32.mrb[0].mxu0
        %v3024 = vpop.f32.mrb[0].mxu0
        %v3025 = vpop.f32.mrb[0].mxu0
        %3026 = vdwg.mxu0
        %v3027 = vadd.f32 %v2872, %v3006
        %v3028 = vadd.f32 %v2875, %v3009
        %v3029 = vadd.f32 %v2880, %v3014
        %v3030 = vadd.f32 %v2883, %v3017
        %v3031 = vadd.f32 %v2888, %v3022
        %s3032 = scalar_lea.vmem %s25, 192
        %v3033 = vld [vmem:[%s3032] sm:$0xf]
        %v3034 = vld [vmem:[%s3032 + $0x4] sm:$0xf]
        %v3035 = vld [vmem:[%s3032 + $0x8] sm:$0xf]
        %v3036 = vld [vmem:[%s3032 + $0xc] sm:$0xf]
        %v3037 = vld [vmem:[%s3032 + $0x10] sm:$0xf]
        %v3038 = vld [vmem:[%s3032 + $0x14] sm:$0xf]
        %v3039 = vld [vmem:[%s3032 + $0x18] sm:$0xf]
        %v3040 = vld [vmem:[%s3032 + $0x1c] sm:$0xf]
        %v3041 = vld [vmem:[%s3032 + $0x20] sm:$0xf]
        %v3042 = vld [vmem:[%s3032 + $0x24] sm:$0xf]
        %v3043 = vld [vmem:[%s3032 + $0x28] sm:$0xf]
        %v3044 = vld [vmem:[%s3032 + $0x2c] sm:$0xf]
        %v3045 = vld [vmem:[%s3032 + $0x30] sm:$0xf]
        %v3046 = vld [vmem:[%s3032 + $0x34] sm:$0xf]
        %v3047 = vld [vmem:[%s3032 + $0x38] sm:$0xf]
        %v3048 = vld [vmem:[%s3032 + $0x3c] sm:$0xf]
        %vm3049 = vsmask.f32 6400
        %v3050 = vrot.slane %v2660, 1
        %v3051 = vrot.slane %v2662, 2
        %v3052 = vor.u32 %v3050, %v3051
        %v3053 = vrot.slane %v2671, 1
        %v3054 = vrot.slane %v2667, 2
        %v3055 = vor.u32 %v3053, %v3054
        %v3056 = vsel %vm3049, %v3052, %v3055
        %v3058 = vshrl.u32 %v2910, 16
        %v3060 = vrot.slane %v3058, 1
        %v3061 = vshll.u32 %v2910, 16
        %v3063 = vrot.slane %v3061, 2
        %v3064 = vor.u32 %v3060, %v3063
        %v3065 = vsel %vm3049, %v3055, %v3064
        %v3085 = vunpack.c.l.b16 %v3033
        %v3086 = vunpack.c.l.b16 %v3034
        %v3087 = vunpack.c.l.b16 %v3035
        %v3088 = vunpack.c.l.b16 %v3036
        %v3089 = vunpack.c.l.b16 %v3037
        %v3090 = vunpack.c.l.b16 %v3038
        %v3091 = vunpack.c.l.b16 %v3039
        %v3092 = vunpack.c.l.b16 %v3040
        %v3093 = vunpack.c.l.b16 %v3041
        %v3094 = vunpack.c.l.b16 %v3042
        %v3095 = vunpack.c.l.b16 %v3043
        %v3096 = vunpack.c.l.b16 %v3044
        %v3097 = vunpack.c.l.b16 %v3045
        %v3098 = vunpack.c.l.b16 %v3046
        %v3099 = vunpack.c.l.b16 %v3047
        %v3100 = vunpack.c.l.b16 %v3048
        %v3101 = vpack.c.b16 %v3086, %v3085
        %v3102 = vpack.c.b16 %v3088, %v3087
        %v3103 = vpack.c.b16 %v3090, %v3089
        %v3104 = vpack.c.b16 %v3092, %v3091
        %v3105 = vpack.c.b16 %v3094, %v3093
        %v3106 = vpack.c.b16 %v3096, %v3095
        %v3107 = vpack.c.b16 %v3098, %v3097
        %v3108 = vpack.c.b16 %v3100, %v3099
        %3117 = vmatprep.subr.bf16.mxu0 0
        %3118 = vmatpush1.bf16.msra.mxu0 %v3101
        %3119 = vmatprep.subr.bf16.mxu0 0
        %3120 = vmatpush1.bf16.msra.mxu0 %v3102
        %3121 = vmatprep.subr.bf16.mxu0 0
        %3122 = vmatpush1.bf16.msra.mxu0 %v3103
        %3123 = vmatprep.subr.bf16.mxu0 0
        %3124 = vmatpush1.bf16.msra.mxu0 %v3104
        %3125 = vmatprep.subr.bf16.mxu0 0
        %3126 = vmatpush1.bf16.msra.mxu0 %v3105
        %3127 = vmatprep.subr.bf16.mxu0 0
        %3128 = vmatpush1.bf16.msra.mxu0 %v3106
        %3129 = vmatprep.subr.bf16.mxu0 0
        %3130 = vmatpush1.bf16.msra.mxu0 %v3107
        %3131 = vmatprep.subr.bf16.mxu0 0
        %3132 = vmatpush1.bf16.msra.mxu0 %v3108
        %3133 = vmatprep.subr.bf16.mxu0 0
        %3134 = vmatpush1.bf16.msra.mxu0 0
        %3135 = vmatprep.subr.bf16.mxu0 0
        %3136 = vmatpush1.bf16.msra.mxu0 0
        %3137 = vmatprep.subr.bf16.mxu0 0
        %3138 = vmatpush1.bf16.msra.mxu0 0
        %3139 = vmatprep.subr.bf16.mxu0 0
        %3140 = vmatpush1.bf16.msra.mxu0 0
        %3141 = vmatprep.subr.bf16.mxu0 0
        %3142 = vmatpush1.bf16.msra.mxu0 0
        %3143 = vmatprep.subr.bf16.mxu0 0
        %3144 = vmatpush1.bf16.msra.mxu0 0
        %3145 = vmatprep.subr.bf16.mxu0 0
        %3146 = vmatpush1.bf16.msra.mxu0 0
        %3147 = vmatprep.subr.bf16.mxu0 0
        %3148 = vmatpush1.bf16.msra.mxu0 0
        %3149 = vmatprep.mubr.bf16.mxu0 0
        %3150 = vmatmul.mubr.bf16.gmra.mrb[0].mxu0 %v3056
        %v3151 = vpop.f32.mrb[0].mxu0
        %v3152 = vadd.f32 0.0, %v3151
        %v3153 = vpop.f32.mrb[0].mxu0
        %v3154 = vpop.f32.mrb[0].mxu0
        %v3155 = vadd.f32 0.0, %v3154
        %v3156 = vpop.f32.mrb[0].mxu0
        %3157 = vmatprep.mubr.bf16.mxu0 0
        %3158 = vmatmul.mubr.bf16.gmra.mrb[0].mxu0 %v3065
        %v3159 = vpop.f32.mrb[0].mxu0
        %v3160 = vadd.f32 0.0, %v3159
        %v3161 = vpop.f32.mrb[0].mxu0
        %v3162 = vpop.f32.mrb[0].mxu0
        %v3163 = vadd.f32 0.0, %v3162
        %v3164 = vpop.f32.mrb[0].mxu0
        %3165 = vmatprep.mubr.bf16.mxu0 0
        %3166 = vmatmul.mubr.bf16.gmra.mrb[0].mxu0 %v3064
        %v3167 = vpop.f32.mrb[0].mxu0
        %v3168 = vadd.f32 0.0, %v3167
        %v3169 = vpop.f32.mrb[0].mxu0
        %v3170 = vpop.f32.mrb[0].mxu0
        %v3171 = vpop.f32.mrb[0].mxu0
        %3172 = vdwg.mxu0
        %v3173 = vadd.f32 %v3027, %v3152
        %v3174 = vadd.f32 %v3028, %v3155
        %v3175 = vadd.f32 %v3029, %v3160
        %v3176 = vadd.f32 %v3030, %v3163
        %v3177 = vadd.f32 %v3031, %v3168
        %s3178 = scalar_lea.vmem %s25, 256
        %v3179 = vld [vmem:[%s3178] sm:$0xf]
        %v3180 = vld [vmem:[%s3178 + $0x4] sm:$0xf]
        %v3181 = vld [vmem:[%s3178 + $0x8] sm:$0xf]
        %v3182 = vld [vmem:[%s3178 + $0xc] sm:$0xf]
        %v3183 = vld [vmem:[%s3178 + $0x10] sm:$0xf]
        %v3184 = vld [vmem:[%s3178 + $0x14] sm:$0xf]
        %v3185 = vld [vmem:[%s3178 + $0x18] sm:$0xf]
        %v3186 = vld [vmem:[%s3178 + $0x1c] sm:$0xf]
        %v3187 = vld [vmem:[%s3178 + $0x20] sm:$0xf]
        %v3188 = vld [vmem:[%s3178 + $0x24] sm:$0xf]
        %v3189 = vld [vmem:[%s3178 + $0x28] sm:$0xf]
        %v3190 = vld [vmem:[%s3178 + $0x2c] sm:$0xf]
        %v3191 = vld [vmem:[%s3178 + $0x30] sm:$0xf]
        %v3192 = vld [vmem:[%s3178 + $0x34] sm:$0xf]
        %v3193 = vld [vmem:[%s3178 + $0x38] sm:$0xf]
        %v3194 = vld [vmem:[%s3178 + $0x3c] sm:$0xf]
        %vm3195 = vcmask 1045504
        %v3196 = vrot.slane %v2639, 2
        %v3197 = vrot.slane %v2640, 2
        %v3198 = vsel %vm3195, %v3196, %v3197
        %v3199 = vrot.slane %v2910, 2
        %v3200 = vsel %vm3195, %v3197, %v3199
        %v3220 = vunpack.c.l.b16 %v3179
        %v3221 = vunpack.c.l.b16 %v3180
        %v3222 = vunpack.c.l.b16 %v3181
        %v3223 = vunpack.c.l.b16 %v3182
        %v3224 = vunpack.c.l.b16 %v3183
        %v3225 = vunpack.c.l.b16 %v3184
        %v3226 = vunpack.c.l.b16 %v3185
        %v3227 = vunpack.c.l.b16 %v3186
        %v3228 = vunpack.c.l.b16 %v3187
        %v3229 = vunpack.c.l.b16 %v3188
        %v3230 = vunpack.c.l.b16 %v3189
        %v3231 = vunpack.c.l.b16 %v3190
        %v3232 = vunpack.c.l.b16 %v3191
        %v3233 = vunpack.c.l.b16 %v3192
        %v3234 = vunpack.c.l.b16 %v3193
        %v3235 = vunpack.c.l.b16 %v3194
        %v3236 = vpack.c.b16 %v3221, %v3220
        %v3237 = vpack.c.b16 %v3223, %v3222
        %v3238 = vpack.c.b16 %v3225, %v3224
        %v3239 = vpack.c.b16 %v3227, %v3226
        %v3240 = vpack.c.b16 %v3229, %v3228
        %v3241 = vpack.c.b16 %v3231, %v3230
        %v3242 = vpack.c.b16 %v3233, %v3232
        %v3243 = vpack.c.b16 %v3235, %v3234
        %3252 = vmatprep.subr.bf16.mxu0 0
        %3253 = vmatpush1.bf16.msra.mxu0 %v3236
        %3254 = vmatprep.subr.bf16.mxu0 0
        %3255 = vmatpush1.bf16.msra.mxu0 %v3237
        %3256 = vmatprep.subr.bf16.mxu0 0
        %3257 = vmatpush1.bf16.msra.mxu0 %v3238
        %3258 = vmatprep.subr.bf16.mxu0 0
        %3259 = vmatpush1.bf16.msra.mxu0 %v3239
        %3260 = vmatprep.subr.bf16.mxu0 0
        %3261 = vmatpush1.bf16.msra.mxu0 %v3240
        %3262 = vmatprep.subr.bf16.mxu0 0
        %3263 = vmatpush1.bf16.msra.mxu0 %v3241
        %3264 = vmatprep.subr.bf16.mxu0 0
        %3265 = vmatpush1.bf16.msra.mxu0 %v3242
        %3266 = vmatprep.subr.bf16.mxu0 0
        %3267 = vmatpush1.bf16.msra.mxu0 %v3243
        %3268 = vmatprep.subr.bf16.mxu0 0
        %3269 = vmatpush1.bf16.msra.mxu0 0
        %3270 = vmatprep.subr.bf16.mxu0 0
        %3271 = vmatpush1.bf16.msra.mxu0 0
        %3272 = vmatprep.subr.bf16.mxu0 0
        %3273 = vmatpush1.bf16.msra.mxu0 0
        %3274 = vmatprep.subr.bf16.mxu0 0
        %3275 = vmatpush1.bf16.msra.mxu0 0
        %3276 = vmatprep.subr.bf16.mxu0 0
        %3277 = vmatpush1.bf16.msra.mxu0 0
        %3278 = vmatprep.subr.bf16.mxu0 0
        %3279 = vmatpush1.bf16.msra.mxu0 0
        %3280 = vmatprep.subr.bf16.mxu0 0
        %3281 = vmatpush1.bf16.msra.mxu0 0
        %3282 = vmatprep.subr.bf16.mxu0 0
        %3283 = vmatpush1.bf16.msra.mxu0 0
        %3284 = vmatprep.mubr.bf16.mxu0 0
        %3285 = vmatmul.mubr.bf16.gmra.mrb[0].mxu0 %v3198
        %v3286 = vpop.f32.mrb[0].mxu0
        %v3287 = vadd.f32 0.0, %v3286
        %v3288 = vpop.f32.mrb[0].mxu0
        %v3289 = vpop.f32.mrb[0].mxu0
        %v3290 = vadd.f32 0.0, %v3289
        %v3291 = vpop.f32.mrb[0].mxu0
        %3292 = vmatprep.mubr.bf16.mxu0 0
        %3293 = vmatmul.mubr.bf16.gmra.mrb[0].mxu0 %v3200
        %v3294 = vpop.f32.mrb[0].mxu0
        %v3295 = vadd.f32 0.0, %v3294
        %v3296 = vpop.f32.mrb[0].mxu0
        %v3297 = vpop.f32.mrb[0].mxu0
        %v3298 = vadd.f32 0.0, %v3297
        %v3299 = vpop.f32.mrb[0].mxu0
        %3300 = vmatprep.mubr.bf16.mxu0 0
        %3301 = vmatmul.mubr.bf16.gmra.mrb[0].mxu0 %v3199
        %v3302 = vpop.f32.mrb[0].mxu0
        %v3303 = vadd.f32 0.0, %v3302
        %v3304 = vpop.f32.mrb[0].mxu0
        %v3305 = vpop.f32.mrb[0].mxu0
        %v3306 = vpop.f32.mrb[0].mxu0
        %3307 = vdwg.mxu0
        %v3308 = vadd.f32 %v3173, %v3287
        %v3309 = vadd.f32 %v3174, %v3290
        %v3310 = vadd.f32 %v3175, %v3295
        %v3311 = vadd.f32 %v3176, %v3298
        %v3312 = vadd.f32 %v3177, %v3303
        %s3313 = scalar_lea.vmem %s25, 320
        %v3314 = vld [vmem:[%s3313] sm:$0xf]
        %v3315 = vld [vmem:[%s3313 + $0x4] sm:$0xf]
        %v3316 = vld [vmem:[%s3313 + $0x8] sm:$0xf]
        %v3317 = vld [vmem:[%s3313 + $0xc] sm:$0xf]
        %v3318 = vld [vmem:[%s3313 + $0x10] sm:$0xf]
        %v3319 = vld [vmem:[%s3313 + $0x14] sm:$0xf]
        %v3320 = vld [vmem:[%s3313 + $0x18] sm:$0xf]
        %v3321 = vld [vmem:[%s3313 + $0x1c] sm:$0xf]
        %v3322 = vld [vmem:[%s3313 + $0x20] sm:$0xf]
        %v3323 = vld [vmem:[%s3313 + $0x24] sm:$0xf]
        %v3324 = vld [vmem:[%s3313 + $0x28] sm:$0xf]
        %v3325 = vld [vmem:[%s3313 + $0x2c] sm:$0xf]
        %v3326 = vld [vmem:[%s3313 + $0x30] sm:$0xf]
        %v3327 = vld [vmem:[%s3313 + $0x34] sm:$0xf]
        %v3328 = vld [vmem:[%s3313 + $0x38] sm:$0xf]
        %v3329 = vld [vmem:[%s3313 + $0x3c] sm:$0xf]
        %vm3330 = vsmask.f32 5376
        %v3331 = vrot.slane %v2660, 2
        %v3332 = vrot.slane %v2662, 3
        %v3333 = vor.u32 %v3331, %v3332
        %v3334 = vrot.slane %v2671, 2
        %v3335 = vrot.slane %v2667, 3
        %v3336 = vor.u32 %v3334, %v3335
        %v3337 = vsel %vm3330, %v3333, %v3336
        %v3338 = vrot.slane %v3058, 2
        %v3339 = vrot.slane %v3061, 3
        %v3340 = vor.u32 %v3338, %v3339
        %v3341 = vsel %vm3330, %v3336, %v3340
        %v3361 = vunpack.c.l.b16 %v3314
        %v3362 = vunpack.c.l.b16 %v3315
        %v3363 = vunpack.c.l.b16 %v3316
        %v3364 = vunpack.c.l.b16 %v3317
        %v3365 = vunpack.c.l.b16 %v3318
        %v3366 = vunpack.c.l.b16 %v3319
        %v3367 = vunpack.c.l.b16 %v3320
        %v3368 = vunpack.c.l.b16 %v3321
        %v3369 = vunpack.c.l.b16 %v3322
        %v3370 = vunpack.c.l.b16 %v3323
        %v3371 = vunpack.c.l.b16 %v3324
        %v3372 = vunpack.c.l.b16 %v3325
        %v3373 = vunpack.c.l.b16 %v3326
        %v3374 = vunpack.c.l.b16 %v3327
        %v3375 = vunpack.c.l.b16 %v3328
        %v3376 = vunpack.c.l.b16 %v3329
        %v3377 = vpack.c.b16 %v3362, %v3361
        %v3378 = vpack.c.b16 %v3364, %v3363
        %v3379 = vpack.c.b16 %v3366, %v3365
        %v3380 = vpack.c.b16 %v3368, %v3367
        %v3381 = vpack.c.b16 %v3370, %v3369
        %v3382 = vpack.c.b16 %v3372, %v3371
        %v3383 = vpack.c.b16 %v3374, %v3373
        %v3384 = vpack.c.b16 %v3376, %v3375
        %3393 = vmatprep.subr.bf16.mxu0 0
        %3394 = vmatpush1.bf16.msra.mxu0 %v3377
        %3395 = vmatprep.subr.bf16.mxu0 0
        %3396 = vmatpush1.bf16.msra.mxu0 %v3378
        %3397 = vmatprep.subr.bf16.mxu0 0
        %3398 = vmatpush1.bf16.msra.mxu0 %v3379
        %3399 = vmatprep.subr.bf16.mxu0 0
        %3400 = vmatpush1.bf16.msra.mxu0 %v3380
        %3401 = vmatprep.subr.bf16.mxu0 0
        %3402 = vmatpush1.bf16.msra.mxu0 %v3381
        %3403 = vmatprep.subr.bf16.mxu0 0
        %3404 = vmatpush1.bf16.msra.mxu0 %v3382
        %3405 = vmatprep.subr.bf16.mxu0 0
        %3406 = vmatpush1.bf16.msra.mxu0 %v3383
        %3407 = vmatprep.subr.bf16.mxu0 0
        %3408 = vmatpush1.bf16.msra.mxu0 %v3384
        %3409 = vmatprep.subr.bf16.mxu0 0
        %3410 = vmatpush1.bf16.msra.mxu0 0
        %3411 = vmatprep.subr.bf16.mxu0 0
        %3412 = vmatpush1.bf16.msra.mxu0 0
        %3413 = vmatprep.subr.bf16.mxu0 0
        %3414 = vmatpush1.bf16.msra.mxu0 0
        %3415 = vmatprep.subr.bf16.mxu0 0
        %3416 = vmatpush1.bf16.msra.mxu0 0
        %3417 = vmatprep.subr.bf16.mxu0 0
        %3418 = vmatpush1.bf16.msra.mxu0 0
        %3419 = vmatprep.subr.bf16.mxu0 0
        %3420 = vmatpush1.bf16.msra.mxu0 0
        %3421 = vmatprep.subr.bf16.mxu0 0
        %3422 = vmatpush1.bf16.msra.mxu0 0
        %3423 = vmatprep.subr.bf16.mxu0 0
        %3424 = vmatpush1.bf16.msra.mxu0 0
        %3425 = vmatprep.mubr.bf16.mxu0 0
        %3426 = vmatmul.mubr.bf16.gmra.mrb[0].mxu0 %v3337
        %v3427 = vpop.f32.mrb[0].mxu0
        %v3428 = vadd.f32 0.0, %v3427
        %v3429 = vpop.f32.mrb[0].mxu0
        %v3430 = vpop.f32.mrb[0].mxu0
        %v3431 = vadd.f32 0.0, %v3430
        %v3432 = vpop.f32.mrb[0].mxu0
        %3433 = vmatprep.mubr.bf16.mxu0 0
        %3434 = vmatmul.mubr.bf16.gmra.mrb[0].mxu0 %v3341
        %v3435 = vpop.f32.mrb[0].mxu0
        %v3436 = vadd.f32 0.0, %v3435
        %v3437 = vpop.f32.mrb[0].mxu0
        %v3438 = vpop.f32.mrb[0].mxu0
        %v3439 = vadd.f32 0.0, %v3438
        %v3440 = vpop.f32.mrb[0].mxu0
        %3441 = vmatprep.mubr.bf16.mxu0 0
        %3442 = vmatmul.mubr.bf16.gmra.mrb[0].mxu0 %v3340
        %v3443 = vpop.f32.mrb[0].mxu0
        %v3444 = vadd.f32 0.0, %v3443
        %v3445 = vpop.f32.mrb[0].mxu0
        %v3446 = vpop.f32.mrb[0].mxu0
        %v3447 = vpop.f32.mrb[0].mxu0
        %3448 = vdwg.mxu0
        %v3449 = vadd.f32 %v3308, %v3428
        %v3450 = vadd.f32 %v3309, %v3431
        %v3451 = vadd.f32 %v3310, %v3436
        %v3452 = vadd.f32 %v3311, %v3439
        %v3453 = vadd.f32 %v3312, %v3444
        %s3454 = scalar_lea.vmem %s25, 384
        %v3455 = vld [vmem:[%s3454] sm:$0xf]
        %v3456 = vld [vmem:[%s3454 + $0x4] sm:$0xf]
        %v3457 = vld [vmem:[%s3454 + $0x8] sm:$0xf]
        %v3458 = vld [vmem:[%s3454 + $0xc] sm:$0xf]
        %v3459 = vld [vmem:[%s3454 + $0x10] sm:$0xf]
        %v3460 = vld [vmem:[%s3454 + $0x14] sm:$0xf]
        %v3461 = vld [vmem:[%s3454 + $0x18] sm:$0xf]
        %v3462 = vld [vmem:[%s3454 + $0x1c] sm:$0xf]
        %v3463 = vld [vmem:[%s3454 + $0x20] sm:$0xf]
        %v3464 = vld [vmem:[%s3454 + $0x24] sm:$0xf]
        %v3465 = vld [vmem:[%s3454 + $0x28] sm:$0xf]
        %v3466 = vld [vmem:[%s3454 + $0x2c] sm:$0xf]
        %v3467 = vld [vmem:[%s3454 + $0x30] sm:$0xf]
        %v3468 = vld [vmem:[%s3454 + $0x34] sm:$0xf]
        %v3469 = vld [vmem:[%s3454 + $0x38] sm:$0xf]
        %v3470 = vld [vmem:[%s3454 + $0x3c] sm:$0xf]
        %vm3471 = vcmask 1044480
        %v3472 = vrot.slane %v2639, 3
        %v3473 = vrot.slane %v2640, 3
        %v3474 = vsel %vm3471, %v3472, %v3473
        %v3475 = vrot.slane %v2910, 3
        %v3476 = vsel %vm3471, %v3473, %v3475
        %v3496 = vunpack.c.l.b16 %v3455
        %v3497 = vunpack.c.l.b16 %v3456
        %v3498 = vunpack.c.l.b16 %v3457
        %v3499 = vunpack.c.l.b16 %v3458
        %v3500 = vunpack.c.l.b16 %v3459
        %v3501 = vunpack.c.l.b16 %v3460
        %v3502 = vunpack.c.l.b16 %v3461
        %v3503 = vunpack.c.l.b16 %v3462
        %v3504 = vunpack.c.l.b16 %v3463
        %v3505 = vunpack.c.l.b16 %v3464
        %v3506 = vunpack.c.l.b16 %v3465
        %v3507 = vunpack.c.l.b16 %v3466
        %v3508 = vunpack.c.l.b16 %v3467
        %v3509 = vunpack.c.l.b16 %v3468
        %v3510 = vunpack.c.l.b16 %v3469
        %v3511 = vunpack.c.l.b16 %v3470
        %v3512 = vpack.c.b16 %v3497, %v3496
        %v3513 = vpack.c.b16 %v3499, %v3498
        %v3514 = vpack.c.b16 %v3501, %v3500
        %v3515 = vpack.c.b16 %v3503, %v3502
        %v3516 = vpack.c.b16 %v3505, %v3504
        %v3517 = vpack.c.b16 %v3507, %v3506
        %v3518 = vpack.c.b16 %v3509, %v3508
        %v3519 = vpack.c.b16 %v3511, %v3510
        %3528 = vmatprep.subr.bf16.mxu0 0
        %3529 = vmatpush1.bf16.msra.mxu0 %v3512
        %3530 = vmatprep.subr.bf16.mxu0 0
        %3531 = vmatpush1.bf16.msra.mxu0 %v3513
        %3532 = vmatprep.subr.bf16.mxu0 0
        %3533 = vmatpush1.bf16.msra.mxu0 %v3514
        %3534 = vmatprep.subr.bf16.mxu0 0
        %3535 = vmatpush1.bf16.msra.mxu0 %v3515
        %3536 = vmatprep.subr.bf16.mxu0 0
        %3537 = vmatpush1.bf16.msra.mxu0 %v3516
        %3538 = vmatprep.subr.bf16.mxu0 0
        %3539 = vmatpush1.bf16.msra.mxu0 %v3517
        %3540 = vmatprep.subr.bf16.mxu0 0
        %3541 = vmatpush1.bf16.msra.mxu0 %v3518
        %3542 = vmatprep.subr.bf16.mxu0 0
        %3543 = vmatpush1.bf16.msra.mxu0 %v3519
        %3544 = vmatprep.subr.bf16.mxu0 0
        %3545 = vmatpush1.bf16.msra.mxu0 0
        %3546 = vmatprep.subr.bf16.mxu0 0
        %3547 = vmatpush1.bf16.msra.mxu0 0
        %3548 = vmatprep.subr.bf16.mxu0 0
        %3549 = vmatpush1.bf16.msra.mxu0 0
        %3550 = vmatprep.subr.bf16.mxu0 0
        %3551 = vmatpush1.bf16.msra.mxu0 0
        %3552 = vmatprep.subr.bf16.mxu0 0
        %3553 = vmatpush1.bf16.msra.mxu0 0
        %3554 = vmatprep.subr.bf16.mxu0 0
        %3555 = vmatpush1.bf16.msra.mxu0 0
        %3556 = vmatprep.subr.bf16.mxu0 0
        %3557 = vmatpush1.bf16.msra.mxu0 0
        %3558 = vmatprep.subr.bf16.mxu0 0
        %3559 = vmatpush1.bf16.msra.mxu0 0
        %3560 = vmatprep.mubr.bf16.mxu0 0
        %3561 = vmatmul.mubr.bf16.gmra.mrb[0].mxu0 %v3474
        %v3562 = vpop.f32.mrb[0].mxu0
        %v3563 = vadd.f32 0.0, %v3562
        %v3564 = vpop.f32.mrb[0].mxu0
        %v3565 = vpop.f32.mrb[0].mxu0
        %v3566 = vadd.f32 0.0, %v3565
        %v3567 = vpop.f32.mrb[0].mxu0
        %3568 = vmatprep.mubr.bf16.mxu0 0
        %3569 = vmatmul.mubr.bf16.gmra.mrb[0].mxu0 %v3476
        %v3570 = vpop.f32.mrb[0].mxu0
        %v3571 = vadd.f32 0.0, %v3570
        %v3572 = vpop.f32.mrb[0].mxu0
        %v3573 = vpop.f32.mrb[0].mxu0
        %v3574 = vadd.f32 0.0, %v3573
        %v3575 = vpop.f32.mrb[0].mxu0
        %3576 = vmatprep.mubr.bf16.mxu0 0
        %3577 = vmatmul.mubr.bf16.gmra.mrb[0].mxu0 %v3475
        %v3578 = vpop.f32.mrb[0].mxu0
        %v3579 = vadd.f32 0.0, %v3578
        %v3580 = vpop.f32.mrb[0].mxu0
        %v3581 = vpop.f32.mrb[0].mxu0
        %v3582 = vpop.f32.mrb[0].mxu0
        %3583 = vdwg.mxu0
        %v3584 = vadd.f32 %v3449, %v3563
        %v3585 = vadd.f32 %v3450, %v3566
        %v3586 = vadd.f32 %v3451, %v3571
        %v3587 = vadd.f32 %v3452, %v3574
        %v3588 = vadd.f32 %v3453, %v3579
        %s3589 = scalar_lea.vmem %s25, 448
        %v3590 = vld [vmem:[%s3589] sm:$0xf]
        %v3591 = vld [vmem:[%s3589 + $0x4] sm:$0xf]
        %v3592 = vld [vmem:[%s3589 + $0x8] sm:$0xf]
        %v3593 = vld [vmem:[%s3589 + $0xc] sm:$0xf]
        %v3594 = vld [vmem:[%s3589 + $0x10] sm:$0xf]
        %v3595 = vld [vmem:[%s3589 + $0x14] sm:$0xf]
        %v3596 = vld [vmem:[%s3589 + $0x18] sm:$0xf]
        %v3597 = vld [vmem:[%s3589 + $0x1c] sm:$0xf]
        %v3598 = vld [vmem:[%s3589 + $0x20] sm:$0xf]
        %v3599 = vld [vmem:[%s3589 + $0x24] sm:$0xf]
        %v3600 = vld [vmem:[%s3589 + $0x28] sm:$0xf]
        %v3601 = vld [vmem:[%s3589 + $0x2c] sm:$0xf]
        %v3602 = vld [vmem:[%s3589 + $0x30] sm:$0xf]
        %v3603 = vld [vmem:[%s3589 + $0x34] sm:$0xf]
        %v3604 = vld [vmem:[%s3589 + $0x38] sm:$0xf]
        %v3605 = vld [vmem:[%s3589 + $0x3c] sm:$0xf]
        %vm3606 = vsmask.f32 4352
        %v3607 = vrot.slane %v2660, 3
        %v3608 = vrot.slane %v2662, 4
        %v3609 = vor.u32 %v3607, %v3608
        %v3610 = vrot.slane %v2671, 3
        %v3611 = vrot.slane %v2667, 4
        %v3612 = vor.u32 %v3610, %v3611
        %v3613 = vsel %vm3606, %v3609, %v3612
        %v3614 = vrot.slane %v3058, 3
        %v3615 = vrot.slane %v3061, 4
        %v3616 = vor.u32 %v3614, %v3615
        %v3617 = vsel %vm3606, %v3612, %v3616
        %v3637 = vunpack.c.l.b16 %v3590
        %v3638 = vunpack.c.l.b16 %v3591
        %v3639 = vunpack.c.l.b16 %v3592
        %v3640 = vunpack.c.l.b16 %v3593
        %v3641 = vunpack.c.l.b16 %v3594
        %v3642 = vunpack.c.l.b16 %v3595
        %v3643 = vunpack.c.l.b16 %v3596
        %v3644 = vunpack.c.l.b16 %v3597
        %v3645 = vunpack.c.l.b16 %v3598
        %v3646 = vunpack.c.l.b16 %v3599
        %v3647 = vunpack.c.l.b16 %v3600
        %v3648 = vunpack.c.l.b16 %v3601
        %v3649 = vunpack.c.l.b16 %v3602
        %v3650 = vunpack.c.l.b16 %v3603
        %v3651 = vunpack.c.l.b16 %v3604
        %v3652 = vunpack.c.l.b16 %v3605
        %v3653 = vpack.c.b16 %v3638, %v3637
        %v3654 = vpack.c.b16 %v3640, %v3639
        %v3655 = vpack.c.b16 %v3642, %v3641
        %v3656 = vpack.c.b16 %v3644, %v3643
        %v3657 = vpack.c.b16 %v3646, %v3645
        %v3658 = vpack.c.b16 %v3648, %v3647
        %v3659 = vpack.c.b16 %v3650, %v3649
        %v3660 = vpack.c.b16 %v3652, %v3651
        %3669 = vmatprep.subr.bf16.mxu0 0
        %3670 = vmatpush1.bf16.msra.mxu0 %v3653
        %3671 = vmatprep.subr.bf16.mxu0 0
        %3672 = vmatpush1.bf16.msra.mxu0 %v3654
        %3673 = vmatprep.subr.bf16.mxu0 0
        %3674 = vmatpush1.bf16.msra.mxu0 %v3655
        %3675 = vmatprep.subr.bf16.mxu0 0
        %3676 = vmatpush1.bf16.msra.mxu0 %v3656
        %3677 = vmatprep.subr.bf16.mxu0 0
        %3678 = vmatpush1.bf16.msra.mxu0 %v3657
        %3679 = vmatprep.subr.bf16.mxu0 0
        %3680 = vmatpush1.bf16.msra.mxu0 %v3658
        %3681 = vmatprep.subr.bf16.mxu0 0
        %3682 = vmatpush1.bf16.msra.mxu0 %v3659
        %3683 = vmatprep.subr.bf16.mxu0 0
        %3684 = vmatpush1.bf16.msra.mxu0 %v3660
        %3685 = vmatprep.subr.bf16.mxu0 0
        %3686 = vmatpush1.bf16.msra.mxu0 0
        %3687 = vmatprep.subr.bf16.mxu0 0
        %3688 = vmatpush1.bf16.msra.mxu0 0
        %3689 = vmatprep.subr.bf16.mxu0 0
        %3690 = vmatpush1.bf16.msra.mxu0 0
        %3691 = vmatprep.subr.bf16.mxu0 0
        %3692 = vmatpush1.bf16.msra.mxu0 0
        %3693 = vmatprep.subr.bf16.mxu0 0
        %3694 = vmatpush1.bf16.msra.mxu0 0
        %3695 = vmatprep.subr.bf16.mxu0 0
        %3696 = vmatpush1.bf16.msra.mxu0 0
        %3697 = vmatprep.subr.bf16.mxu0 0
        %3698 = vmatpush1.bf16.msra.mxu0 0
        %3699 = vmatprep.subr.bf16.mxu0 0
        %3700 = vmatpush1.bf16.msra.mxu0 0
        %3701 = vmatprep.mubr.bf16.mxu0 0
        %3702 = vmatmul.mubr.bf16.gmra.mrb[0].mxu0 %v3613
        %v3703 = vpop.f32.mrb[0].mxu0
        %v3704 = vadd.f32 0.0, %v3703
        %v3705 = vpop.f32.mrb[0].mxu0
        %v3706 = vpop.f32.mrb[0].mxu0
        %v3707 = vadd.f32 0.0, %v3706
        %v3708 = vpop.f32.mrb[0].mxu0
        %3709 = vmatprep.mubr.bf16.mxu0 0
        %3710 = vmatmul.mubr.bf16.gmra.mrb[0].mxu0 %v3617
        %v3711 = vpop.f32.mrb[0].mxu0
        %v3712 = vadd.f32 0.0, %v3711
        %v3713 = vpop.f32.mrb[0].mxu0
        %v3714 = vpop.f32.mrb[0].mxu0
        %v3715 = vadd.f32 0.0, %v3714
        %v3716 = vpop.f32.mrb[0].mxu0
        %3717 = vmatprep.mubr.bf16.mxu0 0
        %3718 = vmatmul.mubr.bf16.gmra.mrb[0].mxu0 %v3616
        %v3719 = vpop.f32.mrb[0].mxu0
        %v3720 = vadd.f32 0.0, %v3719
        %v3721 = vpop.f32.mrb[0].mxu0
        %v3722 = vpop.f32.mrb[0].mxu0
        %v3723 = vpop.f32.mrb[0].mxu0
        %3724 = vdwg.mxu0
        %v3725 = vadd.f32 %v3584, %v3704
        %v3726 = vadd.f32 %v3585, %v3707
        %v3727 = vadd.f32 %v3586, %v3712
        %v3728 = vadd.f32 %v3587, %v3715
        %v3729 = vadd.f32 %v3588, %v3720
        %s3730 = scalar_lea.vmem %s25, 512
        %v3731 = vld [vmem:[%s3730] sm:$0xf]
        %v3732 = vld [vmem:[%s3730 + $0x4] sm:$0xf]
        %v3733 = vld [vmem:[%s3730 + $0x8] sm:$0xf]
        %v3734 = vld [vmem:[%s3730 + $0xc] sm:$0xf]
        %v3735 = vld [vmem:[%s3730 + $0x10] sm:$0xf]
        %v3736 = vld [vmem:[%s3730 + $0x14] sm:$0xf]
        %v3737 = vld [vmem:[%s3730 + $0x18] sm:$0xf]
        %v3738 = vld [vmem:[%s3730 + $0x1c] sm:$0xf]
        %v3739 = vld [vmem:[%s3730 + $0x20] sm:$0xf]
        %v3740 = vld [vmem:[%s3730 + $0x24] sm:$0xf]
        %v3741 = vld [vmem:[%s3730 + $0x28] sm:$0xf]
        %v3742 = vld [vmem:[%s3730 + $0x2c] sm:$0xf]
        %v3743 = vld [vmem:[%s3730 + $0x30] sm:$0xf]
        %v3744 = vld [vmem:[%s3730 + $0x34] sm:$0xf]
        %v3745 = vld [vmem:[%s3730 + $0x38] sm:$0xf]
        %v3746 = vld [vmem:[%s3730 + $0x3c] sm:$0xf]
        %v3747 = vpack.c.bf16 %v2609, %v2607
        %v3748 = vpack.c.bf16 %v2613, %v2611
        %v3749 = vpack.c.bf16 %v2622, %v2622
        %v3766 = vunpack.c.l.b16 %v3731
        %v3767 = vunpack.c.l.b16 %v3732
        %v3768 = vunpack.c.l.b16 %v3733
        %v3769 = vunpack.c.l.b16 %v3734
        %v3770 = vunpack.c.l.b16 %v3735
        %v3771 = vunpack.c.l.b16 %v3736
        %v3772 = vunpack.c.l.b16 %v3737
        %v3773 = vunpack.c.l.b16 %v3738
        %v3774 = vunpack.c.l.b16 %v3739
        %v3775 = vunpack.c.l.b16 %v3740
        %v3776 = vunpack.c.l.b16 %v3741
        %v3777 = vunpack.c.l.b16 %v3742
        %v3778 = vunpack.c.l.b16 %v3743
        %v3779 = vunpack.c.l.b16 %v3744
        %v3780 = vunpack.c.l.b16 %v3745
        %v3781 = vunpack.c.l.b16 %v3746
        %v3782 = vpack.c.b16 %v3767, %v3766
        %v3783 = vpack.c.b16 %v3769, %v3768
        %v3784 = vpack.c.b16 %v3771, %v3770
        %v3785 = vpack.c.b16 %v3773, %v3772
        %v3786 = vpack.c.b16 %v3775, %v3774
        %v3787 = vpack.c.b16 %v3777, %v3776
        %v3788 = vpack.c.b16 %v3779, %v3778
        %v3789 = vpack.c.b16 %v3781, %v3780
        %3798 = vmatprep.subr.bf16.mxu0 0
        %3799 = vmatpush1.bf16.msra.mxu0 %v3782
        %3800 = vmatprep.subr.bf16.mxu0 0
        %3801 = vmatpush1.bf16.msra.mxu0 %v3783
        %3802 = vmatprep.subr.bf16.mxu0 0
        %3803 = vmatpush1.bf16.msra.mxu0 %v3784
        %3804 = vmatprep.subr.bf16.mxu0 0
        %3805 = vmatpush1.bf16.msra.mxu0 %v3785
        %3806 = vmatprep.subr.bf16.mxu0 0
        %3807 = vmatpush1.bf16.msra.mxu0 %v3786
        %3808 = vmatprep.subr.bf16.mxu0 0
        %3809 = vmatpush1.bf16.msra.mxu0 %v3787
        %3810 = vmatprep.subr.bf16.mxu0 0
        %3811 = vmatpush1.bf16.msra.mxu0 %v3788
        %3812 = vmatprep.subr.bf16.mxu0 0
        %3813 = vmatpush1.bf16.msra.mxu0 %v3789
        %3814 = vmatprep.subr.bf16.mxu0 0
        %3815 = vmatpush1.bf16.msra.mxu0 0
        %3816 = vmatprep.subr.bf16.mxu0 0
        %3817 = vmatpush1.bf16.msra.mxu0 0
        %3818 = vmatprep.subr.bf16.mxu0 0
        %3819 = vmatpush1.bf16.msra.mxu0 0
        %3820 = vmatprep.subr.bf16.mxu0 0
        %3821 = vmatpush1.bf16.msra.mxu0 0
        %3822 = vmatprep.subr.bf16.mxu0 0
        %3823 = vmatpush1.bf16.msra.mxu0 0
        %3824 = vmatprep.subr.bf16.mxu0 0
        %3825 = vmatpush1.bf16.msra.mxu0 0
        %3826 = vmatprep.subr.bf16.mxu0 0
        %3827 = vmatpush1.bf16.msra.mxu0 0
        %3828 = vmatprep.subr.bf16.mxu0 0
        %3829 = vmatpush1.bf16.msra.mxu0 0
        %3830 = vmatprep.mubr.bf16.mxu0 0
        %3831 = vmatmul.mubr.bf16.gmra.mrb[0].mxu0 %v3747
        %v3832 = vpop.f32.mrb[0].mxu0
        %v3833 = vadd.f32 0.0, %v3832
        %v3834 = vpop.f32.mrb[0].mxu0
        %v3835 = vpop.f32.mrb[0].mxu0
        %v3836 = vadd.f32 0.0, %v3835
        %v3837 = vpop.f32.mrb[0].mxu0
        %3838 = vmatprep.mubr.bf16.mxu0 0
        %3839 = vmatmul.mubr.bf16.gmra.mrb[0].mxu0 %v3748
        %v3840 = vpop.f32.mrb[0].mxu0
        %v3841 = vadd.f32 0.0, %v3840
        %v3842 = vpop.f32.mrb[0].mxu0
        %v3843 = vpop.f32.mrb[0].mxu0
        %v3844 = vadd.f32 0.0, %v3843
        %v3845 = vpop.f32.mrb[0].mxu0
        %3846 = vmatprep.mubr.bf16.mxu0 0
        %3847 = vmatmul.mubr.bf16.gmra.mrb[0].mxu0 %v3749
        %v3848 = vpop.f32.mrb[0].mxu0
        %v3849 = vadd.f32 0.0, %v3848
        %v3850 = vpop.f32.mrb[0].mxu0
        %v3851 = vpop.f32.mrb[0].mxu0
        %v3852 = vpop.f32.mrb[0].mxu0
        %3853 = vdwg.mxu0
        %v3854 = vadd.f32 %v3725, %v3833
        %v3855 = vadd.f32 %v3726, %v3836
        %v3856 = vadd.f32 %v3727, %v3841
        %v3857 = vadd.f32 %v3728, %v3844
        %v3858 = vadd.f32 %v3729, %v3849
        %v3859 = vld [vmem:[#allocation17] sm:$0x1]
        %v3861 = vlaneseq
        %v3862 = vshrl.u32 %v3861, 7
        %v3863 = vsub.s32 0, %v3862
        %v3864 = vrot.slane %v3859, %v3863
        %v3866 = vadd.f32 %v3854, %v3864
        %v3867 = vadd.f32 %v3855, %v3864
        %v3868 = vadd.f32 %v3856, %v3864
        %v3869 = vadd.f32 %v3857, %v3864
        %v3870 = vadd.f32 %v3858, %v3864
        %v3871 = vmul.f32 %v3866, 0.5
        %v3872 = vmul.f32 %v3867, 0.5
        %v3873 = vmul.f32 %v3868, 0.5
        %v3874 = vmul.f32 %v3869, 0.5
        %v3875 = vmul.f32 %v3870, 0.5
        %v3876 = vmul.f32 %v3866, 0.044715
        %v3877 = vmul.f32 %v3867, 0.044715
        %v3878 = vmul.f32 %v3868, 0.044715
        %v3879 = vmul.f32 %v3869, 0.044715
        %v3880 = vmul.f32 %v3870, 0.044715
        %v3881 = vmul.f32 %v3876, %v3866
        %v3882 = vmul.f32 %v3877, %v3867
        %v3883 = vmul.f32 %v3878, %v3868
        %v3884 = vmul.f32 %v3879, %v3869
        %v3885 = vmul.f32 %v3880, %v3870
        %v3886 = vmul.f32 %v3881, %v3866
        %v3887 = vmul.f32 %v3882, %v3867
        %v3888 = vmul.f32 %v3883, %v3868
        %v3889 = vmul.f32 %v3884, %v3869
        %v3890 = vmul.f32 %v3885, %v3870
        %v3891 = vadd.f32 %v3866, %v3886
        %v3892 = vadd.f32 %v3867, %v3887
        %v3893 = vadd.f32 %v3868, %v3888
        %v3894 = vadd.f32 %v3869, %v3889
        %v3895 = vadd.f32 %v3870, %v3890
        %v3896 = vmul.f32 %v3891, 0.7978846
        %v3897 = vmul.f32 %v3892, 0.7978846
        %v3898 = vmul.f32 %v3893, 0.7978846
        %v3899 = vmul.f32 %v3894, 0.7978846
        %v3900 = vmul.f32 %v3895, 0.7978846
        %v3901 = vtanh.pop %v3896
        %v3902 = vtanh.pop %v3897
        %v3903 = vtanh.pop %v3898
        %v3904 = vtanh.pop %v3899
        %v3905 = vtanh.pop %v3900
        %v3906 = vadd.f32 %v3901, 1.0
        %v3907 = vadd.f32 %v3902, 1.0
        %v3908 = vadd.f32 %v3903, 1.0
        %v3909 = vadd.f32 %v3904, 1.0
        %v3910 = vadd.f32 %v3905, 1.0
        %v3911 = vmul.f32 %v3871, %v3906
        %v3912 = vmul.f32 %v3872, %v3907
        %v3913 = vmul.f32 %v3873, %v3908
        %v3914 = vmul.f32 %v3874, %v3909
        %v3915 = vmul.f32 %v3875, %v3910
        %v3916 = vadd.f32 %v2578, %v3911
        %v3917 = vadd.f32 %v2581, %v3912
        %v3918 = vadd.f32 %v2586, %v3913
        %v3919 = vadd.f32 %v2589, %v3914
        %v3920 = vadd.f32 %v2594, %v3915
        %v3921 = vld [vmem:[#allocation19] sm:$0x1]
        %v3922 = vld [vmem:[#allocation20] sm:$0x1]
        %3923 = vadd.xlane.f32.xlu0 %v3916
        %v3924 = vpop.xlane.xlu0 %3923
        %3925 = vadd.xlane.f32.xlu0 %v3917
        %v3926 = vpop.xlane.xlu0 %3925
        %3927 = vadd.xlane.f32.xlu0 %v3918
        %v3928 = vpop.xlane.xlu0 %3927
        %3929 = vadd.xlane.f32.xlu0 %v3919
        %v3930 = vpop.xlane.xlu0 %3929
        %v3931 = vsel %vm1699, %v3920, 0.0
        %3932 = vadd.xlane.f32.xlu0 %v3931
        %v3933 = vpop.xlane.xlu0 %3932
        %v3934 = vmul.f32 %v3916, %v3916
        %v3935 = vmul.f32 %v3917, %v3917
        %v3936 = vmul.f32 %v3918, %v3918
        %v3937 = vmul.f32 %v3919, %v3919
        %v3938 = vmul.f32 %v3920, %v3920
        %3939 = vadd.xlane.f32.xlu0 %v3934
        %v3940 = vpop.xlane.xlu0 %3939
        %3941 = vadd.xlane.f32.xlu0 %v3935
        %v3942 = vpop.xlane.xlu0 %3941
        %3943 = vadd.xlane.f32.xlu0 %v3936
        %v3944 = vpop.xlane.xlu0 %3943
        %3945 = vadd.xlane.f32.xlu0 %v3937
        %v3946 = vpop.xlane.xlu0 %3945
        %v3947 = vsel %vm1699, %v3938, 0.0
        %3948 = vadd.xlane.f32.xlu0 %v3947
        %v3949 = vpop.xlane.xlu0 %3948
        %v3950 = vrcp.pop 64.0
        %v3951 = vmul.f32 %v3924, %v3950
        %v3952 = vmul.f32 %v3926, %v3950
        %v3953 = vmul.f32 %v3928, %v3950
        %v3954 = vmul.f32 %v3930, %v3950
        %v3955 = vmul.f32 %v3933, %v3950
        %v3956 = vmul.f32 %v3940, %v3950
        %v3957 = vmul.f32 %v3942, %v3950
        %v3958 = vmul.f32 %v3944, %v3950
        %v3959 = vmul.f32 %v3946, %v3950
        %v3960 = vmul.f32 %v3949, %v3950
        %v3961 = vmul.f32 %v3951, %v3951
        %v3962 = vmul.f32 %v3952, %v3952
        %v3963 = vmul.f32 %v3953, %v3953
        %v3964 = vmul.f32 %v3954, %v3954
        %v3965 = vmul.f32 %v3955, %v3955
        %v3966 = vsub.f32 %v3956, %v3961
        %v3967 = vsub.f32 %v3957, %v3962
        %v3968 = vsub.f32 %v3958, %v3963
        %v3969 = vsub.f32 %v3959, %v3964
        %v3970 = vsub.f32 %v3960, %v3965
        %v3971 = vsub.f32 %v3916, %v3951
        %v3972 = vsub.f32 %v3917, %v3952
        %v3973 = vsub.f32 %v3918, %v3953
        %v3974 = vsub.f32 %v3919, %v3954
        %v3975 = vsub.f32 %v3920, %v3955
        %v3976 = vadd.f32 %v3966, 1e-05
        %v3977 = vadd.f32 %v3967, 1e-05
        %v3978 = vadd.f32 %v3968, 1e-05
        %v3979 = vadd.f32 %v3969, 1e-05
        %v3980 = vadd.f32 %v3970, 1e-05
        %v3981 = vrsqrt.pop %v3976
        %v3982 = vrsqrt.pop %v3977
        %v3983 = vrsqrt.pop %v3978
        %v3984 = vrsqrt.pop %v3979
        %v3985 = vrsqrt.pop %v3980
        %v3986 = vmul.f32 %v3971, %v3981
        %v3987 = vmul.f32 %v3972, %v3982
        %v3988 = vmul.f32 %v3973, %v3983
        %v3989 = vmul.f32 %v3974, %v3984
        %v3990 = vmul.f32 %v3975, %v3985
        %v3992 = vlaneseq
        %v3993 = vshrl.u32 %v3992, 7
        %v3994 = vsub.s32 0, %v3993
        %v3995 = vrot.slane %v3921, %v3994
        %v3997 = vmul.f32 %v3986, %v3995
        %v3998 = vmul.f32 %v3987, %v3995
        %v3999 = vmul.f32 %v3988, %v3995
        %v4000 = vmul.f32 %v3989, %v3995
        %v4001 = vmul.f32 %v3990, %v3995
        %v4003 = vlaneseq
        %v4004 = vshrl.u32 %v4003, 7
        %v4005 = vsub.s32 0, %v4004
        %v4006 = vrot.slane %v3922, %v4005
        %v4008 = vadd.f32 %v3997, %v4006
        %v4009 = vadd.f32 %v3998, %v4006
        %v4010 = vadd.f32 %v3999, %v4006
        %v4011 = vadd.f32 %v4000, %v4006
        %v4012 = vadd.f32 %v4001, %v4006
        %v4013 = vld [vmem:[%s3] sm:$0x1]
        %v4015 = vlaneseq
        %v4016 = vshrl.u32 %v4015, 7
        %v4017 = vsub.s32 0, %v4016
        %v4018 = vrot.slane %v4013, %v4017
        %4019 = vset.pattern.permute.xlu0 0
        %4020 = vperm.xlu0 %4019, %v4018
        %v4021 = vpop.permute.xlu0 %4020
        %v4023 = vmul.f32 %v4021, %v4008
        %v4024 = vmul.f32 %v4021, %v4009
        %v4025 = vmul.f32 %v4021, %v4010
        %v4026 = vmul.f32 %v4021, %v4011
        %v4027 = vmul.f32 %v4021, %v4012
        %v4028 = vlaneseq
        %v4029 = vand.u32 %v4028, 127
        %v4030 = vld [vmem:[%s33] sm:$0xff]
        %v4031 = vld [vmem:[%s33 + $0x8] sm:$0xff]
        %v4032 = vld [vmem:[%s33 + $0x10] sm:$0xff]
        %v4033 = vld [vmem:[%s33 + $0x18] sm:$0xff]
        %v4034 = vld [vmem:[%s33 + $0x20] sm:$0xff]
        %v4035 = vld [vmem:[%s33 + $0x28] sm:$0xff]
        %v4036 = vld [vmem:[%s33 + $0x30] sm:$0xff]
        %v4037 = vld [vmem:[%s33 + $0x38] sm:$0xff]
        %v4038 = vld [vmem:[%s33 + $0x40] sm:$0xff]
        %v4039 = vld [vmem:[%s33 + $0x48] sm:$0xff]
        %v4040 = vld [vmem:[%s33 + $0x50] sm:$0xff]
        %v4041 = vld [vmem:[%s33 + $0x58] sm:$0xff]
        %v4042 = vld [vmem:[%s33 + $0x60] sm:$0xff]
        %v4043 = vld [vmem:[%s33 + $0x68] sm:$0xff]
        %v4044 = vld [vmem:[%s33 + $0x70] sm:$0xff]
        %v4045 = vld [vmem:[%s33 + $0x78] sm:$0xff]
        %v4046 = vpack.c.bf16 %v4009, %v4008
        %v4047 = vpack.c.bf16 %v4011, %v4010
        %v4048 = vpack.c.bf16 %v4012, %v4012
        %v4049 = vld [vmem:[%s35] sm:$0x3]
        %v4051 = vlaneseq
        %v4052 = vshrl.u32 %v4051, 7
        %v4053 = vsub.s32 0, %v4052
        %v4054 = vrot.slane %v4049, %v4053
        %v4055 = vlaneseq
        %v4056 = vshrl.u32 %v4055, 7
        %v4057 = vsub.s32 1, %v4056
        %v4058 = vrot.slane %v4049, %v4057
        %v4077 = vunpack.c.l.b16 %v4030
        %v4078 = vunpack.c.h.b16 %v4030
        %v4079 = vunpack.c.l.b16 %v4031
        %v4080 = vunpack.c.h.b16 %v4031
        %v4081 = vunpack.c.l.b16 %v4032
        %v4082 = vunpack.c.h.b16 %v4032
        %v4083 = vunpack.c.l.b16 %v4033
        %v4084 = vunpack.c.h.b16 %v4033
        %v4085 = vunpack.c.l.b16 %v4034
        %v4086 = vunpack.c.h.b16 %v4034
        %v4087 = vunpack.c.l.b16 %v4035
        %v4088 = vunpack.c.h.b16 %v4035
        %v4089 = vunpack.c.l.b16 %v4036
        %v4090 = vunpack.c.h.b16 %v4036
        %v4091 = vunpack.c.l.b16 %v4037
        %v4092 = vunpack.c.h.b16 %v4037
        %v4093 = vunpack.c.l.b16 %v4038
        %v4094 = vunpack.c.h.b16 %v4038
        %v4095 = vunpack.c.l.b16 %v4039
        %v4096 = vunpack.c.h.b16 %v4039
        %v4097 = vunpack.c.l.b16 %v4040
        %v4098 = vunpack.c.h.b16 %v4040
        %v4099 = vunpack.c.l.b16 %v4041
        %v4100 = vunpack.c.h.b16 %v4041
        %v4101 = vunpack.c.l.b16 %v4042
        %v4102 = vunpack.c.h.b16 %v4042
        %v4103 = vunpack.c.l.b16 %v4043
        %v4104 = vunpack.c.h.b16 %v4043
        %v4105 = vunpack.c.l.b16 %v4044
        %v4106 = vunpack.c.h.b16 %v4044
        %v4107 = vunpack.c.l.b16 %v4045
        %v4108 = vunpack.c.h.b16 %v4045
        %v4109 = vpack.c.b16 %v4079, %v4077
        %v4110 = vpack.c.b16 %v4080, %v4078
        %v4111 = vpack.c.b16 %v4083, %v4081
        %v4112 = vpack.c.b16 %v4084, %v4082
        %v4113 = vpack.c.b16 %v4087, %v4085
        %v4114 = vpack.c.b16 %v4088, %v4086
        %v4115 = vpack.c.b16 %v4091, %v4089
        %v4116 = vpack.c.b16 %v4092, %v4090
        %v4117 = vpack.c.b16 %v4095, %v4093
        %v4118 = vpack.c.b16 %v4096, %v4094
        %v4119 = vpack.c.b16 %v4099, %v4097
        %v4120 = vpack.c.b16 %v4100, %v4098
        %v4121 = vpack.c.b16 %v4103, %v4101
        %v4122 = vpack.c.b16 %v4104, %v4102
        %v4123 = vpack.c.b16 %v4107, %v4105
        %v4124 = vpack.c.b16 %v4108, %v4106
        %4141 = vmatprep.subr.bf16.mxu0 %v4110
        %4142 = vmatpush1.bf16.msra.mxu0 %v4109
        %4143 = vmatprep.subr.bf16.mxu0 %v4112
        %4144 = vmatpush1.bf16.msra.mxu0 %v4111
        %4145 = vmatprep.subr.bf16.mxu0 %v4114
        %4146 = vmatpush1.bf16.msra.mxu0 %v4113
        %4147 = vmatprep.subr.bf16.mxu0 %v4116
        %4148 = vmatpush1.bf16.msra.mxu0 %v4115
        %4149 = vmatprep.subr.bf16.mxu0 %v4118
        %4150 = vmatpush1.bf16.msra.mxu0 %v4117
        %4151 = vmatprep.subr.bf16.mxu0 %v4120
        %4152 = vmatpush1.bf16.msra.mxu0 %v4119
        %4153 = vmatprep.subr.bf16.mxu0 %v4122
        %4154 = vmatpush1.bf16.msra.mxu0 %v4121
        %4155 = vmatprep.subr.bf16.mxu0 %v4124
        %4156 = vmatpush1.bf16.msra.mxu0 %v4123
        %4157 = vmatprep.subr.bf16.mxu0 0
        %4158 = vmatpush1.bf16.msra.mxu0 0
        %4159 = vmatprep.subr.bf16.mxu0 0
        %4160 = vmatpush1.bf16.msra.mxu0 0
        %4161 = vmatprep.subr.bf16.mxu0 0
        %4162 = vmatpush1.bf16.msra.mxu0 0
        %4163 = vmatprep.subr.bf16.mxu0 0
        %4164 = vmatpush1.bf16.msra.mxu0 0
        %4165 = vmatprep.subr.bf16.mxu0 0
        %4166 = vmatpush1.bf16.msra.mxu0 0
        %4167 = vmatprep.subr.bf16.mxu0 0
        %4168 = vmatpush1.bf16.msra.mxu0 0
        %4169 = vmatprep.subr.bf16.mxu0 0
        %4170 = vmatpush1.bf16.msra.mxu0 0
        %4171 = vmatprep.subr.bf16.mxu0 0
        %4172 = vmatpush1.bf16.msra.mxu0 0
        %4173 = vmatprep.mubr.bf16.mxu0 0
        %4174 = vmatmul.mubr.bf16.gmra.mrb[0].mxu0 %v4046
        %v4175 = vpop.f32.mrb[0].mxu0
        %v4176 = vadd.f32 %v4054, %v4175
        %v4177 = vpop.f32.mrb[0].mxu0
        %v4178 = vadd.f32 %v4058, %v4177
        %v4179 = vpop.f32.mrb[0].mxu0
        %v4180 = vadd.f32 %v4054, %v4179
        %v4181 = vpop.f32.mrb[0].mxu0
        %v4182 = vadd.f32 %v4058, %v4181
        %4183 = vmatprep.mubr.bf16.mxu0 0
        %4184 = vmatmul.mubr.bf16.gmra.mrb[0].mxu0 %v4047
        %v4185 = vpop.f32.mrb[0].mxu0
        %v4186 = vadd.f32 %v4054, %v4185
        %v4187 = vpop.f32.mrb[0].mxu0
        %v4188 = vadd.f32 %v4058, %v4187
        %v4189 = vpop.f32.mrb[0].mxu0
        %v4190 = vadd.f32 %v4054, %v4189
        %v4191 = vpop.f32.mrb[0].mxu0
        %v4192 = vadd.f32 %v4058, %v4191
        %4193 = vmatprep.mubr.bf16.mxu0 0
        %4194 = vmatmul.mubr.bf16.gmra.mrb[0].mxu0 %v4048
        %v4195 = vpop.f32.mrb[0].mxu0
        %v4196 = vadd.f32 %v4054, %v4195
        %v4197 = vpop.f32.mrb[0].mxu0
        %v4198 = vadd.f32 %v4058, %v4197
        %v4199 = vpop.f32.mrb[0].mxu0
        %v4200 = vpop.f32.mrb[0].mxu0
        %4201 = vdwg.mxu0
        %vm4202 = vcmp.ge.s32.totalorder %v4029, 0
        %vm4203 = vcmp.lt.s32.totalorder %v4029, 16
        %vm4204 = vmand %vm4202, %vm4203
        %v4205 = vsel %vm4204, 1, 0
        %vm4206 = vcmp.eq.s32.totalorder %v4205, 1
        %v4207 = vsel %vm4206, %v4176, 0.0
        %v4208 = vsel %vm4206, %v4180, 0.0
        %v4209 = vsel %vm4206, %v4186, 0.0
        %v4210 = vsel %vm4206, %v4190, 0.0
        %v4211 = vsel %vm4206, %v4196, 0.0
        %v4212 = vpack.c.bf16 %v4208, %v4207
        %v4213 = vpack.c.bf16 %v4210, %v4209
        %v4214 = vpack.c.bf16 %v4211, %v4211
        %v4215 = vpack.c.bf16 %v4180, %v4176
        %v4216 = vpack.c.bf16 %v4190, %v4186
        %v4217 = vpack.c.bf16 %v4196, %v4196
        %4221 = vrot.lane.b32.xlu0 %v4215, 64
        %v4222 = vpop.permute.xlu0 %4221
        %4223 = vrot.lane.b32.xlu0 %v4216, 64
        %v4224 = vpop.permute.xlu0 %4223
        %4225 = vrot.lane.b32.xlu0 %v4217, 64
        %v4226 = vpop.permute.xlu0 %4225
        %vm4227 = vcmask 523264
        %v4229 = vsel %vm4227, %v4212, 0
        %v4232 = vsel %vm4227, %v4213, 0
        %v4235 = vsel %vm4227, %v4214, 0
        %v4238 = vsel %vm4227, %v4222, 0
        %v4241 = vsel %vm4227, %v4224, 0
        %v4244 = vsel %vm4227, %v4226, 0
        %4246 = vmatprep.subr.bf16.mxu0 0
        %4247 = vmatpush1.bf16.xpose.msra.mxu0 %v4238
        %4248 = vmatprep.subr.bf16.mxu0 0
        %4249 = vmatpush1.bf16.xpose.msra.mxu0 %v4241
        %4250 = vmatprep.subr.bf16.mxu0 0
        %4251 = vmatpush1.bf16.xpose.msra.mxu0 %v4244
        %4252 = vmatprep.subr.bf16.mxu0 0
        %4253 = vmatpush1.bf16.xpose.msra.mxu0 0
        %4254 = vmatprep.subr.bf16.mxu0 0
        %4255 = vmatpush1.bf16.xpose.msra.mxu0 0
        %4256 = vmatprep.subr.bf16.mxu0 0
        %4257 = vmatpush1.bf16.xpose.msra.mxu0 0
        %4258 = vmatprep.subr.bf16.mxu0 0
        %4259 = vmatpush1.bf16.xpose.msra.mxu0 0
        %4260 = vmatprep.subr.bf16.mxu0 0
        %4261 = vmatpush1.bf16.xpose.msra.mxu0 0
        %4262 = vmatprep.subr.bf16.mxu0 0
        %4263 = vmatpush1.bf16.xpose.msra.mxu0 0
        %4264 = vmatprep.subr.bf16.mxu0 0
        %4265 = vmatpush1.bf16.xpose.msra.mxu0 0
        %4266 = vmatprep.subr.bf16.mxu0 0
        %4267 = vmatpush1.bf16.xpose.msra.mxu0 0
        %4268 = vmatprep.subr.bf16.mxu0 0
        %4269 = vmatpush1.bf16.xpose.msra.mxu0 0
        %4270 = vmatprep.subr.bf16.mxu0 0
        %4271 = vmatpush1.bf16.xpose.msra.mxu0 0
        %4272 = vmatprep.subr.bf16.mxu0 0
        %4273 = vmatpush1.bf16.xpose.msra.mxu0 0
        %4274 = vmatprep.subr.bf16.mxu0 0
        %4275 = vmatpush1.bf16.xpose.msra.mxu0 0
        %4276 = vmatprep.subr.bf16.mxu0 0
        %4277 = vmatpush1.bf16.xpose.msra.mxu0 0
        %4278 = vmatprep.mubr.bf16.mxu0 0
        %4279 = vmatmul.mubr.bf16.gmra.mrb[0].mxu0 %v4229
        %v4280 = vpop.f32.mrb[0].mxu0
        %v4281 = vadd.f32 0.0, %v4280
        %v4282 = vpop.f32.mrb[0].mxu0
        %v4283 = vpop.f32.mrb[0].mxu0
        %v4284 = vadd.f32 0.0, %v4283
        %v4285 = vpop.f32.mrb[0].mxu0
        %4286 = vmatprep.mubr.bf16.mxu0 0
        %4287 = vmatmul.mubr.bf16.gmra.mrb[0].mxu0 %v4232
        %v4288 = vpop.f32.mrb[0].mxu0
        %v4289 = vadd.f32 0.0, %v4288
        %v4290 = vpop.f32.mrb[0].mxu0
        %v4291 = vpop.f32.mrb[0].mxu0
        %v4292 = vadd.f32 0.0, %v4291
        %v4293 = vpop.f32.mrb[0].mxu0
        %4294 = vmatprep.mubr.bf16.mxu0 0
        %4295 = vmatmul.mubr.bf16.gmra.mrb[0].mxu0 %v4235
        %v4296 = vpop.f32.mrb[0].mxu0
        %v4297 = vadd.f32 0.0, %v4296
        %v4298 = vpop.f32.mrb[0].mxu0
        %v4299 = vpop.f32.mrb[0].mxu0
        %v4300 = vpop.f32.mrb[0].mxu0
        %4301 = vdwg.mxu0
        %vm4302 = vcmask 318464
        %v4303 = vsel %vm4302, %v4281, -inf
        %4304 = vmax.xlane.f32.xlu0 %v4303
        %v4305 = vpop.xlane.xlu0 %4304
        %v4306 = vsel %vm4302, %v4284, -inf
        %4307 = vmax.xlane.f32.xlu0 %v4306
        %v4308 = vpop.xlane.xlu0 %4307
        %v4309 = vsel %vm4302, %v4289, -inf
        %4310 = vmax.xlane.f32.xlu0 %v4309
        %v4311 = vpop.xlane.xlu0 %4310
        %v4312 = vsel %vm4302, %v4292, -inf
        %4313 = vmax.xlane.f32.xlu0 %v4312
        %v4314 = vpop.xlane.xlu0 %4313
        %vm4315 = vcmask 317440
        %v4316 = vsel %vm4315, %v4297, -inf
        %4317 = vmax.xlane.f32.xlu0 %v4316
        %v4318 = vpop.xlane.xlu0 %4317
        %v4319 = vsub.f32 %v4281, %v4305
        %v4320 = vsub.f32 %v4284, %v4308
        %v4321 = vsub.f32 %v4289, %v4311
        %v4322 = vsub.f32 %v4292, %v4314
        %v4323 = vsub.f32 %v4297, %v4318
        %v4324 = vmul.f32 %v4319, 1.442695
        %v4325 = vpow.pop %v4324
        %v4326 = vmul.f32 %v4320, 1.442695
        %v4327 = vpow.pop %v4326
        %v4328 = vmul.f32 %v4321, 1.442695
        %v4329 = vpow.pop %v4328
        %v4330 = vmul.f32 %v4322, 1.442695
        %v4331 = vpow.pop %v4330
        %v4332 = vmul.f32 %v4323, 1.442695
        %v4333 = vpow.pop %v4332
        %v4334 = vsel %vm4302, %v4325, 0.0
        %4335 = vadd.xlane.f32.xlu0 %v4334
        %v4336 = vpop.xlane.xlu0 %4335
        %v4337 = vsel %vm4302, %v4327, 0.0
        %4338 = vadd.xlane.f32.xlu0 %v4337
        %v4339 = vpop.xlane.xlu0 %4338
        %v4340 = vsel %vm4302, %v4329, 0.0
        %4341 = vadd.xlane.f32.xlu0 %v4340
        %v4342 = vpop.xlane.xlu0 %4341
        %v4343 = vsel %vm4302, %v4331, 0.0
        %4344 = vadd.xlane.f32.xlu0 %v4343
        %v4345 = vpop.xlane.xlu0 %4344
        %v4346 = vsel %vm4315, %v4333, 0.0
        %4347 = vadd.xlane.f32.xlu0 %v4346
        %v4348 = vpop.xlane.xlu0 %4347
        %v4349 = vrcp.pop %v4336
        %v4350 = vrcp.pop %v4339
        %v4351 = vrcp.pop %v4342
        %v4352 = vrcp.pop %v4345
        %v4353 = vrcp.pop %v4348
        %v4354 = vmul.f32 %v4325, %v4349
        %v4355 = vmul.f32 %v4327, %v4350
        %v4356 = vmul.f32 %v4329, %v4351
        %v4357 = vmul.f32 %v4331, %v4352
        %v4358 = vmul.f32 %v4333, %v4353
        %v4359 = vpack.c.bf16 %v4355, %v4354
        %v4360 = vpack.c.bf16 %v4357, %v4356
        %v4361 = vpack.c.bf16 %v4358, %v4358
        %v4362 = vpack.c.bf16 %v4182, %v4178
        %v4363 = vpack.c.bf16 %v4192, %v4188
        %v4364 = vpack.c.bf16 %v4198, %v4198
        %v4366 = vsel %vm4302, %v4359, 0
        %v4369 = vsel %vm4302, %v4360, 0
        %v4372 = vsel %vm4302, %v4361, 0
        %v4374 = vsel %vm2621, 4294967295, 65535
        %v4375 = vsel %vm2604, %v4374, 0
        %v4377 = vand.u32 %v4364, %v4375
        %4379 = vmatprep.subr.bf16.mxu0 0
        %4380 = vmatpush1.bf16.msra.mxu0 %v4362
        %4381 = vmatprep.subr.bf16.mxu0 0
        %4382 = vmatpush1.bf16.msra.mxu0 %v4363
        %4383 = vmatprep.subr.bf16.mxu0 0
        %4384 = vmatpush1.bf16.msra.mxu0 %v4377
        %4385 = vmatprep.subr.bf16.mxu0 0
        %4386 = vmatpush1.bf16.msra.mxu0 0
        %4387 = vmatprep.subr.bf16.mxu0 0
        %4388 = vmatpush1.bf16.msra.mxu0 0
        %4389 = vmatprep.subr.bf16.mxu0 0
        %4390 = vmatpush1.bf16.msra.mxu0 0
        %4391 = vmatprep.subr.bf16.mxu0 0
        %4392 = vmatpush1.bf16.msra.mxu0 0
        %4393 = vmatprep.subr.bf16.mxu0 0
        %4394 = vmatpush1.bf16.msra.mxu0 0
        %4395 = vmatprep.subr.bf16.mxu0 0
        %4396 = vmatpush1.bf16.msra.mxu0 0
        %4397 = vmatprep.subr.bf16.mxu0 0
        %4398 = vmatpush1.bf16.msra.mxu0 0
        %4399 = vmatprep.subr.bf16.mxu0 0
        %4400 = vmatpush1.bf16.msra.mxu0 0
        %4401 = vmatprep.subr.bf16.mxu0 0
        %4402 = vmatpush1.bf16.msra.mxu0 0
        %4403 = vmatprep.subr.bf16.mxu0 0
        %4404 = vmatpush1.bf16.msra.mxu0 0
        %4405 = vmatprep.subr.bf16.mxu0 0
        %4406 = vmatpush1.bf16.msra.mxu0 0
        %4407 = vmatprep.subr.bf16.mxu0 0
        %4408 = vmatpush1.bf16.msra.mxu0 0
        %4409 = vmatprep.subr.bf16.mxu0 0
        %4410 = vmatpush1.bf16.msra.mxu0 0
        %4411 = vmatprep.mubr.bf16.mxu0 0
        %4412 = vmatmul.mubr.bf16.gmra.mrb[0].mxu0 %v4366
        %v4413 = vpop.f32.mrb[0].mxu0
        %v4414 = vadd.f32 0.0, %v4413
        %v4415 = vpop.f32.mrb[0].mxu0
        %v4416 = vpop.f32.mrb[0].mxu0
        %v4417 = vadd.f32 0.0, %v4416
        %v4418 = vpop.f32.mrb[0].mxu0
        %4419 = vmatprep.mubr.bf16.mxu0 0
        %4420 = vmatmul.mubr.bf16.gmra.mrb[0].mxu0 %v4369
        %v4421 = vpop.f32.mrb[0].mxu0
        %v4422 = vadd.f32 0.0, %v4421
        %v4423 = vpop.f32.mrb[0].mxu0
        %v4424 = vpop.f32.mrb[0].mxu0
        %v4425 = vadd.f32 0.0, %v4424
        %v4426 = vpop.f32.mrb[0].mxu0
        %4427 = vmatprep.mubr.bf16.mxu0 0
        %4428 = vmatmul.mubr.bf16.gmra.mrb[0].mxu0 %v4372
        %v4429 = vpop.f32.mrb[0].mxu0
        %v4430 = vadd.f32 0.0, %v4429
        %v4431 = vpop.f32.mrb[0].mxu0
        %v4432 = vpop.f32.mrb[0].mxu0
        %v4433 = vpop.f32.mrb[0].mxu0
        %4434 = vdwg.mxu0
        %v4435 = vsel %vm4206, %v4414, 0.0
        %v4436 = vsel %vm4206, %v4417, 0.0
        %v4437 = vsel %vm4206, %v4422, 0.0
        %v4438 = vsel %vm4206, %v4425, 0.0
        %v4439 = vsel %vm4206, %v4430, 0.0
        %v4440 = vadd.f32 %v4435, 0.0
        %v4441 = vadd.f32 %v4436, 0.0
        %v4442 = vadd.f32 %v4437, 0.0
        %v4443 = vadd.f32 %v4438, 0.0
        %v4444 = vadd.f32 %v4439, 0.0
        %vm4445 = vcmp.ge.s32.totalorder %v4029, 16
        %vm4446 = vcmp.lt.s32.totalorder %v4029, 32
        %vm4447 = vmand %vm4445, %vm4446
        %v4448 = vsel %vm4447, 1, 0
        %vm4449 = vcmp.eq.s32.totalorder %v4448, 1
        %v4450 = vsel %vm4449, %v4176, 0.0
        %v4451 = vsel %vm4449, %v4180, 0.0
        %v4452 = vsel %vm4449, %v4186, 0.0
        %v4453 = vsel %vm4449, %v4190, 0.0
        %v4454 = vsel %vm4449, %v4196, 0.0
        %v4455 = vpack.c.bf16 %v4451, %v4450
        %v4456 = vpack.c.bf16 %v4453, %v4452
        %v4457 = vpack.c.bf16 %v4454, %v4454
        %v4459 = vsel %vm4227, %v4455, 0
        %v4462 = vsel %vm4227, %v4456, 0
        %v4465 = vsel %vm4227, %v4457, 0
        %4467 = vmatprep.subr.bf16.mxu0 0
        %4468 = vmatpush1.bf16.xpose.msra.mxu0 %v4238
        %4469 = vmatprep.subr.bf16.mxu0 0
        %4470 = vmatpush1.bf16.xpose.msra.mxu0 %v4241
        %4471 = vmatprep.subr.bf16.mxu0 0
        %4472 = vmatpush1.bf16.xpose.msra.mxu0 %v4244
        %4473 = vmatprep.subr.bf16.mxu0 0
        %4474 = vmatpush1.bf16.xpose.msra.mxu0 0
        %4475 = vmatprep.subr.bf16.mxu0 0
        %4476 = vmatpush1.bf16.xpose.msra.mxu0 0
        %4477 = vmatprep.subr.bf16.mxu0 0
        %4478 = vmatpush1.bf16.xpose.msra.mxu0 0
        %4479 = vmatprep.subr.bf16.mxu0 0
        %4480 = vmatpush1.bf16.xpose.msra.mxu0 0
        %4481 = vmatprep.subr.bf16.mxu0 0
        %4482 = vmatpush1.bf16.xpose.msra.mxu0 0
        %4483 = vmatprep.subr.bf16.mxu0 0
        %4484 = vmatpush1.bf16.xpose.msra.mxu0 0
        %4485 = vmatprep.subr.bf16.mxu0 0
        %4486 = vmatpush1.bf16.xpose.msra.mxu0 0
        %4487 = vmatprep.subr.bf16.mxu0 0
        %4488 = vmatpush1.bf16.xpose.msra.mxu0 0
        %4489 = vmatprep.subr.bf16.mxu0 0
        %4490 = vmatpush1.bf16.xpose.msra.mxu0 0
        %4491 = vmatprep.subr.bf16.mxu0 0
        %4492 = vmatpush1.bf16.xpose.msra.mxu0 0
        %4493 = vmatprep.subr.bf16.mxu0 0
        %4494 = vmatpush1.bf16.xpose.msra.mxu0 0
        %4495 = vmatprep.subr.bf16.mxu0 0
        %4496 = vmatpush1.bf16.xpose.msra.mxu0 0
        %4497 = vmatprep.subr.bf16.mxu0 0
        %4498 = vmatpush1.bf16.xpose.msra.mxu0 0
        %4499 = vmatprep.mubr.bf16.mxu0 0
        %4500 = vmatmul.mubr.bf16.gmra.mrb[0].mxu0 %v4459
        %v4501 = vpop.f32.mrb[0].mxu0
        %v4502 = vadd.f32 0.0, %v4501
        %v4503 = vpop.f32.mrb[0].mxu0
        %v4504 = vpop.f32.mrb[0].mxu0
        %v4505 = vadd.f32 0.0, %v4504
        %v4506 = vpop.f32.mrb[0].mxu0
        %4507 = vmatprep.mubr.bf16.mxu0 0
        %4508 = vmatmul.mubr.bf16.gmra.mrb[0].mxu0 %v4462
        %v4509 = vpop.f32.mrb[0].mxu0
        %v4510 = vadd.f32 0.0, %v4509
        %v4511 = vpop.f32.mrb[0].mxu0
        %v4512 = vpop.f32.mrb[0].mxu0
        %v4513 = vadd.f32 0.0, %v4512
        %v4514 = vpop.f32.mrb[0].mxu0
        %4515 = vmatprep.mubr.bf16.mxu0 0
        %4516 = vmatmul.mubr.bf16.gmra.mrb[0].mxu0 %v4465
        %v4517 = vpop.f32.mrb[0].mxu0
        %v4518 = vadd.f32 0.0, %v4517
        %v4519 = vpop.f32.mrb[0].mxu0
        %v4520 = vpop.f32.mrb[0].mxu0
        %v4521 = vpop.f32.mrb[0].mxu0
        %4522 = vdwg.mxu0
        %v4523 = vsel %vm4302, %v4502, -inf
        %4524 = vmax.xlane.f32.xlu0 %v4523
        %v4525 = vpop.xlane.xlu0 %4524
        %v4526 = vsel %vm4302, %v4505, -inf
        %4527 = vmax.xlane.f32.xlu0 %v4526
        %v4528 = vpop.xlane.xlu0 %4527
        %v4529 = vsel %vm4302, %v4510, -inf
        %4530 = vmax.xlane.f32.xlu0 %v4529
        %v4531 = vpop.xlane.xlu0 %4530
        %v4532 = vsel %vm4302, %v4513, -inf
        %4533 = vmax.xlane.f32.xlu0 %v4532
        %v4534 = vpop.xlane.xlu0 %4533
        %v4535 = vsel %vm4315, %v4518, -inf
        %4536 = vmax.xlane.f32.xlu0 %v4535
        %v4537 = vpop.xlane.xlu0 %4536
        %v4538 = vsub.f32 %v4502, %v4525
        %v4539 = vsub.f32 %v4505, %v4528
        %v4540 = vsub.f32 %v4510, %v4531
        %v4541 = vsub.f32 %v4513, %v4534
        %v4542 = vsub.f32 %v4518, %v4537
        %v4543 = vmul.f32 %v4538, 1.442695
        %v4544 = vpow.pop %v4543
        %v4545 = vmul.f32 %v4539, 1.442695
        %v4546 = vpow.pop %v4545
        %v4547 = vmul.f32 %v4540, 1.442695
        %v4548 = vpow.pop %v4547
        %v4549 = vmul.f32 %v4541, 1.442695
        %v4550 = vpow.pop %v4549
        %v4551 = vmul.f32 %v4542, 1.442695
        %v4552 = vpow.pop %v4551
        %v4553 = vsel %vm4302, %v4544, 0.0
        %4554 = vadd.xlane.f32.xlu0 %v4553
        %v4555 = vpop.xlane.xlu0 %4554
        %v4556 = vsel %vm4302, %v4546, 0.0
        %4557 = vadd.xlane.f32.xlu0 %v4556
        %v4558 = vpop.xlane.xlu0 %4557
        %v4559 = vsel %vm4302, %v4548, 0.0
        %4560 = vadd.xlane.f32.xlu0 %v4559
        %v4561 = vpop.xlane.xlu0 %4560
        %v4562 = vsel %vm4302, %v4550, 0.0
        %4563 = vadd.xlane.f32.xlu0 %v4562
        %v4564 = vpop.xlane.xlu0 %4563
        %v4565 = vsel %vm4315, %v4552, 0.0
        %4566 = vadd.xlane.f32.xlu0 %v4565
        %v4567 = vpop.xlane.xlu0 %4566
        %v4568 = vrcp.pop %v4555
        %v4569 = vrcp.pop %v4558
        %v4570 = vrcp.pop %v4561
        %v4571 = vrcp.pop %v4564
        %v4572 = vrcp.pop %v4567
        %v4573 = vmul.f32 %v4544, %v4568
        %v4574 = vmul.f32 %v4546, %v4569
        %v4575 = vmul.f32 %v4548, %v4570
        %v4576 = vmul.f32 %v4550, %v4571
        %v4577 = vmul.f32 %v4552, %v4572
        %v4578 = vpack.c.bf16 %v4574, %v4573
        %v4579 = vpack.c.bf16 %v4576, %v4575
        %v4580 = vpack.c.bf16 %v4577, %v4577
        %v4582 = vsel %vm4302, %v4578, 0
        %v4585 = vsel %vm4302, %v4579, 0
        %v4588 = vsel %vm4302, %v4580, 0
        %4590 = vmatprep.subr.bf16.mxu0 0
        %4591 = vmatpush1.bf16.msra.mxu0 %v4362
        %4592 = vmatprep.subr.bf16.mxu0 0
        %4593 = vmatpush1.bf16.msra.mxu0 %v4363
        %4594 = vmatprep.subr.bf16.mxu0 0
        %4595 = vmatpush1.bf16.msra.mxu0 %v4377
        %4596 = vmatprep.subr.bf16.mxu0 0
        %4597 = vmatpush1.bf16.msra.mxu0 0
        %4598 = vmatprep.subr.bf16.mxu0 0
        %4599 = vmatpush1.bf16.msra.mxu0 0
        %4600 = vmatprep.subr.bf16.mxu0 0
        %4601 = vmatpush1.bf16.msra.mxu0 0
        %4602 = vmatprep.subr.bf16.mxu0 0
        %4603 = vmatpush1.bf16.msra.mxu0 0
        %4604 = vmatprep.subr.bf16.mxu0 0
        %4605 = vmatpush1.bf16.msra.mxu0 0
        %4606 = vmatprep.subr.bf16.mxu0 0
        %4607 = vmatpush1.bf16.msra.mxu0 0
        %4608 = vmatprep.subr.bf16.mxu0 0
        %4609 = vmatpush1.bf16.msra.mxu0 0
        %4610 = vmatprep.subr.bf16.mxu0 0
        %4611 = vmatpush1.bf16.msra.mxu0 0
        %4612 = vmatprep.subr.bf16.mxu0 0
        %4613 = vmatpush1.bf16.msra.mxu0 0
        %4614 = vmatprep.subr.bf16.mxu0 0
        %4615 = vmatpush1.bf16.msra.mxu0 0
        %4616 = vmatprep.subr.bf16.mxu0 0
        %4617 = vmatpush1.bf16.msra.mxu0 0
        %4618 = vmatprep.subr.bf16.mxu0 0
        %4619 = vmatpush1.bf16.msra.mxu0 0
        %4620 = vmatprep.subr.bf16.mxu0 0
        %4621 = vmatpush1.bf16.msra.mxu0 0
        %4622 = vmatprep.mubr.bf16.mxu0 0
        %4623 = vmatmul.mubr.bf16.gmra.mrb[0].mxu0 %v4582
        %v4624 = vpop.f32.mrb[0].mxu0
        %v4625 = vadd.f32 0.0, %v4624
        %v4626 = vpop.f32.mrb[0].mxu0
        %v4627 = vpop.f32.mrb[0].mxu0
        %v4628 = vadd.f32 0.0, %v4627
        %v4629 = vpop.f32.mrb[0].mxu0
        %4630 = vmatprep.mubr.bf16.mxu0 0
        %4631 = vmatmul.mubr.bf16.gmra.mrb[0].mxu0 %v4585
        %v4632 = vpop.f32.mrb[0].mxu0
        %v4633 = vadd.f32 0.0, %v4632
        %v4634 = vpop.f32.mrb[0].mxu0
        %v4635 = vpop.f32.mrb[0].mxu0
        %v4636 = vadd.f32 0.0, %v4635
        %v4637 = vpop.f32.mrb[0].mxu0
        %4638 = vmatprep.mubr.bf16.mxu0 0
        %4639 = vmatmul.mubr.bf16.gmra.mrb[0].mxu0 %v4588
        %v4640 = vpop.f32.mrb[0].mxu0
        %v4641 = vadd.f32 0.0, %v4640
        %v4642 = vpop.f32.mrb[0].mxu0
        %v4643 = vpop.f32.mrb[0].mxu0
        %v4644 = vpop.f32.mrb[0].mxu0
        %4645 = vdwg.mxu0
        %v4646 = vsel %vm4449, %v4625, 0.0
        %v4647 = vsel %vm4449, %v4628, 0.0
        %v4648 = vsel %vm4449, %v4633, 0.0
        %v4649 = vsel %vm4449, %v4636, 0.0
        %v4650 = vsel %vm4449, %v4641, 0.0
        %v4651 = vadd.f32 %v4440, %v4646
        %v4652 = vadd.f32 %v4441, %v4647
        %v4653 = vadd.f32 %v4442, %v4648
        %v4654 = vadd.f32 %v4443, %v4649
        %v4655 = vadd.f32 %v4444, %v4650
        %vm4656 = vcmp.ge.s32.totalorder %v4029, 32
        %vm4657 = vcmp.lt.s32.totalorder %v4029, 48
        %vm4658 = vmand %vm4656, %vm4657
        %v4659 = vsel %vm4658, 1, 0
        %vm4660 = vcmp.eq.s32.totalorder %v4659, 1
        %v4661 = vsel %vm4660, %v4176, 0.0
        %v4662 = vsel %vm4660, %v4180, 0.0
        %v4663 = vsel %vm4660, %v4186, 0.0
        %v4664 = vsel %vm4660, %v4190, 0.0
        %v4665 = vsel %vm4660, %v4196, 0.0
        %v4666 = vpack.c.bf16 %v4662, %v4661
        %v4667 = vpack.c.bf16 %v4664, %v4663
        %v4668 = vpack.c.bf16 %v4665, %v4665
        %v4670 = vsel %vm4227, %v4666, 0
        %v4673 = vsel %vm4227, %v4667, 0
        %v4676 = vsel %vm4227, %v4668, 0
        %4678 = vmatprep.subr.bf16.mxu0 0
        %4679 = vmatpush1.bf16.xpose.msra.mxu0 %v4238
        %4680 = vmatprep.subr.bf16.mxu0 0
        %4681 = vmatpush1.bf16.xpose.msra.mxu0 %v4241
        %4682 = vmatprep.subr.bf16.mxu0 0
        %4683 = vmatpush1.bf16.xpose.msra.mxu0 %v4244
        %4684 = vmatprep.subr.bf16.mxu0 0
        %4685 = vmatpush1.bf16.xpose.msra.mxu0 0
        %4686 = vmatprep.subr.bf16.mxu0 0
        %4687 = vmatpush1.bf16.xpose.msra.mxu0 0
        %4688 = vmatprep.subr.bf16.mxu0 0
        %4689 = vmatpush1.bf16.xpose.msra.mxu0 0
        %4690 = vmatprep.subr.bf16.mxu0 0
        %4691 = vmatpush1.bf16.xpose.msra.mxu0 0
        %4692 = vmatprep.subr.bf16.mxu0 0
        %4693 = vmatpush1.bf16.xpose.msra.mxu0 0
        %4694 = vmatprep.subr.bf16.mxu0 0
        %4695 = vmatpush1.bf16.xpose.msra.mxu0 0
        %4696 = vmatprep.subr.bf16.mxu0 0
        %4697 = vmatpush1.bf16.xpose.msra.mxu0 0
        %4698 = vmatprep.subr.bf16.mxu0 0
        %4699 = vmatpush1.bf16.xpose.msra.mxu0 0
        %4700 = vmatprep.subr.bf16.mxu0 0
        %4701 = vmatpush1.bf16.xpose.msra.mxu0 0
        %4702 = vmatprep.subr.bf16.mxu0 0
        %4703 = vmatpush1.bf16.xpose.msra.mxu0 0
        %4704 = vmatprep.subr.bf16.mxu0 0
        %4705 = vmatpush1.bf16.xpose.msra.mxu0 0
        %4706 = vmatprep.subr.bf16.mxu0 0
        %4707 = vmatpush1.bf16.xpose.msra.mxu0 0
        %4708 = vmatprep.subr.bf16.mxu0 0
        %4709 = vmatpush1.bf16.xpose.msra.mxu0 0
        %4710 = vmatprep.mubr.bf16.mxu0 0
        %4711 = vmatmul.mubr.bf16.gmra.mrb[0].mxu0 %v4670
        %v4712 = vpop.f32.mrb[0].mxu0
        %v4713 = vadd.f32 0.0, %v4712
        %v4714 = vpop.f32.mrb[0].mxu0
        %v4715 = vpop.f32.mrb[0].mxu0
        %v4716 = vadd.f32 0.0, %v4715
        %v4717 = vpop.f32.mrb[0].mxu0
        %4718 = vmatprep.mubr.bf16.mxu0 0
        %4719 = vmatmul.mubr.bf16.gmra.mrb[0].mxu0 %v4673
        %v4720 = vpop.f32.mrb[0].mxu0
        %v4721 = vadd.f32 0.0, %v4720
        %v4722 = vpop.f32.mrb[0].mxu0
        %v4723 = vpop.f32.mrb[0].mxu0
        %v4724 = vadd.f32 0.0, %v4723
        %v4725 = vpop.f32.mrb[0].mxu0
        %4726 = vmatprep.mubr.bf16.mxu0 0
        %4727 = vmatmul.mubr.bf16.gmra.mrb[0].mxu0 %v4676
        %v4728 = vpop.f32.mrb[0].mxu0
        %v4729 = vadd.f32 0.0, %v4728
        %v4730 = vpop.f32.mrb[0].mxu0
        %v4731 = vpop.f32.mrb[0].mxu0
        %v4732 = vpop.f32.mrb[0].mxu0
        %4733 = vdwg.mxu0
        %v4734 = vsel %vm4302, %v4713, -inf
        %4735 = vmax.xlane.f32.xlu0 %v4734
        %v4736 = vpop.xlane.xlu0 %4735
        %v4737 = vsel %vm4302, %v4716, -inf
        %4738 = vmax.xlane.f32.xlu0 %v4737
        %v4739 = vpop.xlane.xlu0 %4738
        %v4740 = vsel %vm4302, %v4721, -inf
        %4741 = vmax.xlane.f32.xlu0 %v4740
        %v4742 = vpop.xlane.xlu0 %4741
        %v4743 = vsel %vm4302, %v4724, -inf
        %4744 = vmax.xlane.f32.xlu0 %v4743
        %v4745 = vpop.xlane.xlu0 %4744
        %v4746 = vsel %vm4315, %v4729, -inf
        %4747 = vmax.xlane.f32.xlu0 %v4746
        %v4748 = vpop.xlane.xlu0 %4747
        %v4749 = vsub.f32 %v4713, %v4736
        %v4750 = vsub.f32 %v4716, %v4739
        %v4751 = vsub.f32 %v4721, %v4742
        %v4752 = vsub.f32 %v4724, %v4745
        %v4753 = vsub.f32 %v4729, %v4748
        %v4754 = vmul.f32 %v4749, 1.442695
        %v4755 = vpow.pop %v4754
        %v4756 = vmul.f32 %v4750, 1.442695
        %v4757 = vpow.pop %v4756
        %v4758 = vmul.f32 %v4751, 1.442695
        %v4759 = vpow.pop %v4758
        %v4760 = vmul.f32 %v4752, 1.442695
        %v4761 = vpow.pop %v4760
        %v4762 = vmul.f32 %v4753, 1.442695
        %v4763 = vpow.pop %v4762
        %v4764 = vsel %vm4302, %v4755, 0.0
        %4765 = vadd.xlane.f32.xlu0 %v4764
        %v4766 = vpop.xlane.xlu0 %4765
        %v4767 = vsel %vm4302, %v4757, 0.0
        %4768 = vadd.xlane.f32.xlu0 %v4767
        %v4769 = vpop.xlane.xlu0 %4768
        %v4770 = vsel %vm4302, %v4759, 0.0
        %4771 = vadd.xlane.f32.xlu0 %v4770
        %v4772 = vpop.xlane.xlu0 %4771
        %v4773 = vsel %vm4302, %v4761, 0.0
        %4774 = vadd.xlane.f32.xlu0 %v4773
        %v4775 = vpop.xlane.xlu0 %4774
        %v4776 = vsel %vm4315, %v4763, 0.0
        %4777 = vadd.xlane.f32.xlu0 %v4776
        %v4778 = vpop.xlane.xlu0 %4777
        %v4779 = vrcp.pop %v4766
        %v4780 = vrcp.pop %v4769
        %v4781 = vrcp.pop %v4772
        %v4782 = vrcp.pop %v4775
        %v4783 = vrcp.pop %v4778
        %v4784 = vmul.f32 %v4755, %v4779
        %v4785 = vmul.f32 %v4757, %v4780
        %v4786 = vmul.f32 %v4759, %v4781
        %v4787 = vmul.f32 %v4761, %v4782
        %v4788 = vmul.f32 %v4763, %v4783
        %v4789 = vpack.c.bf16 %v4785, %v4784
        %v4790 = vpack.c.bf16 %v4787, %v4786
        %v4791 = vpack.c.bf16 %v4788, %v4788
        %v4793 = vsel %vm4302, %v4789, 0
        %v4796 = vsel %vm4302, %v4790, 0
        %v4799 = vsel %vm4302, %v4791, 0
        %4801 = vmatprep.subr.bf16.mxu0 0
        %4802 = vmatpush1.bf16.msra.mxu0 %v4362
        %4803 = vmatprep.subr.bf16.mxu0 0
        %4804 = vmatpush1.bf16.msra.mxu0 %v4363
        %4805 = vmatprep.subr.bf16.mxu0 0
        %4806 = vmatpush1.bf16.msra.mxu0 %v4377
        %4807 = vmatprep.subr.bf16.mxu0 0
        %4808 = vmatpush1.bf16.msra.mxu0 0
        %4809 = vmatprep.subr.bf16.mxu0 0
        %4810 = vmatpush1.bf16.msra.mxu0 0
        %4811 = vmatprep.subr.bf16.mxu0 0
        %4812 = vmatpush1.bf16.msra.mxu0 0
        %4813 = vmatprep.subr.bf16.mxu0 0
        %4814 = vmatpush1.bf16.msra.mxu0 0
        %4815 = vmatprep.subr.bf16.mxu0 0
        %4816 = vmatpush1.bf16.msra.mxu0 0
        %4817 = vmatprep.subr.bf16.mxu0 0
        %4818 = vmatpush1.bf16.msra.mxu0 0
        %4819 = vmatprep.subr.bf16.mxu0 0
        %4820 = vmatpush1.bf16.msra.mxu0 0
        %4821 = vmatprep.subr.bf16.mxu0 0
        %4822 = vmatpush1.bf16.msra.mxu0 0
        %4823 = vmatprep.subr.bf16.mxu0 0
        %4824 = vmatpush1.bf16.msra.mxu0 0
        %4825 = vmatprep.subr.bf16.mxu0 0
        %4826 = vmatpush1.bf16.msra.mxu0 0
        %4827 = vmatprep.subr.bf16.mxu0 0
        %4828 = vmatpush1.bf16.msra.mxu0 0
        %4829 = vmatprep.subr.bf16.mxu0 0
        %4830 = vmatpush1.bf16.msra.mxu0 0
        %4831 = vmatprep.subr.bf16.mxu0 0
        %4832 = vmatpush1.bf16.msra.mxu0 0
        %4833 = vmatprep.mubr.bf16.mxu0 0
        %4834 = vmatmul.mubr.bf16.gmra.mrb[0].mxu0 %v4793
        %v4835 = vpop.f32.mrb[0].mxu0
        %v4836 = vadd.f32 0.0, %v4835
        %v4837 = vpop.f32.mrb[0].mxu0
        %v4838 = vpop.f32.mrb[0].mxu0
        %v4839 = vadd.f32 0.0, %v4838
        %v4840 = vpop.f32.mrb[0].mxu0
        %4841 = vmatprep.mubr.bf16.mxu0 0
        %4842 = vmatmul.mubr.bf16.gmra.mrb[0].mxu0 %v4796
        %v4843 = vpop.f32.mrb[0].mxu0
        %v4844 = vadd.f32 0.0, %v4843
        %v4845 = vpop.f32.mrb[0].mxu0
        %v4846 = vpop.f32.mrb[0].mxu0
        %v4847 = vadd.f32 0.0, %v4846
        %v4848 = vpop.f32.mrb[0].mxu0
        %4849 = vmatprep.mubr.bf16.mxu0 0
        %4850 = vmatmul.mubr.bf16.gmra.mrb[0].mxu0 %v4799
        %v4851 = vpop.f32.mrb[0].mxu0
        %v4852 = vadd.f32 0.0, %v4851
        %v4853 = vpop.f32.mrb[0].mxu0
        %v4854 = vpop.f32.mrb[0].mxu0
        %v4855 = vpop.f32.mrb[0].mxu0
        %4856 = vdwg.mxu0
        %v4857 = vsel %vm4660, %v4836, 0.0
        %v4858 = vsel %vm4660, %v4839, 0.0
        %v4859 = vsel %vm4660, %v4844, 0.0
        %v4860 = vsel %vm4660, %v4847, 0.0
        %v4861 = vsel %vm4660, %v4852, 0.0
        %v4862 = vadd.f32 %v4651, %v4857
        %v4863 = vadd.f32 %v4652, %v4858
        %v4864 = vadd.f32 %v4653, %v4859
        %v4865 = vadd.f32 %v4654, %v4860
        %v4866 = vadd.f32 %v4655, %v4861
        %vm4867 = vcmp.ge.s32.totalorder %v4029, 48
        %vm4868 = vcmp.lt.s32.totalorder %v4029, 64
        %vm4869 = vmand %vm4867, %vm4868
        %v4870 = vsel %vm4869, 1, 0
        %vm4871 = vcmp.eq.s32.totalorder %v4870, 1
        %v4872 = vsel %vm4871, %v4176, 0.0
        %v4873 = vsel %vm4871, %v4180, 0.0
        %v4874 = vsel %vm4871, %v4186, 0.0
        %v4875 = vsel %vm4871, %v4190, 0.0
        %v4876 = vsel %vm4871, %v4196, 0.0
        %v4877 = vpack.c.bf16 %v4873, %v4872
        %v4878 = vpack.c.bf16 %v4875, %v4874
        %v4879 = vpack.c.bf16 %v4876, %v4876
        %v4881 = vsel %vm4227, %v4877, 0
        %v4884 = vsel %vm4227, %v4878, 0
        %v4887 = vsel %vm4227, %v4879, 0
        %4889 = vmatprep.subr.bf16.mxu0 0
        %4890 = vmatpush1.bf16.xpose.msra.mxu0 %v4238
        %4891 = vmatprep.subr.bf16.mxu0 0
        %4892 = vmatpush1.bf16.xpose.msra.mxu0 %v4241
        %4893 = vmatprep.subr.bf16.mxu0 0
        %4894 = vmatpush1.bf16.xpose.msra.mxu0 %v4244
        %4895 = vmatprep.subr.bf16.mxu0 0
        %4896 = vmatpush1.bf16.xpose.msra.mxu0 0
        %4897 = vmatprep.subr.bf16.mxu0 0
        %4898 = vmatpush1.bf16.xpose.msra.mxu0 0
        %4899 = vmatprep.subr.bf16.mxu0 0
        %4900 = vmatpush1.bf16.xpose.msra.mxu0 0
        %4901 = vmatprep.subr.bf16.mxu0 0
        %4902 = vmatpush1.bf16.xpose.msra.mxu0 0
        %4903 = vmatprep.subr.bf16.mxu0 0
        %4904 = vmatpush1.bf16.xpose.msra.mxu0 0
        %4905 = vmatprep.subr.bf16.mxu0 0
        %4906 = vmatpush1.bf16.xpose.msra.mxu0 0
        %4907 = vmatprep.subr.bf16.mxu0 0
        %4908 = vmatpush1.bf16.xpose.msra.mxu0 0
        %4909 = vmatprep.subr.bf16.mxu0 0
        %4910 = vmatpush1.bf16.xpose.msra.mxu0 0
        %4911 = vmatprep.subr.bf16.mxu0 0
        %4912 = vmatpush1.bf16.xpose.msra.mxu0 0
        %4913 = vmatprep.subr.bf16.mxu0 0
        %4914 = vmatpush1.bf16.xpose.msra.mxu0 0
        %4915 = vmatprep.subr.bf16.mxu0 0
        %4916 = vmatpush1.bf16.xpose.msra.mxu0 0
        %4917 = vmatprep.subr.bf16.mxu0 0
        %4918 = vmatpush1.bf16.xpose.msra.mxu0 0
        %4919 = vmatprep.subr.bf16.mxu0 0
        %4920 = vmatpush1.bf16.xpose.msra.mxu0 0
        %4921 = vmatprep.mubr.bf16.mxu0 0
        %4922 = vmatmul.mubr.bf16.gmra.mrb[0].mxu0 %v4881
        %v4923 = vpop.f32.mrb[0].mxu0
        %v4924 = vadd.f32 0.0, %v4923
        %v4925 = vpop.f32.mrb[0].mxu0
        %v4926 = vpop.f32.mrb[0].mxu0
        %v4927 = vadd.f32 0.0, %v4926
        %v4928 = vpop.f32.mrb[0].mxu0
        %4929 = vmatprep.mubr.bf16.mxu0 0
        %4930 = vmatmul.mubr.bf16.gmra.mrb[0].mxu0 %v4884
        %v4931 = vpop.f32.mrb[0].mxu0
        %v4932 = vadd.f32 0.0, %v4931
        %v4933 = vpop.f32.mrb[0].mxu0
        %v4934 = vpop.f32.mrb[0].mxu0
        %v4935 = vadd.f32 0.0, %v4934
        %v4936 = vpop.f32.mrb[0].mxu0
        %4937 = vmatprep.mubr.bf16.mxu0 0
        %4938 = vmatmul.mubr.bf16.gmra.mrb[0].mxu0 %v4887
        %v4939 = vpop.f32.mrb[0].mxu0
        %v4940 = vadd.f32 0.0, %v4939
        %v4941 = vpop.f32.mrb[0].mxu0
        %v4942 = vpop.f32.mrb[0].mxu0
        %v4943 = vpop.f32.mrb[0].mxu0
        %4944 = vdwg.mxu0
        %v4945 = vsel %vm4302, %v4924, -inf
        %4946 = vmax.xlane.f32.xlu0 %v4945
        %v4947 = vpop.xlane.xlu0 %4946
        %v4948 = vsel %vm4302, %v4927, -inf
        %4949 = vmax.xlane.f32.xlu0 %v4948
        %v4950 = vpop.xlane.xlu0 %4949
        %v4951 = vsel %vm4302, %v4932, -inf
        %4952 = vmax.xlane.f32.xlu0 %v4951
        %v4953 = vpop.xlane.xlu0 %4952
        %v4954 = vsel %vm4302, %v4935, -inf
        %4955 = vmax.xlane.f32.xlu0 %v4954
        %v4956 = vpop.xlane.xlu0 %4955
        %v4957 = vsel %vm4315, %v4940, -inf
        %4958 = vmax.xlane.f32.xlu0 %v4957
        %v4959 = vpop.xlane.xlu0 %4958
        %v4960 = vsub.f32 %v4924, %v4947
        %v4961 = vsub.f32 %v4927, %v4950
        %v4962 = vsub.f32 %v4932, %v4953
        %v4963 = vsub.f32 %v4935, %v4956
        %v4964 = vsub.f32 %v4940, %v4959
        %v4965 = vmul.f32 %v4960, 1.442695
        %v4966 = vpow.pop %v4965
        %v4967 = vmul.f32 %v4961, 1.442695
        %v4968 = vpow.pop %v4967
        %v4969 = vmul.f32 %v4962, 1.442695
        %v4970 = vpow.pop %v4969
        %v4971 = vmul.f32 %v4963, 1.442695
        %v4972 = vpow.pop %v4971
        %v4973 = vmul.f32 %v4964, 1.442695
        %v4974 = vpow.pop %v4973
        %v4975 = vsel %vm4302, %v4966, 0.0
        %4976 = vadd.xlane.f32.xlu0 %v4975
        %v4977 = vpop.xlane.xlu0 %4976
        %v4978 = vsel %vm4302, %v4968, 0.0
        %4979 = vadd.xlane.f32.xlu0 %v4978
        %v4980 = vpop.xlane.xlu0 %4979
        %v4981 = vsel %vm4302, %v4970, 0.0
        %4982 = vadd.xlane.f32.xlu0 %v4981
        %v4983 = vpop.xlane.xlu0 %4982
        %v4984 = vsel %vm4302, %v4972, 0.0
        %4985 = vadd.xlane.f32.xlu0 %v4984
        %v4986 = vpop.xlane.xlu0 %4985
        %v4987 = vsel %vm4315, %v4974, 0.0
        %4988 = vadd.xlane.f32.xlu0 %v4987
        %v4989 = vpop.xlane.xlu0 %4988
        %v4990 = vrcp.pop %v4977
        %v4991 = vrcp.pop %v4980
        %v4992 = vrcp.pop %v4983
        %v4993 = vrcp.pop %v4986
        %v4994 = vrcp.pop %v4989
        %v4995 = vmul.f32 %v4966, %v4990
        %v4996 = vmul.f32 %v4968, %v4991
        %v4997 = vmul.f32 %v4970, %v4992
        %v4998 = vmul.f32 %v4972, %v4993
        %v4999 = vmul.f32 %v4974, %v4994
        %v5000 = vpack.c.bf16 %v4996, %v4995
        %v5001 = vpack.c.bf16 %v4998, %v4997
        %v5002 = vpack.c.bf16 %v4999, %v4999
        %v5004 = vsel %vm4302, %v5000, 0
        %v5007 = vsel %vm4302, %v5001, 0
        %v5010 = vsel %vm4302, %v5002, 0
        %5012 = vmatprep.subr.bf16.mxu0 0
        %5013 = vmatpush1.bf16.msra.mxu0 %v4362
        %5014 = vmatprep.subr.bf16.mxu0 0
        %5015 = vmatpush1.bf16.msra.mxu0 %v4363
        %5016 = vmatprep.subr.bf16.mxu0 0
        %5017 = vmatpush1.bf16.msra.mxu0 %v4377
        %5018 = vmatprep.subr.bf16.mxu0 0
        %5019 = vmatpush1.bf16.msra.mxu0 0
        %5020 = vmatprep.subr.bf16.mxu0 0
        %5021 = vmatpush1.bf16.msra.mxu0 0
        %5022 = vmatprep.subr.bf16.mxu0 0
        %5023 = vmatpush1.bf16.msra.mxu0 0
        %5024 = vmatprep.subr.bf16.mxu0 0
        %5025 = vmatpush1.bf16.msra.mxu0 0
        %5026 = vmatprep.subr.bf16.mxu0 0
        %5027 = vmatpush1.bf16.msra.mxu0 0
        %5028 = vmatprep.subr.bf16.mxu0 0
        %5029 = vmatpush1.bf16.msra.mxu0 0
        %5030 = vmatprep.subr.bf16.mxu0 0
        %5031 = vmatpush1.bf16.msra.mxu0 0
        %5032 = vmatprep.subr.bf16.mxu0 0
        %5033 = vmatpush1.bf16.msra.mxu0 0
        %5034 = vmatprep.subr.bf16.mxu0 0
        %5035 = vmatpush1.bf16.msra.mxu0 0
        %5036 = vmatprep.subr.bf16.mxu0 0
        %5037 = vmatpush1.bf16.msra.mxu0 0
        %5038 = vmatprep.subr.bf16.mxu0 0
        %5039 = vmatpush1.bf16.msra.mxu0 0
        %5040 = vmatprep.subr.bf16.mxu0 0
        %5041 = vmatpush1.bf16.msra.mxu0 0
        %5042 = vmatprep.subr.bf16.mxu0 0
        %5043 = vmatpush1.bf16.msra.mxu0 0
        %5044 = vmatprep.mubr.bf16.mxu0 0
        %5045 = vmatmul.mubr.bf16.gmra.mrb[0].mxu0 %v5004
        %v5046 = vpop.f32.mrb[0].mxu0
        %v5047 = vadd.f32 0.0, %v5046
        %v5048 = vpop.f32.mrb[0].mxu0
        %v5049 = vpop.f32.mrb[0].mxu0
        %v5050 = vadd.f32 0.0, %v5049
        %v5051 = vpop.f32.mrb[0].mxu0
        %5052 = vmatprep.mubr.bf16.mxu0 0
        %5053 = vmatmul.mubr.bf16.gmra.mrb[0].mxu0 %v5007
        %v5054 = vpop.f32.mrb[0].mxu0
        %v5055 = vadd.f32 0.0, %v5054
        %v5056 = vpop.f32.mrb[0].mxu0
        %v5057 = vpop.f32.mrb[0].mxu0
        %v5058 = vadd.f32 0.0, %v5057
        %v5059 = vpop.f32.mrb[0].mxu0
        %5060 = vmatprep.mubr.bf16.mxu0 0
        %5061 = vmatmul.mubr.bf16.gmra.mrb[0].mxu0 %v5010
        %v5062 = vpop.f32.mrb[0].mxu0
        %v5063 = vadd.f32 0.0, %v5062
        %v5064 = vpop.f32.mrb[0].mxu0
        %v5065 = vpop.f32.mrb[0].mxu0
        %v5066 = vpop.f32.mrb[0].mxu0
        %5067 = vdwg.mxu0
        %v5068 = vsel %vm4871, %v5047, 0.0
        %v5069 = vsel %vm4871, %v5050, 0.0
        %v5070 = vsel %vm4871, %v5055, 0.0
        %v5071 = vsel %vm4871, %v5058, 0.0
        %v5072 = vsel %vm4871, %v5063, 0.0
        %v5073 = vadd.f32 %v4862, %v5068
        %v5074 = vadd.f32 %v4863, %v5069
        %v5075 = vadd.f32 %v4864, %v5070
        %v5076 = vadd.f32 %v4865, %v5071
        %v5077 = vadd.f32 %v4866, %v5072
        %v5078 = vld [vmem:[#allocation22] sm:$0xf]
        %v5079 = vld [vmem:[#allocation22 + $0x4] sm:$0xf]
        %v5080 = vld [vmem:[#allocation22 + $0x8] sm:$0xf]
        %v5081 = vld [vmem:[#allocation22 + $0xc] sm:$0xf]
        %v5082 = vld [vmem:[#allocation22 + $0x10] sm:$0xf]
        %v5083 = vld [vmem:[#allocation22 + $0x14] sm:$0xf]
        %v5084 = vld [vmem:[#allocation22 + $0x18] sm:$0xf]
        %v5085 = vld [vmem:[#allocation22 + $0x1c] sm:$0xf]
        %v5086 = vpack.c.bf16 %v5074, %v5073
        %v5087 = vpack.c.bf16 %v5076, %v5075
        %v5088 = vpack.c.bf16 %v5077, %v5077
        %v5089 = vld [vmem:[%s39] sm:$0x1]
        %v5091 = vlaneseq
        %v5092 = vshrl.u32 %v5091, 7
        %v5093 = vsub.s32 0, %v5092
        %v5094 = vrot.slane %v5089, %v5093
        %v5104 = vunpack.c.l.b16 %v5078
        %v5105 = vunpack.c.l.b16 %v5079
        %v5106 = vunpack.c.l.b16 %v5080
        %v5107 = vunpack.c.l.b16 %v5081
        %v5108 = vunpack.c.l.b16 %v5082
        %v5109 = vunpack.c.l.b16 %v5083
        %v5110 = vunpack.c.l.b16 %v5084
        %v5111 = vunpack.c.l.b16 %v5085
        %v5112 = vpack.c.b16 %v5105, %v5104
        %v5113 = vpack.c.b16 %v5107, %v5106
        %v5114 = vpack.c.b16 %v5109, %v5108
        %v5115 = vpack.c.b16 %v5111, %v5110
        %v5121 = vsel %vm4227, %v5086, 0
        %v5124 = vsel %vm4227, %v5087, 0
        %v5127 = vsel %vm4227, %v5088, 0
        %5129 = vmatprep.subr.bf16.mxu0 0
        %5130 = vmatpush1.bf16.msra.mxu0 %v5112
        %5131 = vmatprep.subr.bf16.mxu0 0
        %5132 = vmatpush1.bf16.msra.mxu0 %v5113
        %5133 = vmatprep.subr.bf16.mxu0 0
        %5134 = vmatpush1.bf16.msra.mxu0 %v5114
        %5135 = vmatprep.subr.bf16.mxu0 0
        %5136 = vmatpush1.bf16.msra.mxu0 %v5115
        %5137 = vmatprep.subr.bf16.mxu0 0
        %5138 = vmatpush1.bf16.msra.mxu0 0
        %5139 = vmatprep.subr.bf16.mxu0 0
        %5140 = vmatpush1.bf16.msra.mxu0 0
        %5141 = vmatprep.subr.bf16.mxu0 0
        %5142 = vmatpush1.bf16.msra.mxu0 0
        %5143 = vmatprep.subr.bf16.mxu0 0
        %5144 = vmatpush1.bf16.msra.mxu0 0
        %5145 = vmatprep.subr.bf16.mxu0 0
        %5146 = vmatpush1.bf16.msra.mxu0 0
        %5147 = vmatprep.subr.bf16.mxu0 0
        %5148 = vmatpush1.bf16.msra.mxu0 0
        %5149 = vmatprep.subr.bf16.mxu0 0
        %5150 = vmatpush1.bf16.msra.mxu0 0
        %5151 = vmatprep.subr.bf16.mxu0 0
        %5152 = vmatpush1.bf16.msra.mxu0 0
        %5153 = vmatprep.subr.bf16.mxu0 0
        %5154 = vmatpush1.bf16.msra.mxu0 0
        %5155 = vmatprep.subr.bf16.mxu0 0
        %5156 = vmatpush1.bf16.msra.mxu0 0
        %5157 = vmatprep.subr.bf16.mxu0 0
        %5158 = vmatpush1.bf16.msra.mxu0 0
        %5159 = vmatprep.subr.bf16.mxu0 0
        %5160 = vmatpush1.bf16.msra.mxu0 0
        %5161 = vmatprep.mubr.bf16.mxu0 0
        %5162 = vmatmul.mubr.bf16.gmra.mrb[0].mxu0 %v5121
        %v5163 = vpop.f32.mrb[0].mxu0
        %v5164 = vadd.f32 %v5094, %v5163
        %v5165 = vpop.f32.mrb[0].mxu0
        %v5166 = vpop.f32.mrb[0].mxu0
        %v5167 = vadd.f32 %v5094, %v5166
        %v5168 = vpop.f32.mrb[0].mxu0
        %5169 = vmatprep.mubr.bf16.mxu0 0
        %5170 = vmatmul.mubr.bf16.gmra.mrb[0].mxu0 %v5124
        %v5171 = vpop.f32.mrb[0].mxu0
        %v5172 = vadd.f32 %v5094, %v5171
        %v5173 = vpop.f32.mrb[0].mxu0
        %v5174 = vpop.f32.mrb[0].mxu0
        %v5175 = vadd.f32 %v5094, %v5174
        %v5176 = vpop.f32.mrb[0].mxu0
        %5177 = vmatprep.mubr.bf16.mxu0 0
        %5178 = vmatmul.mubr.bf16.gmra.mrb[0].mxu0 %v5127
        %v5179 = vpop.f32.mrb[0].mxu0
        %v5180 = vadd.f32 %v5094, %v5179
        %v5181 = vpop.f32.mrb[0].mxu0
        %v5182 = vpop.f32.mrb[0].mxu0
        %v5183 = vpop.f32.mrb[0].mxu0
        %5184 = vdwg.mxu0
        %v5185 = vadd.f32 %v4008, %v5164
        %v5186 = vadd.f32 %v4009, %v5167
        %v5187 = vadd.f32 %v4010, %v5172
        %v5188 = vadd.f32 %v4011, %v5175
        %v5189 = vadd.f32 %v4012, %v5180
        %v5190 = vld [vmem:[#allocation23] sm:$0x1]
        %v5191 = vld [vmem:[#allocation25] sm:$0x1]
        %5192 = vadd.xlane.f32.xlu0 %v5185
        %v5193 = vpop.xlane.xlu0 %5192
        %5194 = vadd.xlane.f32.xlu0 %v5186
        %v5195 = vpop.xlane.xlu0 %5194
        %5196 = vadd.xlane.f32.xlu0 %v5187
        %v5197 = vpop.xlane.xlu0 %5196
        %5198 = vadd.xlane.f32.xlu0 %v5188
        %v5199 = vpop.xlane.xlu0 %5198
        %v5200 = vsel %vm1699, %v5189, 0.0
        %5201 = vadd.xlane.f32.xlu0 %v5200
        %v5202 = vpop.xlane.xlu0 %5201
        %v5203 = vmul.f32 %v5185, %v5185
        %v5204 = vmul.f32 %v5186, %v5186
        %v5205 = vmul.f32 %v5187, %v5187
        %v5206 = vmul.f32 %v5188, %v5188
        %v5207 = vmul.f32 %v5189, %v5189
        %5208 = vadd.xlane.f32.xlu0 %v5203
        %v5209 = vpop.xlane.xlu0 %5208
        %5210 = vadd.xlane.f32.xlu0 %v5204
        %v5211 = vpop.xlane.xlu0 %5210
        %5212 = vadd.xlane.f32.xlu0 %v5205
        %v5213 = vpop.xlane.xlu0 %5212
        %5214 = vadd.xlane.f32.xlu0 %v5206
        %v5215 = vpop.xlane.xlu0 %5214
        %v5216 = vsel %vm1699, %v5207, 0.0
        %5217 = vadd.xlane.f32.xlu0 %v5216
        %v5218 = vpop.xlane.xlu0 %5217
        %v5219 = vmul.f32 %v5193, %v3950
        %v5220 = vmul.f32 %v5195, %v3950
        %v5221 = vmul.f32 %v5197, %v3950
        %v5222 = vmul.f32 %v5199, %v3950
        %v5223 = vmul.f32 %v5202, %v3950
        %v5224 = vmul.f32 %v5209, %v3950
        %v5225 = vmul.f32 %v5211, %v3950
        %v5226 = vmul.f32 %v5213, %v3950
        %v5227 = vmul.f32 %v5215, %v3950
        %v5228 = vmul.f32 %v5218, %v3950
        %v5229 = vmul.f32 %v5219, %v5219
        %v5230 = vmul.f32 %v5220, %v5220
        %v5231 = vmul.f32 %v5221, %v5221
        %v5232 = vmul.f32 %v5222, %v5222
        %v5233 = vmul.f32 %v5223, %v5223
        %v5234 = vsub.f32 %v5224, %v5229
        %v5235 = vsub.f32 %v5225, %v5230
        %v5236 = vsub.f32 %v5226, %v5231
        %v5237 = vsub.f32 %v5227, %v5232
        %v5238 = vsub.f32 %v5228, %v5233
        %v5239 = vsub.f32 %v5185, %v5219
        %v5240 = vsub.f32 %v5186, %v5220
        %v5241 = vsub.f32 %v5187, %v5221
        %v5242 = vsub.f32 %v5188, %v5222
        %v5243 = vsub.f32 %v5189, %v5223
        %v5244 = vadd.f32 %v5234, 1e-05
        %v5245 = vadd.f32 %v5235, 1e-05
        %v5246 = vadd.f32 %v5236, 1e-05
        %v5247 = vadd.f32 %v5237, 1e-05
        %v5248 = vadd.f32 %v5238, 1e-05
        %v5249 = vrsqrt.pop %v5244
        %v5250 = vrsqrt.pop %v5245
        %v5251 = vrsqrt.pop %v5246
        %v5252 = vrsqrt.pop %v5247
        %v5253 = vrsqrt.pop %v5248
        %v5254 = vmul.f32 %v5239, %v5249
        %v5255 = vmul.f32 %v5240, %v5250
        %v5256 = vmul.f32 %v5241, %v5251
        %v5257 = vmul.f32 %v5242, %v5252
        %v5258 = vmul.f32 %v5243, %v5253
        %v5260 = vlaneseq
        %v5261 = vshrl.u32 %v5260, 7
        %v5262 = vsub.s32 0, %v5261
        %v5263 = vrot.slane %v5190, %v5262
        %v5265 = vmul.f32 %v5254, %v5263
        %v5266 = vmul.f32 %v5255, %v5263
        %v5267 = vmul.f32 %v5256, %v5263
        %v5268 = vmul.f32 %v5257, %v5263
        %v5269 = vmul.f32 %v5258, %v5263
        %v5271 = vlaneseq
        %v5272 = vshrl.u32 %v5271, 7
        %v5273 = vsub.s32 0, %v5272
        %v5274 = vrot.slane %v5191, %v5273
        %v5276 = vadd.f32 %v5265, %v5274
        %v5277 = vadd.f32 %v5266, %v5274
        %v5278 = vadd.f32 %v5267, %v5274
        %v5279 = vadd.f32 %v5268, %v5274
        %v5280 = vadd.f32 %v5269, %v5274
        %v5281 = vld [vmem:[#allocation26] sm:$0xf]
        %v5282 = vld [vmem:[#allocation26 + $0x4] sm:$0xf]
        %v5283 = vld [vmem:[#allocation26 + $0x8] sm:$0xf]
        %v5284 = vld [vmem:[#allocation26 + $0xc] sm:$0xf]
        %v5285 = vld [vmem:[#allocation26 + $0x10] sm:$0xf]
        %v5286 = vld [vmem:[#allocation26 + $0x14] sm:$0xf]
        %v5287 = vld [vmem:[#allocation26 + $0x18] sm:$0xf]
        %v5288 = vld [vmem:[#allocation26 + $0x1c] sm:$0xf]
        %v5289 = vld [vmem:[#allocation26 + $0x20] sm:$0xf]
        %v5290 = vld [vmem:[#allocation26 + $0x24] sm:$0xf]
        %v5291 = vld [vmem:[#allocation26 + $0x28] sm:$0xf]
        %v5292 = vld [vmem:[#allocation26 + $0x2c] sm:$0xf]
        %v5293 = vld [vmem:[#allocation26 + $0x30] sm:$0xf]
        %v5294 = vld [vmem:[#allocation26 + $0x34] sm:$0xf]
        %v5295 = vld [vmem:[#allocation26 + $0x38] sm:$0xf]
        %v5296 = vld [vmem:[#allocation26 + $0x3c] sm:$0xf]
        %v5297 = vpack.c.bf16 %v5277, %v5276
        %v5298 = vpack.c.bf16 %v5279, %v5278
        %v5299 = vpack.c.bf16 %v5280, %v5280
        %v5300 = vld [vmem:[#allocation28] sm:$0x1]
        %v5302 = vlaneseq
        %v5303 = vshrl.u32 %v5302, 7
        %v5304 = vsub.s32 0, %v5303
        %v5305 = vrot.slane %v5300, %v5304
        %v5323 = vunpack.c.l.b16 %v5281
        %v5324 = vunpack.c.l.b16 %v5282
        %v5325 = vunpack.c.l.b16 %v5283
        %v5326 = vunpack.c.l.b16 %v5284
        %v5327 = vunpack.c.l.b16 %v5285
        %v5328 = vunpack.c.l.b16 %v5286
        %v5329 = vunpack.c.l.b16 %v5287
        %v5330 = vunpack.c.l.b16 %v5288
        %v5331 = vunpack.c.l.b16 %v5289
        %v5332 = vunpack.c.l.b16 %v5290
        %v5333 = vunpack.c.l.b16 %v5291
        %v5334 = vunpack.c.l.b16 %v5292
        %v5335 = vunpack.c.l.b16 %v5293
        %v5336 = vunpack.c.l.b16 %v5294
        %v5337 = vunpack.c.l.b16 %v5295
        %v5338 = vunpack.c.l.b16 %v5296
        %v5339 = vpack.c.b16 %v5324, %v5323
        %v5340 = vpack.c.b16 %v5326, %v5325
        %v5341 = vpack.c.b16 %v5328, %v5327
        %v5342 = vpack.c.b16 %v5330, %v5329
        %v5343 = vpack.c.b16 %v5332, %v5331
        %v5344 = vpack.c.b16 %v5334, %v5333
        %v5345 = vpack.c.b16 %v5336, %v5335
        %v5346 = vpack.c.b16 %v5338, %v5337
        %5355 = vmatprep.subr.bf16.mxu0 0
        %5356 = vmatpush1.bf16.msra.mxu0 %v5339
        %5357 = vmatprep.subr.bf16.mxu0 0
        %5358 = vmatpush1.bf16.msra.mxu0 %v5340
        %5359 = vmatprep.subr.bf16.mxu0 0
        %5360 = vmatpush1.bf16.msra.mxu0 %v5341
        %5361 = vmatprep.subr.bf16.mxu0 0
        %5362 = vmatpush1.bf16.msra.mxu0 %v5342
        %5363 = vmatprep.subr.bf16.mxu0 0
        %5364 = vmatpush1.bf16.msra.mxu0 %v5343
        %5365 = vmatprep.subr.bf16.mxu0 0
        %5366 = vmatpush1.bf16.msra.mxu0 %v5344
        %5367 = vmatprep.subr.bf16.mxu0 0
        %5368 = vmatpush1.bf16.msra.mxu0 %v5345
        %5369 = vmatprep.subr.bf16.mxu0 0
        %5370 = vmatpush1.bf16.msra.mxu0 %v5346
        %5371 = vmatprep.subr.bf16.mxu0 0
        %5372 = vmatpush1.bf16.msra.mxu0 0
        %5373 = vmatprep.subr.bf16.mxu0 0
        %5374 = vmatpush1.bf16.msra.mxu0 0
        %5375 = vmatprep.subr.bf16.mxu0 0
        %5376 = vmatpush1.bf16.msra.mxu0 0
        %5377 = vmatprep.subr.bf16.mxu0 0
        %5378 = vmatpush1.bf16.msra.mxu0 0
        %5379 = vmatprep.subr.bf16.mxu0 0
        %5380 = vmatpush1.bf16.msra.mxu0 0
        %5381 = vmatprep.subr.bf16.mxu0 0
        %5382 = vmatpush1.bf16.msra.mxu0 0
        %5383 = vmatprep.subr.bf16.mxu0 0
        %5384 = vmatpush1.bf16.msra.mxu0 0
        %5385 = vmatprep.subr.bf16.mxu0 0
        %5386 = vmatpush1.bf16.msra.mxu0 0
        %5387 = vmatprep.mubr.bf16.mxu0 0
        %5388 = vmatmul.mubr.bf16.gmra.mrb[0].mxu0 %v5297
        %v5389 = vpop.f32.mrb[0].mxu0
        %v5390 = vadd.f32 %v5305, %v5389
        %v5391 = vpop.f32.mrb[0].mxu0
        %v5392 = vpop.f32.mrb[0].mxu0
        %v5393 = vadd.f32 %v5305, %v5392
        %v5394 = vpop.f32.mrb[0].mxu0
        %5395 = vmatprep.mubr.bf16.mxu0 0
        %5396 = vmatmul.mubr.bf16.gmra.mrb[0].mxu0 %v5298
        %v5397 = vpop.f32.mrb[0].mxu0
        %v5398 = vadd.f32 %v5305, %v5397
        %v5399 = vpop.f32.mrb[0].mxu0
        %v5400 = vpop.f32.mrb[0].mxu0
        %v5401 = vadd.f32 %v5305, %v5400
        %v5402 = vpop.f32.mrb[0].mxu0
        %5403 = vmatprep.mubr.bf16.mxu0 0
        %5404 = vmatmul.mubr.bf16.gmra.mrb[0].mxu0 %v5299
        %v5405 = vpop.f32.mrb[0].mxu0
        %v5406 = vadd.f32 %v5305, %v5405
        %v5407 = vpop.f32.mrb[0].mxu0
        %v5408 = vpop.f32.mrb[0].mxu0
        %v5409 = vpop.f32.mrb[0].mxu0
        %5410 = vdwg.mxu0
        %v5411 = vmul.f32 %v5390, 0.5
        %v5412 = vmul.f32 %v5393, 0.5
        %v5413 = vmul.f32 %v5398, 0.5
        %v5414 = vmul.f32 %v5401, 0.5
        %v5415 = vmul.f32 %v5406, 0.5
        %v5416 = vmul.f32 %v5390, 0.044715
        %v5417 = vmul.f32 %v5393, 0.044715
        %v5418 = vmul.f32 %v5398, 0.044715
        %v5419 = vmul.f32 %v5401, 0.044715
        %v5420 = vmul.f32 %v5406, 0.044715
        %v5421 = vmul.f32 %v5416, %v5390
        %v5422 = vmul.f32 %v5417, %v5393
        %v5423 = vmul.f32 %v5418, %v5398
        %v5424 = vmul.f32 %v5419, %v5401
        %v5425 = vmul.f32 %v5420, %v5406
        %v5426 = vmul.f32 %v5421, %v5390
        %v5427 = vmul.f32 %v5422, %v5393
        %v5428 = vmul.f32 %v5423, %v5398
        %v5429 = vmul.f32 %v5424, %v5401
        %v5430 = vmul.f32 %v5425, %v5406
        %v5431 = vadd.f32 %v5390, %v5426
        %v5432 = vadd.f32 %v5393, %v5427
        %v5433 = vadd.f32 %v5398, %v5428
        %v5434 = vadd.f32 %v5401, %v5429
        %v5435 = vadd.f32 %v5406, %v5430
        %v5436 = vmul.f32 %v5431, 0.7978846
        %v5437 = vmul.f32 %v5432, 0.7978846
        %v5438 = vmul.f32 %v5433, 0.7978846
        %v5439 = vmul.f32 %v5434, 0.7978846
        %v5440 = vmul.f32 %v5435, 0.7978846
        %v5441 = vtanh.pop %v5436
        %v5442 = vtanh.pop %v5437
        %v5443 = vtanh.pop %v5438
        %v5444 = vtanh.pop %v5439
        %v5445 = vtanh.pop %v5440
        %v5446 = vadd.f32 %v5441, 1.0
        %v5447 = vadd.f32 %v5442, 1.0
        %v5448 = vadd.f32 %v5443, 1.0
        %v5449 = vadd.f32 %v5444, 1.0
        %v5450 = vadd.f32 %v5445, 1.0
        %v5451 = vmul.f32 %v5411, %v5446
        %v5452 = vmul.f32 %v5412, %v5447
        %v5453 = vmul.f32 %v5413, %v5448
        %v5454 = vmul.f32 %v5414, %v5449
        %v5455 = vmul.f32 %v5415, %v5450
        %v5456 = vld [vmem:[#allocation29] sm:$0xf]
        %v5457 = vld [vmem:[#allocation29 + $0x4] sm:$0xf]
        %v5458 = vld [vmem:[#allocation29 + $0x8] sm:$0xf]
        %v5459 = vld [vmem:[#allocation29 + $0xc] sm:$0xf]
        %v5460 = vld [vmem:[#allocation29 + $0x10] sm:$0xf]
        %v5461 = vld [vmem:[#allocation29 + $0x14] sm:$0xf]
        %v5462 = vld [vmem:[#allocation29 + $0x18] sm:$0xf]
        %v5463 = vld [vmem:[#allocation29 + $0x1c] sm:$0xf]
        %v5464 = vld [vmem:[#allocation29 + $0x20] sm:$0xf]
        %v5465 = vld [vmem:[#allocation29 + $0x24] sm:$0xf]
        %v5466 = vld [vmem:[#allocation29 + $0x28] sm:$0xf]
        %v5467 = vld [vmem:[#allocation29 + $0x2c] sm:$0xf]
        %v5468 = vld [vmem:[#allocation29 + $0x30] sm:$0xf]
        %v5469 = vld [vmem:[#allocation29 + $0x34] sm:$0xf]
        %v5470 = vld [vmem:[#allocation29 + $0x38] sm:$0xf]
        %v5471 = vld [vmem:[#allocation29 + $0x3c] sm:$0xf]
        %v5472 = vpack.c.bf16 %v5452, %v5451
        %v5473 = vpack.c.bf16 %v5454, %v5453
        %v5474 = vpack.c.bf16 %v5455, %v5455
        %v5475 = vld [vmem:[#allocation31] sm:$0x1]
        %v5477 = vlaneseq
        %v5478 = vshrl.u32 %v5477, 7
        %v5479 = vsub.s32 0, %v5478
        %v5480 = vrot.slane %v5475, %v5479
        %v5498 = vunpack.c.l.b16 %v5456
        %v5499 = vunpack.c.l.b16 %v5457
        %v5500 = vunpack.c.l.b16 %v5458
        %v5501 = vunpack.c.l.b16 %v5459
        %v5502 = vunpack.c.l.b16 %v5460
        %v5503 = vunpack.c.l.b16 %v5461
        %v5504 = vunpack.c.l.b16 %v5462
        %v5505 = vunpack.c.l.b16 %v5463
        %v5506 = vunpack.c.l.b16 %v5464
        %v5507 = vunpack.c.l.b16 %v5465
        %v5508 = vunpack.c.l.b16 %v5466
        %v5509 = vunpack.c.l.b16 %v5467
        %v5510 = vunpack.c.l.b16 %v5468
        %v5511 = vunpack.c.l.b16 %v5469
        %v5512 = vunpack.c.l.b16 %v5470
        %v5513 = vunpack.c.l.b16 %v5471
        %v5514 = vpack.c.b16 %v5499, %v5498
        %v5515 = vpack.c.b16 %v5501, %v5500
        %v5516 = vpack.c.b16 %v5503, %v5502
        %v5517 = vpack.c.b16 %v5505, %v5504
        %v5518 = vpack.c.b16 %v5507, %v5506
        %v5519 = vpack.c.b16 %v5509, %v5508
        %v5520 = vpack.c.b16 %v5511, %v5510
        %v5521 = vpack.c.b16 %v5513, %v5512
        %5530 = vmatprep.subr.bf16.mxu0 0
        %5531 = vmatpush1.bf16.msra.mxu0 %v5514
        %5532 = vmatprep.subr.bf16.mxu0 0
        %5533 = vmatpush1.bf16.msra.mxu0 %v5515
        %5534 = vmatprep.subr.bf16.mxu0 0
        %5535 = vmatpush1.bf16.msra.mxu0 %v5516
        %5536 = vmatprep.subr.bf16.mxu0 0
        %5537 = vmatpush1.bf16.msra.mxu0 %v5517
        %5538 = vmatprep.subr.bf16.mxu0 0
        %5539 = vmatpush1.bf16.msra.mxu0 %v5518
        %5540 = vmatprep.subr.bf16.mxu0 0
        %5541 = vmatpush1.bf16.msra.mxu0 %v5519
        %5542 = vmatprep.subr.bf16.mxu0 0
        %5543 = vmatpush1.bf16.msra.mxu0 %v5520
        %5544 = vmatprep.subr.bf16.mxu0 0
        %5545 = vmatpush1.bf16.msra.mxu0 %v5521
        %5546 = vmatprep.subr.bf16.mxu0 0
        %5547 = vmatpush1.bf16.msra.mxu0 0
        %5548 = vmatprep.subr.bf16.mxu0 0
        %5549 = vmatpush1.bf16.msra.mxu0 0
        %5550 = vmatprep.subr.bf16.mxu0 0
        %5551 = vmatpush1.bf16.msra.mxu0 0
        %5552 = vmatprep.subr.bf16.mxu0 0
        %5553 = vmatpush1.bf16.msra.mxu0 0
        %5554 = vmatprep.subr.bf16.mxu0 0
        %5555 = vmatpush1.bf16.msra.mxu0 0
        %5556 = vmatprep.subr.bf16.mxu0 0
        %5557 = vmatpush1.bf16.msra.mxu0 0
        %5558 = vmatprep.subr.bf16.mxu0 0
        %5559 = vmatpush1.bf16.msra.mxu0 0
        %5560 = vmatprep.subr.bf16.mxu0 0
        %5561 = vmatpush1.bf16.msra.mxu0 0
        %5562 = vmatprep.mubr.bf16.mxu0 0
        %5563 = vmatmul.mubr.bf16.gmra.mrb[0].mxu0 %v5472
        %v5564 = vpop.f32.mrb[0].mxu0
        %v5565 = vadd.f32 %v5480, %v5564
        %v5566 = vpop.f32.mrb[0].mxu0
        %v5567 = vpop.f32.mrb[0].mxu0
        %v5568 = vadd.f32 %v5480, %v5567
        %v5569 = vpop.f32.mrb[0].mxu0
        %5570 = vmatprep.mubr.bf16.mxu0 0
        %5571 = vmatmul.mubr.bf16.gmra.mrb[0].mxu0 %v5473
        %v5572 = vpop.f32.mrb[0].mxu0
        %v5573 = vadd.f32 %v5480, %v5572
        %v5574 = vpop.f32.mrb[0].mxu0
        %v5575 = vpop.f32.mrb[0].mxu0
        %v5576 = vadd.f32 %v5480, %v5575
        %v5577 = vpop.f32.mrb[0].mxu0
        %5578 = vmatprep.mubr.bf16.mxu0 0
        %5579 = vmatmul.mubr.bf16.gmra.mrb[0].mxu0 %v5474
        %v5580 = vpop.f32.mrb[0].mxu0
        %v5581 = vadd.f32 %v5480, %v5580
        %v5582 = vpop.f32.mrb[0].mxu0
        %v5583 = vpop.f32.mrb[0].mxu0
        %v5584 = vpop.f32.mrb[0].mxu0
        %5585 = vdwg.mxu0
        %v5586 = vadd.f32 %v5276, %v5565
        %v5587 = vadd.f32 %v5277, %v5568
        %v5588 = vadd.f32 %v5278, %v5573
        %v5589 = vadd.f32 %v5279, %v5576
        %v5590 = vadd.f32 %v5280, %v5581
        %v5591 = vld [vmem:[#allocation32] sm:$0x1]
        %v5592 = vld [vmem:[#allocation34] sm:$0x1]
        %5593 = vadd.xlane.f32.xlu0 %v5586
        %v5594 = vpop.xlane.xlu0 %5593
        %5595 = vadd.xlane.f32.xlu0 %v5587
        %v5596 = vpop.xlane.xlu0 %5595
        %5597 = vadd.xlane.f32.xlu0 %v5588
        %v5598 = vpop.xlane.xlu0 %5597
        %5599 = vadd.xlane.f32.xlu0 %v5589
        %v5600 = vpop.xlane.xlu0 %5599
        %v5601 = vsel %vm1699, %v5590, 0.0
        %5602 = vadd.xlane.f32.xlu0 %v5601
        %v5603 = vpop.xlane.xlu0 %5602
        %v5604 = vmul.f32 %v5586, %v5586
        %v5605 = vmul.f32 %v5587, %v5587
        %v5606 = vmul.f32 %v5588, %v5588
        %v5607 = vmul.f32 %v5589, %v5589
        %v5608 = vmul.f32 %v5590, %v5590
        %5609 = vadd.xlane.f32.xlu0 %v5604
        %v5610 = vpop.xlane.xlu0 %5609
        %5611 = vadd.xlane.f32.xlu0 %v5605
        %v5612 = vpop.xlane.xlu0 %5611
        %5613 = vadd.xlane.f32.xlu0 %v5606
        %v5614 = vpop.xlane.xlu0 %5613
        %5615 = vadd.xlane.f32.xlu0 %v5607
        %v5616 = vpop.xlane.xlu0 %5615
        %v5617 = vsel %vm1699, %v5608, 0.0
        %5618 = vadd.xlane.f32.xlu0 %v5617
        %v5619 = vpop.xlane.xlu0 %5618
        %v5620 = vmul.f32 %v5594, %v3950
        %v5621 = vmul.f32 %v5596, %v3950
        %v5622 = vmul.f32 %v5598, %v3950
        %v5623 = vmul.f32 %v5600, %v3950
        %v5624 = vmul.f32 %v5603, %v3950
        %v5625 = vmul.f32 %v5610, %v3950
        %v5626 = vmul.f32 %v5612, %v3950
        %v5627 = vmul.f32 %v5614, %v3950
        %v5628 = vmul.f32 %v5616, %v3950
        %v5629 = vmul.f32 %v5619, %v3950
        %v5630 = vmul.f32 %v5620, %v5620
        %v5631 = vmul.f32 %v5621, %v5621
        %v5632 = vmul.f32 %v5622, %v5622
        %v5633 = vmul.f32 %v5623, %v5623
        %v5634 = vmul.f32 %v5624, %v5624
        %v5635 = vsub.f32 %v5625, %v5630
        %v5636 = vsub.f32 %v5626, %v5631
        %v5637 = vsub.f32 %v5627, %v5632
        %v5638 = vsub.f32 %v5628, %v5633
        %v5639 = vsub.f32 %v5629, %v5634
        %v5640 = vsub.f32 %v5586, %v5620
        %v5641 = vsub.f32 %v5587, %v5621
        %v5642 = vsub.f32 %v5588, %v5622
        %v5643 = vsub.f32 %v5589, %v5623
        %v5644 = vsub.f32 %v5590, %v5624
        %v5645 = vadd.f32 %v5635, 1e-05
        %v5646 = vadd.f32 %v5636, 1e-05
        %v5647 = vadd.f32 %v5637, 1e-05
        %v5648 = vadd.f32 %v5638, 1e-05
        %v5649 = vadd.f32 %v5639, 1e-05
        %v5650 = vrsqrt.pop %v5645
        %v5651 = vrsqrt.pop %v5646
        %v5652 = vrsqrt.pop %v5647
        %v5653 = vrsqrt.pop %v5648
        %v5654 = vrsqrt.pop %v5649
        %v5655 = vmul.f32 %v5640, %v5650
        %v5656 = vmul.f32 %v5641, %v5651
        %v5657 = vmul.f32 %v5642, %v5652
        %v5658 = vmul.f32 %v5643, %v5653
        %v5659 = vmul.f32 %v5644, %v5654
        %v5661 = vlaneseq
        %v5662 = vshrl.u32 %v5661, 7
        %v5663 = vsub.s32 0, %v5662
        %v5664 = vrot.slane %v5591, %v5663
        %v5666 = vmul.f32 %v5655, %v5664
        %v5667 = vmul.f32 %v5656, %v5664
        %v5668 = vmul.f32 %v5657, %v5664
        %v5669 = vmul.f32 %v5658, %v5664
        %v5670 = vmul.f32 %v5659, %v5664
        %v5672 = vlaneseq
        %v5673 = vshrl.u32 %v5672, 7
        %v5674 = vsub.s32 0, %v5673
        %v5675 = vrot.slane %v5592, %v5674
        %v5677 = vadd.f32 %v5666, %v5675
        %v5678 = vadd.f32 %v5667, %v5675
        %v5679 = vadd.f32 %v5668, %v5675
        %v5680 = vadd.f32 %v5669, %v5675
        %v5681 = vadd.f32 %v5670, %v5675
        %5682 = vset.pattern.permute.xlu0 1
        %5683 = vperm.xlu0 %5682, %v4018
        %v5684 = vpop.permute.xlu0 %5683
        %v5686 = vmul.f32 %v5684, %v5677
        %v5687 = vmul.f32 %v5684, %v5678
        %v5688 = vmul.f32 %v5684, %v5679
        %v5689 = vmul.f32 %v5684, %v5680
        %v5690 = vmul.f32 %v5684, %v5681
        %v5691 = vadd.f32 %v4023, %v5686
        %v5692 = vadd.f32 %v4024, %v5687
        %v5693 = vadd.f32 %v4025, %v5688
        %v5694 = vadd.f32 %v4026, %v5689
        %v5695 = vadd.f32 %v4027, %v5690
        %s5696 = scalar_lea.vmem %s33, 128
        %v5697 = vld [vmem:[%s5696] sm:$0xff]
        %v5698 = vld [vmem:[%s5696 + $0x8] sm:$0xff]
        %v5699 = vld [vmem:[%s5696 + $0x10] sm:$0xff]
        %v5700 = vld [vmem:[%s5696 + $0x18] sm:$0xff]
        %v5701 = vld [vmem:[%s5696 + $0x20] sm:$0xff]
        %v5702 = vld [vmem:[%s5696 + $0x28] sm:$0xff]
        %v5703 = vld [vmem:[%s5696 + $0x30] sm:$0xff]
        %v5704 = vld [vmem:[%s5696 + $0x38] sm:$0xff]
        %v5705 = vld [vmem:[%s5696 + $0x40] sm:$0xff]
        %v5706 = vld [vmem:[%s5696 + $0x48] sm:$0xff]
        %v5707 = vld [vmem:[%s5696 + $0x50] sm:$0xff]
        %v5708 = vld [vmem:[%s5696 + $0x58] sm:$0xff]
        %v5709 = vld [vmem:[%s5696 + $0x60] sm:$0xff]
        %v5710 = vld [vmem:[%s5696 + $0x68] sm:$0xff]
        %v5711 = vld [vmem:[%s5696 + $0x70] sm:$0xff]
        %v5712 = vld [vmem:[%s5696 + $0x78] sm:$0xff]
        %v5713 = vpack.c.bf16 %v5678, %v5677
        %v5714 = vpack.c.bf16 %v5680, %v5679
        %v5715 = vpack.c.bf16 %v5681, %v5681
        %s5716 = scalar_lea.vmem %s35, 2
        %v5717 = vld [vmem:[%s5716] sm:$0x3]
        %v5719 = vlaneseq
        %v5720 = vshrl.u32 %v5719, 7
        %v5721 = vsub.s32 0, %v5720
        %v5722 = vrot.slane %v5717, %v5721
        %v5723 = vlaneseq
        %v5724 = vshrl.u32 %v5723, 7
        %v5725 = vsub.s32 1, %v5724
        %v5726 = vrot.slane %v5717, %v5725
        %v5745 = vunpack.c.l.b16 %v5697
        %v5746 = vunpack.c.h.b16 %v5697
        %v5747 = vunpack.c.l.b16 %v5698
        %v5748 = vunpack.c.h.b16 %v5698
        %v5749 = vunpack.c.l.b16 %v5699
        %v5750 = vunpack.c.h.b16 %v5699
        %v5751 = vunpack.c.l.b16 %v5700
        %v5752 = vunpack.c.h.b16 %v5700
        %v5753 = vunpack.c.l.b16 %v5701
        %v5754 = vunpack.c.h.b16 %v5701
        %v5755 = vunpack.c.l.b16 %v5702
        %v5756 = vunpack.c.h.b16 %v5702
        %v5757 = vunpack.c.l.b16 %v5703
        %v5758 = vunpack.c.h.b16 %v5703
        %v5759 = vunpack.c.l.b16 %v5704
        %v5760 = vunpack.c.h.b16 %v5704
        %v5761 = vunpack.c.l.b16 %v5705
        %v5762 = vunpack.c.h.b16 %v5705
        %v5763 = vunpack.c.l.b16 %v5706
        %v5764 = vunpack.c.h.b16 %v5706
        %v5765 = vunpack.c.l.b16 %v5707
        %v5766 = vunpack.c.h.b16 %v5707
        %v5767 = vunpack.c.l.b16 %v5708
        %v5768 = vunpack.c.h.b16 %v5708
        %v5769 = vunpack.c.l.b16 %v5709
        %v5770 = vunpack.c.h.b16 %v5709
        %v5771 = vunpack.c.l.b16 %v5710
        %v5772 = vunpack.c.h.b16 %v5710
        %v5773 = vunpack.c.l.b16 %v5711
        %v5774 = vunpack.c.h.b16 %v5711
        %v5775 = vunpack.c.l.b16 %v5712
        %v5776 = vunpack.c.h.b16 %v5712
        %v5777 = vpack.c.b16 %v5747, %v5745
        %v5778 = vpack.c.b16 %v5748, %v5746
        %v5779 = vpack.c.b16 %v5751, %v5749
        %v5780 = vpack.c.b16 %v5752, %v5750
        %v5781 = vpack.c.b16 %v5755, %v5753
        %v5782 = vpack.c.b16 %v5756, %v5754
        %v5783 = vpack.c.b16 %v5759, %v5757
        %v5784 = vpack.c.b16 %v5760, %v5758
        %v5785 = vpack.c.b16 %v5763, %v5761
        %v5786 = vpack.c.b16 %v5764, %v5762
        %v5787 = vpack.c.b16 %v5767, %v5765
        %v5788 = vpack.c.b16 %v5768, %v5766
        %v5789 = vpack.c.b16 %v5771, %v5769
        %v5790 = vpack.c.b16 %v5772, %v5770
        %v5791 = vpack.c.b16 %v5775, %v5773
        %v5792 = vpack.c.b16 %v5776, %v5774
        %5809 = vmatprep.subr.bf16.mxu0 %v5778
        %5810 = vmatpush1.bf16.msra.mxu0 %v5777
        %5811 = vmatprep.subr.bf16.mxu0 %v5780
        %5812 = vmatpush1.bf16.msra.mxu0 %v5779
        %5813 = vmatprep.subr.bf16.mxu0 %v5782
        %5814 = vmatpush1.bf16.msra.mxu0 %v5781
        %5815 = vmatprep.subr.bf16.mxu0 %v5784
        %5816 = vmatpush1.bf16.msra.mxu0 %v5783
        %5817 = vmatprep.subr.bf16.mxu0 %v5786
        %5818 = vmatpush1.bf16.msra.mxu0 %v5785
        %5819 = vmatprep.subr.bf16.mxu0 %v5788
        %5820 = vmatpush1.bf16.msra.mxu0 %v5787
        %5821 = vmatprep.subr.bf16.mxu0 %v5790
        %5822 = vmatpush1.bf16.msra.mxu0 %v5789
        %5823 = vmatprep.subr.bf16.mxu0 %v5792
        %5824 = vmatpush1.bf16.msra.mxu0 %v5791
        %5825 = vmatprep.subr.bf16.mxu0 0
        %5826 = vmatpush1.bf16.msra.mxu0 0
        %5827 = vmatprep.subr.bf16.mxu0 0
        %5828 = vmatpush1.bf16.msra.mxu0 0
        %5829 = vmatprep.subr.bf16.mxu0 0
        %5830 = vmatpush1.bf16.msra.mxu0 0
        %5831 = vmatprep.subr.bf16.mxu0 0
        %5832 = vmatpush1.bf16.msra.mxu0 0
        %5833 = vmatprep.subr.bf16.mxu0 0
        %5834 = vmatpush1.bf16.msra.mxu0 0
        %5835 = vmatprep.subr.bf16.mxu0 0
        %5836 = vmatpush1.bf16.msra.mxu0 0
        %5837 = vmatprep.subr.bf16.mxu0 0
        %5838 = vmatpush1.bf16.msra.mxu0 0
        %5839 = vmatprep.subr.bf16.mxu0 0
        %5840 = vmatpush1.bf16.msra.mxu0 0
        %5841 = vmatprep.mubr.bf16.mxu0 0
        %5842 = vmatmul.mubr.bf16.gmra.mrb[0].mxu0 %v5713
        %v5843 = vpop.f32.mrb[0].mxu0
        %v5844 = vadd.f32 %v5722, %v5843
        %v5845 = vpop.f32.mrb[0].mxu0
        %v5846 = vadd.f32 %v5726, %v5845
        %v5847 = vpop.f32.mrb[0].mxu0
        %v5848 = vadd.f32 %v5722, %v5847
        %v5849 = vpop.f32.mrb[0].mxu0
        %v5850 = vadd.f32 %v5726, %v5849
        %5851 = vmatprep.mubr.bf16.mxu0 0
        %5852 = vmatmul.mubr.bf16.gmra.mrb[0].mxu0 %v5714
        %v5853 = vpop.f32.mrb[0].mxu0
        %v5854 = vadd.f32 %v5722, %v5853
        %v5855 = vpop.f32.mrb[0].mxu0
        %v5856 = vadd.f32 %v5726, %v5855
        %v5857 = vpop.f32.mrb[0].mxu0
        %v5858 = vadd.f32 %v5722, %v5857
        %v5859 = vpop.f32.mrb[0].mxu0
        %v5860 = vadd.f32 %v5726, %v5859
        %5861 = vmatprep.mubr.bf16.mxu0 0
        %5862 = vmatmul.mubr.bf16.gmra.mrb[0].mxu0 %v5715
        %v5863 = vpop.f32.mrb[0].mxu0
        %v5864 = vadd.f32 %v5722, %v5863
        %v5865 = vpop.f32.mrb[0].mxu0
        %v5866 = vadd.f32 %v5726, %v5865
        %v5867 = vpop.f32.mrb[0].mxu0
        %v5868 = vpop.f32.mrb[0].mxu0
        %5869 = vdwg.mxu0
        %v5870 = vsel %vm4206, %v5844, 0.0
        %v5871 = vsel %vm4206, %v5848, 0.0
        %v5872 = vsel %vm4206, %v5854, 0.0
        %v5873 = vsel %vm4206, %v5858, 0.0
        %v5874 = vsel %vm4206, %v5864, 0.0
        %v5875 = vpack.c.bf16 %v5871, %v5870
        %v5876 = vpack.c.bf16 %v5873, %v5872
        %v5877 = vpack.c.bf16 %v5874, %v5874
        %v5878 = vpack.c.bf16 %v5848, %v5844
        %v5879 = vpack.c.bf16 %v5858, %v5854
        %v5880 = vpack.c.bf16 %v5864, %v5864
        %5884 = vrot.lane.b32.xlu0 %v5878, 64
        %v5885 = vpop.permute.xlu0 %5884
        %5886 = vrot.lane.b32.xlu0 %v5879, 64
        %v5887 = vpop.permute.xlu0 %5886
        %5888 = vrot.lane.b32.xlu0 %v5880, 64
        %v5889 = vpop.permute.xlu0 %5888
        %v5891 = vsel %vm4227, %v5875, 0
        %v5894 = vsel %vm4227, %v5876, 0
        %v5897 = vsel %vm4227, %v5877, 0
        %v5900 = vsel %vm4227, %v5885, 0
        %v5903 = vsel %vm4227, %v5887, 0
        %v5906 = vsel %vm4227, %v5889, 0
        %5908 = vmatprep.subr.bf16.mxu0 0
        %5909 = vmatpush1.bf16.xpose.msra.mxu0 %v5900
        %5910 = vmatprep.subr.bf16.mxu0 0
        %5911 = vmatpush1.bf16.xpose.msra.mxu0 %v5903
        %5912 = vmatprep.subr.bf16.mxu0 0
        %5913 = vmatpush1.bf16.xpose.msra.mxu0 %v5906
        %5914 = vmatprep.subr.bf16.mxu0 0
        %5915 = vmatpush1.bf16.xpose.msra.mxu0 0
        %5916 = vmatprep.subr.bf16.mxu0 0
        %5917 = vmatpush1.bf16.xpose.msra.mxu0 0
        %5918 = vmatprep.subr.bf16.mxu0 0
        %5919 = vmatpush1.bf16.xpose.msra.mxu0 0
        %5920 = vmatprep.subr.bf16.mxu0 0
        %5921 = vmatpush1.bf16.xpose.msra.mxu0 0
        %5922 = vmatprep.subr.bf16.mxu0 0
        %5923 = vmatpush1.bf16.xpose.msra.mxu0 0
        %5924 = vmatprep.subr.bf16.mxu0 0
        %5925 = vmatpush1.bf16.xpose.msra.mxu0 0
        %5926 = vmatprep.subr.bf16.mxu0 0
        %5927 = vmatpush1.bf16.xpose.msra.mxu0 0
        %5928 = vmatprep.subr.bf16.mxu0 0
        %5929 = vmatpush1.bf16.xpose.msra.mxu0 0
        %5930 = vmatprep.subr.bf16.mxu0 0
        %5931 = vmatpush1.bf16.xpose.msra.mxu0 0
        %5932 = vmatprep.subr.bf16.mxu0 0
        %5933 = vmatpush1.bf16.xpose.msra.mxu0 0
        %5934 = vmatprep.subr.bf16.mxu0 0
        %5935 = vmatpush1.bf16.xpose.msra.mxu0 0
        %5936 = vmatprep.subr.bf16.mxu0 0
        %5937 = vmatpush1.bf16.xpose.msra.mxu0 0
        %5938 = vmatprep.subr.bf16.mxu0 0
        %5939 = vmatpush1.bf16.xpose.msra.mxu0 0
        %5940 = vmatprep.mubr.bf16.mxu0 0
        %5941 = vmatmul.mubr.bf16.gmra.mrb[0].mxu0 %v5891
        %v5942 = vpop.f32.mrb[0].mxu0
        %v5943 = vadd.f32 0.0, %v5942
        %v5944 = vpop.f32.mrb[0].mxu0
        %v5945 = vpop.f32.mrb[0].mxu0
        %v5946 = vadd.f32 0.0, %v5945
        %v5947 = vpop.f32.mrb[0].mxu0
        %5948 = vmatprep.mubr.bf16.mxu0 0
        %5949 = vmatmul.mubr.bf16.gmra.mrb[0].mxu0 %v5894
        %v5950 = vpop.f32.mrb[0].mxu0
        %v5951 = vadd.f32 0.0, %v5950
        %v5952 = vpop.f32.mrb[0].mxu0
        %v5953 = vpop.f32.mrb[0].mxu0
        %v5954 = vadd.f32 0.0, %v5953
        %v5955 = vpop.f32.mrb[0].mxu0
        %5956 = vmatprep.mubr.bf16.mxu0 0
        %5957 = vmatmul.mubr.bf16.gmra.mrb[0].mxu0 %v5897
        %v5958 = vpop.f32.mrb[0].mxu0
        %v5959 = vadd.f32 0.0, %v5958
        %v5960 = vpop.f32.mrb[0].mxu0
        %v5961 = vpop.f32.mrb[0].mxu0
        %v5962 = vpop.f32.mrb[0].mxu0
        %5963 = vdwg.mxu0
        %v5964 = vsel %vm4302, %v5943, -inf
        %5965 = vmax.xlane.f32.xlu0 %v5964
        %v5966 = vpop.xlane.xlu0 %5965
        %v5967 = vsel %vm4302, %v5946, -inf
        %5968 = vmax.xlane.f32.xlu0 %v5967
        %v5969 = vpop.xlane.xlu0 %5968
        %v5970 = vsel %vm4302, %v5951, -inf
        %5971 = vmax.xlane.f32.xlu0 %v5970
        %v5972 = vpop.xlane.xlu0 %5971
        %v5973 = vsel %vm4302, %v5954, -inf
        %5974 = vmax.xlane.f32.xlu0 %v5973
        %v5975 = vpop.xlane.xlu0 %5974
        %v5976 = vsel %vm4315, %v5959, -inf
        %5977 = vmax.xlane.f32.xlu0 %v5976
        %v5978 = vpop.xlane.xlu0 %5977
        %v5979 = vsub.f32 %v5943, %v5966
        %v5980 = vsub.f32 %v5946, %v5969
        %v5981 = vsub.f32 %v5951, %v5972
        %v5982 = vsub.f32 %v5954, %v5975
        %v5983 = vsub.f32 %v5959, %v5978
        %v5984 = vmul.f32 %v5979, 1.442695
        %v5985 = vpow.pop %v5984
        %v5986 = vmul.f32 %v5980, 1.442695
        %v5987 = vpow.pop %v5986
        %v5988 = vmul.f32 %v5981, 1.442695
        %v5989 = vpow.pop %v5988
        %v5990 = vmul.f32 %v5982, 1.442695
        %v5991 = vpow.pop %v5990
        %v5992 = vmul.f32 %v5983, 1.442695
        %v5993 = vpow.pop %v5992
        %v5994 = vsel %vm4302, %v5985, 0.0
        %5995 = vadd.xlane.f32.xlu0 %v5994
        %v5996 = vpop.xlane.xlu0 %5995
        %v5997 = vsel %vm4302, %v5987, 0.0
        %5998 = vadd.xlane.f32.xlu0 %v5997
        %v5999 = vpop.xlane.xlu0 %5998
        %v6000 = vsel %vm4302, %v5989, 0.0
        %6001 = vadd.xlane.f32.xlu0 %v6000
        %v6002 = vpop.xlane.xlu0 %6001
        %v6003 = vsel %vm4302, %v5991, 0.0
        %6004 = vadd.xlane.f32.xlu0 %v6003
        %v6005 = vpop.xlane.xlu0 %6004
        %v6006 = vsel %vm4315, %v5993, 0.0
        %6007 = vadd.xlane.f32.xlu0 %v6006
        %v6008 = vpop.xlane.xlu0 %6007
        %v6009 = vrcp.pop %v5996
        %v6010 = vrcp.pop %v5999
        %v6011 = vrcp.pop %v6002
        %v6012 = vrcp.pop %v6005
        %v6013 = vrcp.pop %v6008
        %v6014 = vmul.f32 %v5985, %v6009
        %v6015 = vmul.f32 %v5987, %v6010
        %v6016 = vmul.f32 %v5989, %v6011
        %v6017 = vmul.f32 %v5991, %v6012
        %v6018 = vmul.f32 %v5993, %v6013
        %v6019 = vpack.c.bf16 %v6015, %v6014
        %v6020 = vpack.c.bf16 %v6017, %v6016
        %v6021 = vpack.c.bf16 %v6018, %v6018
        %v6022 = vpack.c.bf16 %v5850, %v5846
        %v6023 = vpack.c.bf16 %v5860, %v5856
        %v6024 = vpack.c.bf16 %v5866, %v5866
        %v6026 = vsel %vm4302, %v6019, 0
        %v6029 = vsel %vm4302, %v6020, 0
        %v6032 = vsel %vm4302, %v6021, 0
        %v6035 = vand.u32 %v6024, %v4375
        %6037 = vmatprep.subr.bf16.mxu0 0
        %6038 = vmatpush1.bf16.msra.mxu0 %v6022
        %6039 = vmatprep.subr.bf16.mxu0 0
        %6040 = vmatpush1.bf16.msra.mxu0 %v6023
        %6041 = vmatprep.subr.bf16.mxu0 0
        %6042 = vmatpush1.bf16.msra.mxu0 %v6035
        %6043 = vmatprep.subr.bf16.mxu0 0
        %6044 = vmatpush1.bf16.msra.mxu0 0
        %6045 = vmatprep.subr.bf16.mxu0 0
        %6046 = vmatpush1.bf16.msra.mxu0 0
        %6047 = vmatprep.subr.bf16.mxu0 0
        %6048 = vmatpush1.bf16.msra.mxu0 0
        %6049 = vmatprep.subr.bf16.mxu0 0
        %6050 = vmatpush1.bf16.msra.mxu0 0
        %6051 = vmatprep.subr.bf16.mxu0 0
        %6052 = vmatpush1.bf16.msra.mxu0 0
        %6053 = vmatprep.subr.bf16.mxu0 0
        %6054 = vmatpush1.bf16.msra.mxu0 0
        %6055 = vmatprep.subr.bf16.mxu0 0
        %6056 = vmatpush1.bf16.msra.mxu0 0
        %6057 = vmatprep.subr.bf16.mxu0 0
        %6058 = vmatpush1.bf16.msra.mxu0 0
        %6059 = vmatprep.subr.bf16.mxu0 0
        %6060 = vmatpush1.bf16.msra.mxu0 0
        %6061 = vmatprep.subr.bf16.mxu0 0
        %6062 = vmatpush1.bf16.msra.mxu0 0
        %6063 = vmatprep.subr.bf16.mxu0 0
        %6064 = vmatpush1.bf16.msra.mxu0 0
        %6065 = vmatprep.subr.bf16.mxu0 0
        %6066 = vmatpush1.bf16.msra.mxu0 0
        %6067 = vmatprep.subr.bf16.mxu0 0
        %6068 = vmatpush1.bf16.msra.mxu0 0
        %6069 = vmatprep.mubr.bf16.mxu0 0
        %6070 = vmatmul.mubr.bf16.gmra.mrb[0].mxu0 %v6026
        %v6071 = vpop.f32.mrb[0].mxu0
        %v6072 = vadd.f32 0.0, %v6071
        %v6073 = vpop.f32.mrb[0].mxu0
        %v6074 = vpop.f32.mrb[0].mxu0
        %v6075 = vadd.f32 0.0, %v6074
        %v6076 = vpop.f32.mrb[0].mxu0
        %6077 = vmatprep.mubr.bf16.mxu0 0
        %6078 = vmatmul.mubr.bf16.gmra.mrb[0].mxu0 %v6029
        %v6079 = vpop.f32.mrb[0].mxu0
        %v6080 = vadd.f32 0.0, %v6079
        %v6081 = vpop.f32.mrb[0].mxu0
        %v6082 = vpop.f32.mrb[0].mxu0
        %v6083 = vadd.f32 0.0, %v6082
        %v6084 = vpop.f32.mrb[0].mxu0
        %6085 = vmatprep.mubr.bf16.mxu0 0
        %6086 = vmatmul.mubr.bf16.gmra.mrb[0].mxu0 %v6032
        %v6087 = vpop.f32.mrb[0].mxu0
        %v6088 = vadd.f32 0.0, %v6087
        %v6089 = vpop.f32.mrb[0].mxu0
        %v6090 = vpop.f32.mrb[0].mxu0
        %v6091 = vpop.f32.mrb[0].mxu0
        %6092 = vdwg.mxu0
        %v6093 = vsel %vm4206, %v6072, 0.0
        %v6094 = vsel %vm4206, %v6075, 0.0
        %v6095 = vsel %vm4206, %v6080, 0.0
        %v6096 = vsel %vm4206, %v6083, 0.0
        %v6097 = vsel %vm4206, %v6088, 0.0
        %v6098 = vadd.f32 %v6093, 0.0
        %v6099 = vadd.f32 %v6094, 0.0
        %v6100 = vadd.f32 %v6095, 0.0
        %v6101 = vadd.f32 %v6096, 0.0
        %v6102 = vadd.f32 %v6097, 0.0
        %v6103 = vsel %vm4449, %v5844, 0.0
        %v6104 = vsel %vm4449, %v5848, 0.0
        %v6105 = vsel %vm4449, %v5854, 0.0
        %v6106 = vsel %vm4449, %v5858, 0.0
        %v6107 = vsel %vm4449, %v5864, 0.0
        %v6108 = vpack.c.bf16 %v6104, %v6103
        %v6109 = vpack.c.bf16 %v6106, %v6105
        %v6110 = vpack.c.bf16 %v6107, %v6107
        %v6112 = vsel %vm4227, %v6108, 0
        %v6115 = vsel %vm4227, %v6109, 0
        %v6118 = vsel %vm4227, %v6110, 0
        %6120 = vmatprep.subr.bf16.mxu0 0
        %6121 = vmatpush1.bf16.xpose.msra.mxu0 %v5900
        %6122 = vmatprep.subr.bf16.mxu0 0
        %6123 = vmatpush1.bf16.xpose.msra.mxu0 %v5903
        %6124 = vmatprep.subr.bf16.mxu0 0
        %6125 = vmatpush1.bf16.xpose.msra.mxu0 %v5906
        %6126 = vmatprep.subr.bf16.mxu0 0
        %6127 = vmatpush1.bf16.xpose.msra.mxu0 0
        %6128 = vmatprep.subr.bf16.mxu0 0
        %6129 = vmatpush1.bf16.xpose.msra.mxu0 0
        %6130 = vmatprep.subr.bf16.mxu0 0
        %6131 = vmatpush1.bf16.xpose.msra.mxu0 0
        %6132 = vmatprep.subr.bf16.mxu0 0
        %6133 = vmatpush1.bf16.xpose.msra.mxu0 0
        %6134 = vmatprep.subr.bf16.mxu0 0
        %6135 = vmatpush1.bf16.xpose.msra.mxu0 0
        %6136 = vmatprep.subr.bf16.mxu0 0
        %6137 = vmatpush1.bf16.xpose.msra.mxu0 0
        %6138 = vmatprep.subr.bf16.mxu0 0
        %6139 = vmatpush1.bf16.xpose.msra.mxu0 0
        %6140 = vmatprep.subr.bf16.mxu0 0
        %6141 = vmatpush1.bf16.xpose.msra.mxu0 0
        %6142 = vmatprep.subr.bf16.mxu0 0
        %6143 = vmatpush1.bf16.xpose.msra.mxu0 0
        %6144 = vmatprep.subr.bf16.mxu0 0
        %6145 = vmatpush1.bf16.xpose.msra.mxu0 0
        %6146 = vmatprep.subr.bf16.mxu0 0
        %6147 = vmatpush1.bf16.xpose.msra.mxu0 0
        %6148 = vmatprep.subr.bf16.mxu0 0
        %6149 = vmatpush1.bf16.xpose.msra.mxu0 0
        %6150 = vmatprep.subr.bf16.mxu0 0
        %6151 = vmatpush1.bf16.xpose.msra.mxu0 0
        %6152 = vmatprep.mubr.bf16.mxu0 0
        %6153 = vmatmul.mubr.bf16.gmra.mrb[0].mxu0 %v6112
        %v6154 = vpop.f32.mrb[0].mxu0
        %v6155 = vadd.f32 0.0, %v6154
        %v6156 = vpop.f32.mrb[0].mxu0
        %v6157 = vpop.f32.mrb[0].mxu0
        %v6158 = vadd.f32 0.0, %v6157
        %v6159 = vpop.f32.mrb[0].mxu0
        %6160 = vmatprep.mubr.bf16.mxu0 0
        %6161 = vmatmul.mubr.bf16.gmra.mrb[0].mxu0 %v6115
        %v6162 = vpop.f32.mrb[0].mxu0
        %v6163 = vadd.f32 0.0, %v6162
        %v6164 = vpop.f32.mrb[0].mxu0
        %v6165 = vpop.f32.mrb[0].mxu0
        %v6166 = vadd.f32 0.0, %v6165
        %v6167 = vpop.f32.mrb[0].mxu0
        %6168 = vmatprep.mubr.bf16.mxu0 0
        %6169 = vmatmul.mubr.bf16.gmra.mrb[0].mxu0 %v6118
        %v6170 = vpop.f32.mrb[0].mxu0
        %v6171 = vadd.f32 0.0, %v6170
        %v6172 = vpop.f32.mrb[0].mxu0
        %v6173 = vpop.f32.mrb[0].mxu0
        %v6174 = vpop.f32.mrb[0].mxu0
        %6175 = vdwg.mxu0
        %v6176 = vsel %vm4302, %v6155, -inf
        %6177 = vmax.xlane.f32.xlu0 %v6176
        %v6178 = vpop.xlane.xlu0 %6177
        %v6179 = vsel %vm4302, %v6158, -inf
        %6180 = vmax.xlane.f32.xlu0 %v6179
        %v6181 = vpop.xlane.xlu0 %6180
        %v6182 = vsel %vm4302, %v6163, -inf
        %6183 = vmax.xlane.f32.xlu0 %v6182
        %v6184 = vpop.xlane.xlu0 %6183
        %v6185 = vsel %vm4302, %v6166, -inf
        %6186 = vmax.xlane.f32.xlu0 %v6185
        %v6187 = vpop.xlane.xlu0 %6186
        %v6188 = vsel %vm4315, %v6171, -inf
        %6189 = vmax.xlane.f32.xlu0 %v6188
        %v6190 = vpop.xlane.xlu0 %6189
        %v6191 = vsub.f32 %v6155, %v6178
        %v6192 = vsub.f32 %v6158, %v6181
        %v6193 = vsub.f32 %v6163, %v6184
        %v6194 = vsub.f32 %v6166, %v6187
        %v6195 = vsub.f32 %v6171, %v6190
        %v6196 = vmul.f32 %v6191, 1.442695
        %v6197 = vpow.pop %v6196
        %v6198 = vmul.f32 %v6192, 1.442695
        %v6199 = vpow.pop %v6198
        %v6200 = vmul.f32 %v6193, 1.442695
        %v6201 = vpow.pop %v6200
        %v6202 = vmul.f32 %v6194, 1.442695
        %v6203 = vpow.pop %v6202
        %v6204 = vmul.f32 %v6195, 1.442695
        %v6205 = vpow.pop %v6204
        %v6206 = vsel %vm4302, %v6197, 0.0
        %6207 = vadd.xlane.f32.xlu0 %v6206
        %v6208 = vpop.xlane.xlu0 %6207
        %v6209 = vsel %vm4302, %v6199, 0.0
        %6210 = vadd.xlane.f32.xlu0 %v6209
        %v6211 = vpop.xlane.xlu0 %6210
        %v6212 = vsel %vm4302, %v6201, 0.0
        %6213 = vadd.xlane.f32.xlu0 %v6212
        %v6214 = vpop.xlane.xlu0 %6213
        %v6215 = vsel %vm4302, %v6203, 0.0
        %6216 = vadd.xlane.f32.xlu0 %v6215
        %v6217 = vpop.xlane.xlu0 %6216
        %v6218 = vsel %vm4315, %v6205, 0.0
        %6219 = vadd.xlane.f32.xlu0 %v6218
        %v6220 = vpop.xlane.xlu0 %6219
        %v6221 = vrcp.pop %v6208
        %v6222 = vrcp.pop %v6211
        %v6223 = vrcp.pop %v6214
        %v6224 = vrcp.pop %v6217
        %v6225 = vrcp.pop %v6220
        %v6226 = vmul.f32 %v6197, %v6221
        %v6227 = vmul.f32 %v6199, %v6222
        %v6228 = vmul.f32 %v6201, %v6223
        %v6229 = vmul.f32 %v6203, %v6224
        %v6230 = vmul.f32 %v6205, %v6225
        %v6231 = vpack.c.bf16 %v6227, %v6226
        %v6232 = vpack.c.bf16 %v6229, %v6228
        %v6233 = vpack.c.bf16 %v6230, %v6230
        %v6235 = vsel %vm4302, %v6231, 0
        %v6238 = vsel %vm4302, %v6232, 0
        %v6241 = vsel %vm4302, %v6233, 0
        %6243 = vmatprep.subr.bf16.mxu0 0
        %6244 = vmatpush1.bf16.msra.mxu0 %v6022
        %6245 = vmatprep.subr.bf16.mxu0 0
        %6246 = vmatpush1.bf16.msra.mxu0 %v6023
        %6247 = vmatprep.subr.bf16.mxu0 0
        %6248 = vmatpush1.bf16.msra.mxu0 %v6035
        %6249 = vmatprep.subr.bf16.mxu0 0
        %6250 = vmatpush1.bf16.msra.mxu0 0
        %6251 = vmatprep.subr.bf16.mxu0 0
        %6252 = vmatpush1.bf16.msra.mxu0 0
        %6253 = vmatprep.subr.bf16.mxu0 0
        %6254 = vmatpush1.bf16.msra.mxu0 0
        %6255 = vmatprep.subr.bf16.mxu0 0
        %6256 = vmatpush1.bf16.msra.mxu0 0
        %6257 = vmatprep.subr.bf16.mxu0 0
        %6258 = vmatpush1.bf16.msra.mxu0 0
        %6259 = vmatprep.subr.bf16.mxu0 0
        %6260 = vmatpush1.bf16.msra.mxu0 0
        %6261 = vmatprep.subr.bf16.mxu0 0
        %6262 = vmatpush1.bf16.msra.mxu0 0
        %6263 = vmatprep.subr.bf16.mxu0 0
        %6264 = vmatpush1.bf16.msra.mxu0 0
        %6265 = vmatprep.subr.bf16.mxu0 0
        %6266 = vmatpush1.bf16.msra.mxu0 0
        %6267 = vmatprep.subr.bf16.mxu0 0
        %6268 = vmatpush1.bf16.msra.mxu0 0
        %6269 = vmatprep.subr.bf16.mxu0 0
        %6270 = vmatpush1.bf16.msra.mxu0 0
        %6271 = vmatprep.subr.bf16.mxu0 0
        %6272 = vmatpush1.bf16.msra.mxu0 0
        %6273 = vmatprep.subr.bf16.mxu0 0
        %6274 = vmatpush1.bf16.msra.mxu0 0
        %6275 = vmatprep.mubr.bf16.mxu0 0
        %6276 = vmatmul.mubr.bf16.gmra.mrb[0].mxu0 %v6235
        %v6277 = vpop.f32.mrb[0].mxu0
        %v6278 = vadd.f32 0.0, %v6277
        %v6279 = vpop.f32.mrb[0].mxu0
        %v6280 = vpop.f32.mrb[0].mxu0
        %v6281 = vadd.f32 0.0, %v6280
        %v6282 = vpop.f32.mrb[0].mxu0
        %6283 = vmatprep.mubr.bf16.mxu0 0
        %6284 = vmatmul.mubr.bf16.gmra.mrb[0].mxu0 %v6238
        %v6285 = vpop.f32.mrb[0].mxu0
        %v6286 = vadd.f32 0.0, %v6285
        %v6287 = vpop.f32.mrb[0].mxu0
        %v6288 = vpop.f32.mrb[0].mxu0
        %v6289 = vadd.f32 0.0, %v6288
        %v6290 = vpop.f32.mrb[0].mxu0
        %6291 = vmatprep.mubr.bf16.mxu0 0
        %6292 = vmatmul.mubr.bf16.gmra.mrb[0].mxu0 %v6241
        %v6293 = vpop.f32.mrb[0].mxu0
        %v6294 = vadd.f32 0.0, %v6293
        %v6295 = vpop.f32.mrb[0].mxu0
        %v6296 = vpop.f32.mrb[0].mxu0
        %v6297 = vpop.f32.mrb[0].mxu0
        %6298 = vdwg.mxu0
        %v6299 = vsel %vm4449, %v6278, 0.0
        %v6300 = vsel %vm4449, %v6281, 0.0
        %v6301 = vsel %vm4449, %v6286, 0.0
        %v6302 = vsel %vm4449, %v6289, 0.0
        %v6303 = vsel %vm4449, %v6294, 0.0
        %v6304 = vadd.f32 %v6098, %v6299
        %v6305 = vadd.f32 %v6099, %v6300
        %v6306 = vadd.f32 %v6100, %v6301
        %v6307 = vadd.f32 %v6101, %v6302
        %v6308 = vadd.f32 %v6102, %v6303
        %v6309 = vsel %vm4660, %v5844, 0.0
        %v6310 = vsel %vm4660, %v5848, 0.0
        %v6311 = vsel %vm4660, %v5854, 0.0
        %v6312 = vsel %vm4660, %v5858, 0.0
        %v6313 = vsel %vm4660, %v5864, 0.0
        %v6314 = vpack.c.bf16 %v6310, %v6309
        %v6315 = vpack.c.bf16 %v6312, %v6311
        %v6316 = vpack.c.bf16 %v6313, %v6313
        %v6318 = vsel %vm4227, %v6314, 0
        %v6321 = vsel %vm4227, %v6315, 0
        %v6324 = vsel %vm4227, %v6316, 0
        %6326 = vmatprep.subr.bf16.mxu0 0
        %6327 = vmatpush1.bf16.xpose.msra.mxu0 %v5900
        %6328 = vmatprep.subr.bf16.mxu0 0
        %6329 = vmatpush1.bf16.xpose.msra.mxu0 %v5903
        %6330 = vmatprep.subr.bf16.mxu0 0
        %6331 = vmatpush1.bf16.xpose.msra.mxu0 %v5906
        %6332 = vmatprep.subr.bf16.mxu0 0
        %6333 = vmatpush1.bf16.xpose.msra.mxu0 0
        %6334 = vmatprep.subr.bf16.mxu0 0
        %6335 = vmatpush1.bf16.xpose.msra.mxu0 0
        %6336 = vmatprep.subr.bf16.mxu0 0
        %6337 = vmatpush1.bf16.xpose.msra.mxu0 0
        %6338 = vmatprep.subr.bf16.mxu0 0
        %6339 = vmatpush1.bf16.xpose.msra.mxu0 0
        %6340 = vmatprep.subr.bf16.mxu0 0
        %6341 = vmatpush1.bf16.xpose.msra.mxu0 0
        %6342 = vmatprep.subr.bf16.mxu0 0
        %6343 = vmatpush1.bf16.xpose.msra.mxu0 0
        %6344 = vmatprep.subr.bf16.mxu0 0
        %6345 = vmatpush1.bf16.xpose.msra.mxu0 0
        %6346 = vmatprep.subr.bf16.mxu0 0
        %6347 = vmatpush1.bf16.xpose.msra.mxu0 0
        %6348 = vmatprep.subr.bf16.mxu0 0
        %6349 = vmatpush1.bf16.xpose.msra.mxu0 0
        %6350 = vmatprep.subr.bf16.mxu0 0
        %6351 = vmatpush1.bf16.xpose.msra.mxu0 0
        %6352 = vmatprep.subr.bf16.mxu0 0
        %6353 = vmatpush1.bf16.xpose.msra.mxu0 0
        %6354 = vmatprep.subr.bf16.mxu0 0
        %6355 = vmatpush1.bf16.xpose.msra.mxu0 0
        %6356 = vmatprep.subr.bf16.mxu0 0
        %6357 = vmatpush1.bf16.xpose.msra.mxu0 0
        %6358 = vmatprep.mubr.bf16.mxu0 0
        %6359 = vmatmul.mubr.bf16.gmra.mrb[0].mxu0 %v6318
        %v6360 = vpop.f32.mrb[0].mxu0
        %v6361 = vadd.f32 0.0, %v6360
        %v6362 = vpop.f32.mrb[0].mxu0
        %v6363 = vpop.f32.mrb[0].mxu0
        %v6364 = vadd.f32 0.0, %v6363
        %v6365 = vpop.f32.mrb[0].mxu0
        %6366 = vmatprep.mubr.bf16.mxu0 0
        %6367 = vmatmul.mubr.bf16.gmra.mrb[0].mxu0 %v6321
        %v6368 = vpop.f32.mrb[0].mxu0
        %v6369 = vadd.f32 0.0, %v6368
        %v6370 = vpop.f32.mrb[0].mxu0
        %v6371 = vpop.f32.mrb[0].mxu0
        %v6372 = vadd.f32 0.0, %v6371
        %v6373 = vpop.f32.mrb[0].mxu0
        %6374 = vmatprep.mubr.bf16.mxu0 0
        %6375 = vmatmul.mubr.bf16.gmra.mrb[0].mxu0 %v6324
        %v6376 = vpop.f32.mrb[0].mxu0
        %v6377 = vadd.f32 0.0, %v6376
        %v6378 = vpop.f32.mrb[0].mxu0
        %v6379 = vpop.f32.mrb[0].mxu0
        %v6380 = vpop.f32.mrb[0].mxu0
        %6381 = vdwg.mxu0
        %v6382 = vsel %vm4302, %v6361, -inf
        %6383 = vmax.xlane.f32.xlu0 %v6382
        %v6384 = vpop.xlane.xlu0 %6383
        %v6385 = vsel %vm4302, %v6364, -inf
        %6386 = vmax.xlane.f32.xlu0 %v6385
        %v6387 = vpop.xlane.xlu0 %6386
        %v6388 = vsel %vm4302, %v6369, -inf
        %6389 = vmax.xlane.f32.xlu0 %v6388
        %v6390 = vpop.xlane.xlu0 %6389
        %v6391 = vsel %vm4302, %v6372, -inf
        %6392 = vmax.xlane.f32.xlu0 %v6391
        %v6393 = vpop.xlane.xlu0 %6392
        %v6394 = vsel %vm4315, %v6377, -inf
        %6395 = vmax.xlane.f32.xlu0 %v6394
        %v6396 = vpop.xlane.xlu0 %6395
        %v6397 = vsub.f32 %v6361, %v6384
        %v6398 = vsub.f32 %v6364, %v6387
        %v6399 = vsub.f32 %v6369, %v6390
        %v6400 = vsub.f32 %v6372, %v6393
        %v6401 = vsub.f32 %v6377, %v6396
        %v6402 = vmul.f32 %v6397, 1.442695
        %v6403 = vpow.pop %v6402
        %v6404 = vmul.f32 %v6398, 1.442695
        %v6405 = vpow.pop %v6404
        %v6406 = vmul.f32 %v6399, 1.442695
        %v6407 = vpow.pop %v6406
        %v6408 = vmul.f32 %v6400, 1.442695
        %v6409 = vpow.pop %v6408
        %v6410 = vmul.f32 %v6401, 1.442695
        %v6411 = vpow.pop %v6410
        %v6412 = vsel %vm4302, %v6403, 0.0
        %6413 = vadd.xlane.f32.xlu0 %v6412
        %v6414 = vpop.xlane.xlu0 %6413
        %v6415 = vsel %vm4302, %v6405, 0.0
        %6416 = vadd.xlane.f32.xlu0 %v6415
        %v6417 = vpop.xlane.xlu0 %6416
        %v6418 = vsel %vm4302, %v6407, 0.0
        %6419 = vadd.xlane.f32.xlu0 %v6418
        %v6420 = vpop.xlane.xlu0 %6419
        %v6421 = vsel %vm4302, %v6409, 0.0
        %6422 = vadd.xlane.f32.xlu0 %v6421
        %v6423 = vpop.xlane.xlu0 %6422
        %v6424 = vsel %vm4315, %v6411, 0.0
        %6425 = vadd.xlane.f32.xlu0 %v6424
        %v6426 = vpop.xlane.xlu0 %6425
        %v6427 = vrcp.pop %v6414
        %v6428 = vrcp.pop %v6417
        %v6429 = vrcp.pop %v6420
        %v6430 = vrcp.pop %v6423
        %v6431 = vrcp.pop %v6426
        %v6432 = vmul.f32 %v6403, %v6427
        %v6433 = vmul.f32 %v6405, %v6428
        %v6434 = vmul.f32 %v6407, %v6429
        %v6435 = vmul.f32 %v6409, %v6430
        %v6436 = vmul.f32 %v6411, %v6431
        %v6437 = vpack.c.bf16 %v6433, %v6432
        %v6438 = vpack.c.bf16 %v6435, %v6434
        %v6439 = vpack.c.bf16 %v6436, %v6436
        %v6441 = vsel %vm4302, %v6437, 0
        %v6444 = vsel %vm4302, %v6438, 0
        %v6447 = vsel %vm4302, %v6439, 0
        %6449 = vmatprep.subr.bf16.mxu0 0
        %6450 = vmatpush1.bf16.msra.mxu0 %v6022
        %6451 = vmatprep.subr.bf16.mxu0 0
        %6452 = vmatpush1.bf16.msra.mxu0 %v6023
        %6453 = vmatprep.subr.bf16.mxu0 0
        %6454 = vmatpush1.bf16.msra.mxu0 %v6035
        %6455 = vmatprep.subr.bf16.mxu0 0
        %6456 = vmatpush1.bf16.msra.mxu0 0
        %6457 = vmatprep.subr.bf16.mxu0 0
        %6458 = vmatpush1.bf16.msra.mxu0 0
        %6459 = vmatprep.subr.bf16.mxu0 0
        %6460 = vmatpush1.bf16.msra.mxu0 0
        %6461 = vmatprep.subr.bf16.mxu0 0
        %6462 = vmatpush1.bf16.msra.mxu0 0
        %6463 = vmatprep.subr.bf16.mxu0 0
        %6464 = vmatpush1.bf16.msra.mxu0 0
        %6465 = vmatprep.subr.bf16.mxu0 0
        %6466 = vmatpush1.bf16.msra.mxu0 0
        %6467 = vmatprep.subr.bf16.mxu0 0
        %6468 = vmatpush1.bf16.msra.mxu0 0
        %6469 = vmatprep.subr.bf16.mxu0 0
        %6470 = vmatpush1.bf16.msra.mxu0 0
        %6471 = vmatprep.subr.bf16.mxu0 0
        %6472 = vmatpush1.bf16.msra.mxu0 0
        %6473 = vmatprep.subr.bf16.mxu0 0
        %6474 = vmatpush1.bf16.msra.mxu0 0
        %6475 = vmatprep.subr.bf16.mxu0 0
        %6476 = vmatpush1.bf16.msra.mxu0 0
        %6477 = vmatprep.subr.bf16.mxu0 0
        %6478 = vmatpush1.bf16.msra.mxu0 0
        %6479 = vmatprep.subr.bf16.mxu0 0
        %6480 = vmatpush1.bf16.msra.mxu0 0
        %6481 = vmatprep.mubr.bf16.mxu0 0
        %6482 = vmatmul.mubr.bf16.gmra.mrb[0].mxu0 %v6441
        %v6483 = vpop.f32.mrb[0].mxu0
        %v6484 = vadd.f32 0.0, %v6483
        %v6485 = vpop.f32.mrb[0].mxu0
        %v6486 = vpop.f32.mrb[0].mxu0
        %v6487 = vadd.f32 0.0, %v6486
        %v6488 = vpop.f32.mrb[0].mxu0
        %6489 = vmatprep.mubr.bf16.mxu0 0
        %6490 = vmatmul.mubr.bf16.gmra.mrb[0].mxu0 %v6444
        %v6491 = vpop.f32.mrb[0].mxu0
        %v6492 = vadd.f32 0.0, %v6491
        %v6493 = vpop.f32.mrb[0].mxu0
        %v6494 = vpop.f32.mrb[0].mxu0
        %v6495 = vadd.f32 0.0, %v6494
        %v6496 = vpop.f32.mrb[0].mxu0
        %6497 = vmatprep.mubr.bf16.mxu0 0
        %6498 = vmatmul.mubr.bf16.gmra.mrb[0].mxu0 %v6447
        %v6499 = vpop.f32.mrb[0].mxu0
        %v6500 = vadd.f32 0.0, %v6499
        %v6501 = vpop.f32.mrb[0].mxu0
        %v6502 = vpop.f32.mrb[0].mxu0
        %v6503 = vpop.f32.mrb[0].mxu0
        %6504 = vdwg.mxu0
        %v6505 = vsel %vm4660, %v6484, 0.0
        %v6506 = vsel %vm4660, %v6487, 0.0
        %v6507 = vsel %vm4660, %v6492, 0.0
        %v6508 = vsel %vm4660, %v6495, 0.0
        %v6509 = vsel %vm4660, %v6500, 0.0
        %v6510 = vadd.f32 %v6304, %v6505
        %v6511 = vadd.f32 %v6305, %v6506
        %v6512 = vadd.f32 %v6306, %v6507
        %v6513 = vadd.f32 %v6307, %v6508
        %v6514 = vadd.f32 %v6308, %v6509
        %v6515 = vsel %vm4871, %v5844, 0.0
        %v6516 = vsel %vm4871, %v5848, 0.0
        %v6517 = vsel %vm4871, %v5854, 0.0
        %v6518 = vsel %vm4871, %v5858, 0.0
        %v6519 = vsel %vm4871, %v5864, 0.0
        %v6520 = vpack.c.bf16 %v6516, %v6515
        %v6521 = vpack.c.bf16 %v6518, %v6517
        %v6522 = vpack.c.bf16 %v6519, %v6519
        %v6524 = vsel %vm4227, %v6520, 0
        %v6527 = vsel %vm4227, %v6521, 0
        %v6530 = vsel %vm4227, %v6522, 0
        %6532 = vmatprep.subr.bf16.mxu0 0
        %6533 = vmatpush1.bf16.xpose.msra.mxu0 %v5900
        %6534 = vmatprep.subr.bf16.mxu0 0
        %6535 = vmatpush1.bf16.xpose.msra.mxu0 %v5903
        %6536 = vmatprep.subr.bf16.mxu0 0
        %6537 = vmatpush1.bf16.xpose.msra.mxu0 %v5906
        %6538 = vmatprep.subr.bf16.mxu0 0
        %6539 = vmatpush1.bf16.xpose.msra.mxu0 0
        %6540 = vmatprep.subr.bf16.mxu0 0
        %6541 = vmatpush1.bf16.xpose.msra.mxu0 0
        %6542 = vmatprep.subr.bf16.mxu0 0
        %6543 = vmatpush1.bf16.xpose.msra.mxu0 0
        %6544 = vmatprep.subr.bf16.mxu0 0
        %6545 = vmatpush1.bf16.xpose.msra.mxu0 0
        %6546 = vmatprep.subr.bf16.mxu0 0
        %6547 = vmatpush1.bf16.xpose.msra.mxu0 0
        %6548 = vmatprep.subr.bf16.mxu0 0
        %6549 = vmatpush1.bf16.xpose.msra.mxu0 0
        %6550 = vmatprep.subr.bf16.mxu0 0
        %6551 = vmatpush1.bf16.xpose.msra.mxu0 0
        %6552 = vmatprep.subr.bf16.mxu0 0
        %6553 = vmatpush1.bf16.xpose.msra.mxu0 0
        %6554 = vmatprep.subr.bf16.mxu0 0
        %6555 = vmatpush1.bf16.xpose.msra.mxu0 0
        %6556 = vmatprep.subr.bf16.mxu0 0
        %6557 = vmatpush1.bf16.xpose.msra.mxu0 0
        %6558 = vmatprep.subr.bf16.mxu0 0
        %6559 = vmatpush1.bf16.xpose.msra.mxu0 0
        %6560 = vmatprep.subr.bf16.mxu0 0
        %6561 = vmatpush1.bf16.xpose.msra.mxu0 0
        %6562 = vmatprep.subr.bf16.mxu0 0
        %6563 = vmatpush1.bf16.xpose.msra.mxu0 0
        %6564 = vmatprep.mubr.bf16.mxu0 0
        %6565 = vmatmul.mubr.bf16.gmra.mrb[0].mxu0 %v6524
        %v6566 = vpop.f32.mrb[0].mxu0
        %v6567 = vadd.f32 0.0, %v6566
        %v6568 = vpop.f32.mrb[0].mxu0
        %v6569 = vpop.f32.mrb[0].mxu0
        %v6570 = vadd.f32 0.0, %v6569
        %v6571 = vpop.f32.mrb[0].mxu0
        %6572 = vmatprep.mubr.bf16.mxu0 0
        %6573 = vmatmul.mubr.bf16.gmra.mrb[0].mxu0 %v6527
        %v6574 = vpop.f32.mrb[0].mxu0
        %v6575 = vadd.f32 0.0, %v6574
        %v6576 = vpop.f32.mrb[0].mxu0
        %v6577 = vpop.f32.mrb[0].mxu0
        %v6578 = vadd.f32 0.0, %v6577
        %v6579 = vpop.f32.mrb[0].mxu0
        %6580 = vmatprep.mubr.bf16.mxu0 0
        %6581 = vmatmul.mubr.bf16.gmra.mrb[0].mxu0 %v6530
        %v6582 = vpop.f32.mrb[0].mxu0
        %v6583 = vadd.f32 0.0, %v6582
        %v6584 = vpop.f32.mrb[0].mxu0
        %v6585 = vpop.f32.mrb[0].mxu0
        %v6586 = vpop.f32.mrb[0].mxu0
        %6587 = vdwg.mxu0
        %v6588 = vsel %vm4302, %v6567, -inf
        %6589 = vmax.xlane.f32.xlu0 %v6588
        %v6590 = vpop.xlane.xlu0 %6589
        %v6591 = vsel %vm4302, %v6570, -inf
        %6592 = vmax.xlane.f32.xlu0 %v6591
        %v6593 = vpop.xlane.xlu0 %6592
        %v6594 = vsel %vm4302, %v6575, -inf
        %6595 = vmax.xlane.f32.xlu0 %v6594
        %v6596 = vpop.xlane.xlu0 %6595
        %v6597 = vsel %vm4302, %v6578, -inf
        %6598 = vmax.xlane.f32.xlu0 %v6597
        %v6599 = vpop.xlane.xlu0 %6598
        %v6600 = vsel %vm4315, %v6583, -inf
        %6601 = vmax.xlane.f32.xlu0 %v6600
        %v6602 = vpop.xlane.xlu0 %6601
        %v6603 = vsub.f32 %v6567, %v6590
        %v6604 = vsub.f32 %v6570, %v6593
        %v6605 = vsub.f32 %v6575, %v6596
        %v6606 = vsub.f32 %v6578, %v6599
        %v6607 = vsub.f32 %v6583, %v6602
        %v6608 = vmul.f32 %v6603, 1.442695
        %v6609 = vpow.pop %v6608
        %v6610 = vmul.f32 %v6604, 1.442695
        %v6611 = vpow.pop %v6610
        %v6612 = vmul.f32 %v6605, 1.442695
        %v6613 = vpow.pop %v6612
        %v6614 = vmul.f32 %v6606, 1.442695
        %v6615 = vpow.pop %v6614
        %v6616 = vmul.f32 %v6607, 1.442695
        %v6617 = vpow.pop %v6616
        %v6618 = vsel %vm4302, %v6609, 0.0
        %6619 = vadd.xlane.f32.xlu0 %v6618
        %v6620 = vpop.xlane.xlu0 %6619
        %v6621 = vsel %vm4302, %v6611, 0.0
        %6622 = vadd.xlane.f32.xlu0 %v6621
        %v6623 = vpop.xlane.xlu0 %6622
        %v6624 = vsel %vm4302, %v6613, 0.0
        %6625 = vadd.xlane.f32.xlu0 %v6624
        %v6626 = vpop.xlane.xlu0 %6625
        %v6627 = vsel %vm4302, %v6615, 0.0
        %6628 = vadd.xlane.f32.xlu0 %v6627
        %v6629 = vpop.xlane.xlu0 %6628
        %v6630 = vsel %vm4315, %v6617, 0.0
        %6631 = vadd.xlane.f32.xlu0 %v6630
        %v6632 = vpop.xlane.xlu0 %6631
        %v6633 = vrcp.pop %v6620
        %v6634 = vrcp.pop %v6623
        %v6635 = vrcp.pop %v6626
        %v6636 = vrcp.pop %v6629
        %v6637 = vrcp.pop %v6632
        %v6638 = vmul.f32 %v6609, %v6633
        %v6639 = vmul.f32 %v6611, %v6634
        %v6640 = vmul.f32 %v6613, %v6635
        %v6641 = vmul.f32 %v6615, %v6636
        %v6642 = vmul.f32 %v6617, %v6637
        %v6643 = vpack.c.bf16 %v6639, %v6638
        %v6644 = vpack.c.bf16 %v6641, %v6640
        %v6645 = vpack.c.bf16 %v6642, %v6642
        %v6647 = vsel %vm4302, %v6643, 0
        %v6650 = vsel %vm4302, %v6644, 0
        %v6653 = vsel %vm4302, %v6645, 0
        %6655 = vmatprep.subr.bf16.mxu0 0
        %6656 = vmatpush1.bf16.msra.mxu0 %v6022
        %6657 = vmatprep.subr.bf16.mxu0 0
        %6658 = vmatpush1.bf16.msra.mxu0 %v6023
        %6659 = vmatprep.subr.bf16.mxu0 0
        %6660 = vmatpush1.bf16.msra.mxu0 %v6035
        %6661 = vmatprep.subr.bf16.mxu0 0
        %6662 = vmatpush1.bf16.msra.mxu0 0
        %6663 = vmatprep.subr.bf16.mxu0 0
        %6664 = vmatpush1.bf16.msra.mxu0 0
        %6665 = vmatprep.subr.bf16.mxu0 0
        %6666 = vmatpush1.bf16.msra.mxu0 0
        %6667 = vmatprep.subr.bf16.mxu0 0
        %6668 = vmatpush1.bf16.msra.mxu0 0
        %6669 = vmatprep.subr.bf16.mxu0 0
        %6670 = vmatpush1.bf16.msra.mxu0 0
        %6671 = vmatprep.subr.bf16.mxu0 0
        %6672 = vmatpush1.bf16.msra.mxu0 0
        %6673 = vmatprep.subr.bf16.mxu0 0
        %6674 = vmatpush1.bf16.msra.mxu0 0
        %6675 = vmatprep.subr.bf16.mxu0 0
        %6676 = vmatpush1.bf16.msra.mxu0 0
        %6677 = vmatprep.subr.bf16.mxu0 0
        %6678 = vmatpush1.bf16.msra.mxu0 0
        %6679 = vmatprep.subr.bf16.mxu0 0
        %6680 = vmatpush1.bf16.msra.mxu0 0
        %6681 = vmatprep.subr.bf16.mxu0 0
        %6682 = vmatpush1.bf16.msra.mxu0 0
        %6683 = vmatprep.subr.bf16.mxu0 0
        %6684 = vmatpush1.bf16.msra.mxu0 0
        %6685 = vmatprep.subr.bf16.mxu0 0
        %6686 = vmatpush1.bf16.msra.mxu0 0
        %6687 = vmatprep.mubr.bf16.mxu0 0
        %6688 = vmatmul.mubr.bf16.gmra.mrb[0].mxu0 %v6647
        %v6689 = vpop.f32.mrb[0].mxu0
        %v6690 = vadd.f32 0.0, %v6689
        %v6691 = vpop.f32.mrb[0].mxu0
        %v6692 = vpop.f32.mrb[0].mxu0
        %v6693 = vadd.f32 0.0, %v6692
        %v6694 = vpop.f32.mrb[0].mxu0
        %6695 = vmatprep.mubr.bf16.mxu0 0
        %6696 = vmatmul.mubr.bf16.gmra.mrb[0].mxu0 %v6650
        %v6697 = vpop.f32.mrb[0].mxu0
        %v6698 = vadd.f32 0.0, %v6697
        %v6699 = vpop.f32.mrb[0].mxu0
        %v6700 = vpop.f32.mrb[0].mxu0
        %v6701 = vadd.f32 0.0, %v6700
        %v6702 = vpop.f32.mrb[0].mxu0
        %6703 = vmatprep.mubr.bf16.mxu0 0
        %6704 = vmatmul.mubr.bf16.gmra.mrb[0].mxu0 %v6653
        %v6705 = vpop.f32.mrb[0].mxu0
        %v6706 = vadd.f32 0.0, %v6705
        %v6707 = vpop.f32.mrb[0].mxu0
        %v6708 = vpop.f32.mrb[0].mxu0
        %v6709 = vpop.f32.mrb[0].mxu0
        %6710 = vdwg.mxu0
        %v6711 = vsel %vm4871, %v6690, 0.0
        %v6712 = vsel %vm4871, %v6693, 0.0
        %v6713 = vsel %vm4871, %v6698, 0.0
        %v6714 = vsel %vm4871, %v6701, 0.0
        %v6715 = vsel %vm4871, %v6706, 0.0
        %v6716 = vadd.f32 %v6510, %v6711
        %v6717 = vadd.f32 %v6511, %v6712
        %v6718 = vadd.f32 %v6512, %v6713
        %v6719 = vadd.f32 %v6513, %v6714
        %v6720 = vadd.f32 %v6514, %v6715
        %s6721 = scalar_lea.vmem [#allocation22], 32
        %v6722 = vld [vmem:[%s6721] sm:$0xf]
        %v6723 = vld [vmem:[%s6721 + $0x4] sm:$0xf]
        %v6724 = vld [vmem:[%s6721 + $0x8] sm:$0xf]
        %v6725 = vld [vmem:[%s6721 + $0xc] sm:$0xf]
        %v6726 = vld [vmem:[%s6721 + $0x10] sm:$0xf]
        %v6727 = vld [vmem:[%s6721 + $0x14] sm:$0xf]
        %v6728 = vld [vmem:[%s6721 + $0x18] sm:$0xf]
        %v6729 = vld [vmem:[%s6721 + $0x1c] sm:$0xf]
        %v6730 = vpack.c.bf16 %v6717, %v6716
        %v6731 = vpack.c.bf16 %v6719, %v6718
        %v6732 = vpack.c.bf16 %v6720, %v6720
        %s6733 = scalar_lea.vmem %s39, 1
        %v6734 = vld [vmem:[%s6733] sm:$0x1]
        %v6736 = vlaneseq
        %v6737 = vshrl.u32 %v6736, 7
        %v6738 = vsub.s32 0, %v6737
        %v6739 = vrot.slane %v6734, %v6738
        %v6749 = vunpack.c.l.b16 %v6722
        %v6750 = vunpack.c.l.b16 %v6723
        %v6751 = vunpack.c.l.b16 %v6724
        %v6752 = vunpack.c.l.b16 %v6725
        %v6753 = vunpack.c.l.b16 %v6726
        %v6754 = vunpack.c.l.b16 %v6727
        %v6755 = vunpack.c.l.b16 %v6728
        %v6756 = vunpack.c.l.b16 %v6729
        %v6757 = vpack.c.b16 %v6750, %v6749
        %v6758 = vpack.c.b16 %v6752, %v6751
        %v6759 = vpack.c.b16 %v6754, %v6753
        %v6760 = vpack.c.b16 %v6756, %v6755
        %v6766 = vsel %vm4227, %v6730, 0
        %v6769 = vsel %vm4227, %v6731, 0
        %v6772 = vsel %vm4227, %v6732, 0
        %6774 = vmatprep.subr.bf16.mxu0 0
        %6775 = vmatpush1.bf16.msra.mxu0 %v6757
        %6776 = vmatprep.subr.bf16.mxu0 0
        %6777 = vmatpush1.bf16.msra.mxu0 %v6758
        %6778 = vmatprep.subr.bf16.mxu0 0
        %6779 = vmatpush1.bf16.msra.mxu0 %v6759
        %6780 = vmatprep.subr.bf16.mxu0 0
        %6781 = vmatpush1.bf16.msra.mxu0 %v6760
        %6782 = vmatprep.subr.bf16.mxu0 0
        %6783 = vmatpush1.bf16.msra.mxu0 0
        %6784 = vmatprep.subr.bf16.mxu0 0
        %6785 = vmatpush1.bf16.msra.mxu0 0
        %6786 = vmatprep.subr.bf16.mxu0 0
        %6787 = vmatpush1.bf16.msra.mxu0 0
        %6788 = vmatprep.subr.bf16.mxu0 0
        %6789 = vmatpush1.bf16.msra.mxu0 0
        %6790 = vmatprep.subr.bf16.mxu0 0
        %6791 = vmatpush1.bf16.msra.mxu0 0
        %6792 = vmatprep.subr.bf16.mxu0 0
        %6793 = vmatpush1.bf16.msra.mxu0 0
        %6794 = vmatprep.subr.bf16.mxu0 0
        %6795 = vmatpush1.bf16.msra.mxu0 0
        %6796 = vmatprep.subr.bf16.mxu0 0
        %6797 = vmatpush1.bf16.msra.mxu0 0
        %6798 = vmatprep.subr.bf16.mxu0 0
        %6799 = vmatpush1.bf16.msra.mxu0 0
        %6800 = vmatprep.subr.bf16.mxu0 0
        %6801 = vmatpush1.bf16.msra.mxu0 0
        %6802 = vmatprep.subr.bf16.mxu0 0
        %6803 = vmatpush1.bf16.msra.mxu0 0
        %6804 = vmatprep.subr.bf16.mxu0 0
        %6805 = vmatpush1.bf16.msra.mxu0 0
        %6806 = vmatprep.mubr.bf16.mxu0 0
        %6807 = vmatmul.mubr.bf16.gmra.mrb[0].mxu0 %v6766
        %v6808 = vpop.f32.mrb[0].mxu0
        %v6809 = vadd.f32 %v6739, %v6808
        %v6810 = vpop.f32.mrb[0].mxu0
        %v6811 = vpop.f32.mrb[0].mxu0
        %v6812 = vadd.f32 %v6739, %v6811
        %v6813 = vpop.f32.mrb[0].mxu0
        %6814 = vmatprep.mubr.bf16.mxu0 0
        %6815 = vmatmul.mubr.bf16.gmra.mrb[0].mxu0 %v6769
        %v6816 = vpop.f32.mrb[0].mxu0
        %v6817 = vadd.f32 %v6739, %v6816
        %v6818 = vpop.f32.mrb[0].mxu0
        %v6819 = vpop.f32.mrb[0].mxu0
        %v6820 = vadd.f32 %v6739, %v6819
        %v6821 = vpop.f32.mrb[0].mxu0
        %6822 = vmatprep.mubr.bf16.mxu0 0
        %6823 = vmatmul.mubr.bf16.gmra.mrb[0].mxu0 %v6772
        %v6824 = vpop.f32.mrb[0].mxu0
        %v6825 = vadd.f32 %v6739, %v6824
        %v6826 = vpop.f32.mrb[0].mxu0
        %v6827 = vpop.f32.mrb[0].mxu0
        %v6828 = vpop.f32.mrb[0].mxu0
        %6829 = vdwg.mxu0
        %v6830 = vadd.f32 %v5677, %v6809
        %v6831 = vadd.f32 %v5678, %v6812
        %v6832 = vadd.f32 %v5679, %v6817
        %v6833 = vadd.f32 %v5680, %v6820
        %v6834 = vadd.f32 %v5681, %v6825
        %s6835 = scalar_lea.vmem [#allocation23], 1
        %v6836 = vld [vmem:[%s6835] sm:$0x1]
        %s6837 = scalar_lea.vmem [#allocation25], 1
        %v6838 = vld [vmem:[%s6837] sm:$0x1]
        %6839 = vadd.xlane.f32.xlu0 %v6830
        %v6840 = vpop.xlane.xlu0 %6839
        %6841 = vadd.xlane.f32.xlu0 %v6831
        %v6842 = vpop.xlane.xlu0 %6841
        %6843 = vadd.xlane.f32.xlu0 %v6832
        %v6844 = vpop.xlane.xlu0 %6843
        %6845 = vadd.xlane.f32.xlu0 %v6833
        %v6846 = vpop.xlane.xlu0 %6845
        %v6847 = vsel %vm1699, %v6834, 0.0
        %6848 = vadd.xlane.f32.xlu0 %v6847
        %v6849 = vpop.xlane.xlu0 %6848
        %v6850 = vmul.f32 %v6830, %v6830
        %v6851 = vmul.f32 %v6831, %v6831
        %v6852 = vmul.f32 %v6832, %v6832
        %v6853 = vmul.f32 %v6833, %v6833
        %v6854 = vmul.f32 %v6834, %v6834
        %6855 = vadd.xlane.f32.xlu0 %v6850
        %v6856 = vpop.xlane.xlu0 %6855
        %6857 = vadd.xlane.f32.xlu0 %v6851
        %v6858 = vpop.xlane.xlu0 %6857
        %6859 = vadd.xlane.f32.xlu0 %v6852
        %v6860 = vpop.xlane.xlu0 %6859
        %6861 = vadd.xlane.f32.xlu0 %v6853
        %v6862 = vpop.xlane.xlu0 %6861
        %v6863 = vsel %vm1699, %v6854, 0.0
        %6864 = vadd.xlane.f32.xlu0 %v6863
        %v6865 = vpop.xlane.xlu0 %6864
        %v6866 = vmul.f32 %v6840, %v3950
        %v6867 = vmul.f32 %v6842, %v3950
        %v6868 = vmul.f32 %v6844, %v3950
        %v6869 = vmul.f32 %v6846, %v3950
        %v6870 = vmul.f32 %v6849, %v3950
        %v6871 = vmul.f32 %v6856, %v3950
        %v6872 = vmul.f32 %v6858, %v3950
        %v6873 = vmul.f32 %v6860, %v3950
        %v6874 = vmul.f32 %v6862, %v3950
        %v6875 = vmul.f32 %v6865, %v3950
        %v6876 = vmul.f32 %v6866, %v6866
        %v6877 = vmul.f32 %v6867, %v6867
        %v6878 = vmul.f32 %v6868, %v6868
        %v6879 = vmul.f32 %v6869, %v6869
        %v6880 = vmul.f32 %v6870, %v6870
        %v6881 = vsub.f32 %v6871, %v6876
        %v6882 = vsub.f32 %v6872, %v6877
        %v6883 = vsub.f32 %v6873, %v6878
        %v6884 = vsub.f32 %v6874, %v6879
        %v6885 = vsub.f32 %v6875, %v6880
        %v6886 = vsub.f32 %v6830, %v6866
        %v6887 = vsub.f32 %v6831, %v6867
        %v6888 = vsub.f32 %v6832, %v6868
        %v6889 = vsub.f32 %v6833, %v6869
        %v6890 = vsub.f32 %v6834, %v6870
        %v6891 = vadd.f32 %v6881, 1e-05
        %v6892 = vadd.f32 %v6882, 1e-05
        %v6893 = vadd.f32 %v6883, 1e-05
        %v6894 = vadd.f32 %v6884, 1e-05
        %v6895 = vadd.f32 %v6885, 1e-05
        %v6896 = vrsqrt.pop %v6891
        %v6897 = vrsqrt.pop %v6892
        %v6898 = vrsqrt.pop %v6893
        %v6899 = vrsqrt.pop %v6894
        %v6900 = vrsqrt.pop %v6895
        %v6901 = vmul.f32 %v6886, %v6896
        %v6902 = vmul.f32 %v6887, %v6897
        %v6903 = vmul.f32 %v6888, %v6898
        %v6904 = vmul.f32 %v6889, %v6899
        %v6905 = vmul.f32 %v6890, %v6900
        %v6907 = vlaneseq
        %v6908 = vshrl.u32 %v6907, 7
        %v6909 = vsub.s32 0, %v6908
        %v6910 = vrot.slane %v6836, %v6909
        %v6912 = vmul.f32 %v6901, %v6910
        %v6913 = vmul.f32 %v6902, %v6910
        %v6914 = vmul.f32 %v6903, %v6910
        %v6915 = vmul.f32 %v6904, %v6910
        %v6916 = vmul.f32 %v6905, %v6910
        %v6918 = vlaneseq
        %v6919 = vshrl.u32 %v6918, 7
        %v6920 = vsub.s32 0, %v6919
        %v6921 = vrot.slane %v6838, %v6920
        %v6923 = vadd.f32 %v6912, %v6921
        %v6924 = vadd.f32 %v6913, %v6921
        %v6925 = vadd.f32 %v6914, %v6921
        %v6926 = vadd.f32 %v6915, %v6921
        %v6927 = vadd.f32 %v6916, %v6921
        %s6928 = scalar_lea.vmem [#allocation26], 64
        %v6929 = vld [vmem:[%s6928] sm:$0xf]
        %v6930 = vld [vmem:[%s6928 + $0x4] sm:$0xf]
        %v6931 = vld [vmem:[%s6928 + $0x8] sm:$0xf]
        %v6932 = vld [vmem:[%s6928 + $0xc] sm:$0xf]
        %v6933 = vld [vmem:[%s6928 + $0x10] sm:$0xf]
        %v6934 = vld [vmem:[%s6928 + $0x14] sm:$0xf]
        %v6935 = vld [vmem:[%s6928 + $0x18] sm:$0xf]
        %v6936 = vld [vmem:[%s6928 + $0x1c] sm:$0xf]
        %v6937 = vld [vmem:[%s6928 + $0x20] sm:$0xf]
        %v6938 = vld [vmem:[%s6928 + $0x24] sm:$0xf]
        %v6939 = vld [vmem:[%s6928 + $0x28] sm:$0xf]
        %v6940 = vld [vmem:[%s6928 + $0x2c] sm:$0xf]
        %v6941 = vld [vmem:[%s6928 + $0x30] sm:$0xf]
        %v6942 = vld [vmem:[%s6928 + $0x34] sm:$0xf]
        %v6943 = vld [vmem:[%s6928 + $0x38] sm:$0xf]
        %v6944 = vld [vmem:[%s6928 + $0x3c] sm:$0xf]
        %v6945 = vpack.c.bf16 %v6924, %v6923
        %v6946 = vpack.c.bf16 %v6926, %v6925
        %v6947 = vpack.c.bf16 %v6927, %v6927
        %s6948 = scalar_lea.vmem [#allocation28], 1
        %v6949 = vld [vmem:[%s6948] sm:$0x1]
        %v6951 = vlaneseq
        %v6952 = vshrl.u32 %v6951, 7
        %v6953 = vsub.s32 0, %v6952
        %v6954 = vrot.slane %v6949, %v6953
        %v6972 = vunpack.c.l.b16 %v6929
        %v6973 = vunpack.c.l.b16 %v6930
        %v6974 = vunpack.c.l.b16 %v6931
        %v6975 = vunpack.c.l.b16 %v6932
        %v6976 = vunpack.c.l.b16 %v6933
        %v6977 = vunpack.c.l.b16 %v6934
        %v6978 = vunpack.c.l.b16 %v6935
        %v6979 = vunpack.c.l.b16 %v6936
        %v6980 = vunpack.c.l.b16 %v6937
        %v6981 = vunpack.c.l.b16 %v6938
        %v6982 = vunpack.c.l.b16 %v6939
        %v6983 = vunpack.c.l.b16 %v6940
        %v6984 = vunpack.c.l.b16 %v6941
        %v6985 = vunpack.c.l.b16 %v6942
        %v6986 = vunpack.c.l.b16 %v6943
        %v6987 = vunpack.c.l.b16 %v6944
        %v6988 = vpack.c.b16 %v6973, %v6972
        %v6989 = vpack.c.b16 %v6975, %v6974
        %v6990 = vpack.c.b16 %v6977, %v6976
        %v6991 = vpack.c.b16 %v6979, %v6978
        %v6992 = vpack.c.b16 %v6981, %v6980
        %v6993 = vpack.c.b16 %v6983, %v6982
        %v6994 = vpack.c.b16 %v6985, %v6984
        %v6995 = vpack.c.b16 %v6987, %v6986
        %7004 = vmatprep.subr.bf16.mxu0 0
        %7005 = vmatpush1.bf16.msra.mxu0 %v6988
        %7006 = vmatprep.subr.bf16.mxu0 0
        %7007 = vmatpush1.bf16.msra.mxu0 %v6989
        %7008 = vmatprep.subr.bf16.mxu0 0
        %7009 = vmatpush1.bf16.msra.mxu0 %v6990
        %7010 = vmatprep.subr.bf16.mxu0 0
        %7011 = vmatpush1.bf16.msra.mxu0 %v6991
        %7012 = vmatprep.subr.bf16.mxu0 0
        %7013 = vmatpush1.bf16.msra.mxu0 %v6992
        %7014 = vmatprep.subr.bf16.mxu0 0
        %7015 = vmatpush1.bf16.msra.mxu0 %v6993
        %7016 = vmatprep.subr.bf16.mxu0 0
        %7017 = vmatpush1.bf16.msra.mxu0 %v6994
        %7018 = vmatprep.subr.bf16.mxu0 0
        %7019 = vmatpush1.bf16.msra.mxu0 %v6995
        %7020 = vmatprep.subr.bf16.mxu0 0
        %7021 = vmatpush1.bf16.msra.mxu0 0
        %7022 = vmatprep.subr.bf16.mxu0 0
        %7023 = vmatpush1.bf16.msra.mxu0 0
        %7024 = vmatprep.subr.bf16.mxu0 0
        %7025 = vmatpush1.bf16.msra.mxu0 0
        %7026 = vmatprep.subr.bf16.mxu0 0
        %7027 = vmatpush1.bf16.msra.mxu0 0
        %7028 = vmatprep.subr.bf16.mxu0 0
        %7029 = vmatpush1.bf16.msra.mxu0 0
        %7030 = vmatprep.subr.bf16.mxu0 0
        %7031 = vmatpush1.bf16.msra.mxu0 0
        %7032 = vmatprep.subr.bf16.mxu0 0
        %7033 = vmatpush1.bf16.msra.mxu0 0
        %7034 = vmatprep.subr.bf16.mxu0 0
        %7035 = vmatpush1.bf16.msra.mxu0 0
        %7036 = vmatprep.mubr.bf16.mxu0 0
        %7037 = vmatmul.mubr.bf16.gmra.mrb[0].mxu0 %v6945
        %v7038 = vpop.f32.mrb[0].mxu0
        %v7039 = vadd.f32 %v6954, %v7038
        %v7040 = vpop.f32.mrb[0].mxu0
        %v7041 = vpop.f32.mrb[0].mxu0
        %v7042 = vadd.f32 %v6954, %v7041
        %v7043 = vpop.f32.mrb[0].mxu0
        %7044 = vmatprep.mubr.bf16.mxu0 0
        %7045 = vmatmul.mubr.bf16.gmra.mrb[0].mxu0 %v6946
        %v7046 = vpop.f32.mrb[0].mxu0
        %v7047 = vadd.f32 %v6954, %v7046
        %v7048 = vpop.f32.mrb[0].mxu0
        %v7049 = vpop.f32.mrb[0].mxu0
        %v7050 = vadd.f32 %v6954, %v7049
        %v7051 = vpop.f32.mrb[0].mxu0
        %7052 = vmatprep.mubr.bf16.mxu0 0
        %7053 = vmatmul.mubr.bf16.gmra.mrb[0].mxu0 %v6947
        %v7054 = vpop.f32.mrb[0].mxu0
        %v7055 = vadd.f32 %v6954, %v7054
        %v7056 = vpop.f32.mrb[0].mxu0
        %v7057 = vpop.f32.mrb[0].mxu0
        %v7058 = vpop.f32.mrb[0].mxu0
        %7059 = vdwg.mxu0
        %v7060 = vmul.f32 %v7039, 0.5
        %v7061 = vmul.f32 %v7042, 0.5
        %v7062 = vmul.f32 %v7047, 0.5
        %v7063 = vmul.f32 %v7050, 0.5
        %v7064 = vmul.f32 %v7055, 0.5
        %v7065 = vmul.f32 %v7039, 0.044715
        %v7066 = vmul.f32 %v7042, 0.044715
        %v7067 = vmul.f32 %v7047, 0.044715
        %v7068 = vmul.f32 %v7050, 0.044715
        %v7069 = vmul.f32 %v7055, 0.044715
        %v7070 = vmul.f32 %v7065, %v7039
        %v7071 = vmul.f32 %v7066, %v7042
        %v7072 = vmul.f32 %v7067, %v7047
        %v7073 = vmul.f32 %v7068, %v7050
        %v7074 = vmul.f32 %v7069, %v7055
        %v7075 = vmul.f32 %v7070, %v7039
        %v7076 = vmul.f32 %v7071, %v7042
        %v7077 = vmul.f32 %v7072, %v7047
        %v7078 = vmul.f32 %v7073, %v7050
        %v7079 = vmul.f32 %v7074, %v7055
        %v7080 = vadd.f32 %v7039, %v7075
        %v7081 = vadd.f32 %v7042, %v7076
        %v7082 = vadd.f32 %v7047, %v7077
        %v7083 = vadd.f32 %v7050, %v7078
        %v7084 = vadd.f32 %v7055, %v7079
        %v7085 = vmul.f32 %v7080, 0.7978846
        %v7086 = vmul.f32 %v7081, 0.7978846
        %v7087 = vmul.f32 %v7082, 0.7978846
        %v7088 = vmul.f32 %v7083, 0.7978846
        %v7089 = vmul.f32 %v7084, 0.7978846
        %v7090 = vtanh.pop %v7085
        %v7091 = vtanh.pop %v7086
        %v7092 = vtanh.pop %v7087
        %v7093 = vtanh.pop %v7088
        %v7094 = vtanh.pop %v7089
        %v7095 = vadd.f32 %v7090, 1.0
        %v7096 = vadd.f32 %v7091, 1.0
        %v7097 = vadd.f32 %v7092, 1.0
        %v7098 = vadd.f32 %v7093, 1.0
        %v7099 = vadd.f32 %v7094, 1.0
        %v7100 = vmul.f32 %v7060, %v7095
        %v7101 = vmul.f32 %v7061, %v7096
        %v7102 = vmul.f32 %v7062, %v7097
        %v7103 = vmul.f32 %v7063, %v7098
        %v7104 = vmul.f32 %v7064, %v7099
        %s7105 = scalar_lea.vmem [#allocation29], 64
        %v7106 = vld [vmem:[%s7105] sm:$0xf]
        %v7107 = vld [vmem:[%s7105 + $0x4] sm:$0xf]
        %v7108 = vld [vmem:[%s7105 + $0x8] sm:$0xf]
        %v7109 = vld [vmem:[%s7105 + $0xc] sm:$0xf]
        %v7110 = vld [vmem:[%s7105 + $0x10] sm:$0xf]
        %v7111 = vld [vmem:[%s7105 + $0x14] sm:$0xf]
        %v7112 = vld [vmem:[%s7105 + $0x18] sm:$0xf]
        %v7113 = vld [vmem:[%s7105 + $0x1c] sm:$0xf]
        %v7114 = vld [vmem:[%s7105 + $0x20] sm:$0xf]
        %v7115 = vld [vmem:[%s7105 + $0x24] sm:$0xf]
        %v7116 = vld [vmem:[%s7105 + $0x28] sm:$0xf]
        %v7117 = vld [vmem:[%s7105 + $0x2c] sm:$0xf]
        %v7118 = vld [vmem:[%s7105 + $0x30] sm:$0xf]
        %v7119 = vld [vmem:[%s7105 + $0x34] sm:$0xf]
        %v7120 = vld [vmem:[%s7105 + $0x38] sm:$0xf]
        %v7121 = vld [vmem:[%s7105 + $0x3c] sm:$0xf]
        %v7122 = vpack.c.bf16 %v7101, %v7100
        %v7123 = vpack.c.bf16 %v7103, %v7102
        %v7124 = vpack.c.bf16 %v7104, %v7104
        %s7125 = scalar_lea.vmem [#allocation31], 1
        %v7126 = vld [vmem:[%s7125] sm:$0x1]
        %v7128 = vlaneseq
        %v7129 = vshrl.u32 %v7128, 7
        %v7130 = vsub.s32 0, %v7129
        %v7131 = vrot.slane %v7126, %v7130
        %v7149 = vunpack.c.l.b16 %v7106
        %v7150 = vunpack.c.l.b16 %v7107
        %v7151 = vunpack.c.l.b16 %v7108
        %v7152 = vunpack.c.l.b16 %v7109
        %v7153 = vunpack.c.l.b16 %v7110
        %v7154 = vunpack.c.l.b16 %v7111
        %v7155 = vunpack.c.l.b16 %v7112
        %v7156 = vunpack.c.l.b16 %v7113
        %v7157 = vunpack.c.l.b16 %v7114
        %v7158 = vunpack.c.l.b16 %v7115
        %v7159 = vunpack.c.l.b16 %v7116
        %v7160 = vunpack.c.l.b16 %v7117
        %v7161 = vunpack.c.l.b16 %v7118
        %v7162 = vunpack.c.l.b16 %v7119
        %v7163 = vunpack.c.l.b16 %v7120
        %v7164 = vunpack.c.l.b16 %v7121
        %v7165 = vpack.c.b16 %v7150, %v7149
        %v7166 = vpack.c.b16 %v7152, %v7151
        %v7167 = vpack.c.b16 %v7154, %v7153
        %v7168 = vpack.c.b16 %v7156, %v7155
        %v7169 = vpack.c.b16 %v7158, %v7157
        %v7170 = vpack.c.b16 %v7160, %v7159
        %v7171 = vpack.c.b16 %v7162, %v7161
        %v7172 = vpack.c.b16 %v7164, %v7163
        %7181 = vmatprep.subr.bf16.mxu0 0
        %7182 = vmatpush1.bf16.msra.mxu0 %v7165
        %7183 = vmatprep.subr.bf16.mxu0 0
        %7184 = vmatpush1.bf16.msra.mxu0 %v7166
        %7185 = vmatprep.subr.bf16.mxu0 0
        %7186 = vmatpush1.bf16.msra.mxu0 %v7167
        %7187 = vmatprep.subr.bf16.mxu0 0
        %7188 = vmatpush1.bf16.msra.mxu0 %v7168
        %7189 = vmatprep.subr.bf16.mxu0 0
        %7190 = vmatpush1.bf16.msra.mxu0 %v7169
        %7191 = vmatprep.subr.bf16.mxu0 0
        %7192 = vmatpush1.bf16.msra.mxu0 %v7170
        %7193 = vmatprep.subr.bf16.mxu0 0
        %7194 = vmatpush1.bf16.msra.mxu0 %v7171
        %7195 = vmatprep.subr.bf16.mxu0 0
        %7196 = vmatpush1.bf16.msra.mxu0 %v7172
        %7197 = vmatprep.subr.bf16.mxu0 0
        %7198 = vmatpush1.bf16.msra.mxu0 0
        %7199 = vmatprep.subr.bf16.mxu0 0
        %7200 = vmatpush1.bf16.msra.mxu0 0
        %7201 = vmatprep.subr.bf16.mxu0 0
        %7202 = vmatpush1.bf16.msra.mxu0 0
        %7203 = vmatprep.subr.bf16.mxu0 0
        %7204 = vmatpush1.bf16.msra.mxu0 0
        %7205 = vmatprep.subr.bf16.mxu0 0
        %7206 = vmatpush1.bf16.msra.mxu0 0
        %7207 = vmatprep.subr.bf16.mxu0 0
        %7208 = vmatpush1.bf16.msra.mxu0 0
        %7209 = vmatprep.subr.bf16.mxu0 0
        %7210 = vmatpush1.bf16.msra.mxu0 0
        %7211 = vmatprep.subr.bf16.mxu0 0
        %7212 = vmatpush1.bf16.msra.mxu0 0
        %7213 = vmatprep.mubr.bf16.mxu0 0
        %7214 = vmatmul.mubr.bf16.gmra.mrb[0].mxu0 %v7122
        %v7215 = vpop.f32.mrb[0].mxu0
        %v7216 = vadd.f32 %v7131, %v7215
        %v7217 = vpop.f32.mrb[0].mxu0
        %v7218 = vpop.f32.mrb[0].mxu0
        %v7219 = vadd.f32 %v7131, %v7218
        %v7220 = vpop.f32.mrb[0].mxu0
        %7221 = vmatprep.mubr.bf16.mxu0 0
        %7222 = vmatmul.mubr.bf16.gmra.mrb[0].mxu0 %v7123
        %v7223 = vpop.f32.mrb[0].mxu0
        %v7224 = vadd.f32 %v7131, %v7223
        %v7225 = vpop.f32.mrb[0].mxu0
        %v7226 = vpop.f32.mrb[0].mxu0
        %v7227 = vadd.f32 %v7131, %v7226
        %v7228 = vpop.f32.mrb[0].mxu0
        %7229 = vmatprep.mubr.bf16.mxu0 0
        %7230 = vmatmul.mubr.bf16.gmra.mrb[0].mxu0 %v7124
        %v7231 = vpop.f32.mrb[0].mxu0
        %v7232 = vadd.f32 %v7131, %v7231
        %v7233 = vpop.f32.mrb[0].mxu0
        %v7234 = vpop.f32.mrb[0].mxu0
        %v7235 = vpop.f32.mrb[0].mxu0
        %7236 = vdwg.mxu0
        %v7237 = vadd.f32 %v6923, %v7216
        %v7238 = vadd.f32 %v6924, %v7219
        %v7239 = vadd.f32 %v6925, %v7224
        %v7240 = vadd.f32 %v6926, %v7227
        %v7241 = vadd.f32 %v6927, %v7232
        %s7242 = scalar_lea.vmem [#allocation32], 1
        %v7243 = vld [vmem:[%s7242] sm:$0x1]
        %s7244 = scalar_lea.vmem [#allocation34], 1
        %v7245 = vld [vmem:[%s7244] sm:$0x1]
        %7246 = vadd.xlane.f32.xlu0 %v7237
        %v7247 = vpop.xlane.xlu0 %7246
        %7248 = vadd.xlane.f32.xlu0 %v7238
        %v7249 = vpop.xlane.xlu0 %7248
        %7250 = vadd.xlane.f32.xlu0 %v7239
        %v7251 = vpop.xlane.xlu0 %7250
        %7252 = vadd.xlane.f32.xlu0 %v7240
        %v7253 = vpop.xlane.xlu0 %7252
        %v7254 = vsel %vm1699, %v7241, 0.0
        %7255 = vadd.xlane.f32.xlu0 %v7254
        %v7256 = vpop.xlane.xlu0 %7255
        %v7257 = vmul.f32 %v7237, %v7237
        %v7258 = vmul.f32 %v7238, %v7238
        %v7259 = vmul.f32 %v7239, %v7239
        %v7260 = vmul.f32 %v7240, %v7240
        %v7261 = vmul.f32 %v7241, %v7241
        %7262 = vadd.xlane.f32.xlu0 %v7257
        %v7263 = vpop.xlane.xlu0 %7262
        %7264 = vadd.xlane.f32.xlu0 %v7258
        %v7265 = vpop.xlane.xlu0 %7264
        %7266 = vadd.xlane.f32.xlu0 %v7259
        %v7267 = vpop.xlane.xlu0 %7266
        %7268 = vadd.xlane.f32.xlu0 %v7260
        %v7269 = vpop.xlane.xlu0 %7268
        %v7270 = vsel %vm1699, %v7261, 0.0
        %7271 = vadd.xlane.f32.xlu0 %v7270
        %v7272 = vpop.xlane.xlu0 %7271
        %v7273 = vmul.f32 %v7247, %v3950
        %v7274 = vmul.f32 %v7249, %v3950
        %v7275 = vmul.f32 %v7251, %v3950
        %v7276 = vmul.f32 %v7253, %v3950
        %v7277 = vmul.f32 %v7256, %v3950
        %v7278 = vmul.f32 %v7263, %v3950
        %v7279 = vmul.f32 %v7265, %v3950
        %v7280 = vmul.f32 %v7267, %v3950
        %v7281 = vmul.f32 %v7269, %v3950
        %v7282 = vmul.f32 %v7272, %v3950
        %v7283 = vmul.f32 %v7273, %v7273
        %v7284 = vmul.f32 %v7274, %v7274
        %v7285 = vmul.f32 %v7275, %v7275
        %v7286 = vmul.f32 %v7276, %v7276
        %v7287 = vmul.f32 %v7277, %v7277
        %v7288 = vsub.f32 %v7278, %v7283
        %v7289 = vsub.f32 %v7279, %v7284
        %v7290 = vsub.f32 %v7280, %v7285
        %v7291 = vsub.f32 %v7281, %v7286
        %v7292 = vsub.f32 %v7282, %v7287
        %v7293 = vsub.f32 %v7237, %v7273
        %v7294 = vsub.f32 %v7238, %v7274
        %v7295 = vsub.f32 %v7239, %v7275
        %v7296 = vsub.f32 %v7240, %v7276
        %v7297 = vsub.f32 %v7241, %v7277
        %v7298 = vadd.f32 %v7288, 1e-05
        %v7299 = vadd.f32 %v7289, 1e-05
        %v7300 = vadd.f32 %v7290, 1e-05
        %v7301 = vadd.f32 %v7291, 1e-05
        %v7302 = vadd.f32 %v7292, 1e-05
        %v7303 = vrsqrt.pop %v7298
        %v7304 = vrsqrt.pop %v7299
        %v7305 = vrsqrt.pop %v7300
        %v7306 = vrsqrt.pop %v7301
        %v7307 = vrsqrt.pop %v7302
        %v7308 = vmul.f32 %v7293, %v7303
        %v7309 = vmul.f32 %v7294, %v7304
        %v7310 = vmul.f32 %v7295, %v7305
        %v7311 = vmul.f32 %v7296, %v7306
        %v7312 = vmul.f32 %v7297, %v7307
        %v7314 = vlaneseq
        %v7315 = vshrl.u32 %v7314, 7
        %v7316 = vsub.s32 0, %v7315
        %v7317 = vrot.slane %v7243, %v7316
        %v7319 = vmul.f32 %v7308, %v7317
        %v7320 = vmul.f32 %v7309, %v7317
        %v7321 = vmul.f32 %v7310, %v7317
        %v7322 = vmul.f32 %v7311, %v7317
        %v7323 = vmul.f32 %v7312, %v7317
        %v7325 = vlaneseq
        %v7326 = vshrl.u32 %v7325, 7
        %v7327 = vsub.s32 0, %v7326
        %v7328 = vrot.slane %v7245, %v7327
        %v7330 = vadd.f32 %v7319, %v7328
        %v7331 = vadd.f32 %v7320, %v7328
        %v7332 = vadd.f32 %v7321, %v7328
        %v7333 = vadd.f32 %v7322, %v7328
        %v7334 = vadd.f32 %v7323, %v7328
        %7335 = vset.pattern.permute.xlu0 2
        %7336 = vperm.xlu0 %7335, %v4018
        %v7337 = vpop.permute.xlu0 %7336
        %v7339 = vmul.f32 %v7337, %v7330
        %v7340 = vmul.f32 %v7337, %v7331
        %v7341 = vmul.f32 %v7337, %v7332
        %v7342 = vmul.f32 %v7337, %v7333
        %v7343 = vmul.f32 %v7337, %v7334
        %v7344 = vadd.f32 %v5691, %v7339
        %v7345 = vadd.f32 %v5692, %v7340
        %v7346 = vadd.f32 %v5693, %v7341
        %v7347 = vadd.f32 %v5694, %v7342
        %v7348 = vadd.f32 %v5695, %v7343
        %v7349 = vld [vmem:[#allocation35] sm:$0xf]
        %v7350 = vld [vmem:[#allocation35 + $0x4] sm:$0xf]
        %v7351 = vld [vmem:[#allocation35 + $0x8] sm:$0xf]
        %v7352 = vld [vmem:[#allocation35 + $0xc] sm:$0xf]
        %v7353 = vld [vmem:[#allocation35 + $0x10] sm:$0xf]
        %v7354 = vld [vmem:[#allocation35 + $0x14] sm:$0xf]
        %v7355 = vld [vmem:[#allocation35 + $0x18] sm:$0xf]
        %v7356 = vld [vmem:[#allocation35 + $0x1c] sm:$0xf]
        %v7357 = vld [vmem:[#allocation35 + $0x20] sm:$0xf]
        %v7358 = vld [vmem:[#allocation35 + $0x24] sm:$0xf]
        %v7359 = vld [vmem:[#allocation35 + $0x28] sm:$0xf]
        %v7360 = vld [vmem:[#allocation35 + $0x2c] sm:$0xf]
        %v7361 = vld [vmem:[#allocation35 + $0x30] sm:$0xf]
        %v7362 = vld [vmem:[#allocation35 + $0x34] sm:$0xf]
        %v7363 = vld [vmem:[#allocation35 + $0x38] sm:$0xf]
        %v7364 = vld [vmem:[#allocation35 + $0x3c] sm:$0xf]
        %v7365 = vpack.c.bf16 %v7345, %v7344
        %v7366 = vpack.c.bf16 %v7347, %v7346
        %v7367 = vpack.c.bf16 %v7348, %v7348
        %v7368 = vld [vmem:[#allocation37] sm:$0x1]
        %v7370 = vlaneseq
        %v7371 = vshrl.u32 %v7370, 7
        %v7372 = vsub.s32 0, %v7371
        %v7373 = vrot.slane %v7368, %v7372
        %v7391 = vunpack.c.l.b16 %v7349
        %v7392 = vunpack.c.l.b16 %v7350
        %v7393 = vunpack.c.l.b16 %v7351
        %v7394 = vunpack.c.l.b16 %v7352
        %v7395 = vunpack.c.l.b16 %v7353
        %v7396 = vunpack.c.l.b16 %v7354
        %v7397 = vunpack.c.l.b16 %v7355
        %v7398 = vunpack.c.l.b16 %v7356
        %v7399 = vunpack.c.l.b16 %v7357
        %v7400 = vunpack.c.l.b16 %v7358
        %v7401 = vunpack.c.l.b16 %v7359
        %v7402 = vunpack.c.l.b16 %v7360
        %v7403 = vunpack.c.l.b16 %v7361
        %v7404 = vunpack.c.l.b16 %v7362
        %v7405 = vunpack.c.l.b16 %v7363
        %v7406 = vunpack.c.l.b16 %v7364
        %v7407 = vpack.c.b16 %v7392, %v7391
        %v7408 = vpack.c.b16 %v7394, %v7393
        %v7409 = vpack.c.b16 %v7396, %v7395
        %v7410 = vpack.c.b16 %v7398, %v7397
        %v7411 = vpack.c.b16 %v7400, %v7399
        %v7412 = vpack.c.b16 %v7402, %v7401
        %v7413 = vpack.c.b16 %v7404, %v7403
        %v7414 = vpack.c.b16 %v7406, %v7405
        %7423 = vmatprep.subr.bf16.mxu0 0
        %7424 = vmatpush1.bf16.msra.mxu0 %v7407
        %7425 = vmatprep.subr.bf16.mxu0 0
        %7426 = vmatpush1.bf16.msra.mxu0 %v7408
        %7427 = vmatprep.subr.bf16.mxu0 0
        %7428 = vmatpush1.bf16.msra.mxu0 %v7409
        %7429 = vmatprep.subr.bf16.mxu0 0
        %7430 = vmatpush1.bf16.msra.mxu0 %v7410
        %7431 = vmatprep.subr.bf16.mxu0 0
        %7432 = vmatpush1.bf16.msra.mxu0 %v7411
        %7433 = vmatprep.subr.bf16.mxu0 0
        %7434 = vmatpush1.bf16.msra.mxu0 %v7412
        %7435 = vmatprep.subr.bf16.mxu0 0
        %7436 = vmatpush1.bf16.msra.mxu0 %v7413
        %7437 = vmatprep.subr.bf16.mxu0 0
        %7438 = vmatpush1.bf16.msra.mxu0 %v7414
        %7439 = vmatprep.subr.bf16.mxu0 0
        %7440 = vmatpush1.bf16.msra.mxu0 0
        %7441 = vmatprep.subr.bf16.mxu0 0
        %7442 = vmatpush1.bf16.msra.mxu0 0
        %7443 = vmatprep.subr.bf16.mxu0 0
        %7444 = vmatpush1.bf16.msra.mxu0 0
        %7445 = vmatprep.subr.bf16.mxu0 0
        %7446 = vmatpush1.bf16.msra.mxu0 0
        %7447 = vmatprep.subr.bf16.mxu0 0
        %7448 = vmatpush1.bf16.msra.mxu0 0
        %7449 = vmatprep.subr.bf16.mxu0 0
        %7450 = vmatpush1.bf16.msra.mxu0 0
        %7451 = vmatprep.subr.bf16.mxu0 0
        %7452 = vmatpush1.bf16.msra.mxu0 0
        %7453 = vmatprep.subr.bf16.mxu0 0
        %7454 = vmatpush1.bf16.msra.mxu0 0
        %7455 = vmatprep.mubr.bf16.mxu0 0
        %7456 = vmatmul.mubr.bf16.gmra.mrb[0].mxu0 %v7365
        %v7457 = vpop.f32.mrb[0].mxu0
        %v7458 = vadd.f32 %v7373, %v7457
        %v7459 = vpop.f32.mrb[0].mxu0
        %v7460 = vpop.f32.mrb[0].mxu0
        %v7461 = vadd.f32 %v7373, %v7460
        %v7462 = vpop.f32.mrb[0].mxu0
        %7463 = vmatprep.mubr.bf16.mxu0 0
        %7464 = vmatmul.mubr.bf16.gmra.mrb[0].mxu0 %v7366
        %v7465 = vpop.f32.mrb[0].mxu0
        %v7466 = vadd.f32 %v7373, %v7465
        %v7467 = vpop.f32.mrb[0].mxu0
        %v7468 = vpop.f32.mrb[0].mxu0
        %v7469 = vadd.f32 %v7373, %v7468
        %v7470 = vpop.f32.mrb[0].mxu0
        %7471 = vmatprep.mubr.bf16.mxu0 0
        %7472 = vmatmul.mubr.bf16.gmra.mrb[0].mxu0 %v7367
        %v7473 = vpop.f32.mrb[0].mxu0
        %v7474 = vadd.f32 %v7373, %v7473
        %v7475 = vpop.f32.mrb[0].mxu0
        %v7476 = vpop.f32.mrb[0].mxu0
        %v7477 = vpop.f32.mrb[0].mxu0
        %7478 = vdwg.mxu0
        %v7479 = vld [vmem:[#allocation38] sm:$0xf]
        %v7480 = vld [vmem:[#allocation38 + $0x4] sm:$0xf]
        %v7481 = vld [vmem:[#allocation38 + $0x8] sm:$0xf]
        %v7482 = vld [vmem:[#allocation38 + $0xc] sm:$0xf]
        %v7483 = vld [vmem:[#allocation38 + $0x10] sm:$0xf]
        %v7484 = vld [vmem:[#allocation38 + $0x14] sm:$0xf]
        %v7485 = vld [vmem:[#allocation38 + $0x18] sm:$0xf]
        %v7486 = vld [vmem:[#allocation38 + $0x1c] sm:$0xf]
        %v7487 = vld [vmem:[#allocation38 + $0x20] sm:$0xf]
        %v7488 = vld [vmem:[#allocation38 + $0x24] sm:$0xf]
        %v7489 = vld [vmem:[#allocation38 + $0x28] sm:$0xf]
        %v7490 = vld [vmem:[#allocation38 + $0x2c] sm:$0xf]
        %v7491 = vld [vmem:[#allocation38 + $0x30] sm:$0xf]
        %v7492 = vld [vmem:[#allocation38 + $0x34] sm:$0xf]
        %v7493 = vld [vmem:[#allocation38 + $0x38] sm:$0xf]
        %v7494 = vld [vmem:[#allocation38 + $0x3c] sm:$0xf]
        %v7495 = vpack.c.bf16 %v7461, %v7458
        %v7496 = vpack.c.bf16 %v7469, %v7466
        %v7497 = vpack.c.bf16 %v7474, %v7474
        %s7498 = scalar_lea.vmem [#allocation38], 64
        %v7499 = vld [vmem:[%s7498] sm:$0xf]
        %v7500 = vld [vmem:[%s7498 + $0x4] sm:$0xf]
        %v7501 = vld [vmem:[%s7498 + $0x8] sm:$0xf]
        %v7502 = vld [vmem:[%s7498 + $0xc] sm:$0xf]
        %v7503 = vld [vmem:[%s7498 + $0x10] sm:$0xf]
        %v7504 = vld [vmem:[%s7498 + $0x14] sm:$0xf]
        %v7505 = vld [vmem:[%s7498 + $0x18] sm:$0xf]
        %v7506 = vld [vmem:[%s7498 + $0x1c] sm:$0xf]
        %v7507 = vld [vmem:[%s7498 + $0x20] sm:$0xf]
        %v7508 = vld [vmem:[%s7498 + $0x24] sm:$0xf]
        %v7509 = vld [vmem:[%s7498 + $0x28] sm:$0xf]
        %v7510 = vld [vmem:[%s7498 + $0x2c] sm:$0xf]
        %v7511 = vld [vmem:[%s7498 + $0x30] sm:$0xf]
        %v7512 = vld [vmem:[%s7498 + $0x34] sm:$0xf]
        %v7513 = vld [vmem:[%s7498 + $0x38] sm:$0xf]
        %v7514 = vld [vmem:[%s7498 + $0x3c] sm:$0xf]
        %v7516 = vshrl.u32 %v7495, 16
        %v7518 = vshll.u32 %v7495, 16
        %v7520 = vrot.slane %v7518, 1
        %v7521 = vor.u32 %v7516, %v7520
        %v7523 = vshll.u32 %v7496, 16
        %v7525 = vrot.slane %v7523, 1
        %v7526 = vsel %vm2269, %v7521, %v7525
        %v7527 = vshrl.u32 %v7496, 16
        %v7529 = vor.u32 %v7527, %v7525
        %v7531 = vshll.u32 %v7497, 16
        %v7533 = vrot.slane %v7531, 1
        %v7534 = vsel %vm2269, %v7529, %v7533
        %v7535 = vshrl.u32 %v7497, 16
        %v7537 = vor.u32 %v7535, %v7533
        %v7557 = vunpack.c.l.b16 %v7499
        %v7558 = vunpack.c.l.b16 %v7500
        %v7559 = vunpack.c.l.b16 %v7501
        %v7560 = vunpack.c.l.b16 %v7502
        %v7561 = vunpack.c.l.b16 %v7503
        %v7562 = vunpack.c.l.b16 %v7504
        %v7563 = vunpack.c.l.b16 %v7505
        %v7564 = vunpack.c.l.b16 %v7506
        %v7565 = vunpack.c.l.b16 %v7507
        %v7566 = vunpack.c.l.b16 %v7508
        %v7567 = vunpack.c.l.b16 %v7509
        %v7568 = vunpack.c.l.b16 %v7510
        %v7569 = vunpack.c.l.b16 %v7511
        %v7570 = vunpack.c.l.b16 %v7512
        %v7571 = vunpack.c.l.b16 %v7513
        %v7572 = vunpack.c.l.b16 %v7514
        %v7573 = vpack.c.b16 %v7558, %v7557
        %v7574 = vpack.c.b16 %v7560, %v7559
        %v7575 = vpack.c.b16 %v7562, %v7561
        %v7576 = vpack.c.b16 %v7564, %v7563
        %v7577 = vpack.c.b16 %v7566, %v7565
        %v7578 = vpack.c.b16 %v7568, %v7567
        %v7579 = vpack.c.b16 %v7570, %v7569
        %v7580 = vpack.c.b16 %v7572, %v7571
        %7589 = vmatprep.subr.bf16.mxu0 0
        %7590 = vmatpush1.bf16.msra.mxu0 %v7573
        %7591 = vmatprep.subr.bf16.mxu0 0
        %7592 = vmatpush1.bf16.msra.mxu0 %v7574
        %7593 = vmatprep.subr.bf16.mxu0 0
        %7594 = vmatpush1.bf16.msra.mxu0 %v7575
        %7595 = vmatprep.subr.bf16.mxu0 0
        %7596 = vmatpush1.bf16.msra.mxu0 %v7576
        %7597 = vmatprep.subr.bf16.mxu0 0
        %7598 = vmatpush1.bf16.msra.mxu0 %v7577
        %7599 = vmatprep.subr.bf16.mxu0 0
        %7600 = vmatpush1.bf16.msra.mxu0 %v7578
        %7601 = vmatprep.subr.bf16.mxu0 0
        %7602 = vmatpush1.bf16.msra.mxu0 %v7579
        %7603 = vmatprep.subr.bf16.mxu0 0
        %7604 = vmatpush1.bf16.msra.mxu0 %v7580
        %7605 = vmatprep.subr.bf16.mxu0 0
        %7606 = vmatpush1.bf16.msra.mxu0 0
        %7607 = vmatprep.subr.bf16.mxu0 0
        %7608 = vmatpush1.bf16.msra.mxu0 0
        %7609 = vmatprep.subr.bf16.mxu0 0
        %7610 = vmatpush1.bf16.msra.mxu0 0
        %7611 = vmatprep.subr.bf16.mxu0 0
        %7612 = vmatpush1.bf16.msra.mxu0 0
        %7613 = vmatprep.subr.bf16.mxu0 0
        %7614 = vmatpush1.bf16.msra.mxu0 0
        %7615 = vmatprep.subr.bf16.mxu0 0
        %7616 = vmatpush1.bf16.msra.mxu0 0
        %7617 = vmatprep.subr.bf16.mxu0 0
        %7618 = vmatpush1.bf16.msra.mxu0 0
        %7619 = vmatprep.subr.bf16.mxu0 0
        %7620 = vmatpush1.bf16.msra.mxu0 0
        %7621 = vmatprep.mubr.bf16.mxu0 0
        %7622 = vmatmul.mubr.bf16.gmra.mrb[0].mxu0 %v7526
        %v7623 = vpop.f32.mrb[0].mxu0
        %v7624 = vadd.f32 0.0, %v7623
        %v7625 = vpop.f32.mrb[0].mxu0
        %v7626 = vpop.f32.mrb[0].mxu0
        %v7627 = vadd.f32 0.0, %v7626
        %v7628 = vpop.f32.mrb[0].mxu0
        %7629 = vmatprep.mubr.bf16.mxu0 0
        %7630 = vmatmul.mubr.bf16.gmra.mrb[0].mxu0 %v7534
        %v7631 = vpop.f32.mrb[0].mxu0
        %v7632 = vadd.f32 0.0, %v7631
        %v7633 = vpop.f32.mrb[0].mxu0
        %v7634 = vpop.f32.mrb[0].mxu0
        %v7635 = vadd.f32 0.0, %v7634
        %v7636 = vpop.f32.mrb[0].mxu0
        %7637 = vmatprep.mubr.bf16.mxu0 0
        %7638 = vmatmul.mubr.bf16.gmra.mrb[0].mxu0 %v7537
        %v7639 = vpop.f32.mrb[0].mxu0
        %v7640 = vadd.f32 0.0, %v7639
        %v7641 = vpop.f32.mrb[0].mxu0
        %v7642 = vpop.f32.mrb[0].mxu0
        %v7643 = vpop.f32.mrb[0].mxu0
        %7644 = vdwg.mxu0
        %v7661 = vunpack.c.l.b16 %v7479
        %v7662 = vunpack.c.l.b16 %v7480
        %v7663 = vunpack.c.l.b16 %v7481
        %v7664 = vunpack.c.l.b16 %v7482
        %v7665 = vunpack.c.l.b16 %v7483
        %v7666 = vunpack.c.l.b16 %v7484
        %v7667 = vunpack.c.l.b16 %v7485
        %v7668 = vunpack.c.l.b16 %v7486
        %v7669 = vunpack.c.l.b16 %v7487
        %v7670 = vunpack.c.l.b16 %v7488
        %v7671 = vunpack.c.l.b16 %v7489
        %v7672 = vunpack.c.l.b16 %v7490
        %v7673 = vunpack.c.l.b16 %v7491
        %v7674 = vunpack.c.l.b16 %v7492
        %v7675 = vunpack.c.l.b16 %v7493
        %v7676 = vunpack.c.l.b16 %v7494
        %v7677 = vpack.c.b16 %v7662, %v7661
        %v7678 = vpack.c.b16 %v7664, %v7663
        %v7679 = vpack.c.b16 %v7666, %v7665
        %v7680 = vpack.c.b16 %v7668, %v7667
        %v7681 = vpack.c.b16 %v7670, %v7669
        %v7682 = vpack.c.b16 %v7672, %v7671
        %v7683 = vpack.c.b16 %v7674, %v7673
        %v7684 = vpack.c.b16 %v7676, %v7675
        %7693 = vmatprep.subr.bf16.mxu0 0
        %7694 = vmatpush1.bf16.msra.mxu0 %v7677
        %7695 = vmatprep.subr.bf16.mxu0 0
        %7696 = vmatpush1.bf16.msra.mxu0 %v7678
        %7697 = vmatprep.subr.bf16.mxu0 0
        %7698 = vmatpush1.bf16.msra.mxu0 %v7679
        %7699 = vmatprep.subr.bf16.mxu0 0
        %7700 = vmatpush1.bf16.msra.mxu0 %v7680
        %7701 = vmatprep.subr.bf16.mxu0 0
        %7702 = vmatpush1.bf16.msra.mxu0 %v7681
        %7703 = vmatprep.subr.bf16.mxu0 0
        %7704 = vmatpush1.bf16.msra.mxu0 %v7682
        %7705 = vmatprep.subr.bf16.mxu0 0
        %7706 = vmatpush1.bf16.msra.mxu0 %v7683
        %7707 = vmatprep.subr.bf16.mxu0 0
        %7708 = vmatpush1.bf16.msra.mxu0 %v7684
        %7709 = vmatprep.subr.bf16.mxu0 0
        %7710 = vmatpush1.bf16.msra.mxu0 0
        %7711 = vmatprep.subr.bf16.mxu0 0
        %7712 = vmatpush1.bf16.msra.mxu0 0
        %7713 = vmatprep.subr.bf16.mxu0 0
        %7714 = vmatpush1.bf16.msra.mxu0 0
        %7715 = vmatprep.subr.bf16.mxu0 0
        %7716 = vmatpush1.bf16.msra.mxu0 0
        %7717 = vmatprep.subr.bf16.mxu0 0
        %7718 = vmatpush1.bf16.msra.mxu0 0
        %7719 = vmatprep.subr.bf16.mxu0 0
        %7720 = vmatpush1.bf16.msra.mxu0 0
        %7721 = vmatprep.subr.bf16.mxu0 0
        %7722 = vmatpush1.bf16.msra.mxu0 0
        %7723 = vmatprep.subr.bf16.mxu0 0
        %7724 = vmatpush1.bf16.msra.mxu0 0
        %7725 = vmatprep.mubr.bf16.mxu0 0
        %7726 = vmatmul.mubr.bf16.gmra.mrb[0].mxu0 %v7495
        %v7727 = vpop.f32.mrb[0].mxu0
        %v7728 = vadd.f32 %v7624, %v7727
        %v7729 = vpop.f32.mrb[0].mxu0
        %v7730 = vpop.f32.mrb[0].mxu0
        %v7731 = vadd.f32 %v7627, %v7730
        %v7732 = vpop.f32.mrb[0].mxu0
        %7733 = vmatprep.mubr.bf16.mxu0 0
        %7734 = vmatmul.mubr.bf16.gmra.mrb[0].mxu0 %v7496
        %v7735 = vpop.f32.mrb[0].mxu0
        %v7736 = vadd.f32 %v7632, %v7735
        %v7737 = vpop.f32.mrb[0].mxu0
        %v7738 = vpop.f32.mrb[0].mxu0
        %v7739 = vadd.f32 %v7635, %v7738
        %v7740 = vpop.f32.mrb[0].mxu0
        %7741 = vmatprep.mubr.bf16.mxu0 0
        %7742 = vmatmul.mubr.bf16.gmra.mrb[0].mxu0 %v7497
        %v7743 = vpop.f32.mrb[0].mxu0
        %v7744 = vadd.f32 %v7640, %v7743
        %v7745 = vpop.f32.mrb[0].mxu0
        %v7746 = vpop.f32.mrb[0].mxu0
        %v7747 = vpop.f32.mrb[0].mxu0
        %7748 = vdwg.mxu0
        %s7749 = scalar_lea.vmem [#allocation38], 128
        %v7750 = vld [vmem:[%s7749] sm:$0xf]
        %v7751 = vld [vmem:[%s7749 + $0x4] sm:$0xf]
        %v7752 = vld [vmem:[%s7749 + $0x8] sm:$0xf]
        %v7753 = vld [vmem:[%s7749 + $0xc] sm:$0xf]
        %v7754 = vld [vmem:[%s7749 + $0x10] sm:$0xf]
        %v7755 = vld [vmem:[%s7749 + $0x14] sm:$0xf]
        %v7756 = vld [vmem:[%s7749 + $0x18] sm:$0xf]
        %v7757 = vld [vmem:[%s7749 + $0x1c] sm:$0xf]
        %v7758 = vld [vmem:[%s7749 + $0x20] sm:$0xf]
        %v7759 = vld [vmem:[%s7749 + $0x24] sm:$0xf]
        %v7760 = vld [vmem:[%s7749 + $0x28] sm:$0xf]
        %v7761 = vld [vmem:[%s7749 + $0x2c] sm:$0xf]
        %v7762 = vld [vmem:[%s7749 + $0x30] sm:$0xf]
        %v7763 = vld [vmem:[%s7749 + $0x34] sm:$0xf]
        %v7764 = vld [vmem:[%s7749 + $0x38] sm:$0xf]
        %v7765 = vld [vmem:[%s7749 + $0x3c] sm:$0xf]
        %v7769 = vrot.slane %v7495, 1
        %v7770 = vrot.slane %v7496, 1
        %v7771 = vsel %vm2914, %v7769, %v7770
        %v7772 = vrot.slane %v7497, 1
        %v7773 = vsel %vm2914, %v7770, %v7772
        %v7793 = vunpack.c.l.b16 %v7750
        %v7794 = vunpack.c.l.b16 %v7751
        %v7795 = vunpack.c.l.b16 %v7752
        %v7796 = vunpack.c.l.b16 %v7753
        %v7797 = vunpack.c.l.b16 %v7754
        %v7798 = vunpack.c.l.b16 %v7755
        %v7799 = vunpack.c.l.b16 %v7756
        %v7800 = vunpack.c.l.b16 %v7757
        %v7801 = vunpack.c.l.b16 %v7758
        %v7802 = vunpack.c.l.b16 %v7759
        %v7803 = vunpack.c.l.b16 %v7760
        %v7804 = vunpack.c.l.b16 %v7761
        %v7805 = vunpack.c.l.b16 %v7762
        %v7806 = vunpack.c.l.b16 %v7763
        %v7807 = vunpack.c.l.b16 %v7764
        %v7808 = vunpack.c.l.b16 %v7765
        %v7809 = vpack.c.b16 %v7794, %v7793
        %v7810 = vpack.c.b16 %v7796, %v7795
        %v7811 = vpack.c.b16 %v7798, %v7797
        %v7812 = vpack.c.b16 %v7800, %v7799
        %v7813 = vpack.c.b16 %v7802, %v7801
        %v7814 = vpack.c.b16 %v7804, %v7803
        %v7815 = vpack.c.b16 %v7806, %v7805
        %v7816 = vpack.c.b16 %v7808, %v7807
        %7825 = vmatprep.subr.bf16.mxu0 0
        %7826 = vmatpush1.bf16.msra.mxu0 %v7809
        %7827 = vmatprep.subr.bf16.mxu0 0
        %7828 = vmatpush1.bf16.msra.mxu0 %v7810
        %7829 = vmatprep.subr.bf16.mxu0 0
        %7830 = vmatpush1.bf16.msra.mxu0 %v7811
        %7831 = vmatprep.subr.bf16.mxu0 0
        %7832 = vmatpush1.bf16.msra.mxu0 %v7812
        %7833 = vmatprep.subr.bf16.mxu0 0
        %7834 = vmatpush1.bf16.msra.mxu0 %v7813
        %7835 = vmatprep.subr.bf16.mxu0 0
        %7836 = vmatpush1.bf16.msra.mxu0 %v7814
        %7837 = vmatprep.subr.bf16.mxu0 0
        %7838 = vmatpush1.bf16.msra.mxu0 %v7815
        %7839 = vmatprep.subr.bf16.mxu0 0
        %7840 = vmatpush1.bf16.msra.mxu0 %v7816
        %7841 = vmatprep.subr.bf16.mxu0 0
        %7842 = vmatpush1.bf16.msra.mxu0 0
        %7843 = vmatprep.subr.bf16.mxu0 0
        %7844 = vmatpush1.bf16.msra.mxu0 0
        %7845 = vmatprep.subr.bf16.mxu0 0
        %7846 = vmatpush1.bf16.msra.mxu0 0
        %7847 = vmatprep.subr.bf16.mxu0 0
        %7848 = vmatpush1.bf16.msra.mxu0 0
        %7849 = vmatprep.subr.bf16.mxu0 0
        %7850 = vmatpush1.bf16.msra.mxu0 0
        %7851 = vmatprep.subr.bf16.mxu0 0
        %7852 = vmatpush1.bf16.msra.mxu0 0
        %7853 = vmatprep.subr.bf16.mxu0 0
        %7854 = vmatpush1.bf16.msra.mxu0 0
        %7855 = vmatprep.subr.bf16.mxu0 0
        %7856 = vmatpush1.bf16.msra.mxu0 0
        %7857 = vmatprep.mubr.bf16.mxu0 0
        %7858 = vmatmul.mubr.bf16.gmra.mrb[0].mxu0 %v7771
        %v7859 = vpop.f32.mrb[0].mxu0
        %v7860 = vadd.f32 0.0, %v7859
        %v7861 = vpop.f32.mrb[0].mxu0
        %v7862 = vpop.f32.mrb[0].mxu0
        %v7863 = vadd.f32 0.0, %v7862
        %v7864 = vpop.f32.mrb[0].mxu0
        %7865 = vmatprep.mubr.bf16.mxu0 0
        %7866 = vmatmul.mubr.bf16.gmra.mrb[0].mxu0 %v7773
        %v7867 = vpop.f32.mrb[0].mxu0
        %v7868 = vadd.f32 0.0, %v7867
        %v7869 = vpop.f32.mrb[0].mxu0
        %v7870 = vpop.f32.mrb[0].mxu0
        %v7871 = vadd.f32 0.0, %v7870
        %v7872 = vpop.f32.mrb[0].mxu0
        %7873 = vmatprep.mubr.bf16.mxu0 0
        %7874 = vmatmul.mubr.bf16.gmra.mrb[0].mxu0 %v7772
        %v7875 = vpop.f32.mrb[0].mxu0
        %v7876 = vadd.f32 0.0, %v7875
        %v7877 = vpop.f32.mrb[0].mxu0
        %v7878 = vpop.f32.mrb[0].mxu0
        %v7879 = vpop.f32.mrb[0].mxu0
        %7880 = vdwg.mxu0
        %v7881 = vadd.f32 %v7728, %v7860
        %v7882 = vadd.f32 %v7731, %v7863
        %v7883 = vadd.f32 %v7736, %v7868
        %v7884 = vadd.f32 %v7739, %v7871
        %v7885 = vadd.f32 %v7744, %v7876
        %s7886 = scalar_lea.vmem [#allocation38], 192
        %v7887 = vld [vmem:[%s7886] sm:$0xf]
        %v7888 = vld [vmem:[%s7886 + $0x4] sm:$0xf]
        %v7889 = vld [vmem:[%s7886 + $0x8] sm:$0xf]
        %v7890 = vld [vmem:[%s7886 + $0xc] sm:$0xf]
        %v7891 = vld [vmem:[%s7886 + $0x10] sm:$0xf]
        %v7892 = vld [vmem:[%s7886 + $0x14] sm:$0xf]
        %v7893 = vld [vmem:[%s7886 + $0x18] sm:$0xf]
        %v7894 = vld [vmem:[%s7886 + $0x1c] sm:$0xf]
        %v7895 = vld [vmem:[%s7886 + $0x20] sm:$0xf]
        %v7896 = vld [vmem:[%s7886 + $0x24] sm:$0xf]
        %v7897 = vld [vmem:[%s7886 + $0x28] sm:$0xf]
        %v7898 = vld [vmem:[%s7886 + $0x2c] sm:$0xf]
        %v7899 = vld [vmem:[%s7886 + $0x30] sm:$0xf]
        %v7900 = vld [vmem:[%s7886 + $0x34] sm:$0xf]
        %v7901 = vld [vmem:[%s7886 + $0x38] sm:$0xf]
        %v7902 = vld [vmem:[%s7886 + $0x3c] sm:$0xf]
        %v7903 = vrot.slane %v7516, 1
        %v7904 = vrot.slane %v7518, 2
        %v7905 = vor.u32 %v7903, %v7904
        %v7906 = vrot.slane %v7527, 1
        %v7907 = vrot.slane %v7523, 2
        %v7908 = vor.u32 %v7906, %v7907
        %v7909 = vsel %vm3049, %v7905, %v7908
        %v7910 = vrot.slane %v7535, 1
        %v7911 = vrot.slane %v7531, 2
        %v7912 = vor.u32 %v7910, %v7911
        %v7913 = vsel %vm3049, %v7908, %v7912
        %v7933 = vunpack.c.l.b16 %v7887
        %v7934 = vunpack.c.l.b16 %v7888
        %v7935 = vunpack.c.l.b16 %v7889
        %v7936 = vunpack.c.l.b16 %v7890
        %v7937 = vunpack.c.l.b16 %v7891
        %v7938 = vunpack.c.l.b16 %v7892
        %v7939 = vunpack.c.l.b16 %v7893
        %v7940 = vunpack.c.l.b16 %v7894
        %v7941 = vunpack.c.l.b16 %v7895
        %v7942 = vunpack.c.l.b16 %v7896
        %v7943 = vunpack.c.l.b16 %v7897
        %v7944 = vunpack.c.l.b16 %v7898
        %v7945 = vunpack.c.l.b16 %v7899
        %v7946 = vunpack.c.l.b16 %v7900
        %v7947 = vunpack.c.l.b16 %v7901
        %v7948 = vunpack.c.l.b16 %v7902
        %v7949 = vpack.c.b16 %v7934, %v7933
        %v7950 = vpack.c.b16 %v7936, %v7935
        %v7951 = vpack.c.b16 %v7938, %v7937
        %v7952 = vpack.c.b16 %v7940, %v7939
        %v7953 = vpack.c.b16 %v7942, %v7941
        %v7954 = vpack.c.b16 %v7944, %v7943
        %v7955 = vpack.c.b16 %v7946, %v7945
        %v7956 = vpack.c.b16 %v7948, %v7947
        %7965 = vmatprep.subr.bf16.mxu0 0
        %7966 = vmatpush1.bf16.msra.mxu0 %v7949
        %7967 = vmatprep.subr.bf16.mxu0 0
        %7968 = vmatpush1.bf16.msra.mxu0 %v7950
        %7969 = vmatprep.subr.bf16.mxu0 0
        %7970 = vmatpush1.bf16.msra.mxu0 %v7951
        %7971 = vmatprep.subr.bf16.mxu0 0
        %7972 = vmatpush1.bf16.msra.mxu0 %v7952
        %7973 = vmatprep.subr.bf16.mxu0 0
        %7974 = vmatpush1.bf16.msra.mxu0 %v7953
        %7975 = vmatprep.subr.bf16.mxu0 0
        %7976 = vmatpush1.bf16.msra.mxu0 %v7954
        %7977 = vmatprep.subr.bf16.mxu0 0
        %7978 = vmatpush1.bf16.msra.mxu0 %v7955
        %7979 = vmatprep.subr.bf16.mxu0 0
        %7980 = vmatpush1.bf16.msra.mxu0 %v7956
        %7981 = vmatprep.subr.bf16.mxu0 0
        %7982 = vmatpush1.bf16.msra.mxu0 0
        %7983 = vmatprep.subr.bf16.mxu0 0
        %7984 = vmatpush1.bf16.msra.mxu0 0
        %7985 = vmatprep.subr.bf16.mxu0 0
        %7986 = vmatpush1.bf16.msra.mxu0 0
        %7987 = vmatprep.subr.bf16.mxu0 0
        %7988 = vmatpush1.bf16.msra.mxu0 0
        %7989 = vmatprep.subr.bf16.mxu0 0
        %7990 = vmatpush1.bf16.msra.mxu0 0
        %7991 = vmatprep.subr.bf16.mxu0 0
        %7992 = vmatpush1.bf16.msra.mxu0 0
        %7993 = vmatprep.subr.bf16.mxu0 0
        %7994 = vmatpush1.bf16.msra.mxu0 0
        %7995 = vmatprep.subr.bf16.mxu0 0
        %7996 = vmatpush1.bf16.msra.mxu0 0
        %7997 = vmatprep.mubr.bf16.mxu0 0
        %7998 = vmatmul.mubr.bf16.gmra.mrb[0].mxu0 %v7909
        %v7999 = vpop.f32.mrb[0].mxu0
        %v8000 = vadd.f32 0.0, %v7999
        %v8001 = vpop.f32.mrb[0].mxu0
        %v8002 = vpop.f32.mrb[0].mxu0
        %v8003 = vadd.f32 0.0, %v8002
        %v8004 = vpop.f32.mrb[0].mxu0
        %8005 = vmatprep.mubr.bf16.mxu0 0
        %8006 = vmatmul.mubr.bf16.gmra.mrb[0].mxu0 %v7913
        %v8007 = vpop.f32.mrb[0].mxu0
        %v8008 = vadd.f32 0.0, %v8007
        %v8009 = vpop.f32.mrb[0].mxu0
        %v8010 = vpop.f32.mrb[0].mxu0
        %v8011 = vadd.f32 0.0, %v8010
        %v8012 = vpop.f32.mrb[0].mxu0
        %8013 = vmatprep.mubr.bf16.mxu0 0
        %8014 = vmatmul.mubr.bf16.gmra.mrb[0].mxu0 %v7912
        %v8015 = vpop.f32.mrb[0].mxu0
        %v8016 = vadd.f32 0.0, %v8015
        %v8017 = vpop.f32.mrb[0].mxu0
        %v8018 = vpop.f32.mrb[0].mxu0
        %v8019 = vpop.f32.mrb[0].mxu0
        %8020 = vdwg.mxu0
        %v8021 = vadd.f32 %v7881, %v8000
        %v8022 = vadd.f32 %v7882, %v8003
        %v8023 = vadd.f32 %v7883, %v8008
        %v8024 = vadd.f32 %v7884, %v8011
        %v8025 = vadd.f32 %v7885, %v8016
        %s8026 = scalar_lea.vmem [#allocation38], 256
        %v8027 = vld [vmem:[%s8026] sm:$0xf]
        %v8028 = vld [vmem:[%s8026 + $0x4] sm:$0xf]
        %v8029 = vld [vmem:[%s8026 + $0x8] sm:$0xf]
        %v8030 = vld [vmem:[%s8026 + $0xc] sm:$0xf]
        %v8031 = vld [vmem:[%s8026 + $0x10] sm:$0xf]
        %v8032 = vld [vmem:[%s8026 + $0x14] sm:$0xf]
        %v8033 = vld [vmem:[%s8026 + $0x18] sm:$0xf]
        %v8034 = vld [vmem:[%s8026 + $0x1c] sm:$0xf]
        %v8035 = vld [vmem:[%s8026 + $0x20] sm:$0xf]
        %v8036 = vld [vmem:[%s8026 + $0x24] sm:$0xf]
        %v8037 = vld [vmem:[%s8026 + $0x28] sm:$0xf]
        %v8038 = vld [vmem:[%s8026 + $0x2c] sm:$0xf]
        %v8039 = vld [vmem:[%s8026 + $0x30] sm:$0xf]
        %v8040 = vld [vmem:[%s8026 + $0x34] sm:$0xf]
        %v8041 = vld [vmem:[%s8026 + $0x38] sm:$0xf]
        %v8042 = vld [vmem:[%s8026 + $0x3c] sm:$0xf]
        %v8043 = vrot.slane %v7495, 2
        %v8044 = vrot.slane %v7496, 2
        %v8045 = vsel %vm3195, %v8043, %v8044
        %v8046 = vrot.slane %v7497, 2
        %v8047 = vsel %vm3195, %v8044, %v8046
        %v8067 = vunpack.c.l.b16 %v8027
        %v8068 = vunpack.c.l.b16 %v8028
        %v8069 = vunpack.c.l.b16 %v8029
        %v8070 = vunpack.c.l.b16 %v8030
        %v8071 = vunpack.c.l.b16 %v8031
        %v8072 = vunpack.c.l.b16 %v8032
        %v8073 = vunpack.c.l.b16 %v8033
        %v8074 = vunpack.c.l.b16 %v8034
        %v8075 = vunpack.c.l.b16 %v8035
        %v8076 = vunpack.c.l.b16 %v8036
        %v8077 = vunpack.c.l.b16 %v8037
        %v8078 = vunpack.c.l.b16 %v8038
        %v8079 = vunpack.c.l.b16 %v8039
        %v8080 = vunpack.c.l.b16 %v8040
        %v8081 = vunpack.c.l.b16 %v8041
        %v8082 = vunpack.c.l.b16 %v8042
        %v8083 = vpack.c.b16 %v8068, %v8067
        %v8084 = vpack.c.b16 %v8070, %v8069
        %v8085 = vpack.c.b16 %v8072, %v8071
        %v8086 = vpack.c.b16 %v8074, %v8073
        %v8087 = vpack.c.b16 %v8076, %v8075
        %v8088 = vpack.c.b16 %v8078, %v8077
        %v8089 = vpack.c.b16 %v8080, %v8079
        %v8090 = vpack.c.b16 %v8082, %v8081
        %8099 = vmatprep.subr.bf16.mxu0 0
        %8100 = vmatpush1.bf16.msra.mxu0 %v8083
        %8101 = vmatprep.subr.bf16.mxu0 0
        %8102 = vmatpush1.bf16.msra.mxu0 %v8084
        %8103 = vmatprep.subr.bf16.mxu0 0
        %8104 = vmatpush1.bf16.msra.mxu0 %v8085
        %8105 = vmatprep.subr.bf16.mxu0 0
        %8106 = vmatpush1.bf16.msra.mxu0 %v8086
        %8107 = vmatprep.subr.bf16.mxu0 0
        %8108 = vmatpush1.bf16.msra.mxu0 %v8087
        %8109 = vmatprep.subr.bf16.mxu0 0
        %8110 = vmatpush1.bf16.msra.mxu0 %v8088
        %8111 = vmatprep.subr.bf16.mxu0 0
        %8112 = vmatpush1.bf16.msra.mxu0 %v8089
        %8113 = vmatprep.subr.bf16.mxu0 0
        %8114 = vmatpush1.bf16.msra.mxu0 %v8090
        %8115 = vmatprep.subr.bf16.mxu0 0
        %8116 = vmatpush1.bf16.msra.mxu0 0
        %8117 = vmatprep.subr.bf16.mxu0 0
        %8118 = vmatpush1.bf16.msra.mxu0 0
        %8119 = vmatprep.subr.bf16.mxu0 0
        %8120 = vmatpush1.bf16.msra.mxu0 0
        %8121 = vmatprep.subr.bf16.mxu0 0
        %8122 = vmatpush1.bf16.msra.mxu0 0
        %8123 = vmatprep.subr.bf16.mxu0 0
        %8124 = vmatpush1.bf16.msra.mxu0 0
        %8125 = vmatprep.subr.bf16.mxu0 0
        %8126 = vmatpush1.bf16.msra.mxu0 0
        %8127 = vmatprep.subr.bf16.mxu0 0
        %8128 = vmatpush1.bf16.msra.mxu0 0
        %8129 = vmatprep.subr.bf16.mxu0 0
        %8130 = vmatpush1.bf16.msra.mxu0 0
        %8131 = vmatprep.mubr.bf16.mxu0 0
        %8132 = vmatmul.mubr.bf16.gmra.mrb[0].mxu0 %v8045
        %v8133 = vpop.f32.mrb[0].mxu0
        %v8134 = vadd.f32 0.0, %v8133
        %v8135 = vpop.f32.mrb[0].mxu0
        %v8136 = vpop.f32.mrb[0].mxu0
        %v8137 = vadd.f32 0.0, %v8136
        %v8138 = vpop.f32.mrb[0].mxu0
        %8139 = vmatprep.mubr.bf16.mxu0 0
        %8140 = vmatmul.mubr.bf16.gmra.mrb[0].mxu0 %v8047
        %v8141 = vpop.f32.mrb[0].mxu0
        %v8142 = vadd.f32 0.0, %v8141
        %v8143 = vpop.f32.mrb[0].mxu0
        %v8144 = vpop.f32.mrb[0].mxu0
        %v8145 = vadd.f32 0.0, %v8144
        %v8146 = vpop.f32.mrb[0].mxu0
        %8147 = vmatprep.mubr.bf16.mxu0 0
        %8148 = vmatmul.mubr.bf16.gmra.mrb[0].mxu0 %v8046
        %v8149 = vpop.f32.mrb[0].mxu0
        %v8150 = vadd.f32 0.0, %v8149
        %v8151 = vpop.f32.mrb[0].mxu0
        %v8152 = vpop.f32.mrb[0].mxu0
        %v8153 = vpop.f32.mrb[0].mxu0
        %8154 = vdwg.mxu0
        %v8155 = vadd.f32 %v8021, %v8134
        %v8156 = vadd.f32 %v8022, %v8137
        %v8157 = vadd.f32 %v8023, %v8142
        %v8158 = vadd.f32 %v8024, %v8145
        %v8159 = vadd.f32 %v8025, %v8150
        %v8160 = vld [vmem:[#allocation40] sm:$0x1]
        %v8162 = vlaneseq
        %v8163 = vshrl.u32 %v8162, 7
        %v8164 = vsub.s32 0, %v8163
        %v8165 = vrot.slane %v8160, %v8164
        %v8167 = vadd.f32 %v8155, %v8165
        %v8168 = vadd.f32 %v8156, %v8165
        %v8169 = vadd.f32 %v8157, %v8165
        %v8170 = vadd.f32 %v8158, %v8165
        %v8171 = vadd.f32 %v8159, %v8165
        %v8172 = vmax.f32 %v8167, 0.0
        %v8173 = vmax.f32 %v8168, 0.0
        %v8174 = vmax.f32 %v8169, 0.0
        %v8175 = vmax.f32 %v8170, 0.0
        %v8176 = vmax.f32 %v8171, 0.0
        %v8177 = vld [vmem:[#allocation41] sm:$0xf]
        %v8178 = vld [vmem:[#allocation41 + $0x4] sm:$0xf]
        %v8179 = vld [vmem:[#allocation41 + $0x8] sm:$0xf]
        %v8180 = vld [vmem:[#allocation41 + $0xc] sm:$0xf]
        %v8181 = vld [vmem:[#allocation41 + $0x10] sm:$0xf]
        %v8182 = vld [vmem:[#allocation41 + $0x14] sm:$0xf]
        %v8183 = vld [vmem:[#allocation41 + $0x18] sm:$0xf]
        %v8184 = vld [vmem:[#allocation41 + $0x1c] sm:$0xf]
        %v8185 = vld [vmem:[#allocation41 + $0x20] sm:$0xf]
        %v8186 = vld [vmem:[#allocation41 + $0x24] sm:$0xf]
        %v8187 = vld [vmem:[#allocation41 + $0x28] sm:$0xf]
        %v8188 = vld [vmem:[#allocation41 + $0x2c] sm:$0xf]
        %v8189 = vld [vmem:[#allocation41 + $0x30] sm:$0xf]
        %v8190 = vld [vmem:[#allocation41 + $0x34] sm:$0xf]
        %v8191 = vld [vmem:[#allocation41 + $0x38] sm:$0xf]
        %v8192 = vld [vmem:[#allocation41 + $0x3c] sm:$0xf]
        %v8193 = vpack.c.bf16 %v8173, %v8172
        %v8194 = vpack.c.bf16 %v8175, %v8174
        %s8195 = scalar_lea.vmem [#allocation41], 64
        %v8196 = vld [vmem:[%s8195] sm:$0xf]
        %v8197 = vld [vmem:[%s8195 + $0x4] sm:$0xf]
        %v8198 = vld [vmem:[%s8195 + $0x8] sm:$0xf]
        %v8199 = vld [vmem:[%s8195 + $0xc] sm:$0xf]
        %v8200 = vld [vmem:[%s8195 + $0x10] sm:$0xf]
        %v8201 = vld [vmem:[%s8195 + $0x14] sm:$0xf]
        %v8202 = vld [vmem:[%s8195 + $0x18] sm:$0xf]
        %v8203 = vld [vmem:[%s8195 + $0x1c] sm:$0xf]
        %v8204 = vld [vmem:[%s8195 + $0x20] sm:$0xf]
        %v8205 = vld [vmem:[%s8195 + $0x24] sm:$0xf]
        %v8206 = vld [vmem:[%s8195 + $0x28] sm:$0xf]
        %v8207 = vld [vmem:[%s8195 + $0x2c] sm:$0xf]
        %v8208 = vld [vmem:[%s8195 + $0x30] sm:$0xf]
        %v8209 = vld [vmem:[%s8195 + $0x34] sm:$0xf]
        %v8210 = vld [vmem:[%s8195 + $0x38] sm:$0xf]
        %v8211 = vld [vmem:[%s8195 + $0x3c] sm:$0xf]
        %v8212 = vpack.c.bf16 %v8176, %v8176
        %v8216 = vrot.slane %v8193, 1
        %v8217 = vrot.slane %v8194, 1
        %v8218 = vsel %vm2914, %v8216, %v8217
        %v8219 = vrot.slane %v8212, 1
        %v8220 = vsel %vm2914, %v8217, %v8219
        %v8239 = vunpack.c.l.b16 %v8196
        %v8240 = vunpack.c.l.b16 %v8197
        %v8241 = vunpack.c.l.b16 %v8198
        %v8242 = vunpack.c.l.b16 %v8199
        %v8243 = vunpack.c.l.b16 %v8200
        %v8244 = vunpack.c.l.b16 %v8201
        %v8245 = vunpack.c.l.b16 %v8202
        %v8246 = vunpack.c.l.b16 %v8203
        %v8247 = vunpack.c.l.b16 %v8204
        %v8248 = vunpack.c.l.b16 %v8205
        %v8249 = vunpack.c.l.b16 %v8206
        %v8250 = vunpack.c.l.b16 %v8207
        %v8251 = vunpack.c.l.b16 %v8208
        %v8252 = vunpack.c.l.b16 %v8209
        %v8253 = vunpack.c.l.b16 %v8210
        %v8254 = vunpack.c.l.b16 %v8211
        %v8255 = vpack.c.b16 %v8240, %v8239
        %v8256 = vpack.c.b16 %v8242, %v8241
        %v8257 = vpack.c.b16 %v8244, %v8243
        %v8258 = vpack.c.b16 %v8246, %v8245
        %v8259 = vpack.c.b16 %v8248, %v8247
        %v8260 = vpack.c.b16 %v8250, %v8249
        %v8261 = vpack.c.b16 %v8252, %v8251
        %v8262 = vpack.c.b16 %v8254, %v8253
        %8271 = vmatprep.subr.bf16.mxu0 0
        %8272 = vmatpush1.bf16.msra.mxu0 %v8255
        %8273 = vmatprep.subr.bf16.mxu0 0
        %8274 = vmatpush1.bf16.msra.mxu0 %v8256
        %8275 = vmatprep.subr.bf16.mxu0 0
        %8276 = vmatpush1.bf16.msra.mxu0 %v8257
        %8277 = vmatprep.subr.bf16.mxu0 0
        %8278 = vmatpush1.bf16.msra.mxu0 %v8258
        %8279 = vmatprep.subr.bf16.mxu0 0
        %8280 = vmatpush1.bf16.msra.mxu0 %v8259
        %8281 = vmatprep.subr.bf16.mxu0 0
        %8282 = vmatpush1.bf16.msra.mxu0 %v8260
        %8283 = vmatprep.subr.bf16.mxu0 0
        %8284 = vmatpush1.bf16.msra.mxu0 %v8261
        %8285 = vmatprep.subr.bf16.mxu0 0
        %8286 = vmatpush1.bf16.msra.mxu0 %v8262
        %8287 = vmatprep.subr.bf16.mxu0 0
        %8288 = vmatpush1.bf16.msra.mxu0 0
        %8289 = vmatprep.subr.bf16.mxu0 0
        %8290 = vmatpush1.bf16.msra.mxu0 0
        %8291 = vmatprep.subr.bf16.mxu0 0
        %8292 = vmatpush1.bf16.msra.mxu0 0
        %8293 = vmatprep.subr.bf16.mxu0 0
        %8294 = vmatpush1.bf16.msra.mxu0 0
        %8295 = vmatprep.subr.bf16.mxu0 0
        %8296 = vmatpush1.bf16.msra.mxu0 0
        %8297 = vmatprep.subr.bf16.mxu0 0
        %8298 = vmatpush1.bf16.msra.mxu0 0
        %8299 = vmatprep.subr.bf16.mxu0 0
        %8300 = vmatpush1.bf16.msra.mxu0 0
        %8301 = vmatprep.subr.bf16.mxu0 0
        %8302 = vmatpush1.bf16.msra.mxu0 0
        %8303 = vmatprep.mubr.bf16.mxu0 0
        %8304 = vmatmul.mubr.bf16.gmra.mrb[0].mxu0 %v8218
        %v8305 = vpop.f32.mrb[0].mxu0
        %v8306 = vadd.f32 0.0, %v8305
        %v8307 = vpop.f32.mrb[0].mxu0
        %v8308 = vpop.f32.mrb[0].mxu0
        %v8309 = vadd.f32 0.0, %v8308
        %v8310 = vpop.f32.mrb[0].mxu0
        %8311 = vmatprep.mubr.bf16.mxu0 0
        %8312 = vmatmul.mubr.bf16.gmra.mrb[0].mxu0 %v8220
        %v8313 = vpop.f32.mrb[0].mxu0
        %v8314 = vadd.f32 0.0, %v8313
        %v8315 = vpop.f32.mrb[0].mxu0
        %v8316 = vpop.f32.mrb[0].mxu0
        %v8317 = vadd.f32 0.0, %v8316
        %v8318 = vpop.f32.mrb[0].mxu0
        %8319 = vdwg.mxu0
        %v8336 = vunpack.c.l.b16 %v8177
        %v8337 = vunpack.c.l.b16 %v8178
        %v8338 = vunpack.c.l.b16 %v8179
        %v8339 = vunpack.c.l.b16 %v8180
        %v8340 = vunpack.c.l.b16 %v8181
        %v8341 = vunpack.c.l.b16 %v8182
        %v8342 = vunpack.c.l.b16 %v8183
        %v8343 = vunpack.c.l.b16 %v8184
        %v8344 = vunpack.c.l.b16 %v8185
        %v8345 = vunpack.c.l.b16 %v8186
        %v8346 = vunpack.c.l.b16 %v8187
        %v8347 = vunpack.c.l.b16 %v8188
        %v8348 = vunpack.c.l.b16 %v8189
        %v8349 = vunpack.c.l.b16 %v8190
        %v8350 = vunpack.c.l.b16 %v8191
        %v8351 = vunpack.c.l.b16 %v8192
        %v8352 = vpack.c.b16 %v8337, %v8336
        %v8353 = vpack.c.b16 %v8339, %v8338
        %v8354 = vpack.c.b16 %v8341, %v8340
        %v8355 = vpack.c.b16 %v8343, %v8342
        %v8356 = vpack.c.b16 %v8345, %v8344
        %v8357 = vpack.c.b16 %v8347, %v8346
        %v8358 = vpack.c.b16 %v8349, %v8348
        %v8359 = vpack.c.b16 %v8351, %v8350
        %8368 = vmatprep.subr.bf16.mxu0 0
        %8369 = vmatpush1.bf16.msra.mxu0 %v8352
        %8370 = vmatprep.subr.bf16.mxu0 0
        %8371 = vmatpush1.bf16.msra.mxu0 %v8353
        %8372 = vmatprep.subr.bf16.mxu0 0
        %8373 = vmatpush1.bf16.msra.mxu0 %v8354
        %8374 = vmatprep.subr.bf16.mxu0 0
        %8375 = vmatpush1.bf16.msra.mxu0 %v8355
        %8376 = vmatprep.subr.bf16.mxu0 0
        %8377 = vmatpush1.bf16.msra.mxu0 %v8356
        %8378 = vmatprep.subr.bf16.mxu0 0
        %8379 = vmatpush1.bf16.msra.mxu0 %v8357
        %8380 = vmatprep.subr.bf16.mxu0 0
        %8381 = vmatpush1.bf16.msra.mxu0 %v8358
        %8382 = vmatprep.subr.bf16.mxu0 0
        %8383 = vmatpush1.bf16.msra.mxu0 %v8359
        %8384 = vmatprep.subr.bf16.mxu0 0
        %8385 = vmatpush1.bf16.msra.mxu0 0
        %8386 = vmatprep.subr.bf16.mxu0 0
        %8387 = vmatpush1.bf16.msra.mxu0 0
        %8388 = vmatprep.subr.bf16.mxu0 0
        %8389 = vmatpush1.bf16.msra.mxu0 0
        %8390 = vmatprep.subr.bf16.mxu0 0
        %8391 = vmatpush1.bf16.msra.mxu0 0
        %8392 = vmatprep.subr.bf16.mxu0 0
        %8393 = vmatpush1.bf16.msra.mxu0 0
        %8394 = vmatprep.subr.bf16.mxu0 0
        %8395 = vmatpush1.bf16.msra.mxu0 0
        %8396 = vmatprep.subr.bf16.mxu0 0
        %8397 = vmatpush1.bf16.msra.mxu0 0
        %8398 = vmatprep.subr.bf16.mxu0 0
        %8399 = vmatpush1.bf16.msra.mxu0 0
        %8400 = vmatprep.mubr.bf16.mxu0 0
        %8401 = vmatmul.mubr.bf16.gmra.mrb[0].mxu0 %v8193
        %v8402 = vpop.f32.mrb[0].mxu0
        %v8403 = vadd.f32 %v8306, %v8402
        %v8404 = vpop.f32.mrb[0].mxu0
        %v8405 = vpop.f32.mrb[0].mxu0
        %v8406 = vadd.f32 %v8309, %v8405
        %v8407 = vpop.f32.mrb[0].mxu0
        %8408 = vmatprep.mubr.bf16.mxu0 0
        %8409 = vmatmul.mubr.bf16.gmra.mrb[0].mxu0 %v8194
        %v8410 = vpop.f32.mrb[0].mxu0
        %v8411 = vadd.f32 %v8314, %v8410
        %v8412 = vpop.f32.mrb[0].mxu0
        %v8413 = vpop.f32.mrb[0].mxu0
        %v8414 = vadd.f32 %v8317, %v8413
        %v8415 = vpop.f32.mrb[0].mxu0
        %8416 = vdwg.mxu0
        %s8417 = scalar_lea.vmem [#allocation41], 128
        %v8418 = vld [vmem:[%s8417] sm:$0xf]
        %v8419 = vld [vmem:[%s8417 + $0x4] sm:$0xf]
        %v8420 = vld [vmem:[%s8417 + $0x8] sm:$0xf]
        %v8421 = vld [vmem:[%s8417 + $0xc] sm:$0xf]
        %v8422 = vld [vmem:[%s8417 + $0x10] sm:$0xf]
        %v8423 = vld [vmem:[%s8417 + $0x14] sm:$0xf]
        %v8424 = vld [vmem:[%s8417 + $0x18] sm:$0xf]
        %v8425 = vld [vmem:[%s8417 + $0x1c] sm:$0xf]
        %v8426 = vld [vmem:[%s8417 + $0x20] sm:$0xf]
        %v8427 = vld [vmem:[%s8417 + $0x24] sm:$0xf]
        %v8428 = vld [vmem:[%s8417 + $0x28] sm:$0xf]
        %v8429 = vld [vmem:[%s8417 + $0x2c] sm:$0xf]
        %v8430 = vld [vmem:[%s8417 + $0x30] sm:$0xf]
        %v8431 = vld [vmem:[%s8417 + $0x34] sm:$0xf]
        %v8432 = vld [vmem:[%s8417 + $0x38] sm:$0xf]
        %v8433 = vld [vmem:[%s8417 + $0x3c] sm:$0xf]
        %v8434 = vrot.slane %v8193, 2
        %v8435 = vrot.slane %v8194, 2
        %v8436 = vsel %vm3195, %v8434, %v8435
        %v8437 = vrot.slane %v8212, 2
        %v8438 = vsel %vm3195, %v8435, %v8437
        %v8457 = vunpack.c.l.b16 %v8418
        %v8458 = vunpack.c.l.b16 %v8419
        %v8459 = vunpack.c.l.b16 %v8420
        %v8460 = vunpack.c.l.b16 %v8421
        %v8461 = vunpack.c.l.b16 %v8422
        %v8462 = vunpack.c.l.b16 %v8423
        %v8463 = vunpack.c.l.b16 %v8424
        %v8464 = vunpack.c.l.b16 %v8425
        %v8465 = vunpack.c.l.b16 %v8426
        %v8466 = vunpack.c.l.b16 %v8427
        %v8467 = vunpack.c.l.b16 %v8428
        %v8468 = vunpack.c.l.b16 %v8429
        %v8469 = vunpack.c.l.b16 %v8430
        %v8470 = vunpack.c.l.b16 %v8431
        %v8471 = vunpack.c.l.b16 %v8432
        %v8472 = vunpack.c.l.b16 %v8433
        %v8473 = vpack.c.b16 %v8458, %v8457
        %v8474 = vpack.c.b16 %v8460, %v8459
        %v8475 = vpack.c.b16 %v8462, %v8461
        %v8476 = vpack.c.b16 %v8464, %v8463
        %v8477 = vpack.c.b16 %v8466, %v8465
        %v8478 = vpack.c.b16 %v8468, %v8467
        %v8479 = vpack.c.b16 %v8470, %v8469
        %v8480 = vpack.c.b16 %v8472, %v8471
        %8489 = vmatprep.subr.bf16.mxu0 0
        %8490 = vmatpush1.bf16.msra.mxu0 %v8473
        %8491 = vmatprep.subr.bf16.mxu0 0
        %8492 = vmatpush1.bf16.msra.mxu0 %v8474
        %8493 = vmatprep.subr.bf16.mxu0 0
        %8494 = vmatpush1.bf16.msra.mxu0 %v8475
        %8495 = vmatprep.subr.bf16.mxu0 0
        %8496 = vmatpush1.bf16.msra.mxu0 %v8476
        %8497 = vmatprep.subr.bf16.mxu0 0
        %8498 = vmatpush1.bf16.msra.mxu0 %v8477
        %8499 = vmatprep.subr.bf16.mxu0 0
        %8500 = vmatpush1.bf16.msra.mxu0 %v8478
        %8501 = vmatprep.subr.bf16.mxu0 0
        %8502 = vmatpush1.bf16.msra.mxu0 %v8479
        %8503 = vmatprep.subr.bf16.mxu0 0
        %8504 = vmatpush1.bf16.msra.mxu0 %v8480
        %8505 = vmatprep.subr.bf16.mxu0 0
        %8506 = vmatpush1.bf16.msra.mxu0 0
        %8507 = vmatprep.subr.bf16.mxu0 0
        %8508 = vmatpush1.bf16.msra.mxu0 0
        %8509 = vmatprep.subr.bf16.mxu0 0
        %8510 = vmatpush1.bf16.msra.mxu0 0
        %8511 = vmatprep.subr.bf16.mxu0 0
        %8512 = vmatpush1.bf16.msra.mxu0 0
        %8513 = vmatprep.subr.bf16.mxu0 0
        %8514 = vmatpush1.bf16.msra.mxu0 0
        %8515 = vmatprep.subr.bf16.mxu0 0
        %8516 = vmatpush1.bf16.msra.mxu0 0
        %8517 = vmatprep.subr.bf16.mxu0 0
        %8518 = vmatpush1.bf16.msra.mxu0 0
        %8519 = vmatprep.subr.bf16.mxu0 0
        %8520 = vmatpush1.bf16.msra.mxu0 0
        %8521 = vmatprep.mubr.bf16.mxu0 0
        %8522 = vmatmul.mubr.bf16.gmra.mrb[0].mxu0 %v8436
        %v8523 = vpop.f32.mrb[0].mxu0
        %v8524 = vadd.f32 0.0, %v8523
        %v8525 = vpop.f32.mrb[0].mxu0
        %v8526 = vpop.f32.mrb[0].mxu0
        %v8527 = vadd.f32 0.0, %v8526
        %v8528 = vpop.f32.mrb[0].mxu0
        %8529 = vmatprep.mubr.bf16.mxu0 0
        %8530 = vmatmul.mubr.bf16.gmra.mrb[0].mxu0 %v8438
        %v8531 = vpop.f32.mrb[0].mxu0
        %v8532 = vadd.f32 0.0, %v8531
        %v8533 = vpop.f32.mrb[0].mxu0
        %v8534 = vpop.f32.mrb[0].mxu0
        %v8535 = vadd.f32 0.0, %v8534
        %v8536 = vpop.f32.mrb[0].mxu0
        %8537 = vdwg.mxu0
        %v8538 = vadd.f32 %v8403, %v8524
        %v8539 = vadd.f32 %v8406, %v8527
        %v8540 = vadd.f32 %v8411, %v8532
        %v8541 = vadd.f32 %v8414, %v8535
        %v8542 = vld [vmem:[%s67] sm:$0x1]
        %v8544 = vlaneseq
        %v8545 = vshrl.u32 %v8544, 7
        %v8546 = vsub.s32 0, %v8545
        %v8547 = vrot.slane %v8542, %v8546
        %v8549 = vadd.f32 %v8538, %v8547
        %v8550 = vadd.f32 %v8539, %v8547
        %v8551 = vadd.f32 %v8540, %v8547
        %v8552 = vadd.f32 %v8541, %v8547
        %v8553 = vmax.f32 %v8549, 0.0
        %v8554 = vmax.f32 %v8550, 0.0
        %v8555 = vmax.f32 %v8551, 0.0
        %v8556 = vmax.f32 %v8552, 0.0
        %v8557 = vld [vmem:[%s69] sm:$0xf]
        %v8558 = vld [vmem:[%s69 + $0x4] sm:$0xf]
        %v8559 = vld [vmem:[%s69 + $0x8] sm:$0xf]
        %v8560 = vld [vmem:[%s69 + $0xc] sm:$0xf]
        %v8561 = vld [vmem:[%s69 + $0x10] sm:$0xf]
        %v8562 = vld [vmem:[%s69 + $0x14] sm:$0xf]
        %v8563 = vld [vmem:[%s69 + $0x18] sm:$0xf]
        %v8564 = vld [vmem:[%s69 + $0x1c] sm:$0xf]
        %v8565 = vld [vmem:[%s69 + $0x20] sm:$0xf]
        %v8566 = vld [vmem:[%s69 + $0x24] sm:$0xf]
        %v8567 = vld [vmem:[%s69 + $0x28] sm:$0xf]
        %v8568 = vld [vmem:[%s69 + $0x2c] sm:$0xf]
        %v8569 = vld [vmem:[%s69 + $0x30] sm:$0xf]
        %v8570 = vld [vmem:[%s69 + $0x34] sm:$0xf]
        %v8571 = vld [vmem:[%s69 + $0x38] sm:$0xf]
        %v8572 = vld [vmem:[%s69 + $0x3c] sm:$0xf]
        %v8573 = vpack.c.bf16 %v8554, %v8553
        %v8574 = vpack.c.bf16 %v8556, %v8555
        %v8575 = vld [vmem:[%s71] sm:$0x1]
        %v8577 = vlaneseq
        %v8578 = vshrl.u32 %v8577, 7
        %v8579 = vsub.s32 0, %v8578
        %v8580 = vrot.slane %v8575, %v8579
        %v8598 = vunpack.c.l.b16 %v8557
        %v8599 = vunpack.c.l.b16 %v8558
        %v8600 = vunpack.c.l.b16 %v8559
        %v8601 = vunpack.c.l.b16 %v8560
        %v8602 = vunpack.c.l.b16 %v8561
        %v8603 = vunpack.c.l.b16 %v8562
        %v8604 = vunpack.c.l.b16 %v8563
        %v8605 = vunpack.c.l.b16 %v8564
        %v8606 = vunpack.c.l.b16 %v8565
        %v8607 = vunpack.c.l.b16 %v8566
        %v8608 = vunpack.c.l.b16 %v8567
        %v8609 = vunpack.c.l.b16 %v8568
        %v8610 = vunpack.c.l.b16 %v8569
        %v8611 = vunpack.c.l.b16 %v8570
        %v8612 = vunpack.c.l.b16 %v8571
        %v8613 = vunpack.c.l.b16 %v8572
        %v8614 = vpack.c.b16 %v8599, %v8598
        %v8615 = vpack.c.b16 %v8601, %v8600
        %v8616 = vpack.c.b16 %v8603, %v8602
        %v8617 = vpack.c.b16 %v8605, %v8604
        %v8618 = vpack.c.b16 %v8607, %v8606
        %v8619 = vpack.c.b16 %v8609, %v8608
        %v8620 = vpack.c.b16 %v8611, %v8610
        %v8621 = vpack.c.b16 %v8613, %v8612
        %8630 = vmatprep.subr.bf16.mxu0 0
        %8631 = vmatpush1.bf16.msra.mxu0 %v8614
        %8632 = vmatprep.subr.bf16.mxu0 0
        %8633 = vmatpush1.bf16.msra.mxu0 %v8615
        %8634 = vmatprep.subr.bf16.mxu0 0
        %8635 = vmatpush1.bf16.msra.mxu0 %v8616
        %8636 = vmatprep.subr.bf16.mxu0 0
        %8637 = vmatpush1.bf16.msra.mxu0 %v8617
        %8638 = vmatprep.subr.bf16.mxu0 0
        %8639 = vmatpush1.bf16.msra.mxu0 %v8618
        %8640 = vmatprep.subr.bf16.mxu0 0
        %8641 = vmatpush1.bf16.msra.mxu0 %v8619
        %8642 = vmatprep.subr.bf16.mxu0 0
        %8643 = vmatpush1.bf16.msra.mxu0 %v8620
        %8644 = vmatprep.subr.bf16.mxu0 0
        %8645 = vmatpush1.bf16.msra.mxu0 %v8621
        %8646 = vmatprep.subr.bf16.mxu0 0
        %8647 = vmatpush1.bf16.msra.mxu0 0
        %8648 = vmatprep.subr.bf16.mxu0 0
        %8649 = vmatpush1.bf16.msra.mxu0 0
        %8650 = vmatprep.subr.bf16.mxu0 0
        %8651 = vmatpush1.bf16.msra.mxu0 0
        %8652 = vmatprep.subr.bf16.mxu0 0
        %8653 = vmatpush1.bf16.msra.mxu0 0
        %8654 = vmatprep.subr.bf16.mxu0 0
        %8655 = vmatpush1.bf16.msra.mxu0 0
        %8656 = vmatprep.subr.bf16.mxu0 0
        %8657 = vmatpush1.bf16.msra.mxu0 0
        %8658 = vmatprep.subr.bf16.mxu0 0
        %8659 = vmatpush1.bf16.msra.mxu0 0
        %8660 = vmatprep.subr.bf16.mxu0 0
        %8661 = vmatpush1.bf16.msra.mxu0 0
        %8662 = vmatprep.mubr.bf16.mxu0 0
        %8663 = vmatmul.mubr.bf16.gmra.mrb[0].mxu0 %v8573
        %v8664 = vpop.f32.mrb[0].mxu0
        %v8665 = vadd.f32 %v8580, %v8664
        %v8666 = vpop.f32.mrb[0].mxu0
        %v8667 = vpop.f32.mrb[0].mxu0
        %v8668 = vadd.f32 %v8580, %v8667
        %v8669 = vpop.f32.mrb[0].mxu0
        %8670 = vmatprep.mubr.bf16.mxu0 0
        %8671 = vmatmul.mubr.bf16.gmra.mrb[0].mxu0 %v8574
        %v8672 = vpop.f32.mrb[0].mxu0
        %v8673 = vadd.f32 %v8580, %v8672
        %v8674 = vpop.f32.mrb[0].mxu0
        %v8675 = vpop.f32.mrb[0].mxu0
        %v8676 = vadd.f32 %v8580, %v8675
        %v8677 = vpop.f32.mrb[0].mxu0
        %8678 = vdwg.mxu0
        %v8679 = vmax.f32 %v8665, 0.0
        %v8680 = vmax.f32 %v8668, 0.0
        %v8681 = vmax.f32 %v8673, 0.0
        %v8682 = vmax.f32 %v8676, 0.0
        %v8683 = vadd.f32 %v8679, %v8680
        %v8684 = vadd.f32 %v8683, %v8681
        %v8685 = vsel %vm1699, %v8682, 0.0
        %v8686 = vadd.f32 %v8684, %v8685
        %v8687 = vrot.slane %v8686, 4
        %v8688 = vadd.f32 %v8686, %v8687
        %v8689 = vrot.slane %v8688, 2
        %v8690 = vadd.f32 %v8688, %v8689
        %v8691 = vrot.slane %v8690, 1
        %v8692 = vadd.f32 %v8690, %v8691
        %v8693 = vrcp.pop 31.0
        %v8694 = vmul.f32 %v8692, %v8693
        %v8695 = vsub.f32 %v8679, %v8694
        %v8696 = vsub.f32 %v8680, %v8694
        %v8697 = vsub.f32 %v8681, %v8694
        %v8698 = vsub.f32 %v8682, %v8694
        %v8699 = vmul.f32 %v8695, %v8695
        %v8700 = vmul.f32 %v8696, %v8696
        %v8701 = vmul.f32 %v8697, %v8697
        %v8702 = vmul.f32 %v8698, %v8698
        %v8703 = vadd.f32 %v8699, %v8700
        %v8704 = vadd.f32 %v8703, %v8701
        %v8705 = vsel %vm1699, %v8702, 0.0
        %v8706 = vadd.f32 %v8704, %v8705
        %v8707 = vrot.slane %v8706, 4
        %v8708 = vadd.f32 %v8706, %v8707
        %v8709 = vrot.slane %v8708, 2
        %v8710 = vadd.f32 %v8708, %v8709
        %v8711 = vrot.slane %v8710, 1
        %v8712 = vadd.f32 %v8710, %v8711
        %v8713 = vrcp.pop 30.0
        %v8714 = vmul.f32 %v8712, %v8713
        %v8715 = vrsqrt.pop %v8714
        %v8716 = vmul.f32 %v8714, %v8715
        %vm8717 = vcmp.eq.f32.partialorder %v8714, inf
        %v8718 = vsel %vm8717, %v8714, %v8716
        %vm8719 = vcmp.eq.f32.partialorder %v8714, 0.0
        %v8720 = vand.u32 %v8714, 2147483648
        %v8721 = vsel %vm8719, %v8720, %v8718
        %v8722 = vld [vmem:[#allocation43] sm:$0xf]
        %v8723 = vld [vmem:[#allocation43 + $0x4] sm:$0xf]
        %v8724 = vld [vmem:[#allocation43 + $0x8] sm:$0xf]
        %v8725 = vld [vmem:[#allocation43 + $0xc] sm:$0xf]
        %v8726 = vld [vmem:[#allocation43 + $0x10] sm:$0xf]
        %v8727 = vld [vmem:[#allocation43 + $0x14] sm:$0xf]
        %v8728 = vld [vmem:[#allocation43 + $0x18] sm:$0xf]
        %v8729 = vld [vmem:[#allocation43 + $0x1c] sm:$0xf]
        %v8730 = vld [vmem:[#allocation43 + $0x20] sm:$0xf]
        %v8731 = vld [vmem:[#allocation43 + $0x24] sm:$0xf]
        %v8732 = vld [vmem:[#allocation43 + $0x28] sm:$0xf]
        %v8733 = vld [vmem:[#allocation43 + $0x2c] sm:$0xf]
        %v8734 = vld [vmem:[#allocation43 + $0x30] sm:$0xf]
        %v8735 = vld [vmem:[#allocation43 + $0x34] sm:$0xf]
        %v8736 = vld [vmem:[#allocation43 + $0x38] sm:$0xf]
        %v8737 = vld [vmem:[#allocation43 + $0x3c] sm:$0xf]
        %v8738 = vld [vmem:[#allocation43 + $0x40] sm:$0xf]
        %v8739 = vld [vmem:[#allocation43 + $0x44] sm:$0xf]
        %v8740 = vld [vmem:[#allocation43 + $0x48] sm:$0xf]
        %v8741 = vld [vmem:[#allocation43 + $0x4c] sm:$0xf]
        %v8742 = vld [vmem:[#allocation43 + $0x50] sm:$0xf]
        %v8743 = vld [vmem:[#allocation43 + $0x54] sm:$0xf]
        %v8744 = vld [vmem:[#allocation43 + $0x58] sm:$0xf]
        %v8745 = vld [vmem:[#allocation43 + $0x5c] sm:$0xf]
        %v8746 = vld [vmem:[#allocation43 + $0x60] sm:$0xf]
        %v8747 = vld [vmem:[#allocation43 + $0x64] sm:$0xf]
        %v8748 = vld [vmem:[#allocation43 + $0x68] sm:$0xf]
        %v8749 = vld [vmem:[#allocation43 + $0x6c] sm:$0xf]
        %v8750 = vld [vmem:[#allocation43 + $0x70] sm:$0xf]
        %v8751 = vld [vmem:[#allocation43 + $0x74] sm:$0xf]
        %v8752 = vld [vmem:[#allocation43 + $0x78] sm:$0xf]
        %v8753 = vld [vmem:[#allocation43 + $0x7c] sm:$0xf]
        %v8754 = vpack.c.bf16 %v8694, %v8694
        %v8755 = vpack.c.bf16 %v8721, %v8721
        %v8756 = vld [vmem:[#allocation44] sm:$0x1]
        %v8789 = vunpack.c.l.b16 %v8722
        %v8790 = vunpack.c.l.b16 %v8723
        %v8791 = vunpack.c.l.b16 %v8724
        %v8792 = vunpack.c.l.b16 %v8725
        %v8793 = vunpack.c.l.b16 %v8726
        %v8794 = vunpack.c.l.b16 %v8727
        %v8795 = vunpack.c.l.b16 %v8728
        %v8796 = vunpack.c.l.b16 %v8729
        %v8797 = vunpack.c.l.b16 %v8730
        %v8798 = vunpack.c.l.b16 %v8731
        %v8799 = vunpack.c.l.b16 %v8732
        %v8800 = vunpack.c.l.b16 %v8733
        %v8801 = vunpack.c.l.b16 %v8734
        %v8802 = vunpack.c.l.b16 %v8735
        %v8803 = vunpack.c.l.b16 %v8736
        %v8804 = vunpack.c.l.b16 %v8737
        %v8805 = vunpack.c.l.b16 %v8738
        %v8806 = vunpack.c.l.b16 %v8739
        %v8807 = vunpack.c.l.b16 %v8740
        %v8808 = vunpack.c.l.b16 %v8741
        %v8809 = vunpack.c.l.b16 %v8742
        %v8810 = vunpack.c.l.b16 %v8743
        %v8811 = vunpack.c.l.b16 %v8744
        %v8812 = vunpack.c.l.b16 %v8745
        %v8813 = vunpack.c.l.b16 %v8746
        %v8814 = vunpack.c.l.b16 %v8747
        %v8815 = vunpack.c.l.b16 %v8748
        %v8816 = vunpack.c.l.b16 %v8749
        %v8817 = vunpack.c.l.b16 %v8750
        %v8818 = vunpack.c.l.b16 %v8751
        %v8819 = vunpack.c.l.b16 %v8752
        %v8820 = vunpack.c.l.b16 %v8753
        %v8821 = vpack.c.b16 %v8790, %v8789
        %v8822 = vpack.c.b16 %v8792, %v8791
        %v8823 = vpack.c.b16 %v8794, %v8793
        %v8824 = vpack.c.b16 %v8796, %v8795
        %v8825 = vpack.c.b16 %v8798, %v8797
        %v8826 = vpack.c.b16 %v8800, %v8799
        %v8827 = vpack.c.b16 %v8802, %v8801
        %v8828 = vpack.c.b16 %v8804, %v8803
        %v8829 = vpack.c.b16 %v8806, %v8805
        %v8830 = vpack.c.b16 %v8808, %v8807
        %v8831 = vpack.c.b16 %v8810, %v8809
        %v8832 = vpack.c.b16 %v8812, %v8811
        %v8833 = vpack.c.b16 %v8814, %v8813
        %v8834 = vpack.c.b16 %v8816, %v8815
        %v8835 = vpack.c.b16 %v8818, %v8817
        %v8836 = vpack.c.b16 %v8820, %v8819
        %8853 = vmatprep.subr.bf16.mxu0 0
        %8854 = vmatpush1.bf16.msra.mxu0 %v8821
        %8855 = vmatprep.subr.bf16.mxu0 0
        %8856 = vmatpush1.bf16.msra.mxu0 %v8822
        %8857 = vmatprep.subr.bf16.mxu0 0
        %8858 = vmatpush1.bf16.msra.mxu0 %v8823
        %8859 = vmatprep.subr.bf16.mxu0 0
        %8860 = vmatpush1.bf16.msra.mxu0 %v8824
        %8861 = vmatprep.subr.bf16.mxu0 0
        %8862 = vmatpush1.bf16.msra.mxu0 %v8825
        %8863 = vmatprep.subr.bf16.mxu0 0
        %8864 = vmatpush1.bf16.msra.mxu0 %v8826
        %8865 = vmatprep.subr.bf16.mxu0 0
        %8866 = vmatpush1.bf16.msra.mxu0 %v8827
        %8867 = vmatprep.subr.bf16.mxu0 0
        %8868 = vmatpush1.bf16.msra.mxu0 %v8828
        %8869 = vmatprep.subr.bf16.mxu0 0
        %8870 = vmatpush1.bf16.msra.mxu0 %v8829
        %8871 = vmatprep.subr.bf16.mxu0 0
        %8872 = vmatpush1.bf16.msra.mxu0 %v8830
        %8873 = vmatprep.subr.bf16.mxu0 0
        %8874 = vmatpush1.bf16.msra.mxu0 %v8831
        %8875 = vmatprep.subr.bf16.mxu0 0
        %8876 = vmatpush1.bf16.msra.mxu0 %v8832
        %8877 = vmatprep.subr.bf16.mxu0 0
        %8878 = vmatpush1.bf16.msra.mxu0 %v8833
        %8879 = vmatprep.subr.bf16.mxu0 0
        %8880 = vmatpush1.bf16.msra.mxu0 %v8834
        %8881 = vmatprep.subr.bf16.mxu0 0
        %8882 = vmatpush1.bf16.msra.mxu0 %v8835
        %8883 = vmatprep.subr.bf16.mxu0 0
        %8884 = vmatpush1.bf16.msra.mxu0 %v8836
        %8885 = vmatprep.mubr.bf16.mxu0 %v8755
        %8886 = vmatmul.mubr.bf16.gmra.mrb[0].mxu0 %v8754
        %v8887 = vpop.f32.mrb[0].mxu0
        %v8888 = vadd.f32 %v8756, %v8887
        %v8889 = vpop.f32.mrb[0].mxu0
        %v8890 = vpop.f32.mrb[0].mxu0
        %v8891 = vpop.f32.mrb[0].mxu0
        %8892 = vdwg.mxu0
        %v8893 = vmul.f32 %v8888, %v8888
        %vm8894 = vcmask 1040384
        %v8895 = vsel %vm8894, %v8893, 0.0
        %8896 = vadd.xlane.f32.xlu0 %v8895
        %v8897 = vpop.xlane.xlu0 %8896
        %v8898 = vmax.f32 %v8897, 1e-24
        %v8899 = vrsqrt.pop %v8898
        %v8900 = vmul.f32 %v8888, %v8899
        %8901 = vst [vmem:[%s1533] sm:$0x1] %v8900
        %s8902 = sand.u32 %s917, 1
        %s8903 = scalar_lea.sflag [#allocation4], %s8902
        %s8904 = sand.u32 %s917, 1
        %s8905 = scalar_lea.vmem [#allocation46], %s8904
        // Predicated region
        $region285: #{wavlm_base_forward.1} parent=171 // pred_check
          %p8906 = pneg %p927
        $region286: #{wavlm_base_forward.1} parent=171 // pred_check_branch
          %8908 = sbr.rel (%p8906) target = $region288
        $region287: #{wavlm_base_forward.1} parent=171 // pred_region
          %s8910 = ssub.s32 16, 16
          %8911 = vsyncadd %s8903, %s8910
          %s8912 = smul.addr %s106, 16
          %s8913 = scalar_lea.hbm %s77, %s8912
          %s8915 = sshll.u32 %s8905, 4
          %s8916 = int_to_ptr.vmem [resolvable:$true] %s8915
          %8918 = dma.vmem_to_hbm [thread:$0]  %s8916, 16, %s8913, %s8903
        $region288: #{wavlm_base_forward.1} parent=171 // pred_fallthru
          _
      $region172: #{wavlm_base_forward.1} parent=5 // pred_fallthru
        _
      %p8919 = scmp.le.s32.totalorder 2, %s101
      // Predicated region
      $region289: #{wavlm_base_forward.1} parent=5 // pred_check
        %p8920 = pneg %p8919
      $region290: #{wavlm_base_forward.1} parent=5 // pred_check_branch
        %8922 = sbr.rel (%p8920) target = $region292
      $region291: #{wavlm_base_forward.1} parent=5 // pred_region
        %s8923 = ssub.s32 %s101, 2
        // Predicated region
        $region293: #{wavlm_base_forward.1} parent=291 // pred_check
          %p8924 = pneg %p933
        $region294: #{wavlm_base_forward.1} parent=291 // pred_check_branch
          %8926 = sbr.rel (%p8924) target = $region296
        $region295: #{wavlm_base_forward.1} parent=291 // pred_region
          %s8927 = sand.u32 %s918, 1
          %s8928 = scalar_lea.sflag [#allocation4], %s8927
          %s8929 = sand.u32 %s918, 1
          %s8930 = scalar_lea.vmem [#allocation46], %s8929
          %8931 = dma.done %s8928, 16
        $region296: #{wavlm_base_forward.1} parent=291 // pred_fallthru
          _
      $region292: #{wavlm_base_forward.1} parent=5 // pred_fallthru
        _
    $region6: #{wavlm_base_forward.1} parent=1 // loop_footer
      %s105 = sadd.s32 1, %s101
    $region7: #{wavlm_base_forward.1} parent=1 // loop_footer_branch
      %100 = sbr.rel target = $region3
    $region8: #{wavlm_base_forward.1} parent=1 // loop_exit
      _
    %8932 = vsyncpa [#allocation3], 1
    %s8933 = scalar_lea.sflag [#allocation3], 1
    %8934 = vsyncpa %s8933, 1
    %8935 = vsyncpa [#allocation6], 1
    %8936 = vsyncpa [#allocation9], 1
    %8937 = vsyncpa [#allocation12], 1
    %8938 = vsyncpa [#allocation15], 1
    %8939 = vsyncpa [#allocation18], 1
    %8940 = vsyncpa [#allocation21], 1
    %8941 = vsyncpa [#allocation24], 1
    %8942 = vsyncpa [#allocation27], 1
    %8943 = vsyncpa [#allocation30], 1
    %8944 = vsyncpa [#allocation33], 1
    %8945 = vsyncpa [#allocation36], 1
    %8946 = vsyncpa [#allocation39], 1
    %8947 = vsyncpa [#allocation42], 1
    %8948 = vsyncpa [#allocation45], 1
    %8949 = vsyncpa [#allocation4], 1
    %s8950 = scalar_lea.sflag [#allocation4], 1
    %8951 = vsyncpa %s8950, 1

</llo_original>
